<compile_context>
chip_gen: v5e
topology: v5e:2x2
jax: 0.10.0
libtpu: 0.0.40
codegen_flags: <defaults>
</compile_context>

<pallas_src>
import functools
import math

import jax
import jax.numpy as jnp
from jax import lax
from jax.experimental import pallas as pl
from jax.experimental.pallas import tpu as pltpu


def _const_index_map(ndim):
    return lambda i: (0,) * ndim


# ----------------------------------------------------------------------------
# Kernel 1: fused CNN stack, gridded over the batch
# ----------------------------------------------------------------------------
def _conv3_bn(x, w, s, h):
    """kernel_size=3, padding=1 conv as 3 shifted-tap matmuls + folded BN.
    x: (N, L, C) bf16; w: (3*C, Cout) bf16 with taps ordered [t-1, t, t+1].
    Returns (N*L, Cout) float32."""
    n, l, c = x.shape
    z = jnp.zeros((n, 1, c), x.dtype)
    prv = jnp.concatenate([z, x[:, :l - 1, :]], axis=1).reshape(n * l, c)
    nxt = jnp.concatenate([x[:, 1:, :], z], axis=1).reshape(n * l, c)
    acc = jnp.dot(prv, w[0:c], preferred_element_type=jnp.float32)
    acc = acc + jnp.dot(x.reshape(n * l, c), w[c:2 * c],
                        preferred_element_type=jnp.float32)
    acc = acc + jnp.dot(nxt, w[2 * c:3 * c],
                        preferred_element_type=jnp.float32)
    return acc * s + h


def _resblock_pool(x, w1, s1, h1, w2, s2, h2, wadj, badj, n, l):
    """ResidualBlock (conv-bn-relu-conv-bn + 1x1 residual, relu) + MaxPool1d(2).
    x: (N, L, Cin) bf16.  Returns (N, L//2, Cout) float32."""
    cin = x.shape[2]
    cout = wadj.shape[1]
    y1 = jnp.maximum(_conv3_bn(x, w1, s1, h1), 0.0)                # (N*L, Cout)
    y2 = _conv3_bn(y1.astype(jnp.bfloat16).reshape(n, l, cout), w2, s2, h2)
    res = jnp.dot(x.reshape(n * l, cin), wadj,
                  preferred_element_type=jnp.float32) + badj
    out = jnp.maximum(y2 + res, 0.0)                               # (N*L, Cout)
    # fused MaxPool1d(kernel_size=2, stride=2)
    return jnp.max(out.reshape(n, l // 2, 2, cout), axis=2)        # (N, L/2, Cout)


def cnn_kernel(x_ref,
               w1a_ref, s1a_ref, h1a_ref, w2a_ref, s2a_ref, h2a_ref, wra_ref, bra_ref,
               w1b_ref, s1b_ref, h1b_ref, w2b_ref, s2b_ref, h2b_ref, wrb_ref, brb_ref,
               w1c_ref, s1c_ref, h1c_ref, w2c_ref, s2c_ref, h2c_ref, wrc_ref, brc_ref,
               o_ref):
    nb, l, _ = x_ref.shape
    x = x_ref[...]                                                 # (Nb, L, 64) bf16
    a = _resblock_pool(x,
                       w1a_ref[...], s1a_ref[...], h1a_ref[...],
                       w2a_ref[...], s2a_ref[...], h2a_ref[...],
                       wra_ref[...], bra_ref[...], nb, l)
    b = _resblock_pool(a.astype(jnp.bfloat16),
                       w1b_ref[...], s1b_ref[...], h1b_ref[...],
                       w2b_ref[...], s2b_ref[...], h2b_ref[...],
                       wrb_ref[...], brb_ref[...], nb, l // 2)
    c = _resblock_pool(b.astype(jnp.bfloat16),
                       w1c_ref[...], s1c_ref[...], h1c_ref[...],
                       w2c_ref[...], s2c_ref[...], h2c_ref[...],
                       wrc_ref[...], brc_ref[...], nb, l // 4)
    # CNN-tail Dropout(0.5): identity in eval mode
    o_ref[...] = c.astype(o_ref.dtype)                             # (Nb, L/8, 256) bf16


def cnn_forward(x_nlc, params, batch_block=8):
    """x_nlc: (N, L, 59) channels-last float32 -> (N, L//8, 256) bfloat16."""
    n, l, cin = x_nlc.shape
    assert l % 8 == 0, "L must be divisible by 8 (three MaxPool(2) stages)"
    cin_pad = params["blocks"][0]["wadj"].shape[0]                 # 59 -> 64
    cout_last = params["blocks"][-1]["wadj"].shape[1]
    x = jnp.pad(x_nlc, ((0, 0), (0, 0), (0, cin_pad - cin))).astype(jnp.bfloat16)

    nb = min(batch_block, n)
    n_pad = ((n + nb - 1) // nb) * nb
    if n_pad != n:
        x = jnp.pad(x, ((0, n_pad - n), (0, 0), (0, 0)))

    flat = []
    for blk in params["blocks"]:
        flat += [blk["w1"], blk["s1"], blk["h1"], blk["w2"], blk["s2"],
                 blk["h2"], blk["wadj"], blk["badj"]]

    # rough cost hint for the XLA scheduler
    flops, ci, ll = 0, cin_pad, l
    for co in (64, 128, 256):
        flops += 2 * n_pad * ll * (3 * ci * co + 3 * co * co + ci * co)
        ci, ll = co, ll // 2
    weight_bytes = sum(int(w.size) * w.dtype.itemsize for w in flat)
    bytes_accessed = (int(x.size) * x.dtype.itemsize + weight_bytes
                      + n_pad * (l // 8) * cout_last * 2)

    out = pl.pallas_call(
        cnn_kernel,
        out_shape=jax.ShapeDtypeStruct((n_pad, l // 8, cout_last), jnp.bfloat16),
        grid=(n_pad // nb,),
        in_specs=([pl.BlockSpec((nb, l, cin_pad), lambda i: (i, 0, 0))]
                  + [pl.BlockSpec(w.shape, _const_index_map(w.ndim))
                     for w in flat]),
        out_specs=pl.BlockSpec((nb, l // 8, cout_last), lambda i: (i, 0, 0)),
        compiler_params=pltpu.CompilerParams(
            dimension_semantics=("parallel",),
            vmem_limit_bytes=64 * 1024 * 1024),
        cost_estimate=pl.CostEstimate(flops=int(flops), transcendentals=0,
                                      bytes_accessed=int(bytes_accessed)),
    )(x, *flat)
    return out[:n]


# ----------------------------------------------------------------------------
# Kernel 2: fused MultiheadAttention + 2-layer LSTM + MLP head, batched grid
# ----------------------------------------------------------------------------
def attn_lstm_head_kernel(x_ref, wqkv_ref, bqkv_ref, wo_ref, bo_ref,
                          wih0_ref, whh0_ref, b0_ref,
                          wih1_ref, whh1_ref, b1_ref,
                          wf1_ref, bf1_ref, wf2_ref, bf2_ref,
                          o_ref, xg_ref, *, num_heads):
    nb, s_len, e = x_ref.shape
    hd = e // num_heads
    hdim = e                           # LSTM hidden size == embed == 256
    scale = 1.0 / math.sqrt(hd)
    rows = nb * s_len

    xb = x_ref[...]                                                # (B, S, E) bf16

    # ---- MultiheadAttention (fused QKV projection, self-attention) ----
    qkv = (jnp.dot(xb.reshape(rows, e), wqkv_ref[...],
                   preferred_element_type=jnp.float32)
           + bqkv_ref[...]).reshape(nb, s_len, 3 * e)
    q = qkv[:, :, 0:e] * scale
    k = qkv[:, :, e:2 * e]
    v = qkv[:, :, 2 * e:3 * e]

    # Each head's context is projected straight into the output accumulation
    # (no concat of 32-lane head slices).
    wo = wo_ref[...]
    acc = jnp.zeros((rows, e), jnp.float32)
    for h in range(num_heads):
        lo = h * hd
        qh = q[:, :, lo:lo + hd]
        kh = k[:, :, lo:lo + hd]
        vh = v[:, :, lo:lo + hd]
        sc = jnp.einsum("bsd,btd->bst", qh, kh,
                        preferred_element_type=jnp.float32)        # (B, S, S)
        sc = sc - jnp.max(sc, axis=-1, keepdims=True)
        p = jnp.exp(sc)
        p = p * pl.reciprocal(jnp.sum(p, axis=-1, keepdims=True), approx=True)
        ctx = jnp.einsum("bst,btd->bsd", p, vh,
                         preferred_element_type=jnp.float32)        # (B, S, hd)
        acc = acc + jnp.dot(ctx.reshape(rows, hd).astype(jnp.bfloat16),
                            wo[lo:lo + hd, :],
                            preferred_element_type=jnp.float32)
    attn = acc + bo_ref[...]                                        # (B*S, E)

    # ---- 2-layer LSTM, batch_first, h0=c0=0, gate order i,f,g,o ----
    # Layer-1 input projection hoisted off the recurrence: one matmul for the
    # whole sequence, stored time-major (S, B, 4E) in VMEM scratch.
    attn_tm = attn.reshape(nb, s_len, e).transpose(1, 0, 2).reshape(rows, e)
    xg_ref[...] = (jnp.dot(attn_tm.astype(jnp.bfloat16), wih0_ref[...],
                           preferred_element_type=jnp.float32)
                   + b0_ref[...]).reshape(s_len, nb, 4 * e)

    whh0 = whh0_ref[...]
    wih1 = wih1_ref[...]
    whh1 = whh1_ref[...]
    b1v = b1_ref[...]

    def step(t, carry):
        h1, c1, h2, c2 = carry                                      # (B, H) f32 each
        # layer 1: only the recurrent matmul is on the critical path
        g1 = xg_ref[t] + jnp.dot(h1.astype(jnp.bfloat16), whh0,
                                 preferred_element_type=jnp.float32)
        i1 = jax.nn.sigmoid(g1[:, 0:hdim])
        f1 = jax.nn.sigmoid(g1[:, hdim:2 * hdim])
        u1 = jnp.tanh(g1[:, 2 * hdim:3 * hdim])
        o1 = jax.nn.sigmoid(g1[:, 3 * hdim:4 * hdim])
        c1 = f1 * c1 + i1 * u1
        h1 = o1 * jnp.tanh(c1)
        # inter-layer LSTM Dropout(0.5): identity in eval mode
        g2 = (jnp.dot(h1.astype(jnp.bfloat16), wih1,
                      preferred_element_type=jnp.float32)
              + jnp.dot(h2.astype(jnp.bfloat16), whh1,
                        preferred_element_type=jnp.float32) + b1v)
        i2 = jax.nn.sigmoid(g2[:, 0:hdim])
        f2 = jax.nn.sigmoid(g2[:, hdim:2 * hdim])
        u2 = jnp.tanh(g2[:, 2 * hdim:3 * hdim])
        o2 = jax.nn.sigmoid(g2[:, 3 * hdim:4 * hdim])
        c2 = f2 * c2 + i2 * u2
        h2 = o2 * jnp.tanh(c2)
        return h1, c1, h2, c2

    zero = jnp.zeros((nb, hdim), jnp.float32)
    unroll = s_len if s_len <= 32 else 4          # guard vreg/imem blowup at large S
    _, _, h2, _ = lax.fori_loop(0, s_len, step, (zero, zero, zero, zero),
                                unroll=unroll)

    # ---- MLP head: fc1 + ReLU (+ Dropout=identity) + lane-padded fc2 ----
    z = jnp.maximum(jnp.dot(h2.astype(jnp.bfloat16), wf1_ref[...],
                            preferred_element_type=jnp.float32) + bf1_ref[...],
                    0.0)                                            # (B, 128)
    logits = (jnp.dot(z.astype(jnp.bfloat16), wf2_ref[...],
                      preferred_element_type=jnp.float32) + bf2_ref[...])
    o_ref[...] = logits.astype(o_ref.dtype)                         # (B, 128) lane-dense


def attn_lstm_head(x_nse, mha_p, lstm_p, head_p, num_heads=8, batch_block=8):
    n, s, e = x_nse.shape
    out_w = head_p["w2T"].shape[1]                                  # 128 (lane-padded)
    nb = min(batch_block, n)
    n_pad = ((n + nb - 1) // nb) * nb
    if n_pad != n:
        x_nse = jnp.pad(x_nse, ((0, n_pad - n), (0, 0), (0, 0)))

    weights = [mha_p["wqkvT"], mha_p["bqkv"], mha_p["woT"], mha_p["bo"],
               lstm_p["wih0T"], lstm_p["whh0T"], lstm_p["b0"],
               lstm_p["wih1T"], lstm_p["whh1T"], lstm_p["b1"],
               head_p["w1T"], head_p["b1"], head_p["w2T"], head_p["b2"]]

    flops = (2 * n_pad * s * (3 * e * e + 2 * s * e + e * e + 16 * e * e)
             + 2 * n_pad * (e * 128 + 128 * 128))
    transcendentals = n_pad * s * (num_heads * s + 10 * e)
    weight_bytes = sum(int(w.size) * w.dtype.itemsize for w in weights)
    bytes_accessed = (int(x_nse.size) * x_nse.dtype.itemsize + weight_bytes
                      + n_pad * out_w * 4)

    out = pl.pallas_call(
        functools.partial(attn_lstm_head_kernel, num_heads=num_heads),
        out_shape=jax.ShapeDtypeStruct((n_pad, out_w), jnp.float32),
        grid=(n_pad // nb,),
        in_specs=([pl.BlockSpec((nb, s, e), lambda i: (i, 0, 0))]
                  + [pl.BlockSpec(w.shape, _const_index_map(w.ndim))
                     for w in weights]),
        out_specs=pl.BlockSpec((nb, out_w), lambda i: (i, 0)),
        scratch_shapes=[pltpu.VMEM((s, nb, 4 * e), jnp.float32)],
        compiler_params=pltpu.CompilerParams(
            dimension_semantics=("parallel",),
            vmem_limit_bytes=32 * 1024 * 1024),
        cost_estimate=pl.CostEstimate(flops=int(flops),
                                      transcendentals=int(transcendentals),
                                      bytes_accessed=int(bytes_accessed)),
    )(x_nse, *weights)
    return out[:n]                                  # (N, 128) lane-padded logits


# ----------------------------------------------------------------------------
# Full forward pass (wrapper glue: layout transpose + final logit slice)
# ----------------------------------------------------------------------------
def cnn_lstm_forward(x_ncl, params, batch_block=8):
    # x_ncl: (N, 59, L) exactly like the PyTorch module's input
    x = jnp.transpose(x_ncl, (0, 2, 1))                   # (N, L, C) channels-last
    feat = cnn_forward(x, params, batch_block)            # (N, S=L//8, 256) bf16
    logits_pad = attn_lstm_head(feat, params["mha"], params["lstm"],
                                params["head"], batch_block=batch_block)
    return logits_pad[:, :4]                              # drop fc2 lane padding


# ----------------------------------------------------------------------------
# Deterministic synthetic parameters (shapes per the PyTorch module __init__)
# ----------------------------------------------------------------------------
def init_params(key):
    keys = iter(jax.random.split(key, 64))
    bf = jnp.bfloat16

    def nrm(shape, scale=0.05, dtype=jnp.float32):
        return (scale * jax.random.normal(next(keys), shape,
                                          jnp.float32)).astype(dtype)

    eps = 1e-5
    blocks = []
    for cin, cin_pad, cout in [(59, 64, 64), (64, 64, 128), (128, 128, 256)]:
        w1, b1 = nrm((3, cin, cout)), nrm((cout,))
        g1, be1 = 1.0 + nrm((cout,)), nrm((cout,))
        w2, b2 = nrm((3, cout, cout)), nrm((cout,))
        g2, be2 = 1.0 + nrm((cout,)), nrm((cout,))
        wadj, badj = nrm((cin, cout)), nrm((cout,))
        # Fold eval-mode BatchNorm + conv bias into per-channel scale/shift.
        # NOTE: synthetic running_mean=0 / running_var=1; a real checkpoint
        # must use s = gamma/sqrt(running_var+eps), h = (conv_bias-running_mean)*s + beta.
        s1 = g1 / jnp.sqrt(1.0 + eps)
        h1 = b1 * s1 + be1
        s2 = g2 / jnp.sqrt(1.0 + eps)
        h2 = b2 * s2 + be2
        # zero-pad Cin -> Cin_pad so the first block's contractions are MXU aligned
        # (tap layout: rows [k*Cin_pad:(k+1)*Cin_pad] == torch weight[:, :, k].T)
        w1p = jnp.zeros((3, cin_pad, cout), jnp.float32).at[:, :cin, :].set(w1)
        wadjp = jnp.zeros((cin_pad, cout), jnp.float32).at[:cin, :].set(wadj)
        blocks.append(dict(
            w1=w1p.reshape(3 * cin_pad, cout).astype(bf),
            s1=s1.reshape(1, cout), h1=h1.reshape(1, cout),
            w2=w2.reshape(3 * cout, cout).astype(bf),
            s2=s2.reshape(1, cout), h2=h2.reshape(1, cout),
            wadj=wadjp.astype(bf), badj=badj.reshape(1, cout)))

    e = 256
    mha_p = dict(wqkvT=nrm((e, 3 * e), 0.03, bf), bqkv=nrm((1, 3 * e)),
                 woT=nrm((e, e), 0.03, bf), bo=nrm((1, e)))
    # NOTE: b0/b1 represent (b_ih + b_hh) of each LSTM layer; PyTorch stores
    # them separately and they must be summed when porting real weights.
    lstm_p = dict(wih0T=nrm((e, 4 * e), 0.03, bf), whh0T=nrm((e, 4 * e), 0.03, bf),
                  b0=nrm((1, 4 * e)),
                  wih1T=nrm((e, 4 * e), 0.03, bf), whh1T=nrm((e, 4 * e), 0.03, bf),
                  b1=nrm((1, 4 * e)))
    # fc2 lane-padded from (128, 4) to (128, 128) so the kernel store is dense.
    w2t = jnp.zeros((128, 128), jnp.float32).at[:, :4].set(
        0.05 * jax.random.normal(next(keys), (128, 4), jnp.float32))
    b2 = jnp.zeros((1, 128), jnp.float32).at[:, :4].set(
        0.05 * jax.random.normal(next(keys), (1, 4), jnp.float32))
    head_p = dict(w1T=nrm((e, 128), 0.05, bf), b1=nrm((1, 128)),
                  w2T=w2t.astype(bf), b2=b2)
    return dict(blocks=blocks, mha=mha_p, lstm=lstm_p, head=head_p)


if __name__ == "__main__":
    key = jax.random.PRNGKey(0)
    kx, kp = jax.random.split(key)

    N, C_IN, L = 2, 59, 16          # L=16 -> seq length 2 after 3x MaxPool(2)
    x = jax.random.normal(kx, (N, C_IN, L), jnp.float32)
    params = init_params(kp)

    fwd = jax.jit(lambda inp: cnn_lstm_forward(inp, params))
    out = jax.block_until_ready(fwd(x))
    assert out.shape == (N, 4), out.shape
    assert bool(jnp.all(jnp.isfinite(out)))
    print("KERNEL_OK")
</pallas_src>

<mosaic_0001>
module attributes {stable_mosaic.version = 11 : i64} {
  func.func @cnn_kernel(%arg0: i32, %arg1: memref<2x16x64xbf16, #tpu.memory_space<vmem>>, %arg2: memref<192x64xbf16, #tpu.memory_space<vmem>>, %arg3: memref<1x64xf32, #tpu.memory_space<vmem>>, %arg4: memref<1x64xf32, #tpu.memory_space<vmem>>, %arg5: memref<192x64xbf16, #tpu.memory_space<vmem>>, %arg6: memref<1x64xf32, #tpu.memory_space<vmem>>, %arg7: memref<1x64xf32, #tpu.memory_space<vmem>>, %arg8: memref<64x64xbf16, #tpu.memory_space<vmem>>, %arg9: memref<1x64xf32, #tpu.memory_space<vmem>>, %arg10: memref<192x128xbf16, #tpu.memory_space<vmem>>, %arg11: memref<1x128xf32, #tpu.memory_space<vmem>>, %arg12: memref<1x128xf32, #tpu.memory_space<vmem>>, %arg13: memref<384x128xbf16, #tpu.memory_space<vmem>>, %arg14: memref<1x128xf32, #tpu.memory_space<vmem>>, %arg15: memref<1x128xf32, #tpu.memory_space<vmem>>, %arg16: memref<64x128xbf16, #tpu.memory_space<vmem>>, %arg17: memref<1x128xf32, #tpu.memory_space<vmem>>, %arg18: memref<384x256xbf16, #tpu.memory_space<vmem>>, %arg19: memref<1x256xf32, #tpu.memory_space<vmem>>, %arg20: memref<1x256xf32, #tpu.memory_space<vmem>>, %arg21: memref<768x256xbf16, #tpu.memory_space<vmem>>, %arg22: memref<1x256xf32, #tpu.memory_space<vmem>>, %arg23: memref<1x256xf32, #tpu.memory_space<vmem>>, %arg24: memref<128x256xbf16, #tpu.memory_space<vmem>>, %arg25: memref<1x256xf32, #tpu.memory_space<vmem>>, %arg26: memref<2x2x256xbf16, #tpu.memory_space<vmem>>) attributes {dimension_semantics = [#tpu.dimension_semantics<parallel>], iteration_bounds = array<i64: 1>, scalar_prefetch = 0 : i64, scratch_operands = 0 : i64, tpu.core_type = #tpu.core_type<tc>, window_params = [{transform_indices = @transform_0, window_bounds = array<i64: 2, 16, 64>}, {pipeline_mode = #tpu.pipeline_mode<synchronous>, transform_indices = @transform_1, window_bounds = array<i64: 192, 64>}, {pipeline_mode = #tpu.pipeline_mode<synchronous>, transform_indices = @transform_2, window_bounds = array<i64: 1, 64>}, {pipeline_mode = #tpu.pipeline_mode<synchronous>, transform_indices = @transform_3, window_bounds = array<i64: 1, 64>}, {pipeline_mode = #tpu.pipeline_mode<synchronous>, transform_indices = @transform_4, window_bounds = array<i64: 192, 64>}, {pipeline_mode = #tpu.pipeline_mode<synchronous>, transform_indices = @transform_5, window_bounds = array<i64: 1, 64>}, {pipeline_mode = #tpu.pipeline_mode<synchronous>, transform_indices = @transform_6, window_bounds = array<i64: 1, 64>}, {pipeline_mode = #tpu.pipeline_mode<synchronous>, transform_indices = @transform_7, window_bounds = array<i64: 64, 64>}, {pipeline_mode = #tpu.pipeline_mode<synchronous>, transform_indices = @transform_8, window_bounds = array<i64: 1, 64>}, {pipeline_mode = #tpu.pipeline_mode<synchronous>, transform_indices = @transform_9, window_bounds = array<i64: 192, 128>}, {pipeline_mode = #tpu.pipeline_mode<synchronous>, transform_indices = @transform_10, window_bounds = array<i64: 1, 128>}, {pipeline_mode = #tpu.pipeline_mode<synchronous>, transform_indices = @transform_11, window_bounds = array<i64: 1, 128>}, {pipeline_mode = #tpu.pipeline_mode<synchronous>, transform_indices = @transform_12, window_bounds = array<i64: 384, 128>}, {pipeline_mode = #tpu.pipeline_mode<synchronous>, transform_indices = @transform_13, window_bounds = array<i64: 1, 128>}, {pipeline_mode = #tpu.pipeline_mode<synchronous>, transform_indices = @transform_14, window_bounds = array<i64: 1, 128>}, {pipeline_mode = #tpu.pipeline_mode<synchronous>, transform_indices = @transform_15, window_bounds = array<i64: 64, 128>}, {pipeline_mode = #tpu.pipeline_mode<synchronous>, transform_indices = @transform_16, window_bounds = array<i64: 1, 128>}, {pipeline_mode = #tpu.pipeline_mode<synchronous>, transform_indices = @transform_17, window_bounds = array<i64: 384, 256>}, {pipeline_mode = #tpu.pipeline_mode<synchronous>, transform_indices = @transform_18, window_bounds = array<i64: 1, 256>}, {pipeline_mode = #tpu.pipeline_mode<synchronous>, transform_indices = @transform_19, window_bounds = array<i64: 1, 256>}, {pipeline_mode = #tpu.pipeline_mode<synchronous>, transform_indices = @transform_20, window_bounds = array<i64: 768, 256>}, {pipeline_mode = #tpu.pipeline_mode<synchronous>, transform_indices = @transform_21, window_bounds = array<i64: 1, 256>}, {pipeline_mode = #tpu.pipeline_mode<synchronous>, transform_indices = @transform_22, window_bounds = array<i64: 1, 256>}, {pipeline_mode = #tpu.pipeline_mode<synchronous>, transform_indices = @transform_23, window_bounds = array<i64: 128, 256>}, {pipeline_mode = #tpu.pipeline_mode<synchronous>, transform_indices = @transform_24, window_bounds = array<i64: 1, 256>}, {transform_indices = @transform_25, window_bounds = array<i64: 2, 2, 256>}]} {
    %c0 = arith.constant 0 : index
    %c0_0 = arith.constant 0 : index
    %c0_1 = arith.constant 0 : index
    %0 = vector.load %arg1[%c0, %c0_0, %c0_1] : memref<2x16x64xbf16, #tpu.memory_space<vmem>>, vector<2x16x64xbf16>
    %c0_2 = arith.constant 0 : index
    %c0_3 = arith.constant 0 : index
    %1 = vector.load %arg2[%c0_2, %c0_3] : memref<192x64xbf16, #tpu.memory_space<vmem>>, vector<192x64xbf16>
    %c0_4 = arith.constant 0 : index
    %c0_5 = arith.constant 0 : index
    %2 = vector.load %arg3[%c0_4, %c0_5] : memref<1x64xf32, #tpu.memory_space<vmem>>, vector<1x64xf32>
    %c0_6 = arith.constant 0 : index
    %c0_7 = arith.constant 0 : index
    %3 = vector.load %arg4[%c0_6, %c0_7] : memref<1x64xf32, #tpu.memory_space<vmem>>, vector<1x64xf32>
    %c0_8 = arith.constant 0 : index
    %c0_9 = arith.constant 0 : index
    %4 = vector.load %arg5[%c0_8, %c0_9] : memref<192x64xbf16, #tpu.memory_space<vmem>>, vector<192x64xbf16>
    %c0_10 = arith.constant 0 : index
    %c0_11 = arith.constant 0 : index
    %5 = vector.load %arg6[%c0_10, %c0_11] : memref<1x64xf32, #tpu.memory_space<vmem>>, vector<1x64xf32>
    %c0_12 = arith.constant 0 : index
    %c0_13 = arith.constant 0 : index
    %6 = vector.load %arg7[%c0_12, %c0_13] : memref<1x64xf32, #tpu.memory_space<vmem>>, vector<1x64xf32>
    %c0_14 = arith.constant 0 : index
    %c0_15 = arith.constant 0 : index
    %7 = vector.load %arg8[%c0_14, %c0_15] : memref<64x64xbf16, #tpu.memory_space<vmem>>, vector<64x64xbf16>
    %c0_16 = arith.constant 0 : index
    %c0_17 = arith.constant 0 : index
    %8 = vector.load %arg9[%c0_16, %c0_17] : memref<1x64xf32, #tpu.memory_space<vmem>>, vector<1x64xf32>
    %cst = arith.constant 0.000000e+00 : bf16
    %9 = vector.broadcast %cst : bf16 to vector<2x1x64xbf16>
    %10 = vector.extract_strided_slice %0 {offsets = [0, 0, 0], sizes = [2, 15, 64], strides = [1, 1, 1]} : vector<2x16x64xbf16> to vector<2x15x64xbf16>
    %11 = tpu.concatenate %9, %10 in 1 : vector<2x1x64xbf16>, vector<2x15x64xbf16> -> vector<2x16x64xbf16>
    %12 = vector.shape_cast %11 : vector<2x16x64xbf16> to vector<32x64xbf16>
    %13 = vector.extract_strided_slice %0 {offsets = [0, 1, 0], sizes = [2, 15, 64], strides = [1, 1, 1]} : vector<2x16x64xbf16> to vector<2x15x64xbf16>
    %14 = tpu.concatenate %13, %9 in 1 : vector<2x15x64xbf16>, vector<2x1x64xbf16> -> vector<2x16x64xbf16>
    %15 = vector.shape_cast %14 : vector<2x16x64xbf16> to vector<32x64xbf16>
    %16 = vector.extract_strided_slice %1 {offsets = [0, 0], sizes = [64, 64], strides = [1, 1]} : vector<192x64xbf16> to vector<64x64xbf16>
    %cst_18 = arith.constant dense<0.000000e+00> : vector<32x64xf32>
    %17 = tpu.matmul %12, %16, %cst_18 {dimension_numbers = #tpu.dot_dimension_numbers<[1], [0], [0], [1], [0, 0, 1, 1], [], []>} : vector<32x64xbf16>, vector<64x64xbf16>, vector<32x64xf32> -> vector<32x64xf32>
    %18 = vector.shape_cast %0 : vector<2x16x64xbf16> to vector<32x64xbf16>
    %19 = vector.extract_strided_slice %1 {offsets = [64, 0], sizes = [64, 64], strides = [1, 1]} : vector<192x64xbf16> to vector<64x64xbf16>
    %cst_19 = arith.constant dense<0.000000e+00> : vector<32x64xf32>
    %20 = tpu.matmul %18, %19, %cst_19 {dimension_numbers = #tpu.dot_dimension_numbers<[1], [0], [0], [1], [0, 0, 1, 1], [], []>} : vector<32x64xbf16>, vector<64x64xbf16>, vector<32x64xf32> -> vector<32x64xf32>
    %21 = arith.addf %17, %20 : vector<32x64xf32>
    %22 = vector.extract_strided_slice %1 {offsets = [128, 0], sizes = [64, 64], strides = [1, 1]} : vector<192x64xbf16> to vector<64x64xbf16>
    %cst_20 = arith.constant dense<0.000000e+00> : vector<32x64xf32>
    %23 = tpu.matmul %15, %22, %cst_20 {dimension_numbers = #tpu.dot_dimension_numbers<[1], [0], [0], [1], [0, 0, 1, 1], [], []>} : vector<32x64xbf16>, vector<64x64xbf16>, vector<32x64xf32> -> vector<32x64xf32>
    %24 = arith.addf %21, %23 : vector<32x64xf32>
    %25 = vector.broadcast %2 : vector<1x64xf32> to vector<32x64xf32>
    %26 = arith.mulf %24, %25 : vector<32x64xf32>
    %27 = vector.broadcast %3 : vector<1x64xf32> to vector<32x64xf32>
    %28 = arith.addf %26, %27 : vector<32x64xf32>
    %cst_21 = arith.constant 0.000000e+00 : f32
    %29 = vector.broadcast %cst_21 : f32 to vector<32x64xf32>
    %30 = arith.maximumf %28, %29 : vector<32x64xf32>
    %31 = arith.truncf %30 : vector<32x64xf32> to vector<32x64xbf16>
    %32 = vector.shape_cast %31 : vector<32x64xbf16> to vector<2x16x64xbf16>
    %cst_22 = arith.constant 0.000000e+00 : bf16
    %33 = vector.broadcast %cst_22 : bf16 to vector<2x1x64xbf16>
    %34 = vector.extract_strided_slice %32 {offsets = [0, 0, 0], sizes = [2, 15, 64], strides = [1, 1, 1]} : vector<2x16x64xbf16> to vector<2x15x64xbf16>
    %35 = tpu.concatenate %33, %34 in 1 : vector<2x1x64xbf16>, vector<2x15x64xbf16> -> vector<2x16x64xbf16>
    %36 = vector.shape_cast %35 : vector<2x16x64xbf16> to vector<32x64xbf16>
    %37 = vector.extract_strided_slice %32 {offsets = [0, 1, 0], sizes = [2, 15, 64], strides = [1, 1, 1]} : vector<2x16x64xbf16> to vector<2x15x64xbf16>
    %38 = tpu.concatenate %37, %33 in 1 : vector<2x15x64xbf16>, vector<2x1x64xbf16> -> vector<2x16x64xbf16>
    %39 = vector.shape_cast %38 : vector<2x16x64xbf16> to vector<32x64xbf16>
    %40 = vector.extract_strided_slice %4 {offsets = [0, 0], sizes = [64, 64], strides = [1, 1]} : vector<192x64xbf16> to vector<64x64xbf16>
    %cst_23 = arith.constant dense<0.000000e+00> : vector<32x64xf32>
    %41 = tpu.matmul %36, %40, %cst_23 {dimension_numbers = #tpu.dot_dimension_numbers<[1], [0], [0], [1], [0, 0, 1, 1], [], []>} : vector<32x64xbf16>, vector<64x64xbf16>, vector<32x64xf32> -> vector<32x64xf32>
    %42 = vector.shape_cast %32 : vector<2x16x64xbf16> to vector<32x64xbf16>
    %43 = vector.extract_strided_slice %4 {offsets = [64, 0], sizes = [64, 64], strides = [1, 1]} : vector<192x64xbf16> to vector<64x64xbf16>
    %cst_24 = arith.constant dense<0.000000e+00> : vector<32x64xf32>
    %44 = tpu.matmul %42, %43, %cst_24 {dimension_numbers = #tpu.dot_dimension_numbers<[1], [0], [0], [1], [0, 0, 1, 1], [], []>} : vector<32x64xbf16>, vector<64x64xbf16>, vector<32x64xf32> -> vector<32x64xf32>
    %45 = arith.addf %41, %44 : vector<32x64xf32>
    %46 = vector.extract_strided_slice %4 {offsets = [128, 0], sizes = [64, 64], strides = [1, 1]} : vector<192x64xbf16> to vector<64x64xbf16>
    %cst_25 = arith.constant dense<0.000000e+00> : vector<32x64xf32>
    %47 = tpu.matmul %39, %46, %cst_25 {dimension_numbers = #tpu.dot_dimension_numbers<[1], [0], [0], [1], [0, 0, 1, 1], [], []>} : vector<32x64xbf16>, vector<64x64xbf16>, vector<32x64xf32> -> vector<32x64xf32>
    %48 = arith.addf %45, %47 : vector<32x64xf32>
    %49 = vector.broadcast %5 : vector<1x64xf32> to vector<32x64xf32>
    %50 = arith.mulf %48, %49 : vector<32x64xf32>
    %51 = vector.broadcast %6 : vector<1x64xf32> to vector<32x64xf32>
    %52 = arith.addf %50, %51 : vector<32x64xf32>
    %53 = vector.shape_cast %0 : vector<2x16x64xbf16> to vector<32x64xbf16>
    %cst_26 = arith.constant dense<0.000000e+00> : vector<32x64xf32>
    %54 = tpu.matmul %53, %7, %cst_26 {dimension_numbers = #tpu.dot_dimension_numbers<[1], [0], [0], [1], [0, 0, 1, 1], [], []>} : vector<32x64xbf16>, vector<64x64xbf16>, vector<32x64xf32> -> vector<32x64xf32>
    %55 = vector.broadcast %8 : vector<1x64xf32> to vector<32x64xf32>
    %56 = arith.addf %54, %55 : vector<32x64xf32>
    %57 = arith.addf %52, %56 : vector<32x64xf32>
    %cst_27 = arith.constant 0.000000e+00 : f32
    %58 = vector.broadcast %cst_27 : f32 to vector<32x64xf32>
    %59 = arith.maximumf %57, %58 : vector<32x64xf32>
    %60 = vector.shape_cast %59 : vector<32x64xf32> to vector<2x8x2x64xf32>
    %cst_28 = arith.constant dense<0xFF800000> : vector<2x8x64xf32>
    %61 = vector.multi_reduction <maximumf>, %60, %cst_28 [2] : vector<2x8x2x64xf32> to vector<2x8x64xf32>
    %62 = arith.truncf %61 : vector<2x8x64xf32> to vector<2x8x64xbf16>
    %c0_29 = arith.constant 0 : index
    %c0_30 = arith.constant 0 : index
    %63 = vector.load %arg10[%c0_29, %c0_30] : memref<192x128xbf16, #tpu.memory_space<vmem>>, vector<192x128xbf16>
    %c0_31 = arith.constant 0 : index
    %c0_32 = arith.constant 0 : index
    %64 = vector.load %arg11[%c0_31, %c0_32] : memref<1x128xf32, #tpu.memory_space<vmem>>, vector<1x128xf32>
    %c0_33 = arith.constant 0 : index
    %c0_34 = arith.constant 0 : index
    %65 = vector.load %arg12[%c0_33, %c0_34] : memref<1x128xf32, #tpu.memory_space<vmem>>, vector<1x128xf32>
    %c0_35 = arith.constant 0 : index
    %c0_36 = arith.constant 0 : index
    %66 = vector.load %arg13[%c0_35, %c0_36] : memref<384x128xbf16, #tpu.memory_space<vmem>>, vector<384x128xbf16>
    %c0_37 = arith.constant 0 : index
    %c0_38 = arith.constant 0 : index
    %67 = vector.load %arg14[%c0_37, %c0_38] : memref<1x128xf32, #tpu.memory_space<vmem>>, vector<1x128xf32>
    %c0_39 = arith.constant 0 : index
    %c0_40 = arith.constant 0 : index
    %68 = vector.load %arg15[%c0_39, %c0_40] : memref<1x128xf32, #tpu.memory_space<vmem>>, vector<1x128xf32>
    %c0_41 = arith.constant 0 : index
    %c0_42 = arith.constant 0 : index
    %69 = vector.load %arg16[%c0_41, %c0_42] : memref<64x128xbf16, #tpu.memory_space<vmem>>, vector<64x128xbf16>
    %c0_43 = arith.constant 0 : index
    %c0_44 = arith.constant 0 : index
    %70 = vector.load %arg17[%c0_43, %c0_44] : memref<1x128xf32, #tpu.memory_space<vmem>>, vector<1x128xf32>
    %cst_45 = arith.constant 0.000000e+00 : bf16
    %71 = vector.broadcast %cst_45 : bf16 to vector<2x1x64xbf16>
    %72 = vector.extract_strided_slice %62 {offsets = [0, 0, 0], sizes = [2, 7, 64], strides = [1, 1, 1]} : vector<2x8x64xbf16> to vector<2x7x64xbf16>
    %73 = tpu.concatenate %71, %72 in 1 : vector<2x1x64xbf16>, vector<2x7x64xbf16> -> vector<2x8x64xbf16>
    %74 = vector.shape_cast %73 : vector<2x8x64xbf16> to vector<16x64xbf16>
    %75 = vector.extract_strided_slice %62 {offsets = [0, 1, 0], sizes = [2, 7, 64], strides = [1, 1, 1]} : vector<2x8x64xbf16> to vector<2x7x64xbf16>
    %76 = tpu.concatenate %75, %71 in 1 : vector<2x7x64xbf16>, vector<2x1x64xbf16> -> vector<2x8x64xbf16>
    %77 = vector.shape_cast %76 : vector<2x8x64xbf16> to vector<16x64xbf16>
    %78 = vector.extract_strided_slice %63 {offsets = [0, 0], sizes = [64, 128], strides = [1, 1]} : vector<192x128xbf16> to vector<64x128xbf16>
    %cst_46 = arith.constant dense<0.000000e+00> : vector<16x128xf32>
    %79 = tpu.matmul %74, %78, %cst_46 {dimension_numbers = #tpu.dot_dimension_numbers<[1], [0], [0], [1], [0, 0, 1, 1], [], []>} : vector<16x64xbf16>, vector<64x128xbf16>, vector<16x128xf32> -> vector<16x128xf32>
    %80 = vector.shape_cast %62 : vector<2x8x64xbf16> to vector<16x64xbf16>
    %81 = vector.extract_strided_slice %63 {offsets = [64, 0], sizes = [64, 128], strides = [1, 1]} : vector<192x128xbf16> to vector<64x128xbf16>
    %cst_47 = arith.constant dense<0.000000e+00> : vector<16x128xf32>
    %82 = tpu.matmul %80, %81, %cst_47 {dimension_numbers = #tpu.dot_dimension_numbers<[1], [0], [0], [1], [0, 0, 1, 1], [], []>} : vector<16x64xbf16>, vector<64x128xbf16>, vector<16x128xf32> -> vector<16x128xf32>
    %83 = arith.addf %79, %82 : vector<16x128xf32>
    %84 = vector.extract_strided_slice %63 {offsets = [128, 0], sizes = [64, 128], strides = [1, 1]} : vector<192x128xbf16> to vector<64x128xbf16>
    %cst_48 = arith.constant dense<0.000000e+00> : vector<16x128xf32>
    %85 = tpu.matmul %77, %84, %cst_48 {dimension_numbers = #tpu.dot_dimension_numbers<[1], [0], [0], [1], [0, 0, 1, 1], [], []>} : vector<16x64xbf16>, vector<64x128xbf16>, vector<16x128xf32> -> vector<16x128xf32>
    %86 = arith.addf %83, %85 : vector<16x128xf32>
    %87 = vector.broadcast %64 : vector<1x128xf32> to vector<16x128xf32>
    %88 = arith.mulf %86, %87 : vector<16x128xf32>
    %89 = vector.broadcast %65 : vector<1x128xf32> to vector<16x128xf32>
    %90 = arith.addf %88, %89 : vector<16x128xf32>
    %cst_49 = arith.constant 0.000000e+00 : f32
    %91 = vector.broadcast %cst_49 : f32 to vector<16x128xf32>
    %92 = arith.maximumf %90, %91 : vector<16x128xf32>
    %93 = arith.truncf %92 : vector<16x128xf32> to vector<16x128xbf16>
    %94 = vector.shape_cast %93 : vector<16x128xbf16> to vector<2x8x128xbf16>
    %cst_50 = arith.constant 0.000000e+00 : bf16
    %95 = vector.broadcast %cst_50 : bf16 to vector<2x1x128xbf16>
    %96 = vector.extract_strided_slice %94 {offsets = [0, 0, 0], sizes = [2, 7, 128], strides = [1, 1, 1]} : vector<2x8x128xbf16> to vector<2x7x128xbf16>
    %97 = tpu.concatenate %95, %96 in 1 : vector<2x1x128xbf16>, vector<2x7x128xbf16> -> vector<2x8x128xbf16>
    %98 = vector.shape_cast %97 : vector<2x8x128xbf16> to vector<16x128xbf16>
    %99 = vector.extract_strided_slice %94 {offsets = [0, 1, 0], sizes = [2, 7, 128], strides = [1, 1, 1]} : vector<2x8x128xbf16> to vector<2x7x128xbf16>
    %100 = tpu.concatenate %99, %95 in 1 : vector<2x7x128xbf16>, vector<2x1x128xbf16> -> vector<2x8x128xbf16>
    %101 = vector.shape_cast %100 : vector<2x8x128xbf16> to vector<16x128xbf16>
    %102 = vector.extract_strided_slice %66 {offsets = [0, 0], sizes = [128, 128], strides = [1, 1]} : vector<384x128xbf16> to vector<128x128xbf16>
    %cst_51 = arith.constant dense<0.000000e+00> : vector<16x128xf32>
    %103 = tpu.matmul %98, %102, %cst_51 {dimension_numbers = #tpu.dot_dimension_numbers<[1], [0], [0], [1], [0, 0, 1, 1], [], []>} : vector<16x128xbf16>, vector<128x128xbf16>, vector<16x128xf32> -> vector<16x128xf32>
    %104 = vector.shape_cast %94 : vector<2x8x128xbf16> to vector<16x128xbf16>
    %105 = vector.extract_strided_slice %66 {offsets = [128, 0], sizes = [128, 128], strides = [1, 1]} : vector<384x128xbf16> to vector<128x128xbf16>
    %cst_52 = arith.constant dense<0.000000e+00> : vector<16x128xf32>
    %106 = tpu.matmul %104, %105, %cst_52 {dimension_numbers = #tpu.dot_dimension_numbers<[1], [0], [0], [1], [0, 0, 1, 1], [], []>} : vector<16x128xbf16>, vector<128x128xbf16>, vector<16x128xf32> -> vector<16x128xf32>
    %107 = arith.addf %103, %106 : vector<16x128xf32>
    %108 = vector.extract_strided_slice %66 {offsets = [256, 0], sizes = [128, 128], strides = [1, 1]} : vector<384x128xbf16> to vector<128x128xbf16>
    %cst_53 = arith.constant dense<0.000000e+00> : vector<16x128xf32>
    %109 = tpu.matmul %101, %108, %cst_53 {dimension_numbers = #tpu.dot_dimension_numbers<[1], [0], [0], [1], [0, 0, 1, 1], [], []>} : vector<16x128xbf16>, vector<128x128xbf16>, vector<16x128xf32> -> vector<16x128xf32>
    %110 = arith.addf %107, %109 : vector<16x128xf32>
    %111 = vector.broadcast %67 : vector<1x128xf32> to vector<16x128xf32>
    %112 = arith.mulf %110, %111 : vector<16x128xf32>
    %113 = vector.broadcast %68 : vector<1x128xf32> to vector<16x128xf32>
    %114 = arith.addf %112, %113 : vector<16x128xf32>
    %115 = vector.shape_cast %62 : vector<2x8x64xbf16> to vector<16x64xbf16>
    %cst_54 = arith.constant dense<0.000000e+00> : vector<16x128xf32>
    %116 = tpu.matmul %115, %69, %cst_54 {dimension_numbers = #tpu.dot_dimension_numbers<[1], [0], [0], [1], [0, 0, 1, 1], [], []>} : vector<16x64xbf16>, vector<64x128xbf16>, vector<16x128xf32> -> vector<16x128xf32>
    %117 = vector.broadcast %70 : vector<1x128xf32> to vector<16x128xf32>
    %118 = arith.addf %116, %117 : vector<16x128xf32>
    %119 = arith.addf %114, %118 : vector<16x128xf32>
    %cst_55 = arith.constant 0.000000e+00 : f32
    %120 = vector.broadcast %cst_55 : f32 to vector<16x128xf32>
    %121 = arith.maximumf %119, %120 : vector<16x128xf32>
    %122 = vector.shape_cast %121 : vector<16x128xf32> to vector<2x4x2x128xf32>
    %cst_56 = arith.constant dense<0xFF800000> : vector<2x4x128xf32>
    %123 = vector.multi_reduction <maximumf>, %122, %cst_56 [2] : vector<2x4x2x128xf32> to vector<2x4x128xf32>
    %124 = arith.truncf %123 : vector<2x4x128xf32> to vector<2x4x128xbf16>
    %c0_57 = arith.constant 0 : index
    %c0_58 = arith.constant 0 : index
    %125 = vector.load %arg18[%c0_57, %c0_58] : memref<384x256xbf16, #tpu.memory_space<vmem>>, vector<384x256xbf16>
    %c0_59 = arith.constant 0 : index
    %c0_60 = arith.constant 0 : index
    %126 = vector.load %arg19[%c0_59, %c0_60] : memref<1x256xf32, #tpu.memory_space<vmem>>, vector<1x256xf32>
    %c0_61 = arith.constant 0 : index
    %c0_62 = arith.constant 0 : index
    %127 = vector.load %arg20[%c0_61, %c0_62] : memref<1x256xf32, #tpu.memory_space<vmem>>, vector<1x256xf32>
    %c0_63 = arith.constant 0 : index
    %c0_64 = arith.constant 0 : index
    %128 = vector.load %arg21[%c0_63, %c0_64] : memref<768x256xbf16, #tpu.memory_space<vmem>>, vector<768x256xbf16>
    %c0_65 = arith.constant 0 : index
    %c0_66 = arith.constant 0 : index
    %129 = vector.load %arg22[%c0_65, %c0_66] : memref<1x256xf32, #tpu.memory_space<vmem>>, vector<1x256xf32>
    %c0_67 = arith.constant 0 : index
    %c0_68 = arith.constant 0 : index
    %130 = vector.load %arg23[%c0_67, %c0_68] : memref<1x256xf32, #tpu.memory_space<vmem>>, vector<1x256xf32>
    %c0_69 = arith.constant 0 : index
    %c0_70 = arith.constant 0 : index
    %131 = vector.load %arg24[%c0_69, %c0_70] : memref<128x256xbf16, #tpu.memory_space<vmem>>, vector<128x256xbf16>
    %c0_71 = arith.constant 0 : index
    %c0_72 = arith.constant 0 : index
    %132 = vector.load %arg25[%c0_71, %c0_72] : memref<1x256xf32, #tpu.memory_space<vmem>>, vector<1x256xf32>
    %cst_73 = arith.constant 0.000000e+00 : bf16
    %133 = vector.broadcast %cst_73 : bf16 to vector<2x1x128xbf16>
    %134 = vector.extract_strided_slice %124 {offsets = [0, 0, 0], sizes = [2, 3, 128], strides = [1, 1, 1]} : vector<2x4x128xbf16> to vector<2x3x128xbf16>
    %135 = tpu.concatenate %133, %134 in 1 : vector<2x1x128xbf16>, vector<2x3x128xbf16> -> vector<2x4x128xbf16>
    %136 = vector.shape_cast %135 : vector<2x4x128xbf16> to vector<8x128xbf16>
    %137 = vector.extract_strided_slice %124 {offsets = [0, 1, 0], sizes = [2, 3, 128], strides = [1, 1, 1]} : vector<2x4x128xbf16> to vector<2x3x128xbf16>
    %138 = tpu.concatenate %137, %133 in 1 : vector<2x3x128xbf16>, vector<2x1x128xbf16> -> vector<2x4x128xbf16>
    %139 = vector.shape_cast %138 : vector<2x4x128xbf16> to vector<8x128xbf16>
    %140 = vector.extract_strided_slice %125 {offsets = [0, 0], sizes = [128, 256], strides = [1, 1]} : vector<384x256xbf16> to vector<128x256xbf16>
    %cst_74 = arith.constant dense<0.000000e+00> : vector<8x256xf32>
    %141 = tpu.matmul %136, %140, %cst_74 {dimension_numbers = #tpu.dot_dimension_numbers<[1], [0], [0], [1], [0, 0, 1, 1], [], []>} : vector<8x128xbf16>, vector<128x256xbf16>, vector<8x256xf32> -> vector<8x256xf32>
    %142 = vector.shape_cast %124 : vector<2x4x128xbf16> to vector<8x128xbf16>
    %143 = vector.extract_strided_slice %125 {offsets = [128, 0], sizes = [128, 256], strides = [1, 1]} : vector<384x256xbf16> to vector<128x256xbf16>
    %cst_75 = arith.constant dense<0.000000e+00> : vector<8x256xf32>
    %144 = tpu.matmul %142, %143, %cst_75 {dimension_numbers = #tpu.dot_dimension_numbers<[1], [0], [0], [1], [0, 0, 1, 1], [], []>} : vector<8x128xbf16>, vector<128x256xbf16>, vector<8x256xf32> -> vector<8x256xf32>
    %145 = arith.addf %141, %144 : vector<8x256xf32>
    %146 = vector.extract_strided_slice %125 {offsets = [256, 0], sizes = [128, 256], strides = [1, 1]} : vector<384x256xbf16> to vector<128x256xbf16>
    %cst_76 = arith.constant dense<0.000000e+00> : vector<8x256xf32>
    %147 = tpu.matmul %139, %146, %cst_76 {dimension_numbers = #tpu.dot_dimension_numbers<[1], [0], [0], [1], [0, 0, 1, 1], [], []>} : vector<8x128xbf16>, vector<128x256xbf16>, vector<8x256xf32> -> vector<8x256xf32>
    %148 = arith.addf %145, %147 : vector<8x256xf32>
    %149 = vector.broadcast %126 : vector<1x256xf32> to vector<8x256xf32>
    %150 = arith.mulf %148, %149 : vector<8x256xf32>
    %151 = vector.broadcast %127 : vector<1x256xf32> to vector<8x256xf32>
    %152 = arith.addf %150, %151 : vector<8x256xf32>
    %cst_77 = arith.constant 0.000000e+00 : f32
    %153 = vector.broadcast %cst_77 : f32 to vector<8x256xf32>
    %154 = arith.maximumf %152, %153 : vector<8x256xf32>
    %155 = arith.truncf %154 : vector<8x256xf32> to vector<8x256xbf16>
    %156 = vector.shape_cast %155 : vector<8x256xbf16> to vector<2x4x256xbf16>
    %cst_78 = arith.constant 0.000000e+00 : bf16
    %157 = vector.broadcast %cst_78 : bf16 to vector<2x1x256xbf16>
    %158 = vector.extract_strided_slice %156 {offsets = [0, 0, 0], sizes = [2, 3, 256], strides = [1, 1, 1]} : vector<2x4x256xbf16> to vector<2x3x256xbf16>
    %159 = tpu.concatenate %157, %158 in 1 : vector<2x1x256xbf16>, vector<2x3x256xbf16> -> vector<2x4x256xbf16>
    %160 = vector.shape_cast %159 : vector<2x4x256xbf16> to vector<8x256xbf16>
    %161 = vector.extract_strided_slice %156 {offsets = [0, 1, 0], sizes = [2, 3, 256], strides = [1, 1, 1]} : vector<2x4x256xbf16> to vector<2x3x256xbf16>
    %162 = tpu.concatenate %161, %157 in 1 : vector<2x3x256xbf16>, vector<2x1x256xbf16> -> vector<2x4x256xbf16>
    %163 = vector.shape_cast %162 : vector<2x4x256xbf16> to vector<8x256xbf16>
    %164 = vector.extract_strided_slice %128 {offsets = [0, 0], sizes = [256, 256], strides = [1, 1]} : vector<768x256xbf16> to vector<256x256xbf16>
    %cst_79 = arith.constant dense<0.000000e+00> : vector<8x256xf32>
    %165 = tpu.matmul %160, %164, %cst_79 {dimension_numbers = #tpu.dot_dimension_numbers<[1], [0], [0], [1], [0, 0, 1, 1], [], []>} : vector<8x256xbf16>, vector<256x256xbf16>, vector<8x256xf32> -> vector<8x256xf32>
    %166 = vector.shape_cast %156 : vector<2x4x256xbf16> to vector<8x256xbf16>
    %167 = vector.extract_strided_slice %128 {offsets = [256, 0], sizes = [256, 256], strides = [1, 1]} : vector<768x256xbf16> to vector<256x256xbf16>
    %cst_80 = arith.constant dense<0.000000e+00> : vector<8x256xf32>
    %168 = tpu.matmul %166, %167, %cst_80 {dimension_numbers = #tpu.dot_dimension_numbers<[1], [0], [0], [1], [0, 0, 1, 1], [], []>} : vector<8x256xbf16>, vector<256x256xbf16>, vector<8x256xf32> -> vector<8x256xf32>
    %169 = arith.addf %165, %168 : vector<8x256xf32>
    %170 = vector.extract_strided_slice %128 {offsets = [512, 0], sizes = [256, 256], strides = [1, 1]} : vector<768x256xbf16> to vector<256x256xbf16>
    %cst_81 = arith.constant dense<0.000000e+00> : vector<8x256xf32>
    %171 = tpu.matmul %163, %170, %cst_81 {dimension_numbers = #tpu.dot_dimension_numbers<[1], [0], [0], [1], [0, 0, 1, 1], [], []>} : vector<8x256xbf16>, vector<256x256xbf16>, vector<8x256xf32> -> vector<8x256xf32>
    %172 = arith.addf %169, %171 : vector<8x256xf32>
    %173 = vector.broadcast %129 : vector<1x256xf32> to vector<8x256xf32>
    %174 = arith.mulf %172, %173 : vector<8x256xf32>
    %175 = vector.broadcast %130 : vector<1x256xf32> to vector<8x256xf32>
    %176 = arith.addf %174, %175 : vector<8x256xf32>
    %177 = vector.shape_cast %124 : vector<2x4x128xbf16> to vector<8x128xbf16>
    %cst_82 = arith.constant dense<0.000000e+00> : vector<8x256xf32>
    %178 = tpu.matmul %177, %131, %cst_82 {dimension_numbers = #tpu.dot_dimension_numbers<[1], [0], [0], [1], [0, 0, 1, 1], [], []>} : vector<8x128xbf16>, vector<128x256xbf16>, vector<8x256xf32> -> vector<8x256xf32>
    %179 = vector.broadcast %132 : vector<1x256xf32> to vector<8x256xf32>
    %180 = arith.addf %178, %179 : vector<8x256xf32>
    %181 = arith.addf %176, %180 : vector<8x256xf32>
    %cst_83 = arith.constant 0.000000e+00 : f32
    %182 = vector.broadcast %cst_83 : f32 to vector<8x256xf32>
    %183 = arith.maximumf %181, %182 : vector<8x256xf32>
    %184 = vector.shape_cast %183 : vector<8x256xf32> to vector<2x2x2x256xf32>
    %cst_84 = arith.constant dense<0xFF800000> : vector<2x2x256xf32>
    %185 = vector.multi_reduction <maximumf>, %184, %cst_84 [2] : vector<2x2x2x256xf32> to vector<2x2x256xf32>
    %186 = arith.truncf %185 : vector<2x2x256xf32> to vector<2x2x256xbf16>
    %c0_85 = arith.constant 0 : index
    %c0_86 = arith.constant 0 : index
    %c0_87 = arith.constant 0 : index
    %187 = vector.load %arg26[%c0_85, %c0_86, %c0_87] : memref<2x2x256xbf16, #tpu.memory_space<vmem>>, vector<2x2x256xbf16>
    tpu.vector_store %arg26[%c0_85, %c0_86, %c0_87], %186 {strides = array<i32>} : memref<2x2x256xbf16, #tpu.memory_space<vmem>>, vector<2x2x256xbf16>,
    return
  }
  func.func @transform_0(%arg0: i32) -> (i32, i32, i32) {
    %c0_i32 = arith.constant 0 : i32
    %c0_i32_0 = arith.constant 0 : i32
    %c0_i32_1 = arith.constant 0 : i32
    return %arg0, %c0_i32, %c0_i32_0 : i32, i32, i32
  }
  func.func @transform_1(%arg0: i32) -> (i32, i32) {
    %c0_i32 = arith.constant 0 : i32
    %c0_i32_0 = arith.constant 0 : i32
    %c0_i32_1 = arith.constant 0 : i32
    return %c0_i32, %c0_i32_0 : i32, i32
  }
  func.func @transform_2(%arg0: i32) -> (i32, i32) {
    %c0_i32 = arith.constant 0 : i32
    %c0_i32_0 = arith.constant 0 : i32
    %c0_i32_1 = arith.constant 0 : i32
    return %c0_i32, %c0_i32_0 : i32, i32
  }
  func.func @transform_3(%arg0: i32) -> (i32, i32) {
    %c0_i32 = arith.constant 0 : i32
    %c0_i32_0 = arith.constant 0 : i32
    %c0_i32_1 = arith.constant 0 : i32
    return %c0_i32, %c0_i32_0 : i32, i32
  }
  func.func @transform_4(%arg0: i32) -> (i32, i32) {
    %c0_i32 = arith.constant 0 : i32
    %c0_i32_0 = arith.constant 0 : i32
    %c0_i32_1 = arith.constant 0 : i32
    return %c0_i32, %c0_i32_0 : i32, i32
  }
  func.func @transform_5(%arg0: i32) -> (i32, i32) {
    %c0_i32 = arith.constant 0 : i32
    %c0_i32_0 = arith.constant 0 : i32
    %c0_i32_1 = arith.constant 0 : i32
    return %c0_i32, %c0_i32_0 : i32, i32
  }
  func.func @transform_6(%arg0: i32) -> (i32, i32) {
    %c0_i32 = arith.constant 0 : i32
    %c0_i32_0 = arith.constant 0 : i32
    %c0_i32_1 = arith.constant 0 : i32
    return %c0_i32, %c0_i32_0 : i32, i32
  }
  func.func @transform_7(%arg0: i32) -> (i32, i32) {
    %c0_i32 = arith.constant 0 : i32
    %c0_i32_0 = arith.constant 0 : i32
    %c0_i32_1 = arith.constant 0 : i32
    return %c0_i32, %c0_i32_0 : i32, i32
  }
  func.func @transform_8(%arg0: i32) -> (i32, i32) {
    %c0_i32 = arith.constant 0 : i32
    %c0_i32_0 = arith.constant 0 : i32
    %c0_i32_1 = arith.constant 0 : i32
    return %c0_i32, %c0_i32_0 : i32, i32
  }
  func.func @transform_9(%arg0: i32) -> (i32, i32) {
    %c0_i32 = arith.constant 0 : i32
    %c0_i32_0 = arith.constant 0 : i32
    %c0_i32_1 = arith.constant 0 : i32
    return %c0_i32, %c0_i32_0 : i32, i32
  }
  func.func @transform_10(%arg0: i32) -> (i32, i32) {
    %c0_i32 = arith.constant 0 : i32
    %c0_i32_0 = arith.constant 0 : i32
    %c0_i32_1 = arith.constant 0 : i32
    return %c0_i32, %c0_i32_0 : i32, i32
  }
  func.func @transform_11(%arg0: i32) -> (i32, i32) {
    %c0_i32 = arith.constant 0 : i32
    %c0_i32_0 = arith.constant 0 : i32
    %c0_i32_1 = arith.constant 0 : i32
    return %c0_i32, %c0_i32_0 : i32, i32
  }
  func.func @transform_12(%arg0: i32) -> (i32, i32) {
    %c0_i32 = arith.constant 0 : i32
    %c0_i32_0 = arith.constant 0 : i32
    %c0_i32_1 = arith.constant 0 : i32
    return %c0_i32, %c0_i32_0 : i32, i32
  }
  func.func @transform_13(%arg0: i32) -> (i32, i32) {
    %c0_i32 = arith.constant 0 : i32
    %c0_i32_0 = arith.constant 0 : i32
    %c0_i32_1 = arith.constant 0 : i32
    return %c0_i32, %c0_i32_0 : i32, i32
  }
  func.func @transform_14(%arg0: i32) -> (i32, i32) {
    %c0_i32 = arith.constant 0 : i32
    %c0_i32_0 = arith.constant 0 : i32
    %c0_i32_1 = arith.constant 0 : i32
    return %c0_i32, %c0_i32_0 : i32, i32
  }
  func.func @transform_15(%arg0: i32) -> (i32, i32) {
    %c0_i32 = arith.constant 0 : i32
    %c0_i32_0 = arith.constant 0 : i32
    %c0_i32_1 = arith.constant 0 : i32
    return %c0_i32, %c0_i32_0 : i32, i32
  }
  func.func @transform_16(%arg0: i32) -> (i32, i32) {
    %c0_i32 = arith.constant 0 : i32
    %c0_i32_0 = arith.constant 0 : i32
    %c0_i32_1 = arith.constant 0 : i32
    return %c0_i32, %c0_i32_0 : i32, i32
  }
  func.func @transform_17(%arg0: i32) -> (i32, i32) {
    %c0_i32 = arith.constant 0 : i32
    %c0_i32_0 = arith.constant 0 : i32
    %c0_i32_1 = arith.constant 0 : i32
    return %c0_i32, %c0_i32_0 : i32, i32
  }
  func.func @transform_18(%arg0: i32) -> (i32, i32) {
    %c0_i32 = arith.constant 0 : i32
    %c0_i32_0 = arith.constant 0 : i32
    %c0_i32_1 = arith.constant 0 : i32
    return %c0_i32, %c0_i32_0 : i32, i32
  }
  func.func @transform_19(%arg0: i32) -> (i32, i32) {
    %c0_i32 = arith.constant 0 : i32
    %c0_i32_0 = arith.constant 0 : i32
    %c0_i32_1 = arith.constant 0 : i32
    return %c0_i32, %c0_i32_0 : i32, i32
  }
  func.func @transform_20(%arg0: i32) -> (i32, i32) {
    %c0_i32 = arith.constant 0 : i32
    %c0_i32_0 = arith.constant 0 : i32
    %c0_i32_1 = arith.constant 0 : i32
    return %c0_i32, %c0_i32_0 : i32, i32
  }
  func.func @transform_21(%arg0: i32) -> (i32, i32) {
    %c0_i32 = arith.constant 0 : i32
    %c0_i32_0 = arith.constant 0 : i32
    %c0_i32_1 = arith.constant 0 : i32
    return %c0_i32, %c0_i32_0 : i32, i32
  }
  func.func @transform_22(%arg0: i32) -> (i32, i32) {
    %c0_i32 = arith.constant 0 : i32
    %c0_i32_0 = arith.constant 0 : i32
    %c0_i32_1 = arith.constant 0 : i32
    return %c0_i32, %c0_i32_0 : i32, i32
  }
  func.func @transform_23(%arg0: i32) -> (i32, i32) {
    %c0_i32 = arith.constant 0 : i32
    %c0_i32_0 = arith.constant 0 : i32
    %c0_i32_1 = arith.constant 0 : i32
    return %c0_i32, %c0_i32_0 : i32, i32
  }
  func.func @transform_24(%arg0: i32) -> (i32, i32) {
    %c0_i32 = arith.constant 0 : i32
    %c0_i32_0 = arith.constant 0 : i32
    %c0_i32_1 = arith.constant 0 : i32
    return %c0_i32, %c0_i32_0 : i32, i32
  }
  func.func @transform_25(%arg0: i32) -> (i32, i32, i32) {
    %c0_i32 = arith.constant 0 : i32
    %c0_i32_0 = arith.constant 0 : i32
    %c0_i32_1 = arith.constant 0 : i32
    return %arg0, %c0_i32, %c0_i32_0 : i32, i32, i32
  }
}

module attributes {stable_mosaic.version = 11 : i64} {
  func.func @attn_lstm_head_kernel(%arg0: i32, %arg1: memref<2x2x256xbf16, #tpu.memory_space<vmem>>, %arg2: memref<256x768xbf16, #tpu.memory_space<vmem>>, %arg3: memref<1x768xf32, #tpu.memory_space<vmem>>, %arg4: memref<256x256xbf16, #tpu.memory_space<vmem>>, %arg5: memref<1x256xf32, #tpu.memory_space<vmem>>, %arg6: memref<256x1024xbf16, #tpu.memory_space<vmem>>, %arg7: memref<256x1024xbf16, #tpu.memory_space<vmem>>, %arg8: memref<1x1024xf32, #tpu.memory_space<vmem>>, %arg9: memref<256x1024xbf16, #tpu.memory_space<vmem>>, %arg10: memref<256x1024xbf16, #tpu.memory_space<vmem>>, %arg11: memref<1x1024xf32, #tpu.memory_space<vmem>>, %arg12: memref<256x128xbf16, #tpu.memory_space<vmem>>, %arg13: memref<1x128xf32, #tpu.memory_space<vmem>>, %arg14: memref<128x128xbf16, #tpu.memory_space<vmem>>, %arg15: memref<1x128xf32, #tpu.memory_space<vmem>>, %arg16: memref<2x128xf32, #tpu.memory_space<vmem>>, %arg17: memref<2x2x1024xf32, #tpu.memory_space<vmem>>) attributes {dimension_semantics = [#tpu.dimension_semantics<parallel>], iteration_bounds = array<i64: 1>, scalar_prefetch = 0 : i64, scratch_operands = 1 : i64, tpu.core_type = #tpu.core_type<tc>, window_params = [{transform_indices = @transform_0, window_bounds = array<i64: 2, 2, 256>}, {pipeline_mode = #tpu.pipeline_mode<synchronous>, transform_indices = @transform_1, window_bounds = array<i64: 256, 768>}, {pipeline_mode = #tpu.pipeline_mode<synchronous>, transform_indices = @transform_2, window_bounds = array<i64: 1, 768>}, {pipeline_mode = #tpu.pipeline_mode<synchronous>, transform_indices = @transform_3, window_bounds = array<i64: 256, 256>}, {pipeline_mode = #tpu.pipeline_mode<synchronous>, transform_indices = @transform_4, window_bounds = array<i64: 1, 256>}, {pipeline_mode = #tpu.pipeline_mode<synchronous>, transform_indices = @transform_5, window_bounds = array<i64: 256, 1024>}, {pipeline_mode = #tpu.pipeline_mode<synchronous>, transform_indices = @transform_6, window_bounds = array<i64: 256, 1024>}, {pipeline_mode = #tpu.pipeline_mode<synchronous>, transform_indices = @transform_7, window_bounds = array<i64: 1, 1024>}, {pipeline_mode = #tpu.pipeline_mode<synchronous>, transform_indices = @transform_8, window_bounds = array<i64: 256, 1024>}, {pipeline_mode = #tpu.pipeline_mode<synchronous>, transform_indices = @transform_9, window_bounds = array<i64: 256, 1024>}, {pipeline_mode = #tpu.pipeline_mode<synchronous>, transform_indices = @transform_10, window_bounds = array<i64: 1, 1024>}, {pipeline_mode = #tpu.pipeline_mode<synchronous>, transform_indices = @transform_11, window_bounds = array<i64: 256, 128>}, {pipeline_mode = #tpu.pipeline_mode<synchronous>, transform_indices = @transform_12, window_bounds = array<i64: 1, 128>}, {pipeline_mode = #tpu.pipeline_mode<synchronous>, transform_indices = @transform_13, window_bounds = array<i64: 128, 128>}, {pipeline_mode = #tpu.pipeline_mode<synchronous>, transform_indices = @transform_14, window_bounds = array<i64: 1, 128>}, {transform_indices = @transform_15, window_bounds = array<i64: 2, 128>}]} {
    %c0 = arith.constant 0 : index
    %c0_0 = arith.constant 0 : index
    %c0_1 = arith.constant 0 : index
    %0 = vector.load %arg1[%c0, %c0_0, %c0_1] : memref<2x2x256xbf16, #tpu.memory_space<vmem>>, vector<2x2x256xbf16>
    %1 = vector.shape_cast %0 : vector<2x2x256xbf16> to vector<4x256xbf16>
    %c0_2 = arith.constant 0 : index
    %c0_3 = arith.constant 0 : index
    %2 = vector.load %arg2[%c0_2, %c0_3] : memref<256x768xbf16, #tpu.memory_space<vmem>>, vector<256x768xbf16>
    %cst = arith.constant dense<0.000000e+00> : vector<4x768xf32>
    %3 = tpu.matmul %1, %2, %cst {dimension_numbers = #tpu.dot_dimension_numbers<[1], [0], [0], [1], [0, 0, 1, 1], [], []>} : vector<4x256xbf16>, vector<256x768xbf16>, vector<4x768xf32> -> vector<4x768xf32>
    %c0_4 = arith.constant 0 : index
    %c0_5 = arith.constant 0 : index
    %4 = vector.load %arg3[%c0_4, %c0_5] : memref<1x768xf32, #tpu.memory_space<vmem>>, vector<1x768xf32>
    %5 = vector.broadcast %4 : vector<1x768xf32> to vector<4x768xf32>
    %6 = arith.addf %3, %5 : vector<4x768xf32>
    %7 = vector.shape_cast %6 : vector<4x768xf32> to vector<2x2x768xf32>
    %8 = vector.extract_strided_slice %7 {offsets = [0, 0, 0], sizes = [2, 2, 256], strides = [1, 1, 1]} : vector<2x2x768xf32> to vector<2x2x256xf32>
    %cst_6 = arith.constant 0.176776692 : f32
    %9 = vector.broadcast %cst_6 : f32 to vector<2x2x256xf32>
    %10 = arith.mulf %8, %9 : vector<2x2x256xf32>
    %11 = vector.extract_strided_slice %7 {offsets = [0, 0, 256], sizes = [2, 2, 256], strides = [1, 1, 1]} : vector<2x2x768xf32> to vector<2x2x256xf32>
    %12 = vector.extract_strided_slice %7 {offsets = [0, 0, 512], sizes = [2, 2, 256], strides = [1, 1, 1]} : vector<2x2x768xf32> to vector<2x2x256xf32>
    %c0_7 = arith.constant 0 : index
    %c0_8 = arith.constant 0 : index
    %13 = vector.load %arg4[%c0_7, %c0_8] : memref<256x256xbf16, #tpu.memory_space<vmem>>, vector<256x256xbf16>
    %cst_9 = arith.constant 0.000000e+00 : f32
    %14 = vector.broadcast %cst_9 : f32 to vector<4x256xf32>
    %15 = vector.extract_strided_slice %10 {offsets = [0, 0, 0], sizes = [2, 2, 32], strides = [1, 1, 1]} : vector<2x2x256xf32> to vector<2x2x32xf32>
    %16 = vector.extract_strided_slice %11 {offsets = [0, 0, 0], sizes = [2, 2, 32], strides = [1, 1, 1]} : vector<2x2x256xf32> to vector<2x2x32xf32>
    %17 = vector.extract_strided_slice %12 {offsets = [0, 0, 0], sizes = [2, 2, 32], strides = [1, 1, 1]} : vector<2x2x256xf32> to vector<2x2x32xf32>
    "tpu.trace_start"() <{level = 10 : i32, message = "bsd,btd->bst"}> : () -> ()
    %cst_10 = arith.constant dense<0.000000e+00> : vector<2x2x2xf32>
    %18 = tpu.matmul %15, %16, %cst_10 {dimension_numbers = #tpu.dot_dimension_numbers<[2], [2], [1], [1], [0, 0, 0, 1, 1, 1], [0], [0]>} : vector<2x2x32xf32>, vector<2x2x32xf32>, vector<2x2x2xf32> -> vector<2x2x2xf32>
    "tpu.trace_stop"() : () -> ()
    %cst_11 = arith.constant dense<0xFF800000> : vector<2x2xf32>
    %19 = vector.multi_reduction <maximumf>, %18, %cst_11 [2] : vector<2x2x2xf32> to vector<2x2xf32>
    %20 = vector.shape_cast %19 : vector<2x2xf32> to vector<2x2x1xf32>
    %21 = vector.broadcast %20 : vector<2x2x1xf32> to vector<2x2x2xf32>
    %22 = arith.subf %18, %21 : vector<2x2x2xf32>
    %23 = math.exp %22 : vector<2x2x2xf32>
    %cst_12 = arith.constant dense<0.000000e+00> : vector<2x2xf32>
    %24 = vector.multi_reduction <add>, %23, %cst_12 [2] : vector<2x2x2xf32> to vector<2x2xf32>
    %25 = vector.shape_cast %24 : vector<2x2xf32> to vector<2x2x1xf32>
    %26 = tpu.reciprocal %25 {approx = true} : vector<2x2x1xf32> -> vector<2x2x1xf32>
    %27 = vector.broadcast %26 : vector<2x2x1xf32> to vector<2x2x2xf32>
    %28 = arith.mulf %23, %27 : vector<2x2x2xf32>
    "tpu.trace_start"() <{level = 10 : i32, message = "bst,btd->bsd"}> : () -> ()
    %cst_13 = arith.constant dense<0.000000e+00> : vector<2x2x32xf32>
    %29 = tpu.matmul %28, %17, %cst_13 {dimension_numbers = #tpu.dot_dimension_numbers<[2], [1], [1], [2], [0, 0, 0, 1, 1, 2], [0], [0]>} : vector<2x2x2xf32>, vector<2x2x32xf32>, vector<2x2x32xf32> -> vector<2x2x32xf32>
    "tpu.trace_stop"() : () -> ()
    %30 = vector.shape_cast %29 : vector<2x2x32xf32> to vector<4x32xf32>
    %31 = arith.truncf %30 : vector<4x32xf32> to vector<4x32xbf16>
    %32 = vector.extract_strided_slice %13 {offsets = [0, 0], sizes = [32, 256], strides = [1, 1]} : vector<256x256xbf16> to vector<32x256xbf16>
    %cst_14 = arith.constant dense<0.000000e+00> : vector<4x256xf32>
    %33 = tpu.matmul %31, %32, %cst_14 {dimension_numbers = #tpu.dot_dimension_numbers<[1], [0], [0], [1], [0, 0, 1, 1], [], []>} : vector<4x32xbf16>, vector<32x256xbf16>, vector<4x256xf32> -> vector<4x256xf32>
    %34 = arith.addf %14, %33 : vector<4x256xf32>
    %35 = vector.extract_strided_slice %10 {offsets = [0, 0, 32], sizes = [2, 2, 32], strides = [1, 1, 1]} : vector<2x2x256xf32> to vector<2x2x32xf32>
    %36 = vector.extract_strided_slice %11 {offsets = [0, 0, 32], sizes = [2, 2, 32], strides = [1, 1, 1]} : vector<2x2x256xf32> to vector<2x2x32xf32>
    %37 = vector.extract_strided_slice %12 {offsets = [0, 0, 32], sizes = [2, 2, 32], strides = [1, 1, 1]} : vector<2x2x256xf32> to vector<2x2x32xf32>
    "tpu.trace_start"() <{level = 10 : i32, message = "bsd,btd->bst"}> : () -> ()
    %cst_15 = arith.constant dense<0.000000e+00> : vector<2x2x2xf32>
    %38 = tpu.matmul %35, %36, %cst_15 {dimension_numbers = #tpu.dot_dimension_numbers<[2], [2], [1], [1], [0, 0, 0, 1, 1, 1], [0], [0]>} : vector<2x2x32xf32>, vector<2x2x32xf32>, vector<2x2x2xf32> -> vector<2x2x2xf32>
    "tpu.trace_stop"() : () -> ()
    %cst_16 = arith.constant dense<0xFF800000> : vector<2x2xf32>
    %39 = vector.multi_reduction <maximumf>, %38, %cst_16 [2] : vector<2x2x2xf32> to vector<2x2xf32>
    %40 = vector.shape_cast %39 : vector<2x2xf32> to vector<2x2x1xf32>
    %41 = vector.broadcast %40 : vector<2x2x1xf32> to vector<2x2x2xf32>
    %42 = arith.subf %38, %41 : vector<2x2x2xf32>
    %43 = math.exp %42 : vector<2x2x2xf32>
    %cst_17 = arith.constant dense<0.000000e+00> : vector<2x2xf32>
    %44 = vector.multi_reduction <add>, %43, %cst_17 [2] : vector<2x2x2xf32> to vector<2x2xf32>
    %45 = vector.shape_cast %44 : vector<2x2xf32> to vector<2x2x1xf32>
    %46 = tpu.reciprocal %45 {approx = true} : vector<2x2x1xf32> -> vector<2x2x1xf32>
    %47 = vector.broadcast %46 : vector<2x2x1xf32> to vector<2x2x2xf32>
    %48 = arith.mulf %43, %47 : vector<2x2x2xf32>
    "tpu.trace_start"() <{level = 10 : i32, message = "bst,btd->bsd"}> : () -> ()
    %cst_18 = arith.constant dense<0.000000e+00> : vector<2x2x32xf32>
    %49 = tpu.matmul %48, %37, %cst_18 {dimension_numbers = #tpu.dot_dimension_numbers<[2], [1], [1], [2], [0, 0, 0, 1, 1, 2], [0], [0]>} : vector<2x2x2xf32>, vector<2x2x32xf32>, vector<2x2x32xf32> -> vector<2x2x32xf32>
    "tpu.trace_stop"() : () -> ()
    %50 = vector.shape_cast %49 : vector<2x2x32xf32> to vector<4x32xf32>
    %51 = arith.truncf %50 : vector<4x32xf32> to vector<4x32xbf16>
    %52 = vector.extract_strided_slice %13 {offsets = [32, 0], sizes = [32, 256], strides = [1, 1]} : vector<256x256xbf16> to vector<32x256xbf16>
    %cst_19 = arith.constant dense<0.000000e+00> : vector<4x256xf32>
    %53 = tpu.matmul %51, %52, %cst_19 {dimension_numbers = #tpu.dot_dimension_numbers<[1], [0], [0], [1], [0, 0, 1, 1], [], []>} : vector<4x32xbf16>, vector<32x256xbf16>, vector<4x256xf32> -> vector<4x256xf32>
    %54 = arith.addf %34, %53 : vector<4x256xf32>
    %55 = vector.extract_strided_slice %10 {offsets = [0, 0, 64], sizes = [2, 2, 32], strides = [1, 1, 1]} : vector<2x2x256xf32> to vector<2x2x32xf32>
    %56 = vector.extract_strided_slice %11 {offsets = [0, 0, 64], sizes = [2, 2, 32], strides = [1, 1, 1]} : vector<2x2x256xf32> to vector<2x2x32xf32>
    %57 = vector.extract_strided_slice %12 {offsets = [0, 0, 64], sizes = [2, 2, 32], strides = [1, 1, 1]} : vector<2x2x256xf32> to vector<2x2x32xf32>
    "tpu.trace_start"() <{level = 10 : i32, message = "bsd,btd->bst"}> : () -> ()
    %cst_20 = arith.constant dense<0.000000e+00> : vector<2x2x2xf32>
    %58 = tpu.matmul %55, %56, %cst_20 {dimension_numbers = #tpu.dot_dimension_numbers<[2], [2], [1], [1], [0, 0, 0, 1, 1, 1], [0], [0]>} : vector<2x2x32xf32>, vector<2x2x32xf32>, vector<2x2x2xf32> -> vector<2x2x2xf32>
    "tpu.trace_stop"() : () -> ()
    %cst_21 = arith.constant dense<0xFF800000> : vector<2x2xf32>
    %59 = vector.multi_reduction <maximumf>, %58, %cst_21 [2] : vector<2x2x2xf32> to vector<2x2xf32>
    %60 = vector.shape_cast %59 : vector<2x2xf32> to vector<2x2x1xf32>
    %61 = vector.broadcast %60 : vector<2x2x1xf32> to vector<2x2x2xf32>
    %62 = arith.subf %58, %61 : vector<2x2x2xf32>
    %63 = math.exp %62 : vector<2x2x2xf32>
    %cst_22 = arith.constant dense<0.000000e+00> : vector<2x2xf32>
    %64 = vector.multi_reduction <add>, %63, %cst_22 [2] : vector<2x2x2xf32> to vector<2x2xf32>
    %65 = vector.shape_cast %64 : vector<2x2xf32> to vector<2x2x1xf32>
    %66 = tpu.reciprocal %65 {approx = true} : vector<2x2x1xf32> -> vector<2x2x1xf32>
    %67 = vector.broadcast %66 : vector<2x2x1xf32> to vector<2x2x2xf32>
    %68 = arith.mulf %63, %67 : vector<2x2x2xf32>
    "tpu.trace_start"() <{level = 10 : i32, message = "bst,btd->bsd"}> : () -> ()
    %cst_23 = arith.constant dense<0.000000e+00> : vector<2x2x32xf32>
    %69 = tpu.matmul %68, %57, %cst_23 {dimension_numbers = #tpu.dot_dimension_numbers<[2], [1], [1], [2], [0, 0, 0, 1, 1, 2], [0], [0]>} : vector<2x2x2xf32>, vector<2x2x32xf32>, vector<2x2x32xf32> -> vector<2x2x32xf32>
    "tpu.trace_stop"() : () -> ()
    %70 = vector.shape_cast %69 : vector<2x2x32xf32> to vector<4x32xf32>
    %71 = arith.truncf %70 : vector<4x32xf32> to vector<4x32xbf16>
    %72 = vector.extract_strided_slice %13 {offsets = [64, 0], sizes = [32, 256], strides = [1, 1]} : vector<256x256xbf16> to vector<32x256xbf16>
    %cst_24 = arith.constant dense<0.000000e+00> : vector<4x256xf32>
    %73 = tpu.matmul %71, %72, %cst_24 {dimension_numbers = #tpu.dot_dimension_numbers<[1], [0], [0], [1], [0, 0, 1, 1], [], []>} : vector<4x32xbf16>, vector<32x256xbf16>, vector<4x256xf32> -> vector<4x256xf32>
    %74 = arith.addf %54, %73 : vector<4x256xf32>
    %75 = vector.extract_strided_slice %10 {offsets = [0, 0, 96], sizes = [2, 2, 32], strides = [1, 1, 1]} : vector<2x2x256xf32> to vector<2x2x32xf32>
    %76 = vector.extract_strided_slice %11 {offsets = [0, 0, 96], sizes = [2, 2, 32], strides = [1, 1, 1]} : vector<2x2x256xf32> to vector<2x2x32xf32>
    %77 = vector.extract_strided_slice %12 {offsets = [0, 0, 96], sizes = [2, 2, 32], strides = [1, 1, 1]} : vector<2x2x256xf32> to vector<2x2x32xf32>
    "tpu.trace_start"() <{level = 10 : i32, message = "bsd,btd->bst"}> : () -> ()
    %cst_25 = arith.constant dense<0.000000e+00> : vector<2x2x2xf32>
    %78 = tpu.matmul %75, %76, %cst_25 {dimension_numbers = #tpu.dot_dimension_numbers<[2], [2], [1], [1], [0, 0, 0, 1, 1, 1], [0], [0]>} : vector<2x2x32xf32>, vector<2x2x32xf32>, vector<2x2x2xf32> -> vector<2x2x2xf32>
    "tpu.trace_stop"() : () -> ()
    %cst_26 = arith.constant dense<0xFF800000> : vector<2x2xf32>
    %79 = vector.multi_reduction <maximumf>, %78, %cst_26 [2] : vector<2x2x2xf32> to vector<2x2xf32>
    %80 = vector.shape_cast %79 : vector<2x2xf32> to vector<2x2x1xf32>
    %81 = vector.broadcast %80 : vector<2x2x1xf32> to vector<2x2x2xf32>
    %82 = arith.subf %78, %81 : vector<2x2x2xf32>
    %83 = math.exp %82 : vector<2x2x2xf32>
    %cst_27 = arith.constant dense<0.000000e+00> : vector<2x2xf32>
    %84 = vector.multi_reduction <add>, %83, %cst_27 [2] : vector<2x2x2xf32> to vector<2x2xf32>
    %85 = vector.shape_cast %84 : vector<2x2xf32> to vector<2x2x1xf32>
    %86 = tpu.reciprocal %85 {approx = true} : vector<2x2x1xf32> -> vector<2x2x1xf32>
    %87 = vector.broadcast %86 : vector<2x2x1xf32> to vector<2x2x2xf32>
    %88 = arith.mulf %83, %87 : vector<2x2x2xf32>
    "tpu.trace_start"() <{level = 10 : i32, message = "bst,btd->bsd"}> : () -> ()
    %cst_28 = arith.constant dense<0.000000e+00> : vector<2x2x32xf32>
    %89 = tpu.matmul %88, %77, %cst_28 {dimension_numbers = #tpu.dot_dimension_numbers<[2], [1], [1], [2], [0, 0, 0, 1, 1, 2], [0], [0]>} : vector<2x2x2xf32>, vector<2x2x32xf32>, vector<2x2x32xf32> -> vector<2x2x32xf32>
    "tpu.trace_stop"() : () -> ()
    %90 = vector.shape_cast %89 : vector<2x2x32xf32> to vector<4x32xf32>
    %91 = arith.truncf %90 : vector<4x32xf32> to vector<4x32xbf16>
    %92 = vector.extract_strided_slice %13 {offsets = [96, 0], sizes = [32, 256], strides = [1, 1]} : vector<256x256xbf16> to vector<32x256xbf16>
    %cst_29 = arith.constant dense<0.000000e+00> : vector<4x256xf32>
    %93 = tpu.matmul %91, %92, %cst_29 {dimension_numbers = #tpu.dot_dimension_numbers<[1], [0], [0], [1], [0, 0, 1, 1], [], []>} : vector<4x32xbf16>, vector<32x256xbf16>, vector<4x256xf32> -> vector<4x256xf32>
    %94 = arith.addf %74, %93 : vector<4x256xf32>
    %95 = vector.extract_strided_slice %10 {offsets = [0, 0, 128], sizes = [2, 2, 32], strides = [1, 1, 1]} : vector<2x2x256xf32> to vector<2x2x32xf32>
    %96 = vector.extract_strided_slice %11 {offsets = [0, 0, 128], sizes = [2, 2, 32], strides = [1, 1, 1]} : vector<2x2x256xf32> to vector<2x2x32xf32>
    %97 = vector.extract_strided_slice %12 {offsets = [0, 0, 128], sizes = [2, 2, 32], strides = [1, 1, 1]} : vector<2x2x256xf32> to vector<2x2x32xf32>
    "tpu.trace_start"() <{level = 10 : i32, message = "bsd,btd->bst"}> : () -> ()
    %cst_30 = arith.constant dense<0.000000e+00> : vector<2x2x2xf32>
    %98 = tpu.matmul %95, %96, %cst_30 {dimension_numbers = #tpu.dot_dimension_numbers<[2], [2], [1], [1], [0, 0, 0, 1, 1, 1], [0], [0]>} : vector<2x2x32xf32>, vector<2x2x32xf32>, vector<2x2x2xf32> -> vector<2x2x2xf32>
    "tpu.trace_stop"() : () -> ()
    %cst_31 = arith.constant dense<0xFF800000> : vector<2x2xf32>
    %99 = vector.multi_reduction <maximumf>, %98, %cst_31 [2] : vector<2x2x2xf32> to vector<2x2xf32>
    %100 = vector.shape_cast %99 : vector<2x2xf32> to vector<2x2x1xf32>
    %101 = vector.broadcast %100 : vector<2x2x1xf32> to vector<2x2x2xf32>
    %102 = arith.subf %98, %101 : vector<2x2x2xf32>
    %103 = math.exp %102 : vector<2x2x2xf32>
    %cst_32 = arith.constant dense<0.000000e+00> : vector<2x2xf32>
    %104 = vector.multi_reduction <add>, %103, %cst_32 [2] : vector<2x2x2xf32> to vector<2x2xf32>
    %105 = vector.shape_cast %104 : vector<2x2xf32> to vector<2x2x1xf32>
    %106 = tpu.reciprocal %105 {approx = true} : vector<2x2x1xf32> -> vector<2x2x1xf32>
    %107 = vector.broadcast %106 : vector<2x2x1xf32> to vector<2x2x2xf32>
    %108 = arith.mulf %103, %107 : vector<2x2x2xf32>
    "tpu.trace_start"() <{level = 10 : i32, message = "bst,btd->bsd"}> : () -> ()
    %cst_33 = arith.constant dense<0.000000e+00> : vector<2x2x32xf32>
    %109 = tpu.matmul %108, %97, %cst_33 {dimension_numbers = #tpu.dot_dimension_numbers<[2], [1], [1], [2], [0, 0, 0, 1, 1, 2], [0], [0]>} : vector<2x2x2xf32>, vector<2x2x32xf32>, vector<2x2x32xf32> -> vector<2x2x32xf32>
    "tpu.trace_stop"() : () -> ()
    %110 = vector.shape_cast %109 : vector<2x2x32xf32> to vector<4x32xf32>
    %111 = arith.truncf %110 : vector<4x32xf32> to vector<4x32xbf16>
    %112 = vector.extract_strided_slice %13 {offsets = [128, 0], sizes = [32, 256], strides = [1, 1]} : vector<256x256xbf16> to vector<32x256xbf16>
    %cst_34 = arith.constant dense<0.000000e+00> : vector<4x256xf32>
    %113 = tpu.matmul %111, %112, %cst_34 {dimension_numbers = #tpu.dot_dimension_numbers<[1], [0], [0], [1], [0, 0, 1, 1], [], []>} : vector<4x32xbf16>, vector<32x256xbf16>, vector<4x256xf32> -> vector<4x256xf32>
    %114 = arith.addf %94, %113 : vector<4x256xf32>
    %115 = vector.extract_strided_slice %10 {offsets = [0, 0, 160], sizes = [2, 2, 32], strides = [1, 1, 1]} : vector<2x2x256xf32> to vector<2x2x32xf32>
    %116 = vector.extract_strided_slice %11 {offsets = [0, 0, 160], sizes = [2, 2, 32], strides = [1, 1, 1]} : vector<2x2x256xf32> to vector<2x2x32xf32>
    %117 = vector.extract_strided_slice %12 {offsets = [0, 0, 160], sizes = [2, 2, 32], strides = [1, 1, 1]} : vector<2x2x256xf32> to vector<2x2x32xf32>
    "tpu.trace_start"() <{level = 10 : i32, message = "bsd,btd->bst"}> : () -> ()
    %cst_35 = arith.constant dense<0.000000e+00> : vector<2x2x2xf32>
    %118 = tpu.matmul %115, %116, %cst_35 {dimension_numbers = #tpu.dot_dimension_numbers<[2], [2], [1], [1], [0, 0, 0, 1, 1, 1], [0], [0]>} : vector<2x2x32xf32>, vector<2x2x32xf32>, vector<2x2x2xf32> -> vector<2x2x2xf32>
    "tpu.trace_stop"() : () -> ()
    %cst_36 = arith.constant dense<0xFF800000> : vector<2x2xf32>
    %119 = vector.multi_reduction <maximumf>, %118, %cst_36 [2] : vector<2x2x2xf32> to vector<2x2xf32>
    %120 = vector.shape_cast %119 : vector<2x2xf32> to vector<2x2x1xf32>
    %121 = vector.broadcast %120 : vector<2x2x1xf32> to vector<2x2x2xf32>
    %122 = arith.subf %118, %121 : vector<2x2x2xf32>
    %123 = math.exp %122 : vector<2x2x2xf32>
    %cst_37 = arith.constant dense<0.000000e+00> : vector<2x2xf32>
    %124 = vector.multi_reduction <add>, %123, %cst_37 [2] : vector<2x2x2xf32> to vector<2x2xf32>
    %125 = vector.shape_cast %124 : vector<2x2xf32> to vector<2x2x1xf32>
    %126 = tpu.reciprocal %125 {approx = true} : vector<2x2x1xf32> -> vector<2x2x1xf32>
    %127 = vector.broadcast %126 : vector<2x2x1xf32> to vector<2x2x2xf32>
    %128 = arith.mulf %123, %127 : vector<2x2x2xf32>
    "tpu.trace_start"() <{level = 10 : i32, message = "bst,btd->bsd"}> : () -> ()
    %cst_38 = arith.constant dense<0.000000e+00> : vector<2x2x32xf32>
    %129 = tpu.matmul %128, %117, %cst_38 {dimension_numbers = #tpu.dot_dimension_numbers<[2], [1], [1], [2], [0, 0, 0, 1, 1, 2], [0], [0]>} : vector<2x2x2xf32>, vector<2x2x32xf32>, vector<2x2x32xf32> -> vector<2x2x32xf32>
    "tpu.trace_stop"() : () -> ()
    %130 = vector.shape_cast %129 : vector<2x2x32xf32> to vector<4x32xf32>
    %131 = arith.truncf %130 : vector<4x32xf32> to vector<4x32xbf16>
    %132 = vector.extract_strided_slice %13 {offsets = [160, 0], sizes = [32, 256], strides = [1, 1]} : vector<256x256xbf16> to vector<32x256xbf16>
    %cst_39 = arith.constant dense<0.000000e+00> : vector<4x256xf32>
    %133 = tpu.matmul %131, %132, %cst_39 {dimension_numbers = #tpu.dot_dimension_numbers<[1], [0], [0], [1], [0, 0, 1, 1], [], []>} : vector<4x32xbf16>, vector<32x256xbf16>, vector<4x256xf32> -> vector<4x256xf32>
    %134 = arith.addf %114, %133 : vector<4x256xf32>
    %135 = vector.extract_strided_slice %10 {offsets = [0, 0, 192], sizes = [2, 2, 32], strides = [1, 1, 1]} : vector<2x2x256xf32> to vector<2x2x32xf32>
    %136 = vector.extract_strided_slice %11 {offsets = [0, 0, 192], sizes = [2, 2, 32], strides = [1, 1, 1]} : vector<2x2x256xf32> to vector<2x2x32xf32>
    %137 = vector.extract_strided_slice %12 {offsets = [0, 0, 192], sizes = [2, 2, 32], strides = [1, 1, 1]} : vector<2x2x256xf32> to vector<2x2x32xf32>
    "tpu.trace_start"() <{level = 10 : i32, message = "bsd,btd->bst"}> : () -> ()
    %cst_40 = arith.constant dense<0.000000e+00> : vector<2x2x2xf32>
    %138 = tpu.matmul %135, %136, %cst_40 {dimension_numbers = #tpu.dot_dimension_numbers<[2], [2], [1], [1], [0, 0, 0, 1, 1, 1], [0], [0]>} : vector<2x2x32xf32>, vector<2x2x32xf32>, vector<2x2x2xf32> -> vector<2x2x2xf32>
    "tpu.trace_stop"() : () -> ()
    %cst_41 = arith.constant dense<0xFF800000> : vector<2x2xf32>
    %139 = vector.multi_reduction <maximumf>, %138, %cst_41 [2] : vector<2x2x2xf32> to vector<2x2xf32>
    %140 = vector.shape_cast %139 : vector<2x2xf32> to vector<2x2x1xf32>
    %141 = vector.broadcast %140 : vector<2x2x1xf32> to vector<2x2x2xf32>
    %142 = arith.subf %138, %141 : vector<2x2x2xf32>
    %143 = math.exp %142 : vector<2x2x2xf32>
    %cst_42 = arith.constant dense<0.000000e+00> : vector<2x2xf32>
    %144 = vector.multi_reduction <add>, %143, %cst_42 [2] : vector<2x2x2xf32> to vector<2x2xf32>
    %145 = vector.shape_cast %144 : vector<2x2xf32> to vector<2x2x1xf32>
    %146 = tpu.reciprocal %145 {approx = true} : vector<2x2x1xf32> -> vector<2x2x1xf32>
    %147 = vector.broadcast %146 : vector<2x2x1xf32> to vector<2x2x2xf32>
    %148 = arith.mulf %143, %147 : vector<2x2x2xf32>
    "tpu.trace_start"() <{level = 10 : i32, message = "bst,btd->bsd"}> : () -> ()
    %cst_43 = arith.constant dense<0.000000e+00> : vector<2x2x32xf32>
    %149 = tpu.matmul %148, %137, %cst_43 {dimension_numbers = #tpu.dot_dimension_numbers<[2], [1], [1], [2], [0, 0, 0, 1, 1, 2], [0], [0]>} : vector<2x2x2xf32>, vector<2x2x32xf32>, vector<2x2x32xf32> -> vector<2x2x32xf32>
    "tpu.trace_stop"() : () -> ()
    %150 = vector.shape_cast %149 : vector<2x2x32xf32> to vector<4x32xf32>
    %151 = arith.truncf %150 : vector<4x32xf32> to vector<4x32xbf16>
    %152 = vector.extract_strided_slice %13 {offsets = [192, 0], sizes = [32, 256], strides = [1, 1]} : vector<256x256xbf16> to vector<32x256xbf16>
    %cst_44 = arith.constant dense<0.000000e+00> : vector<4x256xf32>
    %153 = tpu.matmul %151, %152, %cst_44 {dimension_numbers = #tpu.dot_dimension_numbers<[1], [0], [0], [1], [0, 0, 1, 1], [], []>} : vector<4x32xbf16>, vector<32x256xbf16>, vector<4x256xf32> -> vector<4x256xf32>
    %154 = arith.addf %134, %153 : vector<4x256xf32>
    %155 = vector.extract_strided_slice %10 {offsets = [0, 0, 224], sizes = [2, 2, 32], strides = [1, 1, 1]} : vector<2x2x256xf32> to vector<2x2x32xf32>
    %156 = vector.extract_strided_slice %11 {offsets = [0, 0, 224], sizes = [2, 2, 32], strides = [1, 1, 1]} : vector<2x2x256xf32> to vector<2x2x32xf32>
    %157 = vector.extract_strided_slice %12 {offsets = [0, 0, 224], sizes = [2, 2, 32], strides = [1, 1, 1]} : vector<2x2x256xf32> to vector<2x2x32xf32>
    "tpu.trace_start"() <{level = 10 : i32, message = "bsd,btd->bst"}> : () -> ()
    %cst_45 = arith.constant dense<0.000000e+00> : vector<2x2x2xf32>
    %158 = tpu.matmul %155, %156, %cst_45 {dimension_numbers = #tpu.dot_dimension_numbers<[2], [2], [1], [1], [0, 0, 0, 1, 1, 1], [0], [0]>} : vector<2x2x32xf32>, vector<2x2x32xf32>, vector<2x2x2xf32> -> vector<2x2x2xf32>
    "tpu.trace_stop"() : () -> ()
    %cst_46 = arith.constant dense<0xFF800000> : vector<2x2xf32>
    %159 = vector.multi_reduction <maximumf>, %158, %cst_46 [2] : vector<2x2x2xf32> to vector<2x2xf32>
    %160 = vector.shape_cast %159 : vector<2x2xf32> to vector<2x2x1xf32>
    %161 = vector.broadcast %160 : vector<2x2x1xf32> to vector<2x2x2xf32>
    %162 = arith.subf %158, %161 : vector<2x2x2xf32>
    %163 = math.exp %162 : vector<2x2x2xf32>
    %cst_47 = arith.constant dense<0.000000e+00> : vector<2x2xf32>
    %164 = vector.multi_reduction <add>, %163, %cst_47 [2] : vector<2x2x2xf32> to vector<2x2xf32>
    %165 = vector.shape_cast %164 : vector<2x2xf32> to vector<2x2x1xf32>
    %166 = tpu.reciprocal %165 {approx = true} : vector<2x2x1xf32> -> vector<2x2x1xf32>
    %167 = vector.broadcast %166 : vector<2x2x1xf32> to vector<2x2x2xf32>
    %168 = arith.mulf %163, %167 : vector<2x2x2xf32>
    "tpu.trace_start"() <{level = 10 : i32, message = "bst,btd->bsd"}> : () -> ()
    %cst_48 = arith.constant dense<0.000000e+00> : vector<2x2x32xf32>
    %169 = tpu.matmul %168, %157, %cst_48 {dimension_numbers = #tpu.dot_dimension_numbers<[2], [1], [1], [2], [0, 0, 0, 1, 1, 2], [0], [0]>} : vector<2x2x2xf32>, vector<2x2x32xf32>, vector<2x2x32xf32> -> vector<2x2x32xf32>
    "tpu.trace_stop"() : () -> ()
    %170 = vector.shape_cast %169 : vector<2x2x32xf32> to vector<4x32xf32>
    %171 = arith.truncf %170 : vector<4x32xf32> to vector<4x32xbf16>
    %172 = vector.extract_strided_slice %13 {offsets = [224, 0], sizes = [32, 256], strides = [1, 1]} : vector<256x256xbf16> to vector<32x256xbf16>
    %cst_49 = arith.constant dense<0.000000e+00> : vector<4x256xf32>
    %173 = tpu.matmul %171, %172, %cst_49 {dimension_numbers = #tpu.dot_dimension_numbers<[1], [0], [0], [1], [0, 0, 1, 1], [], []>} : vector<4x32xbf16>, vector<32x256xbf16>, vector<4x256xf32> -> vector<4x256xf32>
    %174 = arith.addf %154, %173 : vector<4x256xf32>
    %c0_50 = arith.constant 0 : index
    %c0_51 = arith.constant 0 : index
    %175 = vector.load %arg5[%c0_50, %c0_51] : memref<1x256xf32, #tpu.memory_space<vmem>>, vector<1x256xf32>
    %176 = vector.broadcast %175 : vector<1x256xf32> to vector<4x256xf32>
    %177 = arith.addf %174, %176 : vector<4x256xf32>
    %178 = vector.shape_cast %177 : vector<4x256xf32> to vector<2x2x256xf32>
    %179 = tpu.transpose %178, [1, 0, 2] : vector<2x2x256xf32> -> vector<2x2x256xf32>
    %180 = vector.shape_cast %179 : vector<2x2x256xf32> to vector<4x256xf32>
    %181 = arith.truncf %180 : vector<4x256xf32> to vector<4x256xbf16>
    %c0_52 = arith.constant 0 : index
    %c0_53 = arith.constant 0 : index
    %182 = vector.load %arg6[%c0_52, %c0_53] : memref<256x1024xbf16, #tpu.memory_space<vmem>>, vector<256x1024xbf16>
    %cst_54 = arith.constant dense<0.000000e+00> : vector<4x1024xf32>
    %183 = tpu.matmul %181, %182, %cst_54 {dimension_numbers = #tpu.dot_dimension_numbers<[1], [0], [0], [1], [0, 0, 1, 1], [], []>} : vector<4x256xbf16>, vector<256x1024xbf16>, vector<4x1024xf32> -> vector<4x1024xf32>
    %c0_55 = arith.constant 0 : index
    %c0_56 = arith.constant 0 : index
    %184 = vector.load %arg8[%c0_55, %c0_56] : memref<1x1024xf32, #tpu.memory_space<vmem>>, vector<1x1024xf32>
    %185 = vector.broadcast %184 : vector<1x1024xf32> to vector<4x1024xf32>
    %186 = arith.addf %183, %185 : vector<4x1024xf32>
    %187 = vector.shape_cast %186 : vector<4x1024xf32> to vector<2x2x1024xf32>
    %c0_57 = arith.constant 0 : index
    %c0_58 = arith.constant 0 : index
    %c0_59 = arith.constant 0 : index
    %188 = vector.load %arg17[%c0_57, %c0_58, %c0_59] : memref<2x2x1024xf32, #tpu.memory_space<vmem>>, vector<2x2x1024xf32>
    tpu.vector_store %arg17[%c0_57, %c0_58, %c0_59], %187 {strides = array<i32>} : memref<2x2x1024xf32, #tpu.memory_space<vmem>>, vector<2x2x1024xf32>,
    %c0_60 = arith.constant 0 : index
    %c0_61 = arith.constant 0 : index
    %189 = vector.load %arg7[%c0_60, %c0_61] : memref<256x1024xbf16, #tpu.memory_space<vmem>>, vector<256x1024xbf16>
    %c0_62 = arith.constant 0 : index
    %c0_63 = arith.constant 0 : index
    %190 = vector.load %arg9[%c0_62, %c0_63] : memref<256x1024xbf16, #tpu.memory_space<vmem>>, vector<256x1024xbf16>
    %c0_64 = arith.constant 0 : index
    %c0_65 = arith.constant 0 : index
    %191 = vector.load %arg10[%c0_64, %c0_65] : memref<256x1024xbf16, #tpu.memory_space<vmem>>, vector<256x1024xbf16>
    %c0_66 = arith.constant 0 : index
    %c0_67 = arith.constant 0 : index
    %192 = vector.load %arg11[%c0_66, %c0_67] : memref<1x1024xf32, #tpu.memory_space<vmem>>, vector<1x1024xf32>
    %cst_68 = arith.constant 0.000000e+00 : f32
    %193 = vector.broadcast %cst_68 : f32 to vector<2x256xf32>
    %c0_i32 = arith.constant 0 : i32
    %194 = arith.index_cast %c0_i32 : i32 to index
    %c0_69 = arith.constant 0 : index
    %c0_70 = arith.constant 0 : index
    %195 = vector.load %arg17[%194, %c0_69, %c0_70] : memref<2x2x1024xf32, #tpu.memory_space<vmem>>, vector<1x2x1024xf32>
    %196 = vector.shape_cast %195 : vector<1x2x1024xf32> to vector<2x1024xf32>
    %197 = arith.truncf %193 : vector<2x256xf32> to vector<2x256xbf16>
    %cst_71 = arith.constant dense<0.000000e+00> : vector<2x1024xf32>
    %198 = tpu.matmul %197, %189, %cst_71 {dimension_numbers = #tpu.dot_dimension_numbers<[1], [0], [0], [1], [0, 0, 1, 1], [], []>} : vector<2x256xbf16>, vector<256x1024xbf16>, vector<2x1024xf32> -> vector<2x1024xf32>
    %199 = arith.addf %196, %198 : vector<2x1024xf32>
    %200 = vector.extract_strided_slice %199 {offsets = [0, 0], sizes = [2, 256], strides = [1, 1]} : vector<2x1024xf32> to vector<2x256xf32>
    %201 = arith.negf %200 : vector<2x256xf32>
    %202 = math.exp %201 : vector<2x256xf32>
    %cst_72 = arith.constant 1.000000e+00 : f32
    %203 = vector.broadcast %cst_72 : f32 to vector<2x256xf32>
    %204 = arith.addf %203, %202 : vector<2x256xf32>
    %205 = arith.divf %203, %204 : vector<2x256xf32>
    %206 = vector.extract_strided_slice %199 {offsets = [0, 256], sizes = [2, 256], strides = [1, 1]} : vector<2x1024xf32> to vector<2x256xf32>
    %207 = arith.negf %206 : vector<2x256xf32>
    %208 = math.exp %207 : vector<2x256xf32>
    %cst_73 = arith.constant 1.000000e+00 : f32
    %209 = vector.broadcast %cst_73 : f32 to vector<2x256xf32>
    %210 = arith.addf %209, %208 : vector<2x256xf32>
    %211 = arith.divf %209, %210 : vector<2x256xf32>
    %212 = vector.extract_strided_slice %199 {offsets = [0, 512], sizes = [2, 256], strides = [1, 1]} : vector<2x1024xf32> to vector<2x256xf32>
    %213 = math.tanh %212 : vector<2x256xf32>
    %214 = vector.extract_strided_slice %199 {offsets = [0, 768], sizes = [2, 256], strides = [1, 1]} : vector<2x1024xf32> to vector<2x256xf32>
    %215 = arith.negf %214 : vector<2x256xf32>
    %216 = math.exp %215 : vector<2x256xf32>
    %cst_74 = arith.constant 1.000000e+00 : f32
    %217 = vector.broadcast %cst_74 : f32 to vector<2x256xf32>
    %218 = arith.addf %217, %216 : vector<2x256xf32>
    %219 = arith.divf %217, %218 : vector<2x256xf32>
    %220 = arith.mulf %211, %193 : vector<2x256xf32>
    %221 = arith.mulf %205, %213 : vector<2x256xf32>
    %222 = arith.addf %220, %221 : vector<2x256xf32>
    %223 = math.tanh %222 : vector<2x256xf32>
    %224 = arith.mulf %219, %223 : vector<2x256xf32>
    %225 = arith.truncf %224 : vector<2x256xf32> to vector<2x256xbf16>
    %cst_75 = arith.constant dense<0.000000e+00> : vector<2x1024xf32>
    %226 = tpu.matmul %225, %190, %cst_75 {dimension_numbers = #tpu.dot_dimension_numbers<[1], [0], [0], [1], [0, 0, 1, 1], [], []>} : vector<2x256xbf16>, vector<256x1024xbf16>, vector<2x1024xf32> -> vector<2x1024xf32>
    %227 = arith.truncf %193 : vector<2x256xf32> to vector<2x256xbf16>
    %cst_76 = arith.constant dense<0.000000e+00> : vector<2x1024xf32>
    %228 = tpu.matmul %227, %191, %cst_76 {dimension_numbers = #tpu.dot_dimension_numbers<[1], [0], [0], [1], [0, 0, 1, 1], [], []>} : vector<2x256xbf16>, vector<256x1024xbf16>, vector<2x1024xf32> -> vector<2x1024xf32>
    %229 = arith.addf %226, %228 : vector<2x1024xf32>
    %230 = vector.broadcast %192 : vector<1x1024xf32> to vector<2x1024xf32>
    %231 = arith.addf %229, %230 : vector<2x1024xf32>
    %232 = vector.extract_strided_slice %231 {offsets = [0, 0], sizes = [2, 256], strides = [1, 1]} : vector<2x1024xf32> to vector<2x256xf32>
    %233 = arith.negf %232 : vector<2x256xf32>
    %234 = math.exp %233 : vector<2x256xf32>
    %cst_77 = arith.constant 1.000000e+00 : f32
    %235 = vector.broadcast %cst_77 : f32 to vector<2x256xf32>
    %236 = arith.addf %235, %234 : vector<2x256xf32>
    %237 = arith.divf %235, %236 : vector<2x256xf32>
    %238 = vector.extract_strided_slice %231 {offsets = [0, 256], sizes = [2, 256], strides = [1, 1]} : vector<2x1024xf32> to vector<2x256xf32>
    %239 = arith.negf %238 : vector<2x256xf32>
    %240 = math.exp %239 : vector<2x256xf32>
    %cst_78 = arith.constant 1.000000e+00 : f32
    %241 = vector.broadcast %cst_78 : f32 to vector<2x256xf32>
    %242 = arith.addf %241, %240 : vector<2x256xf32>
    %243 = arith.divf %241, %242 : vector<2x256xf32>
    %244 = vector.extract_strided_slice %231 {offsets = [0, 512], sizes = [2, 256], strides = [1, 1]} : vector<2x1024xf32> to vector<2x256xf32>
    %245 = math.tanh %244 : vector<2x256xf32>
    %246 = vector.extract_strided_slice %231 {offsets = [0, 768], sizes = [2, 256], strides = [1, 1]} : vector<2x1024xf32> to vector<2x256xf32>
    %247 = arith.negf %246 : vector<2x256xf32>
    %248 = math.exp %247 : vector<2x256xf32>
    %cst_79 = arith.constant 1.000000e+00 : f32
    %249 = vector.broadcast %cst_79 : f32 to vector<2x256xf32>
    %250 = arith.addf %249, %248 : vector<2x256xf32>
    %251 = arith.divf %249, %250 : vector<2x256xf32>
    %252 = arith.mulf %243, %193 : vector<2x256xf32>
    %253 = arith.mulf %237, %245 : vector<2x256xf32>
    %254 = arith.addf %252, %253 : vector<2x256xf32>
    %255 = math.tanh %254 : vector<2x256xf32>
    %256 = arith.mulf %251, %255 : vector<2x256xf32>
    %c1_i32 = arith.constant 1 : i32
    %257 = arith.index_cast %c1_i32 : i32 to index
    %c0_80 = arith.constant 0 : index
    %c0_81 = arith.constant 0 : index
    %258 = vector.load %arg17[%257, %c0_80, %c0_81] : memref<2x2x1024xf32, #tpu.memory_space<vmem>>, vector<1x2x1024xf32>
    %259 = vector.shape_cast %258 : vector<1x2x1024xf32> to vector<2x1024xf32>
    %260 = arith.truncf %224 : vector<2x256xf32> to vector<2x256xbf16>
    %cst_82 = arith.constant dense<0.000000e+00> : vector<2x1024xf32>
    %261 = tpu.matmul %260, %189, %cst_82 {dimension_numbers = #tpu.dot_dimension_numbers<[1], [0], [0], [1], [0, 0, 1, 1], [], []>} : vector<2x256xbf16>, vector<256x1024xbf16>, vector<2x1024xf32> -> vector<2x1024xf32>
    %262 = arith.addf %259, %261 : vector<2x1024xf32>
    %263 = vector.extract_strided_slice %262 {offsets = [0, 0], sizes = [2, 256], strides = [1, 1]} : vector<2x1024xf32> to vector<2x256xf32>
    %264 = arith.negf %263 : vector<2x256xf32>
    %265 = math.exp %264 : vector<2x256xf32>
    %cst_83 = arith.constant 1.000000e+00 : f32
    %266 = vector.broadcast %cst_83 : f32 to vector<2x256xf32>
    %267 = arith.addf %266, %265 : vector<2x256xf32>
    %268 = arith.divf %266, %267 : vector<2x256xf32>
    %269 = vector.extract_strided_slice %262 {offsets = [0, 256], sizes = [2, 256], strides = [1, 1]} : vector<2x1024xf32> to vector<2x256xf32>
    %270 = arith.negf %269 : vector<2x256xf32>
    %271 = math.exp %270 : vector<2x256xf32>
    %cst_84 = arith.constant 1.000000e+00 : f32
    %272 = vector.broadcast %cst_84 : f32 to vector<2x256xf32>
    %273 = arith.addf %272, %271 : vector<2x256xf32>
    %274 = arith.divf %272, %273 : vector<2x256xf32>
    %275 = vector.extract_strided_slice %262 {offsets = [0, 512], sizes = [2, 256], strides = [1, 1]} : vector<2x1024xf32> to vector<2x256xf32>
    %276 = math.tanh %275 : vector<2x256xf32>
    %277 = vector.extract_strided_slice %262 {offsets = [0, 768], sizes = [2, 256], strides = [1, 1]} : vector<2x1024xf32> to vector<2x256xf32>
    %278 = arith.negf %277 : vector<2x256xf32>
    %279 = math.exp %278 : vector<2x256xf32>
    %cst_85 = arith.constant 1.000000e+00 : f32
    %280 = vector.broadcast %cst_85 : f32 to vector<2x256xf32>
    %281 = arith.addf %280, %279 : vector<2x256xf32>
    %282 = arith.divf %280, %281 : vector<2x256xf32>
    %283 = arith.mulf %274, %222 : vector<2x256xf32>
    %284 = arith.mulf %268, %276 : vector<2x256xf32>
    %285 = arith.addf %283, %284 : vector<2x256xf32>
    %286 = math.tanh %285 : vector<2x256xf32>
    %287 = arith.mulf %282, %286 : vector<2x256xf32>
    %288 = arith.truncf %287 : vector<2x256xf32> to vector<2x256xbf16>
    %cst_86 = arith.constant dense<0.000000e+00> : vector<2x1024xf32>
    %289 = tpu.matmul %288, %190, %cst_86 {dimension_numbers = #tpu.dot_dimension_numbers<[1], [0], [0], [1], [0, 0, 1, 1], [], []>} : vector<2x256xbf16>, vector<256x1024xbf16>, vector<2x1024xf32> -> vector<2x1024xf32>
    %290 = arith.truncf %256 : vector<2x256xf32> to vector<2x256xbf16>
    %cst_87 = arith.constant dense<0.000000e+00> : vector<2x1024xf32>
    %291 = tpu.matmul %290, %191, %cst_87 {dimension_numbers = #tpu.dot_dimension_numbers<[1], [0], [0], [1], [0, 0, 1, 1], [], []>} : vector<2x256xbf16>, vector<256x1024xbf16>, vector<2x1024xf32> -> vector<2x1024xf32>
    %292 = arith.addf %289, %291 : vector<2x1024xf32>
    %293 = vector.broadcast %192 : vector<1x1024xf32> to vector<2x1024xf32>
    %294 = arith.addf %292, %293 : vector<2x1024xf32>
    %295 = vector.extract_strided_slice %294 {offsets = [0, 0], sizes = [2, 256], strides = [1, 1]} : vector<2x1024xf32> to vector<2x256xf32>
    %296 = arith.negf %295 : vector<2x256xf32>
    %297 = math.exp %296 : vector<2x256xf32>
    %cst_88 = arith.constant 1.000000e+00 : f32
    %298 = vector.broadcast %cst_88 : f32 to vector<2x256xf32>
    %299 = arith.addf %298, %297 : vector<2x256xf32>
    %300 = arith.divf %298, %299 : vector<2x256xf32>
    %301 = vector.extract_strided_slice %294 {offsets = [0, 256], sizes = [2, 256], strides = [1, 1]} : vector<2x1024xf32> to vector<2x256xf32>
    %302 = arith.negf %301 : vector<2x256xf32>
    %303 = math.exp %302 : vector<2x256xf32>
    %cst_89 = arith.constant 1.000000e+00 : f32
    %304 = vector.broadcast %cst_89 : f32 to vector<2x256xf32>
    %305 = arith.addf %304, %303 : vector<2x256xf32>
    %306 = arith.divf %304, %305 : vector<2x256xf32>
    %307 = vector.extract_strided_slice %294 {offsets = [0, 512], sizes = [2, 256], strides = [1, 1]} : vector<2x1024xf32> to vector<2x256xf32>
    %308 = math.tanh %307 : vector<2x256xf32>
    %309 = vector.extract_strided_slice %294 {offsets = [0, 768], sizes = [2, 256], strides = [1, 1]} : vector<2x1024xf32> to vector<2x256xf32>
    %310 = arith.negf %309 : vector<2x256xf32>
    %311 = math.exp %310 : vector<2x256xf32>
    %cst_90 = arith.constant 1.000000e+00 : f32
    %312 = vector.broadcast %cst_90 : f32 to vector<2x256xf32>
    %313 = arith.addf %312, %311 : vector<2x256xf32>
    %314 = arith.divf %312, %313 : vector<2x256xf32>
    %315 = arith.mulf %306, %254 : vector<2x256xf32>
    %316 = arith.mulf %300, %308 : vector<2x256xf32>
    %317 = arith.addf %315, %316 : vector<2x256xf32>
    %318 = math.tanh %317 : vector<2x256xf32>
    %319 = arith.mulf %314, %318 : vector<2x256xf32>
    %c2_i32 = arith.constant 2 : i32
    %320 = arith.truncf %319 : vector<2x256xf32> to vector<2x256xbf16>
    %c0_91 = arith.constant 0 : index
    %c0_92 = arith.constant 0 : index
    %321 = vector.load %arg12[%c0_91, %c0_92] : memref<256x128xbf16, #tpu.memory_space<vmem>>, vector<256x128xbf16>
    %cst_93 = arith.constant dense<0.000000e+00> : vector<2x128xf32>
    %322 = tpu.matmul %320, %321, %cst_93 {dimension_numbers = #tpu.dot_dimension_numbers<[1], [0], [0], [1], [0, 0, 1, 1], [], []>} : vector<2x256xbf16>, vector<256x128xbf16>, vector<2x128xf32> -> vector<2x128xf32>
    %c0_94 = arith.constant 0 : index
    %c0_95 = arith.constant 0 : index
    %323 = vector.load %arg13[%c0_94, %c0_95] : memref<1x128xf32, #tpu.memory_space<vmem>>, vector<1x128xf32>
    %324 = vector.broadcast %323 : vector<1x128xf32> to vector<2x128xf32>
    %325 = arith.addf %322, %324 : vector<2x128xf32>
    %cst_96 = arith.constant 0.000000e+00 : f32
    %326 = vector.broadcast %cst_96 : f32 to vector<2x128xf32>
    %327 = arith.maximumf %325, %326 : vector<2x128xf32>
    %328 = arith.truncf %327 : vector<2x128xf32> to vector<2x128xbf16>
    %c0_97 = arith.constant 0 : index
    %c0_98 = arith.constant 0 : index
    %329 = vector.load %arg14[%c0_97, %c0_98] : memref<128x128xbf16, #tpu.memory_space<vmem>>, vector<128x128xbf16>
    %cst_99 = arith.constant dense<0.000000e+00> : vector<2x128xf32>
    %330 = tpu.matmul %328, %329, %cst_99 {dimension_numbers = #tpu.dot_dimension_numbers<[1], [0], [0], [1], [0, 0, 1, 1], [], []>} : vector<2x128xbf16>, vector<128x128xbf16>, vector<2x128xf32> -> vector<2x128xf32>
    %c0_100 = arith.constant 0 : index
    %c0_101 = arith.constant 0 : index
    %331 = vector.load %arg15[%c0_100, %c0_101] : memref<1x128xf32, #tpu.memory_space<vmem>>, vector<1x128xf32>
    %332 = vector.broadcast %331 : vector<1x128xf32> to vector<2x128xf32>
    %333 = arith.addf %330, %332 : vector<2x128xf32>
    %c0_102 = arith.constant 0 : index
    %c0_103 = arith.constant 0 : index
    %334 = vector.load %arg16[%c0_102, %c0_103] : memref<2x128xf32, #tpu.memory_space<vmem>>, vector<2x128xf32>
    tpu.vector_store %arg16[%c0_102, %c0_103], %333 {strides = array<i32>} : memref<2x128xf32, #tpu.memory_space<vmem>>, vector<2x128xf32>,
    return
  }
  func.func @transform_0(%arg0: i32) -> (i32, i32, i32) {
    %c0_i32 = arith.constant 0 : i32
    %c0_i32_0 = arith.constant 0 : i32
    %c0_i32_1 = arith.constant 0 : i32
    return %arg0, %c0_i32, %c0_i32_0 : i32, i32, i32
  }
  func.func @transform_1(%arg0: i32) -> (i32, i32) {
    %c0_i32 = arith.constant 0 : i32
    %c0_i32_0 = arith.constant 0 : i32
    %c0_i32_1 = arith.constant 0 : i32
    return %c0_i32, %c0_i32_0 : i32, i32
  }
  func.func @transform_2(%arg0: i32) -> (i32, i32) {
    %c0_i32 = arith.constant 0 : i32
    %c0_i32_0 = arith.constant 0 : i32
    %c0_i32_1 = arith.constant 0 : i32
    return %c0_i32, %c0_i32_0 : i32, i32
  }
  func.func @transform_3(%arg0: i32) -> (i32, i32) {
    %c0_i32 = arith.constant 0 : i32
    %c0_i32_0 = arith.constant 0 : i32
    %c0_i32_1 = arith.constant 0 : i32
    return %c0_i32, %c0_i32_0 : i32, i32
  }
  func.func @transform_4(%arg0: i32) -> (i32, i32) {
    %c0_i32 = arith.constant 0 : i32
    %c0_i32_0 = arith.constant 0 : i32
    %c0_i32_1 = arith.constant 0 : i32
    return %c0_i32, %c0_i32_0 : i32, i32
  }
  func.func @transform_5(%arg0: i32) -> (i32, i32) {
    %c0_i32 = arith.constant 0 : i32
    %c0_i32_0 = arith.constant 0 : i32
    %c0_i32_1 = arith.constant 0 : i32
    return %c0_i32, %c0_i32_0 : i32, i32
  }
  func.func @transform_6(%arg0: i32) -> (i32, i32) {
    %c0_i32 = arith.constant 0 : i32
    %c0_i32_0 = arith.constant 0 : i32
    %c0_i32_1 = arith.constant 0 : i32
    return %c0_i32, %c0_i32_0 : i32, i32
  }
  func.func @transform_7(%arg0: i32) -> (i32, i32) {
    %c0_i32 = arith.constant 0 : i32
    %c0_i32_0 = arith.constant 0 : i32
    %c0_i32_1 = arith.constant 0 : i32
    return %c0_i32, %c0_i32_0 : i32, i32
  }
  func.func @transform_8(%arg0: i32) -> (i32, i32) {
    %c0_i32 = arith.constant 0 : i32
    %c0_i32_0 = arith.constant 0 : i32
    %c0_i32_1 = arith.constant 0 : i32
    return %c0_i32, %c0_i32_0 : i32, i32
  }
  func.func @transform_9(%arg0: i32) -> (i32, i32) {
    %c0_i32 = arith.constant 0 : i32
    %c0_i32_0 = arith.constant 0 : i32
    %c0_i32_1 = arith.constant 0 : i32
    return %c0_i32, %c0_i32_0 : i32, i32
  }
  func.func @transform_10(%arg0: i32) -> (i32, i32) {
    %c0_i32 = arith.constant 0 : i32
    %c0_i32_0 = arith.constant 0 : i32
    %c0_i32_1 = arith.constant 0 : i32
    return %c0_i32, %c0_i32_0 : i32, i32
  }
  func.func @transform_11(%arg0: i32) -> (i32, i32) {
    %c0_i32 = arith.constant 0 : i32
    %c0_i32_0 = arith.constant 0 : i32
    %c0_i32_1 = arith.constant 0 : i32
    return %c0_i32, %c0_i32_0 : i32, i32
  }
  func.func @transform_12(%arg0: i32) -> (i32, i32) {
    %c0_i32 = arith.constant 0 : i32
    %c0_i32_0 = arith.constant 0 : i32
    %c0_i32_1 = arith.constant 0 : i32
    return %c0_i32, %c0_i32_0 : i32, i32
  }
  func.func @transform_13(%arg0: i32) -> (i32, i32) {
    %c0_i32 = arith.constant 0 : i32
    %c0_i32_0 = arith.constant 0 : i32
    %c0_i32_1 = arith.constant 0 : i32
    return %c0_i32, %c0_i32_0 : i32, i32
  }
  func.func @transform_14(%arg0: i32) -> (i32, i32) {
    %c0_i32 = arith.constant 0 : i32
    %c0_i32_0 = arith.constant 0 : i32
    %c0_i32_1 = arith.constant 0 : i32
    return %c0_i32, %c0_i32_0 : i32, i32
  }
  func.func @transform_15(%arg0: i32) -> (i32, i32) {
    %c0_i32 = arith.constant 0 : i32
    %c0_i32_0 = arith.constant 0 : i32
    return %arg0, %c0_i32 : i32, i32
  }
}

</mosaic_0001>

<llo_original>
// kernel: _lambda_.2
$region0: #{_lambda_.2}
  #allocation0 [shape = 'u32[]', space=smem, size = 0x4, offset = 0x4, fixed_abs, tag = 'smem constant byte address 0x4 - core index']
  #allocation1 [shape = 'u32[72,128]{1,0:T(1,128)}', space=vmem, size = 0x9000, scoped, tag = 'internal scratch']
  %s0 = inlined_call_operand.vmem [shape: bf16[2,16,64], index: 0, kind: input, shape index: {}]
  %s1 = inlined_call_operand.hbm [shape: bf16[192,64], index: 1, kind: input, shape index: {}]
  %s2 = inlined_call_operand.hbm [shape: f32[1,64], index: 2, kind: input, shape index: {}]
  %s3 = inlined_call_operand.hbm [shape: f32[1,64], index: 3, kind: input, shape index: {}]
  %s4 = inlined_call_operand.hbm [shape: bf16[192,64], index: 4, kind: input, shape index: {}]
  %s5 = inlined_call_operand.hbm [shape: f32[1,64], index: 5, kind: input, shape index: {}]
  %s6 = inlined_call_operand.hbm [shape: f32[1,64], index: 6, kind: input, shape index: {}]
  %s7 = inlined_call_operand.hbm [shape: bf16[64,64], index: 7, kind: input, shape index: {}]
  %s8 = inlined_call_operand.hbm [shape: f32[1,64], index: 8, kind: input, shape index: {}]
  %s9 = inlined_call_operand.hbm [shape: bf16[192,128], index: 9, kind: input, shape index: {}]
  %s10 = inlined_call_operand.hbm [shape: f32[1,128], index: 10, kind: input, shape index: {}]
  %s11 = inlined_call_operand.hbm [shape: f32[1,128], index: 11, kind: input, shape index: {}]
  %s12 = inlined_call_operand.hbm [shape: bf16[384,128], index: 12, kind: input, shape index: {}]
  %s13 = inlined_call_operand.vmem [shape: f32[1,128], index: 13, kind: input, shape index: {}]
  %s14 = inlined_call_operand.vmem [shape: f32[1,128], index: 14, kind: input, shape index: {}]
  %s15 = inlined_call_operand.vmem [shape: bf16[64,128], index: 15, kind: input, shape index: {}]
  %s16 = inlined_call_operand.vmem [shape: f32[1,128], index: 16, kind: input, shape index: {}]
  %s17 = inlined_call_operand.hbm [shape: bf16[384,256], index: 17, kind: input, shape index: {}]
  %s18 = inlined_call_operand.vmem [shape: f32[1,256], index: 18, kind: input, shape index: {}]
  %s19 = inlined_call_operand.vmem [shape: f32[1,256], index: 19, kind: input, shape index: {}]
  %s20 = inlined_call_operand.hbm [shape: bf16[768,256], index: 20, kind: input, shape index: {}]
  %s21 = inlined_call_operand.vmem [shape: f32[1,256], index: 21, kind: input, shape index: {}]
  %s22 = inlined_call_operand.vmem [shape: f32[1,256], index: 22, kind: input, shape index: {}]
  %s23 = inlined_call_operand.hbm [shape: bf16[128,256], index: 23, kind: input, shape index: {}]
  %s24 = inlined_call_operand.vmem [shape: f32[1,256], index: 24, kind: input, shape index: {}]
  %s25 = inlined_call_operand.vmem [shape: bf16[2,2,256], index: 25, kind: output, shape index: {}]
  %s26 = sld [smem:[#allocation0]]
  $region170: #{_lambda_.2} parent=0
    _
  %s28 = ssub.s32 1, %s26
  %s29 = scalar_select 0, %s28, %s26
  $region1: #{_lambda_.2} parent=0
    #allocation2 [shape = 'u8[49152]{0}', space=vmem, size = 0xc000, scoped, tag = 'input window, operand 1, single buffered']
    #allocation3 [shape = 's32[1]{0}', space=sflag, size = 0x4, scoped, tag = 'scoped memory for _lambda_.2']
    #allocation4 [shape = 'u8[512]{0}', space=vmem, size = 0x400, scoped, tag = 'input window, operand 2, single buffered']
    #allocation5 [shape = 's32[1]{0}', space=sflag, size = 0x4, scoped, tag = 'scoped memory for _lambda_.2']
    #allocation6 [shape = 'u8[512]{0}', space=vmem, size = 0x400, scoped, tag = 'input window, operand 3, single buffered']
    #allocation7 [shape = 'u8[49152]{0}', space=vmem, size = 0xc000, scoped, tag = 'input window, operand 4, single buffered']
    #allocation8 [shape = 's32[1]{0}', space=sflag, size = 0x4, scoped, tag = 'scoped memory for _lambda_.2']
    #allocation9 [shape = 'u8[512]{0}', space=vmem, size = 0x400, scoped, tag = 'input window, operand 5, single buffered']
    #allocation10 [shape = 'u8[512]{0}', space=vmem, size = 0x400, scoped, tag = 'input window, operand 6, single buffered']
    #allocation11 [shape = 's32[1]{0}', space=sflag, size = 0x4, scoped, tag = 'scoped memory for _lambda_.2']
    #allocation12 [shape = 'u8[16384]{0}', space=vmem, size = 0x4000, scoped, tag = 'input window, operand 7, single buffered']
    #allocation13 [shape = 'u8[512]{0}', space=vmem, size = 0x400, scoped, tag = 'input window, operand 8, single buffered']
    #allocation14 [shape = 's32[1]{0}', space=sflag, size = 0x4, scoped, tag = 'scoped memory for _lambda_.2']
    #allocation15 [shape = 'u8[49152]{0}', space=vmem, size = 0xc000, scoped, tag = 'input window, operand 9, single buffered']
    #allocation16 [shape = 'u8[512]{0}', space=vmem, size = 0x400, scoped, tag = 'input window, operand 10, single buffered']
    #allocation17 [shape = 's32[1]{0}', space=sflag, size = 0x4, scoped, tag = 'scoped memory for _lambda_.2']
    #allocation18 [shape = 'u8[512]{0}', space=vmem, size = 0x400, scoped, tag = 'input window, operand 11, single buffered']
    #allocation19 [shape = 'u8[98304]{0}', space=vmem, size = 0x18000, scoped, tag = 'input window, operand 12, single buffered']
    #allocation20 [shape = 's32[1]{0}', space=sflag, size = 0x4, scoped, tag = 'scoped memory for _lambda_.2']
    #allocation21 [shape = 'u8[196608]{0}', space=vmem, size = 0x30000, scoped, tag = 'input window, operand 17, single buffered']
    #allocation22 [shape = 'u8[393216]{0}', space=vmem, size = 0x60000, scoped, tag = 'input window, operand 20, single buffered']
    #allocation23 [shape = 's32[1]{0}', space=sflag, size = 0x4, scoped, tag = 'scoped memory for _lambda_.2']
    #allocation24 [shape = 'u8[65536]{0}', space=vmem, size = 0x10000, scoped, tag = 'input window, operand 23, single buffered']
    %30 = vsyncpa [#allocation3], 0
    %31 = vsyncpa [#allocation5], 0
    %32 = vsyncpa [#allocation8], 0
    %33 = vsyncpa [#allocation11], 0
    %34 = vsyncpa [#allocation14], 0
    %35 = vsyncpa [#allocation17], 0
    %36 = vsyncpa [#allocation20], 0
    %37 = vsyncpa [#allocation23], 0
    // Predicated region
    $region2: #{_lambda_.2} parent=1 // pred_check
      _
    $region3: #{_lambda_.2} parent=1 // pred_check_branch
      %39 = sbr.rel (0) target = $region5
    $region4: #{_lambda_.2} parent=1 // pred_region
      _
    $region5: #{_lambda_.2} parent=1 // pred_fallthru
      _
    // Predicated region
    $region6: #{_lambda_.2} parent=1 // pred_check
      _
    $region7: #{_lambda_.2} parent=1 // pred_check_branch
      %41 = sbr.rel (0) target = $region9
    $region8: #{_lambda_.2} parent=1 // pred_region
      %43 = vsyncadd [#allocation3], 0
      %s44 = sshll.u32 %s1, 4
      %s45 = int_to_ptr.hbm [resolvable:$true] %s44
      %s46 = sshll.u32 [#allocation2], 4
      %s47 = int_to_ptr.vmem [resolvable:$true] %s46
      %52 = dma.hbm_to_vmem [thread:$0]  %s45, 1536, %s47, [#allocation3], 64, 64, 4
    $region9: #{_lambda_.2} parent=1 // pred_fallthru
      _
    // Predicated region
    $region10: #{_lambda_.2} parent=1 // pred_check
      _
    $region11: #{_lambda_.2} parent=1 // pred_check_branch
      %54 = sbr.rel (0) target = $region13
    $region12: #{_lambda_.2} parent=1 // pred_region
      %56 = vsyncadd [#allocation5], 0
      %s58 = sshll.u32 %s2, 4
      %s59 = int_to_ptr.hbm [resolvable:$true] %s58
      %s60 = sshll.u32 [#allocation4], 4
      %s61 = int_to_ptr.vmem [resolvable:$true] %s60
      %63 = dma.hbm_to_vmem [thread:$0]  %s59, 16, %s61, [#allocation5]
    $region13: #{_lambda_.2} parent=1 // pred_fallthru
      _
    // Predicated region
    $region14: #{_lambda_.2} parent=1 // pred_check
      _
    $region15: #{_lambda_.2} parent=1 // pred_check_branch
      %65 = sbr.rel (0) target = $region17
    $region16: #{_lambda_.2} parent=1 // pred_region
      %67 = vsyncadd [#allocation5], 0
      %s69 = sshll.u32 %s3, 4
      %s70 = int_to_ptr.hbm [resolvable:$true] %s69
      %s71 = sshll.u32 [#allocation6], 4
      %s72 = int_to_ptr.vmem [resolvable:$true] %s71
      %74 = dma.hbm_to_vmem [thread:$0]  %s70, 16, %s72, [#allocation5]
    $region17: #{_lambda_.2} parent=1 // pred_fallthru
      _
    // Predicated region
    $region18: #{_lambda_.2} parent=1 // pred_check
      _
    $region19: #{_lambda_.2} parent=1 // pred_check_branch
      %76 = sbr.rel (0) target = $region21
    $region20: #{_lambda_.2} parent=1 // pred_region
      %78 = vsyncadd [#allocation8], 0
      %s79 = sshll.u32 %s4, 4
      %s80 = int_to_ptr.hbm [resolvable:$true] %s79
      %s81 = sshll.u32 [#allocation7], 4
      %s82 = int_to_ptr.vmem [resolvable:$true] %s81
      %87 = dma.hbm_to_vmem [thread:$0]  %s80, 1536, %s82, [#allocation8], 64, 64, 4
    $region21: #{_lambda_.2} parent=1 // pred_fallthru
      _
    // Predicated region
    $region22: #{_lambda_.2} parent=1 // pred_check
      _
    $region23: #{_lambda_.2} parent=1 // pred_check_branch
      %89 = sbr.rel (0) target = $region25
    $region24: #{_lambda_.2} parent=1 // pred_region
      %91 = vsyncadd [#allocation8], 0
      %s93 = sshll.u32 %s5, 4
      %s94 = int_to_ptr.hbm [resolvable:$true] %s93
      %s95 = sshll.u32 [#allocation9], 4
      %s96 = int_to_ptr.vmem [resolvable:$true] %s95
      %98 = dma.hbm_to_vmem [thread:$0]  %s94, 16, %s96, [#allocation8]
    $region25: #{_lambda_.2} parent=1 // pred_fallthru
      _
    // Predicated region
    $region26: #{_lambda_.2} parent=1 // pred_check
      _
    $region27: #{_lambda_.2} parent=1 // pred_check_branch
      %100 = sbr.rel (0) target = $region29
    $region28: #{_lambda_.2} parent=1 // pred_region
      %102 = vsyncadd [#allocation11], 0
      %s104 = sshll.u32 %s6, 4
      %s105 = int_to_ptr.hbm [resolvable:$true] %s104
      %s106 = sshll.u32 [#allocation10], 4
      %s107 = int_to_ptr.vmem [resolvable:$true] %s106
      %109 = dma.hbm_to_vmem [thread:$0]  %s105, 16, %s107, [#allocation11]
    $region29: #{_lambda_.2} parent=1 // pred_fallthru
      _
    // Predicated region
    $region30: #{_lambda_.2} parent=1 // pred_check
      _
    $region31: #{_lambda_.2} parent=1 // pred_check_branch
      %111 = sbr.rel (0) target = $region33
    $region32: #{_lambda_.2} parent=1 // pred_region
      %113 = vsyncadd [#allocation11], 0
      %s114 = sshll.u32 %s7, 4
      %s115 = int_to_ptr.hbm [resolvable:$true] %s114
      %s116 = sshll.u32 [#allocation12], 4
      %s117 = int_to_ptr.vmem [resolvable:$true] %s116
      %122 = dma.hbm_to_vmem [thread:$0]  %s115, 512, %s117, [#allocation11], 64, 64, 4
    $region33: #{_lambda_.2} parent=1 // pred_fallthru
      _
    // Predicated region
    $region34: #{_lambda_.2} parent=1 // pred_check
      _
    $region35: #{_lambda_.2} parent=1 // pred_check_branch
      %124 = sbr.rel (0) target = $region37
    $region36: #{_lambda_.2} parent=1 // pred_region
      %126 = vsyncadd [#allocation14], 0
      %s128 = sshll.u32 %s8, 4
      %s129 = int_to_ptr.hbm [resolvable:$true] %s128
      %s130 = sshll.u32 [#allocation13], 4
      %s131 = int_to_ptr.vmem [resolvable:$true] %s130
      %133 = dma.hbm_to_vmem [thread:$0]  %s129, 16, %s131, [#allocation14]
    $region37: #{_lambda_.2} parent=1 // pred_fallthru
      _
    // Predicated region
    $region38: #{_lambda_.2} parent=1 // pred_check
      _
    $region39: #{_lambda_.2} parent=1 // pred_check_branch
      %135 = sbr.rel (0) target = $region41
    $region40: #{_lambda_.2} parent=1 // pred_region
      %137 = vsyncadd [#allocation14], 0
      %s138 = sshll.u32 %s9, 4
      %s139 = int_to_ptr.hbm [resolvable:$true] %s138
      %s140 = sshll.u32 [#allocation15], 4
      %s141 = int_to_ptr.vmem [resolvable:$true] %s140
      %146 = dma.hbm_to_vmem [thread:$0]  %s139, 1536, %s141, [#allocation14], 64, 64, 4
    $region41: #{_lambda_.2} parent=1 // pred_fallthru
      _
    // Predicated region
    $region42: #{_lambda_.2} parent=1 // pred_check
      _
    $region43: #{_lambda_.2} parent=1 // pred_check_branch
      %148 = sbr.rel (0) target = $region45
    $region44: #{_lambda_.2} parent=1 // pred_region
      %150 = vsyncadd [#allocation17], 0
      %s152 = sshll.u32 %s10, 4
      %s153 = int_to_ptr.hbm [resolvable:$true] %s152
      %s154 = sshll.u32 [#allocation16], 4
      %s155 = int_to_ptr.vmem [resolvable:$true] %s154
      %157 = dma.hbm_to_vmem [thread:$0]  %s153, 16, %s155, [#allocation17]
    $region45: #{_lambda_.2} parent=1 // pred_fallthru
      _
    // Predicated region
    $region46: #{_lambda_.2} parent=1 // pred_check
      _
    $region47: #{_lambda_.2} parent=1 // pred_check_branch
      %159 = sbr.rel (0) target = $region49
    $region48: #{_lambda_.2} parent=1 // pred_region
      %161 = vsyncadd [#allocation17], 0
      %s163 = sshll.u32 %s11, 4
      %s164 = int_to_ptr.hbm [resolvable:$true] %s163
      %s165 = sshll.u32 [#allocation18], 4
      %s166 = int_to_ptr.vmem [resolvable:$true] %s165
      %168 = dma.hbm_to_vmem [thread:$0]  %s164, 16, %s166, [#allocation17]
    $region49: #{_lambda_.2} parent=1 // pred_fallthru
      _
    // Predicated region
    $region50: #{_lambda_.2} parent=1 // pred_check
      _
    $region51: #{_lambda_.2} parent=1 // pred_check_branch
      %170 = sbr.rel (0) target = $region53
    $region52: #{_lambda_.2} parent=1 // pred_region
      %172 = vsyncadd [#allocation20], 0
      %s173 = sshll.u32 %s12, 4
      %s174 = int_to_ptr.hbm [resolvable:$true] %s173
      %s175 = sshll.u32 [#allocation19], 4
      %s176 = int_to_ptr.vmem [resolvable:$true] %s175
      %181 = dma.hbm_to_vmem [thread:$0]  %s174, 3072, %s176, [#allocation20], 64, 64, 4
    $region53: #{_lambda_.2} parent=1 // pred_fallthru
      _
    // Predicated region
    $region54: #{_lambda_.2} parent=1 // pred_check
      _
    $region55: #{_lambda_.2} parent=1 // pred_check_branch
      %183 = sbr.rel (0) target = $region57
    $region56: #{_lambda_.2} parent=1 // pred_region
      _
    $region57: #{_lambda_.2} parent=1 // pred_fallthru
      _
    // Predicated region
    $region58: #{_lambda_.2} parent=1 // pred_check
      _
    $region59: #{_lambda_.2} parent=1 // pred_check_branch
      %185 = sbr.rel (0) target = $region61
    $region60: #{_lambda_.2} parent=1 // pred_region
      _
    $region61: #{_lambda_.2} parent=1 // pred_fallthru
      _
    // Predicated region
    $region62: #{_lambda_.2} parent=1 // pred_check
      _
    $region63: #{_lambda_.2} parent=1 // pred_check_branch
      %187 = sbr.rel (0) target = $region65
    $region64: #{_lambda_.2} parent=1 // pred_region
      _
    $region65: #{_lambda_.2} parent=1 // pred_fallthru
      _
    // Predicated region
    $region66: #{_lambda_.2} parent=1 // pred_check
      _
    $region67: #{_lambda_.2} parent=1 // pred_check_branch
      %189 = sbr.rel (0) target = $region69
    $region68: #{_lambda_.2} parent=1 // pred_region
      _
    $region69: #{_lambda_.2} parent=1 // pred_fallthru
      _
    // Predicated region
    $region70: #{_lambda_.2} parent=1 // pred_check
      _
    $region71: #{_lambda_.2} parent=1 // pred_check_branch
      %191 = sbr.rel (0) target = $region73
    $region72: #{_lambda_.2} parent=1 // pred_region
      %193 = vsyncadd [#allocation20], 0
      %s194 = sshll.u32 %s17, 4
      %s195 = int_to_ptr.hbm [resolvable:$true] %s194
      %s196 = sshll.u32 [#allocation21], 4
      %s197 = int_to_ptr.vmem [resolvable:$true] %s196
      %202 = dma.hbm_to_vmem [thread:$0]  %s195, 6144, %s197, [#allocation20], 128, 128, 8
    $region73: #{_lambda_.2} parent=1 // pred_fallthru
      _
    // Predicated region
    $region74: #{_lambda_.2} parent=1 // pred_check
      _
    $region75: #{_lambda_.2} parent=1 // pred_check_branch
      %204 = sbr.rel (0) target = $region77
    $region76: #{_lambda_.2} parent=1 // pred_region
      _
    $region77: #{_lambda_.2} parent=1 // pred_fallthru
      _
    // Predicated region
    $region78: #{_lambda_.2} parent=1 // pred_check
      _
    $region79: #{_lambda_.2} parent=1 // pred_check_branch
      %206 = sbr.rel (0) target = $region81
    $region80: #{_lambda_.2} parent=1 // pred_region
      _
    $region81: #{_lambda_.2} parent=1 // pred_fallthru
      _
    // Predicated region
    $region82: #{_lambda_.2} parent=1 // pred_check
      _
    $region83: #{_lambda_.2} parent=1 // pred_check_branch
      %208 = sbr.rel (0) target = $region85
    $region84: #{_lambda_.2} parent=1 // pred_region
      %210 = vsyncadd [#allocation23], 0
      %s211 = sshll.u32 %s20, 4
      %s212 = int_to_ptr.hbm [resolvable:$true] %s211
      %s213 = sshll.u32 [#allocation22], 4
      %s214 = int_to_ptr.vmem [resolvable:$true] %s213
      %219 = dma.hbm_to_vmem [thread:$0]  %s212, 12288, %s214, [#allocation23], 128, 128, 8
    $region85: #{_lambda_.2} parent=1 // pred_fallthru
      _
    // Predicated region
    $region86: #{_lambda_.2} parent=1 // pred_check
      _
    $region87: #{_lambda_.2} parent=1 // pred_check_branch
      %221 = sbr.rel (0) target = $region89
    $region88: #{_lambda_.2} parent=1 // pred_region
      _
    $region89: #{_lambda_.2} parent=1 // pred_fallthru
      _
    // Predicated region
    $region90: #{_lambda_.2} parent=1 // pred_check
      _
    $region91: #{_lambda_.2} parent=1 // pred_check_branch
      %223 = sbr.rel (0) target = $region93
    $region92: #{_lambda_.2} parent=1 // pred_region
      _
    $region93: #{_lambda_.2} parent=1 // pred_fallthru
      _
    // Predicated region
    $region94: #{_lambda_.2} parent=1 // pred_check
      _
    $region95: #{_lambda_.2} parent=1 // pred_check_branch
      %225 = sbr.rel (0) target = $region97
    $region96: #{_lambda_.2} parent=1 // pred_region
      %227 = vsyncadd [#allocation23], 0
      %s228 = sshll.u32 %s23, 4
      %s229 = int_to_ptr.hbm [resolvable:$true] %s228
      %s230 = sshll.u32 [#allocation24], 4
      %s231 = int_to_ptr.vmem [resolvable:$true] %s230
      %236 = dma.hbm_to_vmem [thread:$0]  %s229, 2048, %s231, [#allocation23], 128, 128, 8
    $region97: #{_lambda_.2} parent=1 // pred_fallthru
      _
    // Predicated region
    $region98: #{_lambda_.2} parent=1 // pred_check
      _
    $region99: #{_lambda_.2} parent=1 // pred_check_branch
      %238 = sbr.rel (0) target = $region101
    $region100: #{_lambda_.2} parent=1 // pred_region
      _
    $region101: #{_lambda_.2} parent=1 // pred_fallthru
      _
    // Predicated region
    $region102: #{_lambda_.2} parent=1 // pred_check
      _
    $region103: #{_lambda_.2} parent=1 // pred_check_branch
      %240 = sbr.rel (0) target = $region105
    $region104: #{_lambda_.2} parent=1 // pred_region
      %242 = dma.done [#allocation3], 1536
    $region105: #{_lambda_.2} parent=1 // pred_fallthru
      _
    // Predicated region
    $region106: #{_lambda_.2} parent=1 // pred_check
      _
    $region107: #{_lambda_.2} parent=1 // pred_check_branch
      %244 = sbr.rel (0) target = $region109
    $region108: #{_lambda_.2} parent=1 // pred_region
      %246 = dma.done [#allocation5], 16
    $region109: #{_lambda_.2} parent=1 // pred_fallthru
      _
    // Predicated region
    $region110: #{_lambda_.2} parent=1 // pred_check
      _
    $region111: #{_lambda_.2} parent=1 // pred_check_branch
      %248 = sbr.rel (0) target = $region113
    $region112: #{_lambda_.2} parent=1 // pred_region
      %250 = dma.done [#allocation5], 16
    $region113: #{_lambda_.2} parent=1 // pred_fallthru
      _
    // Predicated region
    $region114: #{_lambda_.2} parent=1 // pred_check
      _
    $region115: #{_lambda_.2} parent=1 // pred_check_branch
      %252 = sbr.rel (0) target = $region117
    $region116: #{_lambda_.2} parent=1 // pred_region
      %254 = dma.done [#allocation8], 1536
    $region117: #{_lambda_.2} parent=1 // pred_fallthru
      _
    // Predicated region
    $region118: #{_lambda_.2} parent=1 // pred_check
      _
    $region119: #{_lambda_.2} parent=1 // pred_check_branch
      %256 = sbr.rel (0) target = $region121
    $region120: #{_lambda_.2} parent=1 // pred_region
      %258 = dma.done [#allocation8], 16
    $region121: #{_lambda_.2} parent=1 // pred_fallthru
      _
    // Predicated region
    $region122: #{_lambda_.2} parent=1 // pred_check
      _
    $region123: #{_lambda_.2} parent=1 // pred_check_branch
      %260 = sbr.rel (0) target = $region125
    $region124: #{_lambda_.2} parent=1 // pred_region
      %262 = dma.done [#allocation11], 16
    $region125: #{_lambda_.2} parent=1 // pred_fallthru
      _
    // Predicated region
    $region126: #{_lambda_.2} parent=1 // pred_check
      _
    $region127: #{_lambda_.2} parent=1 // pred_check_branch
      %264 = sbr.rel (0) target = $region129
    $region128: #{_lambda_.2} parent=1 // pred_region
      %266 = dma.done [#allocation11], 512
    $region129: #{_lambda_.2} parent=1 // pred_fallthru
      _
    // Predicated region
    $region130: #{_lambda_.2} parent=1 // pred_check
      _
    $region131: #{_lambda_.2} parent=1 // pred_check_branch
      %268 = sbr.rel (0) target = $region133
    $region132: #{_lambda_.2} parent=1 // pred_region
      %270 = dma.done [#allocation14], 16
    $region133: #{_lambda_.2} parent=1 // pred_fallthru
      _
    // Predicated region
    $region134: #{_lambda_.2} parent=1 // pred_check
      _
    $region135: #{_lambda_.2} parent=1 // pred_check_branch
      %272 = sbr.rel (0) target = $region137
    $region136: #{_lambda_.2} parent=1 // pred_region
      %274 = dma.done [#allocation14], 1536
    $region137: #{_lambda_.2} parent=1 // pred_fallthru
      _
    // Predicated region
    $region138: #{_lambda_.2} parent=1 // pred_check
      _
    $region139: #{_lambda_.2} parent=1 // pred_check_branch
      %276 = sbr.rel (0) target = $region141
    $region140: #{_lambda_.2} parent=1 // pred_region
      %278 = dma.done [#allocation17], 16
    $region141: #{_lambda_.2} parent=1 // pred_fallthru
      _
    // Predicated region
    $region142: #{_lambda_.2} parent=1 // pred_check
      _
    $region143: #{_lambda_.2} parent=1 // pred_check_branch
      %280 = sbr.rel (0) target = $region145
    $region144: #{_lambda_.2} parent=1 // pred_region
      %282 = dma.done [#allocation17], 16
    $region145: #{_lambda_.2} parent=1 // pred_fallthru
      _
    // Predicated region
    $region146: #{_lambda_.2} parent=1 // pred_check
      _
    $region147: #{_lambda_.2} parent=1 // pred_check_branch
      %284 = sbr.rel (0) target = $region149
    $region148: #{_lambda_.2} parent=1 // pred_region
      %286 = dma.done [#allocation20], 3072
    $region149: #{_lambda_.2} parent=1 // pred_fallthru
      _
    // Predicated region
    $region150: #{_lambda_.2} parent=1 // pred_check
      _
    $region151: #{_lambda_.2} parent=1 // pred_check_branch
      %288 = sbr.rel (0) target = $region153
    $region152: #{_lambda_.2} parent=1 // pred_region
      %290 = dma.done [#allocation20], 6144
    $region153: #{_lambda_.2} parent=1 // pred_fallthru
      _
    // Predicated region
    $region154: #{_lambda_.2} parent=1 // pred_check
      _
    $region155: #{_lambda_.2} parent=1 // pred_check_branch
      %292 = sbr.rel (0) target = $region157
    $region156: #{_lambda_.2} parent=1 // pred_region
      %294 = dma.done [#allocation23], 12288
    $region157: #{_lambda_.2} parent=1 // pred_fallthru
      _
    // Predicated region
    $region158: #{_lambda_.2} parent=1 // pred_check
      _
    $region159: #{_lambda_.2} parent=1 // pred_check_branch
      %296 = sbr.rel (0) target = $region161
    $region160: #{_lambda_.2} parent=1 // pred_region
      %298 = dma.done [#allocation23], 2048
    $region161: #{_lambda_.2} parent=1 // pred_fallthru
      _
    %v300 = vld [vmem:[%s0] sm:$0xf]
    %v301 = vld [vmem:[%s0 + $0x4] sm:$0xf]
    %v302 = vld [vmem:[%s0 + $0x8] sm:$0xf]
    %v303 = vld [vmem:[%s0 + $0xc] sm:$0xf]
    %v304 = vld [vmem:[#allocation2] sm:$0xf]
    %v305 = vld [vmem:[#allocation2 + $0x4] sm:$0xf]
    %v306 = vld [vmem:[#allocation2 + $0x8] sm:$0xf]
    %v307 = vld [vmem:[#allocation2 + $0xc] sm:$0xf]
    %v308 = vld [vmem:[#allocation2 + $0x10] sm:$0xf]
    %v309 = vld [vmem:[#allocation2 + $0x14] sm:$0xf]
    %v310 = vld [vmem:[#allocation2 + $0x18] sm:$0xf]
    %v311 = vld [vmem:[#allocation2 + $0x1c] sm:$0xf]
    %v312 = vld [vmem:[#allocation2 + $0x20] sm:$0xf]
    %v313 = vld [vmem:[#allocation2 + $0x24] sm:$0xf]
    %v314 = vld [vmem:[#allocation2 + $0x28] sm:$0xf]
    %v315 = vld [vmem:[#allocation2 + $0x2c] sm:$0xf]
    %v316 = vld [vmem:[#allocation2 + $0x30] sm:$0xf]
    %v317 = vld [vmem:[#allocation2 + $0x34] sm:$0xf]
    %v318 = vld [vmem:[#allocation2 + $0x38] sm:$0xf]
    %v319 = vld [vmem:[#allocation2 + $0x3c] sm:$0xf]
    %v320 = vld [vmem:[#allocation2 + $0x40] sm:$0xf]
    %v321 = vld [vmem:[#allocation2 + $0x44] sm:$0xf]
    %v322 = vld [vmem:[#allocation2 + $0x48] sm:$0xf]
    %v323 = vld [vmem:[#allocation2 + $0x4c] sm:$0xf]
    %v324 = vld [vmem:[#allocation2 + $0x50] sm:$0xf]
    %v325 = vld [vmem:[#allocation2 + $0x54] sm:$0xf]
    %v326 = vld [vmem:[#allocation2 + $0x58] sm:$0xf]
    %v327 = vld [vmem:[#allocation2 + $0x5c] sm:$0xf]
    %v328 = vld [vmem:[#allocation4] sm:$0x1]
    %v329 = vld [vmem:[#allocation6] sm:$0x1]
    %v330 = vld [vmem:[#allocation7] sm:$0xf]
    %v331 = vld [vmem:[#allocation7 + $0x4] sm:$0xf]
    %v332 = vld [vmem:[#allocation7 + $0x8] sm:$0xf]
    %v333 = vld [vmem:[#allocation7 + $0xc] sm:$0xf]
    %v334 = vld [vmem:[#allocation7 + $0x10] sm:$0xf]
    %v335 = vld [vmem:[#allocation7 + $0x14] sm:$0xf]
    %v336 = vld [vmem:[#allocation7 + $0x18] sm:$0xf]
    %v337 = vld [vmem:[#allocation7 + $0x1c] sm:$0xf]
    %v338 = vld [vmem:[#allocation7 + $0x20] sm:$0xf]
    %v339 = vld [vmem:[#allocation7 + $0x24] sm:$0xf]
    %v340 = vld [vmem:[#allocation7 + $0x28] sm:$0xf]
    %v341 = vld [vmem:[#allocation7 + $0x2c] sm:$0xf]
    %v342 = vld [vmem:[#allocation7 + $0x30] sm:$0xf]
    %v343 = vld [vmem:[#allocation7 + $0x34] sm:$0xf]
    %v344 = vld [vmem:[#allocation7 + $0x38] sm:$0xf]
    %v345 = vld [vmem:[#allocation7 + $0x3c] sm:$0xf]
    %v346 = vld [vmem:[#allocation7 + $0x40] sm:$0xf]
    %v347 = vld [vmem:[#allocation7 + $0x44] sm:$0xf]
    %v348 = vld [vmem:[#allocation7 + $0x48] sm:$0xf]
    %v349 = vld [vmem:[#allocation7 + $0x4c] sm:$0xf]
    %v350 = vld [vmem:[#allocation7 + $0x50] sm:$0xf]
    %v351 = vld [vmem:[#allocation7 + $0x54] sm:$0xf]
    %v352 = vld [vmem:[#allocation7 + $0x58] sm:$0xf]
    %v353 = vld [vmem:[#allocation7 + $0x5c] sm:$0xf]
    %v354 = vld [vmem:[#allocation9] sm:$0x1]
    %v355 = vld [vmem:[#allocation10] sm:$0x1]
    %v356 = vld [vmem:[#allocation12] sm:$0xf]
    %v357 = vld [vmem:[#allocation12 + $0x4] sm:$0xf]
    %v358 = vld [vmem:[#allocation12 + $0x8] sm:$0xf]
    %v359 = vld [vmem:[#allocation12 + $0xc] sm:$0xf]
    %v360 = vld [vmem:[#allocation12 + $0x10] sm:$0xf]
    %v361 = vld [vmem:[#allocation12 + $0x14] sm:$0xf]
    %v362 = vld [vmem:[#allocation12 + $0x18] sm:$0xf]
    %v363 = vld [vmem:[#allocation12 + $0x1c] sm:$0xf]
    %v364 = vld [vmem:[#allocation13] sm:$0x1]
    %v369 = vunpack.c.l.b16 %v300
    %v370 = vunpack.c.l.b16 %v301
    %v371 = vunpack.c.l.b16 %v302
    %v372 = vunpack.c.l.b16 %v303
    %v373 = vpack.c.b16 %v370, %v369
    %v374 = vpack.c.b16 %v372, %v371
    %v376 = vshrl.u32 %v373, 16
    %v378 = vrot.slane %v376, 7
    %v379 = vshll.u32 %v373, 16
    %v381 = vor.u32 %v378, %v379
    %v383 = vshrl.u32 %v374, 16
    %v385 = vrot.slane %v383, 7
    %v386 = vshll.u32 %v374, 16
    %v388 = vor.u32 %v385, %v386
    %vm391 = vcmask 1040384
    %vm392 = vsmask.f32 256
    %vm393 = vmand %vm391, %vm392
    %v394 = vsel %vm393, 0, %v381
    %v395 = vsel %vm393, 0, %v388
    %v396 = vrot.slane %v379, 1
    %v397 = vor.u32 %v376, %v396
    %v398 = vrot.slane %v386, 1
    %v399 = vor.u32 %v383, %v398
    %vm402 = vcmask 1047552
    %vm403 = vsmask.f32 7424
    %vm404 = vmand %vm402, %vm403
    %v405 = vsel %vm404, %v397, 0
    %v406 = vsel %vm404, %v399, 0
    %v415 = vunpack.c.l.b16 %v312
    %v416 = vunpack.c.l.b16 %v313
    %v417 = vunpack.c.l.b16 %v314
    %v418 = vunpack.c.l.b16 %v315
    %v419 = vunpack.c.l.b16 %v316
    %v420 = vunpack.c.l.b16 %v317
    %v421 = vunpack.c.l.b16 %v318
    %v422 = vunpack.c.l.b16 %v319
    %v423 = vpack.c.b16 %v416, %v415
    %v424 = vpack.c.b16 %v418, %v417
    %v425 = vpack.c.b16 %v420, %v419
    %v426 = vpack.c.b16 %v422, %v421
    %vm431 = vcmask 523264
    %v432 = vsel %vm431, %v373, 0
    %v434 = vsel %vm431, %v374, 0
    %436 = vmatpush.bf16.msra.mxu0 0
    %437 = vmatpush.bf16.msra.mxu0 0
    %438 = vmatpush.bf16.msra.mxu0 0
    %439 = vmatpush.bf16.msra.mxu0 0
    %440 = vmatpush.bf16.msra.mxu0 %v426
    %441 = vmatpush.bf16.msra.mxu0 %v425
    %442 = vmatpush.bf16.msra.mxu0 %v424
    %443 = vmatpush.bf16.msra.mxu0 %v423
    %444 = vmatmul.bf16.gmra.mxu0 %v432
    %v445 = vpop.f32.mrf.mxu0
    %v446 = vadd.f32 0.0, %v445
    %v447 = vpop.f32.mrf.mxu0
    %v448 = vadd.f32 0.0, %v447
    %449 = vmatmul.bf16.gmra.mxu0 %v434
    %v450 = vpop.f32.mrf.mxu0
    %v451 = vadd.f32 0.0, %v450
    %v452 = vpop.f32.mrf.mxu0
    %v453 = vadd.f32 0.0, %v452
    %454 = vdwg.mxu0
    %v463 = vunpack.c.l.b16 %v304
    %v464 = vunpack.c.l.b16 %v305
    %v465 = vunpack.c.l.b16 %v306
    %v466 = vunpack.c.l.b16 %v307
    %v467 = vunpack.c.l.b16 %v308
    %v468 = vunpack.c.l.b16 %v309
    %v469 = vunpack.c.l.b16 %v310
    %v470 = vunpack.c.l.b16 %v311
    %v471 = vpack.c.b16 %v464, %v463
    %v472 = vpack.c.b16 %v466, %v465
    %v473 = vpack.c.b16 %v468, %v467
    %v474 = vpack.c.b16 %v470, %v469
    %v480 = vsel %vm431, %v394, 0
    %v483 = vsel %vm431, %v395, 0
    %485 = vmatpush.bf16.msra.mxu0 0
    %486 = vmatpush.bf16.msra.mxu0 0
    %487 = vmatpush.bf16.msra.mxu0 0
    %488 = vmatpush.bf16.msra.mxu0 0
    %489 = vmatpush.bf16.msra.mxu0 %v474
    %490 = vmatpush.bf16.msra.mxu0 %v473
    %491 = vmatpush.bf16.msra.mxu0 %v472
    %492 = vmatpush.bf16.msra.mxu0 %v471
    %493 = vmatmul.bf16.gmra.mxu0 %v480
    %v494 = vpop.f32.mrf.mxu0
    %v495 = vadd.f32 %v446, %v494
    %v496 = vpop.f32.mrf.mxu0
    %v497 = vadd.f32 %v448, %v496
    %498 = vmatmul.bf16.gmra.mxu0 %v483
    %v499 = vpop.f32.mrf.mxu0
    %v500 = vadd.f32 %v451, %v499
    %v501 = vpop.f32.mrf.mxu0
    %v502 = vadd.f32 %v453, %v501
    %503 = vdwg.mxu0
    %v512 = vunpack.c.l.b16 %v320
    %v513 = vunpack.c.l.b16 %v321
    %v514 = vunpack.c.l.b16 %v322
    %v515 = vunpack.c.l.b16 %v323
    %v516 = vunpack.c.l.b16 %v324
    %v517 = vunpack.c.l.b16 %v325
    %v518 = vunpack.c.l.b16 %v326
    %v519 = vunpack.c.l.b16 %v327
    %v520 = vpack.c.b16 %v513, %v512
    %v521 = vpack.c.b16 %v515, %v514
    %v522 = vpack.c.b16 %v517, %v516
    %v523 = vpack.c.b16 %v519, %v518
    %v529 = vsel %vm431, %v405, 0
    %v532 = vsel %vm431, %v406, 0
    %534 = vmatpush.bf16.msra.mxu0 0
    %535 = vmatpush.bf16.msra.mxu0 0
    %536 = vmatpush.bf16.msra.mxu0 0
    %537 = vmatpush.bf16.msra.mxu0 0
    %538 = vmatpush.bf16.msra.mxu0 %v523
    %539 = vmatpush.bf16.msra.mxu0 %v522
    %540 = vmatpush.bf16.msra.mxu0 %v521
    %541 = vmatpush.bf16.msra.mxu0 %v520
    %542 = vmatmul.bf16.gmra.mxu0 %v529
    %v543 = vpop.f32.mrf.mxu0
    %v544 = vadd.f32 0.0, %v543
    %v545 = vpop.f32.mrf.mxu0
    %v546 = vadd.f32 0.0, %v545
    %547 = vmatmul.bf16.gmra.mxu0 %v532
    %v548 = vpop.f32.mrf.mxu0
    %v549 = vadd.f32 0.0, %v548
    %v550 = vpop.f32.mrf.mxu0
    %v551 = vadd.f32 0.0, %v550
    %552 = vdwg.mxu0
    %v553 = vadd.f32 %v495, %v544
    %v554 = vadd.f32 %v497, %v546
    %v555 = vadd.f32 %v500, %v549
    %v556 = vadd.f32 %v502, %v551
    %v558 = vperm.slane %v328, 0
    %v560 = vmul.f32 %v553, %v558
    %v561 = vmul.f32 %v554, %v558
    %v562 = vmul.f32 %v555, %v558
    %v563 = vmul.f32 %v556, %v558
    %v565 = vperm.slane %v329, 0
    %v567 = vadd.f32 %v560, %v565
    %v568 = vadd.f32 %v561, %v565
    %v569 = vadd.f32 %v562, %v565
    %v570 = vadd.f32 %v563, %v565
    %v571 = vmax.f32 %v567, 0.0
    %v572 = vmax.f32 %v568, 0.0
    %v573 = vmax.f32 %v569, 0.0
    %v574 = vmax.f32 %v570, 0.0
    %v575 = vpack.c.bf16 %v571, %v571
    %v576 = vpack.c.bf16 %v572, %v572
    %v577 = vpack.c.bf16 %v573, %v573
    %v578 = vpack.c.bf16 %v574, %v574
    %v583 = vunpack.c.l.b16 %v575
    %v584 = vunpack.c.l.b16 %v576
    %v585 = vunpack.c.l.b16 %v577
    %v586 = vunpack.c.l.b16 %v578
    %v587 = vpack.c.b16 %v584, %v583
    %v588 = vpack.c.b16 %v586, %v585
    %v590 = vshrl.u32 %v587, 16
    %v592 = vrot.slane %v590, 7
    %v593 = vshll.u32 %v587, 16
    %v595 = vor.u32 %v592, %v593
    %v597 = vshrl.u32 %v588, 16
    %v599 = vrot.slane %v597, 7
    %v600 = vshll.u32 %v588, 16
    %v602 = vor.u32 %v599, %v600
    %v605 = vsel %vm393, 0, %v595
    %v606 = vsel %vm393, 0, %v602
    %v607 = vrot.slane %v593, 1
    %v608 = vor.u32 %v590, %v607
    %v609 = vrot.slane %v600, 1
    %v610 = vor.u32 %v597, %v609
    %v613 = vsel %vm404, %v608, 0
    %v614 = vsel %vm404, %v610, 0
    %v623 = vunpack.c.l.b16 %v338
    %v624 = vunpack.c.l.b16 %v339
    %v625 = vunpack.c.l.b16 %v340
    %v626 = vunpack.c.l.b16 %v341
    %v627 = vunpack.c.l.b16 %v342
    %v628 = vunpack.c.l.b16 %v343
    %v629 = vunpack.c.l.b16 %v344
    %v630 = vunpack.c.l.b16 %v345
    %v631 = vpack.c.b16 %v624, %v623
    %v632 = vpack.c.b16 %v626, %v625
    %v633 = vpack.c.b16 %v628, %v627
    %v634 = vpack.c.b16 %v630, %v629
    %v639 = vsel %vm431, %v587, 0
    %v641 = vsel %vm431, %v588, 0
    %643 = vmatpush.bf16.msra.mxu0 0
    %644 = vmatpush.bf16.msra.mxu0 0
    %645 = vmatpush.bf16.msra.mxu0 0
    %646 = vmatpush.bf16.msra.mxu0 0
    %647 = vmatpush.bf16.msra.mxu0 %v634
    %648 = vmatpush.bf16.msra.mxu0 %v633
    %649 = vmatpush.bf16.msra.mxu0 %v632
    %650 = vmatpush.bf16.msra.mxu0 %v631
    %651 = vmatmul.bf16.gmra.mxu0 %v639
    %v652 = vpop.f32.mrf.mxu0
    %v653 = vadd.f32 0.0, %v652
    %v654 = vpop.f32.mrf.mxu0
    %v655 = vadd.f32 0.0, %v654
    %656 = vmatmul.bf16.gmra.mxu0 %v641
    %v657 = vpop.f32.mrf.mxu0
    %v658 = vadd.f32 0.0, %v657
    %v659 = vpop.f32.mrf.mxu0
    %v660 = vadd.f32 0.0, %v659
    %661 = vdwg.mxu0
    %v670 = vunpack.c.l.b16 %v330
    %v671 = vunpack.c.l.b16 %v331
    %v672 = vunpack.c.l.b16 %v332
    %v673 = vunpack.c.l.b16 %v333
    %v674 = vunpack.c.l.b16 %v334
    %v675 = vunpack.c.l.b16 %v335
    %v676 = vunpack.c.l.b16 %v336
    %v677 = vunpack.c.l.b16 %v337
    %v678 = vpack.c.b16 %v671, %v670
    %v679 = vpack.c.b16 %v673, %v672
    %v680 = vpack.c.b16 %v675, %v674
    %v681 = vpack.c.b16 %v677, %v676
    %v687 = vsel %vm431, %v605, 0
    %v690 = vsel %vm431, %v606, 0
    %692 = vmatpush.bf16.msra.mxu0 0
    %693 = vmatpush.bf16.msra.mxu0 0
    %694 = vmatpush.bf16.msra.mxu0 0
    %695 = vmatpush.bf16.msra.mxu0 0
    %696 = vmatpush.bf16.msra.mxu0 %v681
    %697 = vmatpush.bf16.msra.mxu0 %v680
    %698 = vmatpush.bf16.msra.mxu0 %v679
    %699 = vmatpush.bf16.msra.mxu0 %v678
    %700 = vmatmul.bf16.gmra.mxu0 %v687
    %v701 = vpop.f32.mrf.mxu0
    %v702 = vadd.f32 %v653, %v701
    %v703 = vpop.f32.mrf.mxu0
    %v704 = vadd.f32 %v655, %v703
    %705 = vmatmul.bf16.gmra.mxu0 %v690
    %v706 = vpop.f32.mrf.mxu0
    %v707 = vadd.f32 %v658, %v706
    %v708 = vpop.f32.mrf.mxu0
    %v709 = vadd.f32 %v660, %v708
    %710 = vdwg.mxu0
    %v719 = vunpack.c.l.b16 %v346
    %v720 = vunpack.c.l.b16 %v347
    %v721 = vunpack.c.l.b16 %v348
    %v722 = vunpack.c.l.b16 %v349
    %v723 = vunpack.c.l.b16 %v350
    %v724 = vunpack.c.l.b16 %v351
    %v725 = vunpack.c.l.b16 %v352
    %v726 = vunpack.c.l.b16 %v353
    %v727 = vpack.c.b16 %v720, %v719
    %v728 = vpack.c.b16 %v722, %v721
    %v729 = vpack.c.b16 %v724, %v723
    %v730 = vpack.c.b16 %v726, %v725
    %v736 = vsel %vm431, %v613, 0
    %v739 = vsel %vm431, %v614, 0
    %741 = vmatpush.bf16.msra.mxu0 0
    %742 = vmatpush.bf16.msra.mxu0 0
    %743 = vmatpush.bf16.msra.mxu0 0
    %744 = vmatpush.bf16.msra.mxu0 0
    %745 = vmatpush.bf16.msra.mxu0 %v730
    %746 = vmatpush.bf16.msra.mxu0 %v729
    %747 = vmatpush.bf16.msra.mxu0 %v728
    %748 = vmatpush.bf16.msra.mxu0 %v727
    %749 = vmatmul.bf16.gmra.mxu0 %v736
    %v750 = vpop.f32.mrf.mxu0
    %v751 = vadd.f32 0.0, %v750
    %v752 = vpop.f32.mrf.mxu0
    %v753 = vadd.f32 0.0, %v752
    %754 = vmatmul.bf16.gmra.mxu0 %v739
    %v755 = vpop.f32.mrf.mxu0
    %v756 = vadd.f32 0.0, %v755
    %v757 = vpop.f32.mrf.mxu0
    %v758 = vadd.f32 0.0, %v757
    %759 = vdwg.mxu0
    %v760 = vadd.f32 %v702, %v751
    %v761 = vadd.f32 %v704, %v753
    %v762 = vadd.f32 %v707, %v756
    %v763 = vadd.f32 %v709, %v758
    %v765 = vperm.slane %v354, 0
    %v767 = vmul.f32 %v760, %v765
    %v768 = vmul.f32 %v761, %v765
    %v769 = vmul.f32 %v762, %v765
    %v770 = vmul.f32 %v763, %v765
    %v772 = vperm.slane %v355, 0
    %v774 = vadd.f32 %v767, %v772
    %v775 = vadd.f32 %v768, %v772
    %v776 = vadd.f32 %v769, %v772
    %v777 = vadd.f32 %v770, %v772
    %v779 = vperm.slane %v364, 0
    %v789 = vunpack.c.l.b16 %v356
    %v790 = vunpack.c.l.b16 %v357
    %v791 = vunpack.c.l.b16 %v358
    %v792 = vunpack.c.l.b16 %v359
    %v793 = vunpack.c.l.b16 %v360
    %v794 = vunpack.c.l.b16 %v361
    %v795 = vunpack.c.l.b16 %v362
    %v796 = vunpack.c.l.b16 %v363
    %v797 = vpack.c.b16 %v790, %v789
    %v798 = vpack.c.b16 %v792, %v791
    %v799 = vpack.c.b16 %v794, %v793
    %v800 = vpack.c.b16 %v796, %v795
    %805 = vmatpush.bf16.msra.mxu0 0
    %806 = vmatpush.bf16.msra.mxu0 0
    %807 = vmatpush.bf16.msra.mxu0 0
    %808 = vmatpush.bf16.msra.mxu0 0
    %809 = vmatpush.bf16.msra.mxu0 %v800
    %810 = vmatpush.bf16.msra.mxu0 %v799
    %811 = vmatpush.bf16.msra.mxu0 %v798
    %812 = vmatpush.bf16.msra.mxu0 %v797
    %813 = vmatmul.bf16.gmra.mxu0 %v432
    %v814 = vpop.f32.mrf.mxu0
    %v815 = vadd.f32 %v779, %v814
    %v816 = vpop.f32.mrf.mxu0
    %v817 = vadd.f32 %v779, %v816
    %818 = vmatmul.bf16.gmra.mxu0 %v434
    %v819 = vpop.f32.mrf.mxu0
    %v820 = vadd.f32 %v779, %v819
    %v821 = vpop.f32.mrf.mxu0
    %v822 = vadd.f32 %v779, %v821
    %823 = vdwg.mxu0
    %v824 = vadd.f32 %v774, %v815
    %v825 = vadd.f32 %v775, %v817
    %v826 = vadd.f32 %v776, %v820
    %v827 = vadd.f32 %v777, %v822
    %v828 = vmax.f32 %v824, 0.0
    %v829 = vmax.f32 %v825, 0.0
    %v830 = vmax.f32 %v826, 0.0
    %v831 = vmax.f32 %v827, 0.0
    %v836 = vrot.slane %v828, 2
    %v837 = vrot.slane %v828, 4
    %v838 = vrot.slane %v828, 6
    %v839 = vrot.slane %v829, 2
    %v840 = vrot.slane %v829, 4
    %v841 = vrot.slane %v829, 6
    %v842 = vrot.slane %v830, 2
    %v843 = vrot.slane %v830, 4
    %v844 = vrot.slane %v830, 6
    %v845 = vrot.slane %v831, 2
    %v846 = vrot.slane %v831, 4
    %v847 = vrot.slane %v831, 6
    %vm860 = vcmask 517120
    %v861 = vsel %vm860, %v828, -inf
    %v862 = vrot.slane %v861, 4
    %v863 = vmax.f32 %v861, %v862
    %v864 = vrot.slane %v863, 2
    %v865 = vmax.f32 %v863, %v864
    %v866 = vrot.slane %v865, 1
    %v867 = vmax.f32 %v865, %v866
    %v868 = vsel %vm860, %v836, -inf
    %v869 = vrot.slane %v868, 4
    %v870 = vmax.f32 %v868, %v869
    %v871 = vrot.slane %v870, 2
    %v872 = vmax.f32 %v870, %v871
    %v873 = vrot.slane %v872, 1
    %v874 = vmax.f32 %v872, %v873
    %v875 = vsel %vm860, %v837, -inf
    %v876 = vrot.slane %v875, 4
    %v877 = vmax.f32 %v875, %v876
    %v878 = vrot.slane %v877, 2
    %v879 = vmax.f32 %v877, %v878
    %v880 = vrot.slane %v879, 1
    %v881 = vmax.f32 %v879, %v880
    %v882 = vsel %vm860, %v838, -inf
    %v883 = vrot.slane %v882, 4
    %v884 = vmax.f32 %v882, %v883
    %v885 = vrot.slane %v884, 2
    %v886 = vmax.f32 %v884, %v885
    %v887 = vrot.slane %v886, 1
    %v888 = vmax.f32 %v886, %v887
    %v889 = vsel %vm860, %v829, -inf
    %v890 = vrot.slane %v889, 4
    %v891 = vmax.f32 %v889, %v890
    %v892 = vrot.slane %v891, 2
    %v893 = vmax.f32 %v891, %v892
    %v894 = vrot.slane %v893, 1
    %v895 = vmax.f32 %v893, %v894
    %v896 = vsel %vm860, %v839, -inf
    %v897 = vrot.slane %v896, 4
    %v898 = vmax.f32 %v896, %v897
    %v899 = vrot.slane %v898, 2
    %v900 = vmax.f32 %v898, %v899
    %v901 = vrot.slane %v900, 1
    %v902 = vmax.f32 %v900, %v901
    %v903 = vsel %vm860, %v840, -inf
    %v904 = vrot.slane %v903, 4
    %v905 = vmax.f32 %v903, %v904
    %v906 = vrot.slane %v905, 2
    %v907 = vmax.f32 %v905, %v906
    %v908 = vrot.slane %v907, 1
    %v909 = vmax.f32 %v907, %v908
    %v910 = vsel %vm860, %v841, -inf
    %v911 = vrot.slane %v910, 4
    %v912 = vmax.f32 %v910, %v911
    %v913 = vrot.slane %v912, 2
    %v914 = vmax.f32 %v912, %v913
    %v915 = vrot.slane %v914, 1
    %v916 = vmax.f32 %v914, %v915
    %v917 = vsel %vm860, %v830, -inf
    %v918 = vrot.slane %v917, 4
    %v919 = vmax.f32 %v917, %v918
    %v920 = vrot.slane %v919, 2
    %v921 = vmax.f32 %v919, %v920
    %v922 = vrot.slane %v921, 1
    %v923 = vmax.f32 %v921, %v922
    %v924 = vsel %vm860, %v842, -inf
    %v925 = vrot.slane %v924, 4
    %v926 = vmax.f32 %v924, %v925
    %v927 = vrot.slane %v926, 2
    %v928 = vmax.f32 %v926, %v927
    %v929 = vrot.slane %v928, 1
    %v930 = vmax.f32 %v928, %v929
    %v931 = vsel %vm860, %v843, -inf
    %v932 = vrot.slane %v931, 4
    %v933 = vmax.f32 %v931, %v932
    %v934 = vrot.slane %v933, 2
    %v935 = vmax.f32 %v933, %v934
    %v936 = vrot.slane %v935, 1
    %v937 = vmax.f32 %v935, %v936
    %v938 = vsel %vm860, %v844, -inf
    %v939 = vrot.slane %v938, 4
    %v940 = vmax.f32 %v938, %v939
    %v941 = vrot.slane %v940, 2
    %v942 = vmax.f32 %v940, %v941
    %v943 = vrot.slane %v942, 1
    %v944 = vmax.f32 %v942, %v943
    %v945 = vsel %vm860, %v831, -inf
    %v946 = vrot.slane %v945, 4
    %v947 = vmax.f32 %v945, %v946
    %v948 = vrot.slane %v947, 2
    %v949 = vmax.f32 %v947, %v948
    %v950 = vrot.slane %v949, 1
    %v951 = vmax.f32 %v949, %v950
    %v952 = vsel %vm860, %v845, -inf
    %v953 = vrot.slane %v952, 4
    %v954 = vmax.f32 %v952, %v953
    %v955 = vrot.slane %v954, 2
    %v956 = vmax.f32 %v954, %v955
    %v957 = vrot.slane %v956, 1
    %v958 = vmax.f32 %v956, %v957
    %v959 = vsel %vm860, %v846, -inf
    %v960 = vrot.slane %v959, 4
    %v961 = vmax.f32 %v959, %v960
    %v962 = vrot.slane %v961, 2
    %v963 = vmax.f32 %v961, %v962
    %v964 = vrot.slane %v963, 1
    %v965 = vmax.f32 %v963, %v964
    %v966 = vsel %vm860, %v847, -inf
    %v967 = vrot.slane %v966, 4
    %v968 = vmax.f32 %v966, %v967
    %v969 = vrot.slane %v968, 2
    %v970 = vmax.f32 %v968, %v969
    %v971 = vrot.slane %v970, 1
    %v972 = vmax.f32 %v970, %v971
    %v973 = vpack.c.bf16 %v867, %v867
    %v974 = vpack.c.bf16 %v874, %v874
    %v975 = vpack.c.bf16 %v881, %v881
    %v976 = vpack.c.bf16 %v888, %v888
    %v977 = vpack.c.bf16 %v895, %v895
    %v978 = vpack.c.bf16 %v902, %v902
    %v979 = vpack.c.bf16 %v909, %v909
    %v980 = vpack.c.bf16 %v916, %v916
    %v981 = vpack.c.bf16 %v923, %v923
    %v982 = vpack.c.bf16 %v930, %v930
    %v983 = vpack.c.bf16 %v937, %v937
    %v984 = vpack.c.bf16 %v944, %v944
    %v985 = vpack.c.bf16 %v951, %v951
    %v986 = vpack.c.bf16 %v958, %v958
    %v987 = vpack.c.bf16 %v965, %v965
    %v988 = vpack.c.bf16 %v972, %v972
    %v989 = vld [vmem:[#allocation15] sm:$0xf]
    %v990 = vld [vmem:[#allocation15 + $0x4] sm:$0xf]
    %v991 = vld [vmem:[#allocation15 + $0x8] sm:$0xf]
    %v992 = vld [vmem:[#allocation15 + $0xc] sm:$0xf]
    %v993 = vld [vmem:[#allocation15 + $0x10] sm:$0xf]
    %v994 = vld [vmem:[#allocation15 + $0x14] sm:$0xf]
    %v995 = vld [vmem:[#allocation15 + $0x18] sm:$0xf]
    %v996 = vld [vmem:[#allocation15 + $0x1c] sm:$0xf]
    %v997 = vld [vmem:[#allocation15 + $0x20] sm:$0xf]
    %v998 = vld [vmem:[#allocation15 + $0x24] sm:$0xf]
    %v999 = vld [vmem:[#allocation15 + $0x28] sm:$0xf]
    %v1000 = vld [vmem:[#allocation15 + $0x2c] sm:$0xf]
    %v1001 = vld [vmem:[#allocation15 + $0x30] sm:$0xf]
    %v1002 = vld [vmem:[#allocation15 + $0x34] sm:$0xf]
    %v1003 = vld [vmem:[#allocation15 + $0x38] sm:$0xf]
    %v1004 = vld [vmem:[#allocation15 + $0x3c] sm:$0xf]
    %v1005 = vld [vmem:[#allocation15 + $0x40] sm:$0xf]
    %v1006 = vld [vmem:[#allocation15 + $0x44] sm:$0xf]
    %v1007 = vld [vmem:[#allocation15 + $0x48] sm:$0xf]
    %v1008 = vld [vmem:[#allocation15 + $0x4c] sm:$0xf]
    %v1009 = vld [vmem:[#allocation15 + $0x50] sm:$0xf]
    %v1010 = vld [vmem:[#allocation15 + $0x54] sm:$0xf]
    %v1011 = vld [vmem:[#allocation15 + $0x58] sm:$0xf]
    %v1012 = vld [vmem:[#allocation15 + $0x5c] sm:$0xf]
    %v1013 = vld [vmem:[#allocation16] sm:$0x1]
    %v1014 = vld [vmem:[#allocation18] sm:$0x1]
    %v1015 = vld [vmem:[#allocation19] sm:$0xf]
    %v1016 = vld [vmem:[#allocation19 + $0x4] sm:$0xf]
    %v1017 = vld [vmem:[#allocation19 + $0x8] sm:$0xf]
    %v1018 = vld [vmem:[#allocation19 + $0xc] sm:$0xf]
    %v1019 = vld [vmem:[#allocation19 + $0x10] sm:$0xf]
    %v1020 = vld [vmem:[#allocation19 + $0x14] sm:$0xf]
    %v1021 = vld [vmem:[#allocation19 + $0x18] sm:$0xf]
    %v1022 = vld [vmem:[#allocation19 + $0x1c] sm:$0xf]
    %v1023 = vld [vmem:[#allocation19 + $0x20] sm:$0xf]
    %v1024 = vld [vmem:[#allocation19 + $0x24] sm:$0xf]
    %v1025 = vld [vmem:[#allocation19 + $0x28] sm:$0xf]
    %v1026 = vld [vmem:[#allocation19 + $0x2c] sm:$0xf]
    %v1027 = vld [vmem:[#allocation19 + $0x30] sm:$0xf]
    %v1028 = vld [vmem:[#allocation19 + $0x34] sm:$0xf]
    %v1029 = vld [vmem:[#allocation19 + $0x38] sm:$0xf]
    %v1030 = vld [vmem:[#allocation19 + $0x3c] sm:$0xf]
    %v1031 = vld [vmem:[#allocation19 + $0x40] sm:$0xf]
    %v1032 = vld [vmem:[#allocation19 + $0x44] sm:$0xf]
    %v1033 = vld [vmem:[#allocation19 + $0x48] sm:$0xf]
    %v1034 = vld [vmem:[#allocation19 + $0x4c] sm:$0xf]
    %v1035 = vld [vmem:[#allocation19 + $0x50] sm:$0xf]
    %v1036 = vld [vmem:[#allocation19 + $0x54] sm:$0xf]
    %v1037 = vld [vmem:[#allocation19 + $0x58] sm:$0xf]
    %v1038 = vld [vmem:[#allocation19 + $0x5c] sm:$0xf]
    %v1039 = vld [vmem:[#allocation19 + $0x60] sm:$0xf]
    %v1040 = vld [vmem:[#allocation19 + $0x64] sm:$0xf]
    %v1041 = vld [vmem:[#allocation19 + $0x68] sm:$0xf]
    %v1042 = vld [vmem:[#allocation19 + $0x6c] sm:$0xf]
    %v1043 = vld [vmem:[#allocation19 + $0x70] sm:$0xf]
    %v1044 = vld [vmem:[#allocation19 + $0x74] sm:$0xf]
    %v1045 = vld [vmem:[#allocation19 + $0x78] sm:$0xf]
    %v1046 = vld [vmem:[#allocation19 + $0x7c] sm:$0xf]
    %v1047 = vld [vmem:[#allocation19 + $0x80] sm:$0xf]
    %v1048 = vld [vmem:[#allocation19 + $0x84] sm:$0xf]
    %v1049 = vld [vmem:[#allocation19 + $0x88] sm:$0xf]
    %v1050 = vld [vmem:[#allocation19 + $0x8c] sm:$0xf]
    %v1051 = vld [vmem:[#allocation19 + $0x90] sm:$0xf]
    %v1052 = vld [vmem:[#allocation19 + $0x94] sm:$0xf]
    %v1053 = vld [vmem:[#allocation19 + $0x98] sm:$0xf]
    %v1054 = vld [vmem:[#allocation19 + $0x9c] sm:$0xf]
    %v1055 = vld [vmem:[#allocation19 + $0xa0] sm:$0xf]
    %v1056 = vld [vmem:[#allocation19 + $0xa4] sm:$0xf]
    %v1057 = vld [vmem:[#allocation19 + $0xa8] sm:$0xf]
    %v1058 = vld [vmem:[#allocation19 + $0xac] sm:$0xf]
    %v1059 = vld [vmem:[#allocation19 + $0xb0] sm:$0xf]
    %v1060 = vld [vmem:[#allocation19 + $0xb4] sm:$0xf]
    %v1061 = vld [vmem:[#allocation19 + $0xb8] sm:$0xf]
    %v1062 = vld [vmem:[#allocation19 + $0xbc] sm:$0xf]
    %v1063 = vld [vmem:[%s13] sm:$0x1]
    %v1064 = vld [vmem:[%s14] sm:$0x1]
    %v1065 = vld [vmem:[%s15] sm:$0xf]
    %v1066 = vld [vmem:[%s15 + $0x4] sm:$0xf]
    %v1067 = vld [vmem:[%s15 + $0x8] sm:$0xf]
    %v1068 = vld [vmem:[%s15 + $0xc] sm:$0xf]
    %v1069 = vld [vmem:[%s15 + $0x10] sm:$0xf]
    %v1070 = vld [vmem:[%s15 + $0x14] sm:$0xf]
    %v1071 = vld [vmem:[%s15 + $0x18] sm:$0xf]
    %v1072 = vld [vmem:[%s15 + $0x1c] sm:$0xf]
    %v1073 = vld [vmem:[%s16] sm:$0x1]
    %v1088 = vperm.slane %v973, 0
    %v1089 = vperm.slane %v974, 0
    %v1090 = vperm.slane %v975, 0
    %v1091 = vperm.slane %v976, 0
    %v1092 = vperm.slane %v977, 0
    %v1093 = vperm.slane %v978, 0
    %v1094 = vperm.slane %v979, 0
    %v1095 = vperm.slane %v981, 0
    %v1096 = vperm.slane %v982, 0
    %v1097 = vperm.slane %v983, 0
    %v1098 = vperm.slane %v984, 0
    %v1099 = vperm.slane %v985, 0
    %v1100 = vperm.slane %v986, 0
    %v1101 = vperm.slane %v987, 0
    %v1102 = vunpack.c.l.b16 %v1088
    %v1103 = vunpack.c.l.b16 %v1089
    %v1104 = vunpack.c.l.b16 %v1090
    %v1105 = vunpack.c.l.b16 %v1091
    %v1106 = vunpack.c.l.b16 %v1092
    %v1107 = vunpack.c.l.b16 %v1093
    %v1108 = vunpack.c.l.b16 %v1094
    %v1109 = vunpack.c.l.b16 %v1095
    %v1110 = vunpack.c.l.b16 %v1096
    %v1111 = vunpack.c.l.b16 %v1097
    %v1112 = vunpack.c.l.b16 %v1098
    %v1113 = vunpack.c.l.b16 %v1099
    %v1114 = vunpack.c.l.b16 %v1100
    %v1115 = vunpack.c.l.b16 %v1101
    %vm1116 = vcmask 1042434
    %v1117 = vsel %vm1116, %v1103, %v1102
    %vm1118 = vcmask 1043459
    %v1119 = vsel %vm1118, %v1104, %v1117
    %vm1120 = vcmask 1044484
    %v1121 = vsel %vm1120, %v1105, %v1119
    %vm1122 = vcmask 1045509
    %v1123 = vsel %vm1122, %v1106, %v1121
    %vm1124 = vcmask 1046534
    %v1125 = vsel %vm1124, %v1107, %v1123
    %vm1126 = vcmask 1047559
    %v1127 = vsel %vm1126, %v1108, %v1125
    %v1128 = vsel %vm1116, %v1110, %v1109
    %v1129 = vsel %vm1118, %v1111, %v1128
    %v1130 = vsel %vm1120, %v1112, %v1129
    %v1131 = vsel %vm1122, %v1113, %v1130
    %v1132 = vsel %vm1124, %v1114, %v1131
    %v1133 = vsel %vm1126, %v1115, %v1132
    %v1134 = vpack.c.b16 %v1127, %v1127
    %v1135 = vpack.c.b16 %v1133, %v1133
    %v1138 = vsel %vm393, 0, %v1134
    %v1139 = vsel %vm393, 0, %v1135
    %v1142 = vperm.slane %v980, 0
    %v1143 = vperm.slane %v988, 0
    %v1144 = vunpack.c.l.b16 %v1142
    %v1145 = vunpack.c.l.b16 %v1143
    %vm1146 = vcmask 1041409
    %v1147 = vsel %vm1146, %v1104, %v1103
    %v1148 = vsel %vm1116, %v1105, %v1147
    %v1149 = vsel %vm1118, %v1106, %v1148
    %v1150 = vsel %vm1120, %v1107, %v1149
    %v1151 = vsel %vm1122, %v1108, %v1150
    %v1152 = vsel %vm1124, %v1144, %v1151
    %v1153 = vsel %vm1146, %v1111, %v1110
    %v1154 = vsel %vm1116, %v1112, %v1153
    %v1155 = vsel %vm1118, %v1113, %v1154
    %v1156 = vsel %vm1120, %v1114, %v1155
    %v1157 = vsel %vm1122, %v1115, %v1156
    %v1158 = vsel %vm1124, %v1145, %v1157
    %v1159 = vpack.c.b16 %v1152, %v1152
    %v1160 = vpack.c.b16 %v1158, %v1158
    %vm1163 = vcmask 1043456
    %vm1164 = vsmask.f32 3328
    %vm1165 = vmand %vm1163, %vm1164
    %v1166 = vsel %vm1165, %v1159, 0
    %v1167 = vsel %vm1165, %v1160, 0
    %v1168 = vsel %vm1146, %v1103, %v1102
    %v1169 = vsel %vm1116, %v1104, %v1168
    %v1170 = vsel %vm1118, %v1105, %v1169
    %v1171 = vsel %vm1120, %v1106, %v1170
    %v1172 = vsel %vm1122, %v1107, %v1171
    %v1173 = vsel %vm1124, %v1108, %v1172
    %v1174 = vsel %vm1126, %v1144, %v1173
    %v1175 = vsel %vm1146, %v1110, %v1109
    %v1176 = vsel %vm1116, %v1111, %v1175
    %v1177 = vsel %vm1118, %v1112, %v1176
    %v1178 = vsel %vm1120, %v1113, %v1177
    %v1179 = vsel %vm1122, %v1114, %v1178
    %v1180 = vsel %vm1124, %v1115, %v1179
    %v1181 = vsel %vm1126, %v1145, %v1180
    %v1182 = vpack.c.b16 %v1181, %v1174
    %v1191 = vunpack.c.l.b16 %v997
    %v1192 = vunpack.c.l.b16 %v998
    %v1193 = vunpack.c.l.b16 %v999
    %v1194 = vunpack.c.l.b16 %v1000
    %v1195 = vunpack.c.l.b16 %v1001
    %v1196 = vunpack.c.l.b16 %v1002
    %v1197 = vunpack.c.l.b16 %v1003
    %v1198 = vunpack.c.l.b16 %v1004
    %v1199 = vpack.c.b16 %v1192, %v1191
    %v1200 = vpack.c.b16 %v1194, %v1193
    %v1201 = vpack.c.b16 %v1196, %v1195
    %v1202 = vpack.c.b16 %v1198, %v1197
    %v1208 = vsel %vm431, %v1182, 0
    %1210 = vmatpush.bf16.msra.mxu0 0
    %1211 = vmatpush.bf16.msra.mxu0 0
    %1212 = vmatpush.bf16.msra.mxu0 0
    %1213 = vmatpush.bf16.msra.mxu0 0
    %1214 = vmatpush.bf16.msra.mxu0 %v1202
    %1215 = vmatpush.bf16.msra.mxu0 %v1201
    %1216 = vmatpush.bf16.msra.mxu0 %v1200
    %1217 = vmatpush.bf16.msra.mxu0 %v1199
    %1218 = vmatmul.bf16.gmra.mxu0 %v1208
    %v1219 = vpop.f32.mrf.mxu0
    %v1220 = vadd.f32 0.0, %v1219
    %v1221 = vpop.f32.mrf.mxu0
    %v1222 = vadd.f32 0.0, %v1221
    %1223 = vdwg.mxu0
    %v1226 = vunpack.c.l.b16 %v1138
    %v1227 = vunpack.c.l.b16 %v1139
    %v1228 = vpack.c.b16 %v1227, %v1226
    %v1237 = vunpack.c.l.b16 %v989
    %v1238 = vunpack.c.l.b16 %v990
    %v1239 = vunpack.c.l.b16 %v991
    %v1240 = vunpack.c.l.b16 %v992
    %v1241 = vunpack.c.l.b16 %v993
    %v1242 = vunpack.c.l.b16 %v994
    %v1243 = vunpack.c.l.b16 %v995
    %v1244 = vunpack.c.l.b16 %v996
    %v1245 = vpack.c.b16 %v1238, %v1237
    %v1246 = vpack.c.b16 %v1240, %v1239
    %v1247 = vpack.c.b16 %v1242, %v1241
    %v1248 = vpack.c.b16 %v1244, %v1243
    %v1254 = vsel %vm431, %v1228, 0
    %1256 = vmatpush.bf16.msra.mxu0 0
    %1257 = vmatpush.bf16.msra.mxu0 0
    %1258 = vmatpush.bf16.msra.mxu0 0
    %1259 = vmatpush.bf16.msra.mxu0 0
    %1260 = vmatpush.bf16.msra.mxu0 %v1248
    %1261 = vmatpush.bf16.msra.mxu0 %v1247
    %1262 = vmatpush.bf16.msra.mxu0 %v1246
    %1263 = vmatpush.bf16.msra.mxu0 %v1245
    %1264 = vmatmul.bf16.gmra.mxu0 %v1254
    %v1265 = vpop.f32.mrf.mxu0
    %v1266 = vadd.f32 %v1220, %v1265
    %v1267 = vpop.f32.mrf.mxu0
    %v1268 = vadd.f32 %v1222, %v1267
    %1269 = vdwg.mxu0
    %v1272 = vunpack.c.l.b16 %v1166
    %v1273 = vunpack.c.l.b16 %v1167
    %v1274 = vpack.c.b16 %v1273, %v1272
    %v1283 = vunpack.c.l.b16 %v1005
    %v1284 = vunpack.c.l.b16 %v1006
    %v1285 = vunpack.c.l.b16 %v1007
    %v1286 = vunpack.c.l.b16 %v1008
    %v1287 = vunpack.c.l.b16 %v1009
    %v1288 = vunpack.c.l.b16 %v1010
    %v1289 = vunpack.c.l.b16 %v1011
    %v1290 = vunpack.c.l.b16 %v1012
    %v1291 = vpack.c.b16 %v1284, %v1283
    %v1292 = vpack.c.b16 %v1286, %v1285
    %v1293 = vpack.c.b16 %v1288, %v1287
    %v1294 = vpack.c.b16 %v1290, %v1289
    %v1300 = vsel %vm431, %v1274, 0
    %1302 = vmatpush.bf16.msra.mxu0 0
    %1303 = vmatpush.bf16.msra.mxu0 0
    %1304 = vmatpush.bf16.msra.mxu0 0
    %1305 = vmatpush.bf16.msra.mxu0 0
    %1306 = vmatpush.bf16.msra.mxu0 %v1294
    %1307 = vmatpush.bf16.msra.mxu0 %v1293
    %1308 = vmatpush.bf16.msra.mxu0 %v1292
    %1309 = vmatpush.bf16.msra.mxu0 %v1291
    %1310 = vmatmul.bf16.gmra.mxu0 %v1300
    %v1311 = vpop.f32.mrf.mxu0
    %v1312 = vadd.f32 0.0, %v1311
    %v1313 = vpop.f32.mrf.mxu0
    %v1314 = vadd.f32 0.0, %v1313
    %1315 = vdwg.mxu0
    %v1316 = vadd.f32 %v1266, %v1312
    %v1317 = vadd.f32 %v1268, %v1314
    %v1319 = vperm.slane %v1013, 0
    %v1321 = vmul.f32 %v1316, %v1319
    %v1322 = vmul.f32 %v1317, %v1319
    %v1324 = vperm.slane %v1014, 0
    %v1326 = vadd.f32 %v1321, %v1324
    %v1327 = vadd.f32 %v1322, %v1324
    %v1328 = vmax.f32 %v1326, 0.0
    %v1329 = vmax.f32 %v1327, 0.0
    %v1330 = vpack.c.bf16 %v1328, %v1328
    %v1331 = vpack.c.bf16 %v1329, %v1329
    %v1334 = vunpack.c.l.b16 %v1330
    %v1335 = vunpack.c.l.b16 %v1331
    %v1336 = vpack.c.b16 %v1334, %v1334
    %v1337 = vpack.c.b16 %v1335, %v1335
    %v1339 = vshrl.u32 %v1336, 16
    %v1341 = vrot.slane %v1339, 7
    %v1342 = vshll.u32 %v1336, 16
    %v1344 = vor.u32 %v1341, %v1342
    %v1346 = vshrl.u32 %v1337, 16
    %v1348 = vrot.slane %v1346, 7
    %v1349 = vshll.u32 %v1337, 16
    %v1351 = vor.u32 %v1348, %v1349
    %v1354 = vsel %vm393, 0, %v1344
    %v1355 = vsel %vm393, 0, %v1351
    %v1356 = vrot.slane %v1342, 1
    %v1357 = vor.u32 %v1339, %v1356
    %v1358 = vrot.slane %v1349, 1
    %v1359 = vor.u32 %v1346, %v1358
    %v1362 = vsel %vm1165, %v1357, 0
    %v1363 = vsel %vm1165, %v1359, 0
    %v1364 = vpack.c.b16 %v1335, %v1334
    %v1382 = vunpack.c.l.b16 %v1031
    %v1383 = vunpack.c.l.b16 %v1032
    %v1384 = vunpack.c.l.b16 %v1033
    %v1385 = vunpack.c.l.b16 %v1034
    %v1386 = vunpack.c.l.b16 %v1035
    %v1387 = vunpack.c.l.b16 %v1036
    %v1388 = vunpack.c.l.b16 %v1037
    %v1389 = vunpack.c.l.b16 %v1038
    %v1390 = vunpack.c.l.b16 %v1039
    %v1391 = vunpack.c.l.b16 %v1040
    %v1392 = vunpack.c.l.b16 %v1041
    %v1393 = vunpack.c.l.b16 %v1042
    %v1394 = vunpack.c.l.b16 %v1043
    %v1395 = vunpack.c.l.b16 %v1044
    %v1396 = vunpack.c.l.b16 %v1045
    %v1397 = vunpack.c.l.b16 %v1046
    %v1398 = vpack.c.b16 %v1383, %v1382
    %v1399 = vpack.c.b16 %v1385, %v1384
    %v1400 = vpack.c.b16 %v1387, %v1386
    %v1401 = vpack.c.b16 %v1389, %v1388
    %v1402 = vpack.c.b16 %v1391, %v1390
    %v1403 = vpack.c.b16 %v1393, %v1392
    %v1404 = vpack.c.b16 %v1395, %v1394
    %v1405 = vpack.c.b16 %v1397, %v1396
    %1414 = vmatpush.bf16.msra.mxu0 %v1405
    %1415 = vmatpush.bf16.msra.mxu0 %v1404
    %1416 = vmatpush.bf16.msra.mxu0 %v1403
    %1417 = vmatpush.bf16.msra.mxu0 %v1402
    %1418 = vmatpush.bf16.msra.mxu0 %v1401
    %1419 = vmatpush.bf16.msra.mxu0 %v1400
    %1420 = vmatpush.bf16.msra.mxu0 %v1399
    %1421 = vmatpush.bf16.msra.mxu0 %v1398
    %1422 = vmatmul.bf16.gmra.mxu0 %v1364
    %v1423 = vpop.f32.mrf.mxu0
    %v1424 = vadd.f32 0.0, %v1423
    %v1425 = vpop.f32.mrf.mxu0
    %v1426 = vadd.f32 0.0, %v1425
    %1427 = vdwg.mxu0
    %v1430 = vunpack.c.l.b16 %v1354
    %v1431 = vunpack.c.l.b16 %v1355
    %v1432 = vpack.c.b16 %v1431, %v1430
    %v1450 = vunpack.c.l.b16 %v1015
    %v1451 = vunpack.c.l.b16 %v1016
    %v1452 = vunpack.c.l.b16 %v1017
    %v1453 = vunpack.c.l.b16 %v1018
    %v1454 = vunpack.c.l.b16 %v1019
    %v1455 = vunpack.c.l.b16 %v1020
    %v1456 = vunpack.c.l.b16 %v1021
    %v1457 = vunpack.c.l.b16 %v1022
    %v1458 = vunpack.c.l.b16 %v1023
    %v1459 = vunpack.c.l.b16 %v1024
    %v1460 = vunpack.c.l.b16 %v1025
    %v1461 = vunpack.c.l.b16 %v1026
    %v1462 = vunpack.c.l.b16 %v1027
    %v1463 = vunpack.c.l.b16 %v1028
    %v1464 = vunpack.c.l.b16 %v1029
    %v1465 = vunpack.c.l.b16 %v1030
    %v1466 = vpack.c.b16 %v1451, %v1450
    %v1467 = vpack.c.b16 %v1453, %v1452
    %v1468 = vpack.c.b16 %v1455, %v1454
    %v1469 = vpack.c.b16 %v1457, %v1456
    %v1470 = vpack.c.b16 %v1459, %v1458
    %v1471 = vpack.c.b16 %v1461, %v1460
    %v1472 = vpack.c.b16 %v1463, %v1462
    %v1473 = vpack.c.b16 %v1465, %v1464
    %1482 = vmatpush.bf16.msra.mxu0 %v1473
    %1483 = vmatpush.bf16.msra.mxu0 %v1472
    %1484 = vmatpush.bf16.msra.mxu0 %v1471
    %1485 = vmatpush.bf16.msra.mxu0 %v1470
    %1486 = vmatpush.bf16.msra.mxu0 %v1469
    %1487 = vmatpush.bf16.msra.mxu0 %v1468
    %1488 = vmatpush.bf16.msra.mxu0 %v1467
    %1489 = vmatpush.bf16.msra.mxu0 %v1466
    %1490 = vmatmul.bf16.gmra.mxu0 %v1432
    %v1491 = vpop.f32.mrf.mxu0
    %v1492 = vadd.f32 %v1424, %v1491
    %v1493 = vpop.f32.mrf.mxu0
    %v1494 = vadd.f32 %v1426, %v1493
    %1495 = vdwg.mxu0
    %v1498 = vunpack.c.l.b16 %v1362
    %v1499 = vunpack.c.l.b16 %v1363
    %v1500 = vpack.c.b16 %v1499, %v1498
    %v1518 = vunpack.c.l.b16 %v1047
    %v1519 = vunpack.c.l.b16 %v1048
    %v1520 = vunpack.c.l.b16 %v1049
    %v1521 = vunpack.c.l.b16 %v1050
    %v1522 = vunpack.c.l.b16 %v1051
    %v1523 = vunpack.c.l.b16 %v1052
    %v1524 = vunpack.c.l.b16 %v1053
    %v1525 = vunpack.c.l.b16 %v1054
    %v1526 = vunpack.c.l.b16 %v1055
    %v1527 = vunpack.c.l.b16 %v1056
    %v1528 = vunpack.c.l.b16 %v1057
    %v1529 = vunpack.c.l.b16 %v1058
    %v1530 = vunpack.c.l.b16 %v1059
    %v1531 = vunpack.c.l.b16 %v1060
    %v1532 = vunpack.c.l.b16 %v1061
    %v1533 = vunpack.c.l.b16 %v1062
    %v1534 = vpack.c.b16 %v1519, %v1518
    %v1535 = vpack.c.b16 %v1521, %v1520
    %v1536 = vpack.c.b16 %v1523, %v1522
    %v1537 = vpack.c.b16 %v1525, %v1524
    %v1538 = vpack.c.b16 %v1527, %v1526
    %v1539 = vpack.c.b16 %v1529, %v1528
    %v1540 = vpack.c.b16 %v1531, %v1530
    %v1541 = vpack.c.b16 %v1533, %v1532
    %1550 = vmatpush.bf16.msra.mxu0 %v1541
    %1551 = vmatpush.bf16.msra.mxu0 %v1540
    %1552 = vmatpush.bf16.msra.mxu0 %v1539
    %1553 = vmatpush.bf16.msra.mxu0 %v1538
    %1554 = vmatpush.bf16.msra.mxu0 %v1537
    %1555 = vmatpush.bf16.msra.mxu0 %v1536
    %1556 = vmatpush.bf16.msra.mxu0 %v1535
    %1557 = vmatpush.bf16.msra.mxu0 %v1534
    %1558 = vmatmul.bf16.gmra.mxu0 %v1500
    %v1559 = vpop.f32.mrf.mxu0
    %v1560 = vadd.f32 0.0, %v1559
    %v1561 = vpop.f32.mrf.mxu0
    %v1562 = vadd.f32 0.0, %v1561
    %1563 = vdwg.mxu0
    %v1564 = vadd.f32 %v1492, %v1560
    %v1565 = vadd.f32 %v1494, %v1562
    %v1567 = vperm.slane %v1063, 0
    %v1569 = vmul.f32 %v1564, %v1567
    %v1570 = vmul.f32 %v1565, %v1567
    %v1572 = vperm.slane %v1064, 0
    %v1574 = vadd.f32 %v1569, %v1572
    %v1575 = vadd.f32 %v1570, %v1572
    %v1577 = vperm.slane %v1073, 0
    %v1587 = vunpack.c.l.b16 %v1065
    %v1588 = vunpack.c.l.b16 %v1066
    %v1589 = vunpack.c.l.b16 %v1067
    %v1590 = vunpack.c.l.b16 %v1068
    %v1591 = vunpack.c.l.b16 %v1069
    %v1592 = vunpack.c.l.b16 %v1070
    %v1593 = vunpack.c.l.b16 %v1071
    %v1594 = vunpack.c.l.b16 %v1072
    %v1595 = vpack.c.b16 %v1588, %v1587
    %v1596 = vpack.c.b16 %v1590, %v1589
    %v1597 = vpack.c.b16 %v1592, %v1591
    %v1598 = vpack.c.b16 %v1594, %v1593
    %1603 = vmatpush.bf16.msra.mxu0 0
    %1604 = vmatpush.bf16.msra.mxu0 0
    %1605 = vmatpush.bf16.msra.mxu0 0
    %1606 = vmatpush.bf16.msra.mxu0 0
    %1607 = vmatpush.bf16.msra.mxu0 %v1598
    %1608 = vmatpush.bf16.msra.mxu0 %v1597
    %1609 = vmatpush.bf16.msra.mxu0 %v1596
    %1610 = vmatpush.bf16.msra.mxu0 %v1595
    %1611 = vmatmul.bf16.gmra.mxu0 %v1208
    %v1612 = vpop.f32.mrf.mxu0
    %v1613 = vadd.f32 %v1577, %v1612
    %v1614 = vpop.f32.mrf.mxu0
    %v1615 = vadd.f32 %v1577, %v1614
    %1616 = vdwg.mxu0
    %v1617 = vadd.f32 %v1574, %v1613
    %v1618 = vadd.f32 %v1575, %v1615
    %v1619 = vmax.f32 %v1617, 0.0
    %v1620 = vmax.f32 %v1618, 0.0
    %v1623 = vrot.slane %v1619, 2
    %v1624 = vrot.slane %v1619, 4
    %v1625 = vrot.slane %v1619, 6
    %v1626 = vrot.slane %v1620, 2
    %v1627 = vrot.slane %v1620, 4
    %v1628 = vrot.slane %v1620, 6
    %vm1635 = vcmask 1041408
    %v1636 = vsel %vm1635, %v1619, -inf
    %v1637 = vrot.slane %v1636, 4
    %v1638 = vmax.f32 %v1636, %v1637
    %v1639 = vrot.slane %v1638, 2
    %v1640 = vmax.f32 %v1638, %v1639
    %v1641 = vrot.slane %v1640, 1
    %v1642 = vmax.f32 %v1640, %v1641
    %v1643 = vsel %vm1635, %v1623, -inf
    %v1644 = vrot.slane %v1643, 4
    %v1645 = vmax.f32 %v1643, %v1644
    %v1646 = vrot.slane %v1645, 2
    %v1647 = vmax.f32 %v1645, %v1646
    %v1648 = vrot.slane %v1647, 1
    %v1649 = vmax.f32 %v1647, %v1648
    %v1650 = vsel %vm1635, %v1624, -inf
    %v1651 = vrot.slane %v1650, 4
    %v1652 = vmax.f32 %v1650, %v1651
    %v1653 = vrot.slane %v1652, 2
    %v1654 = vmax.f32 %v1652, %v1653
    %v1655 = vrot.slane %v1654, 1
    %v1656 = vmax.f32 %v1654, %v1655
    %v1657 = vsel %vm1635, %v1625, -inf
    %v1658 = vrot.slane %v1657, 4
    %v1659 = vmax.f32 %v1657, %v1658
    %v1660 = vrot.slane %v1659, 2
    %v1661 = vmax.f32 %v1659, %v1660
    %v1662 = vrot.slane %v1661, 1
    %v1663 = vmax.f32 %v1661, %v1662
    %v1664 = vsel %vm1635, %v1620, -inf
    %v1665 = vrot.slane %v1664, 4
    %v1666 = vmax.f32 %v1664, %v1665
    %v1667 = vrot.slane %v1666, 2
    %v1668 = vmax.f32 %v1666, %v1667
    %v1669 = vrot.slane %v1668, 1
    %v1670 = vmax.f32 %v1668, %v1669
    %v1671 = vsel %vm1635, %v1626, -inf
    %v1672 = vrot.slane %v1671, 4
    %v1673 = vmax.f32 %v1671, %v1672
    %v1674 = vrot.slane %v1673, 2
    %v1675 = vmax.f32 %v1673, %v1674
    %v1676 = vrot.slane %v1675, 1
    %v1677 = vmax.f32 %v1675, %v1676
    %v1678 = vsel %vm1635, %v1627, -inf
    %v1679 = vrot.slane %v1678, 4
    %v1680 = vmax.f32 %v1678, %v1679
    %v1681 = vrot.slane %v1680, 2
    %v1682 = vmax.f32 %v1680, %v1681
    %v1683 = vrot.slane %v1682, 1
    %v1684 = vmax.f32 %v1682, %v1683
    %v1685 = vsel %vm1635, %v1628, -inf
    %v1686 = vrot.slane %v1685, 4
    %v1687 = vmax.f32 %v1685, %v1686
    %v1688 = vrot.slane %v1687, 2
    %v1689 = vmax.f32 %v1687, %v1688
    %v1690 = vrot.slane %v1689, 1
    %v1691 = vmax.f32 %v1689, %v1690
    %v1692 = vpack.c.bf16 %v1642, %v1642
    %v1693 = vpack.c.bf16 %v1649, %v1649
    %v1694 = vpack.c.bf16 %v1656, %v1656
    %v1695 = vpack.c.bf16 %v1663, %v1663
    %v1696 = vpack.c.bf16 %v1670, %v1670
    %v1697 = vpack.c.bf16 %v1677, %v1677
    %v1698 = vpack.c.bf16 %v1684, %v1684
    %v1699 = vpack.c.bf16 %v1691, %v1691
    %v1700 = vld [vmem:[#allocation21] sm:$0xff]
    %v1701 = vld [vmem:[#allocation21 + $0x8] sm:$0xff]
    %v1702 = vld [vmem:[#allocation21 + $0x10] sm:$0xff]
    %v1703 = vld [vmem:[#allocation21 + $0x18] sm:$0xff]
    %v1704 = vld [vmem:[#allocation21 + $0x20] sm:$0xff]
    %v1705 = vld [vmem:[#allocation21 + $0x28] sm:$0xff]
    %v1706 = vld [vmem:[#allocation21 + $0x30] sm:$0xff]
    %v1707 = vld [vmem:[#allocation21 + $0x38] sm:$0xff]
    %v1708 = vld [vmem:[#allocation21 + $0x40] sm:$0xff]
    %v1709 = vld [vmem:[#allocation21 + $0x48] sm:$0xff]
    %v1710 = vld [vmem:[#allocation21 + $0x50] sm:$0xff]
    %v1711 = vld [vmem:[#allocation21 + $0x58] sm:$0xff]
    %v1712 = vld [vmem:[#allocation21 + $0x60] sm:$0xff]
    %v1713 = vld [vmem:[#allocation21 + $0x68] sm:$0xff]
    %v1714 = vld [vmem:[#allocation21 + $0x70] sm:$0xff]
    %v1715 = vld [vmem:[#allocation21 + $0x78] sm:$0xff]
    %v1716 = vld [vmem:[#allocation21 + $0x80] sm:$0xff]
    %v1717 = vld [vmem:[#allocation21 + $0x88] sm:$0xff]
    %v1718 = vld [vmem:[#allocation21 + $0x90] sm:$0xff]
    %v1719 = vld [vmem:[#allocation21 + $0x98] sm:$0xff]
    %v1720 = vld [vmem:[#allocation21 + $0xa0] sm:$0xff]
    %v1721 = vld [vmem:[#allocation21 + $0xa8] sm:$0xff]
    %v1722 = vld [vmem:[#allocation21 + $0xb0] sm:$0xff]
    %v1723 = vld [vmem:[#allocation21 + $0xb8] sm:$0xff]
    %v1724 = vld [vmem:[#allocation21 + $0xc0] sm:$0xff]
    %v1725 = vld [vmem:[#allocation21 + $0xc8] sm:$0xff]
    %v1726 = vld [vmem:[#allocation21 + $0xd0] sm:$0xff]
    %v1727 = vld [vmem:[#allocation21 + $0xd8] sm:$0xff]
    %v1728 = vld [vmem:[#allocation21 + $0xe0] sm:$0xff]
    %v1729 = vld [vmem:[#allocation21 + $0xe8] sm:$0xff]
    %v1730 = vld [vmem:[#allocation21 + $0xf0] sm:$0xff]
    %v1731 = vld [vmem:[#allocation21 + $0xf8] sm:$0xff]
    %v1732 = vld [vmem:[#allocation21 + $0x100] sm:$0xff]
    %v1733 = vld [vmem:[#allocation21 + $0x108] sm:$0xff]
    %v1734 = vld [vmem:[#allocation21 + $0x110] sm:$0xff]
    %v1735 = vld [vmem:[#allocation21 + $0x118] sm:$0xff]
    %v1736 = vld [vmem:[#allocation21 + $0x120] sm:$0xff]
    %v1737 = vld [vmem:[#allocation21 + $0x128] sm:$0xff]
    %v1738 = vld [vmem:[#allocation21 + $0x130] sm:$0xff]
    %v1739 = vld [vmem:[#allocation21 + $0x138] sm:$0xff]
    %v1740 = vld [vmem:[#allocation21 + $0x140] sm:$0xff]
    %v1741 = vld [vmem:[#allocation21 + $0x148] sm:$0xff]
    %v1742 = vld [vmem:[#allocation21 + $0x150] sm:$0xff]
    %v1743 = vld [vmem:[#allocation21 + $0x158] sm:$0xff]
    %v1744 = vld [vmem:[#allocation21 + $0x160] sm:$0xff]
    %v1745 = vld [vmem:[#allocation21 + $0x168] sm:$0xff]
    %v1746 = vld [vmem:[#allocation21 + $0x170] sm:$0xff]
    %v1747 = vld [vmem:[#allocation21 + $0x178] sm:$0xff]
    %v1748 = vld [vmem:[%s18] sm:$0x3]
    %v1749 = vld [vmem:[%s19] sm:$0x3]
    %v1750 = vld [vmem:[#allocation22] sm:$0xff]
    %v1751 = vld [vmem:[#allocation22 + $0x8] sm:$0xff]
    %v1752 = vld [vmem:[#allocation22 + $0x10] sm:$0xff]
    %v1753 = vld [vmem:[#allocation22 + $0x18] sm:$0xff]
    %v1754 = vld [vmem:[#allocation22 + $0x20] sm:$0xff]
    %v1755 = vld [vmem:[#allocation22 + $0x28] sm:$0xff]
    %v1756 = vld [vmem:[#allocation22 + $0x30] sm:$0xff]
    %v1757 = vld [vmem:[#allocation22 + $0x38] sm:$0xff]
    %v1758 = vld [vmem:[#allocation22 + $0x40] sm:$0xff]
    %v1759 = vld [vmem:[#allocation22 + $0x48] sm:$0xff]
    %v1760 = vld [vmem:[#allocation22 + $0x50] sm:$0xff]
    %v1761 = vld [vmem:[#allocation22 + $0x58] sm:$0xff]
    %v1762 = vld [vmem:[#allocation22 + $0x60] sm:$0xff]
    %v1763 = vld [vmem:[#allocation22 + $0x68] sm:$0xff]
    %v1764 = vld [vmem:[#allocation22 + $0x70] sm:$0xff]
    %v1765 = vld [vmem:[#allocation22 + $0x78] sm:$0xff]
    %v1766 = vld [vmem:[#allocation22 + $0x80] sm:$0xff]
    %v1767 = vld [vmem:[#allocation22 + $0x88] sm:$0xff]
    %v1768 = vld [vmem:[#allocation22 + $0x90] sm:$0xff]
    %v1769 = vld [vmem:[#allocation22 + $0x98] sm:$0xff]
    %v1770 = vld [vmem:[#allocation22 + $0xa0] sm:$0xff]
    %v1771 = vld [vmem:[#allocation22 + $0xa8] sm:$0xff]
    %v1772 = vld [vmem:[#allocation22 + $0xb0] sm:$0xff]
    %v1773 = vld [vmem:[#allocation22 + $0xb8] sm:$0xff]
    %v1774 = vld [vmem:[#allocation22 + $0xc0] sm:$0xff]
    %v1775 = vld [vmem:[#allocation22 + $0xc8] sm:$0xff]
    %v1776 = vld [vmem:[#allocation22 + $0xd0] sm:$0xff]
    %v1777 = vld [vmem:[#allocation22 + $0xd8] sm:$0xff]
    %v1778 = vld [vmem:[#allocation22 + $0xe0] sm:$0xff]
    %v1779 = vld [vmem:[#allocation22 + $0xe8] sm:$0xff]
    %v1780 = vld [vmem:[#allocation22 + $0xf0] sm:$0xff]
    %v1781 = vld [vmem:[#allocation22 + $0xf8] sm:$0xff]
    %v1782 = vld [vmem:[#allocation22 + $0x100] sm:$0xff]
    %v1783 = vld [vmem:[#allocation22 + $0x108] sm:$0xff]
    %v1784 = vld [vmem:[#allocation22 + $0x110] sm:$0xff]
    %v1785 = vld [vmem:[#allocation22 + $0x118] sm:$0xff]
    %v1786 = vld [vmem:[#allocation22 + $0x120] sm:$0xff]
    %v1787 = vld [vmem:[#allocation22 + $0x128] sm:$0xff]
    %v1788 = vld [vmem:[#allocation22 + $0x130] sm:$0xff]
    %v1789 = vld [vmem:[#allocation22 + $0x138] sm:$0xff]
    %v1790 = vld [vmem:[#allocation22 + $0x140] sm:$0xff]
    %v1791 = vld [vmem:[#allocation22 + $0x148] sm:$0xff]
    %v1792 = vld [vmem:[#allocation22 + $0x150] sm:$0xff]
    %v1793 = vld [vmem:[#allocation22 + $0x158] sm:$0xff]
    %v1794 = vld [vmem:[#allocation22 + $0x160] sm:$0xff]
    %v1795 = vld [vmem:[#allocation22 + $0x168] sm:$0xff]
    %v1796 = vld [vmem:[#allocation22 + $0x170] sm:$0xff]
    %v1797 = vld [vmem:[#allocation22 + $0x178] sm:$0xff]
    %v1798 = vld [vmem:[#allocation22 + $0x180] sm:$0xff]
    %v1799 = vld [vmem:[#allocation22 + $0x188] sm:$0xff]
    %v1800 = vld [vmem:[#allocation22 + $0x190] sm:$0xff]
    %v1801 = vld [vmem:[#allocation22 + $0x198] sm:$0xff]
    %v1802 = vld [vmem:[#allocation22 + $0x1a0] sm:$0xff]
    %v1803 = vld [vmem:[#allocation22 + $0x1a8] sm:$0xff]
    %v1804 = vld [vmem:[#allocation22 + $0x1b0] sm:$0xff]
    %v1805 = vld [vmem:[#allocation22 + $0x1b8] sm:$0xff]
    %v1806 = vld [vmem:[#allocation22 + $0x1c0] sm:$0xff]
    %v1807 = vld [vmem:[#allocation22 + $0x1c8] sm:$0xff]
    %v1808 = vld [vmem:[#allocation22 + $0x1d0] sm:$0xff]
    %v1809 = vld [vmem:[#allocation22 + $0x1d8] sm:$0xff]
    %v1810 = vld [vmem:[#allocation22 + $0x1e0] sm:$0xff]
    %v1811 = vld [vmem:[#allocation22 + $0x1e8] sm:$0xff]
    %v1812 = vld [vmem:[#allocation22 + $0x1f0] sm:$0xff]
    %v1813 = vld [vmem:[#allocation22 + $0x1f8] sm:$0xff]
    %v1814 = vld [vmem:[#allocation22 + $0x200] sm:$0xff]
    %v1815 = vld [vmem:[#allocation22 + $0x208] sm:$0xff]
    %v1816 = vld [vmem:[#allocation22 + $0x210] sm:$0xff]
    %v1817 = vld [vmem:[#allocation22 + $0x218] sm:$0xff]
    %v1818 = vld [vmem:[#allocation22 + $0x220] sm:$0xff]
    %v1819 = vld [vmem:[#allocation22 + $0x228] sm:$0xff]
    %v1820 = vld [vmem:[#allocation22 + $0x230] sm:$0xff]
    %v1821 = vld [vmem:[#allocation22 + $0x238] sm:$0xff]
    %v1822 = vld [vmem:[#allocation22 + $0x240] sm:$0xff]
    %v1823 = vld [vmem:[#allocation22 + $0x248] sm:$0xff]
    %v1824 = vld [vmem:[#allocation22 + $0x250] sm:$0xff]
    %v1825 = vld [vmem:[#allocation22 + $0x258] sm:$0xff]
    %v1826 = vld [vmem:[#allocation22 + $0x260] sm:$0xff]
    %v1827 = vld [vmem:[#allocation22 + $0x268] sm:$0xff]
    %v1828 = vld [vmem:[#allocation22 + $0x270] sm:$0xff]
    %v1829 = vld [vmem:[#allocation22 + $0x278] sm:$0xff]
    %v1830 = vld [vmem:[#allocation22 + $0x280] sm:$0xff]
    %v1831 = vld [vmem:[#allocation22 + $0x288] sm:$0xff]
    %v1832 = vld [vmem:[#allocation22 + $0x290] sm:$0xff]
    %v1833 = vld [vmem:[#allocation22 + $0x298] sm:$0xff]
    %v1834 = vld [vmem:[#allocation22 + $0x2a0] sm:$0xff]
    %v1835 = vld [vmem:[#allocation22 + $0x2a8] sm:$0xff]
    %v1836 = vld [vmem:[#allocation22 + $0x2b0] sm:$0xff]
    %v1837 = vld [vmem:[#allocation22 + $0x2b8] sm:$0xff]
    %v1838 = vld [vmem:[#allocation22 + $0x2c0] sm:$0xff]
    %v1839 = vld [vmem:[#allocation22 + $0x2c8] sm:$0xff]
    %v1840 = vld [vmem:[#allocation22 + $0x2d0] sm:$0xff]
    %v1841 = vld [vmem:[#allocation22 + $0x2d8] sm:$0xff]
    %v1842 = vld [vmem:[#allocation22 + $0x2e0] sm:$0xff]
    %v1843 = vld [vmem:[#allocation22 + $0x2e8] sm:$0xff]
    %v1844 = vld [vmem:[#allocation22 + $0x2f0] sm:$0xff]
    %v1845 = vld [vmem:[#allocation22 + $0x2f8] sm:$0xff]
    %v1846 = vld [vmem:[%s21] sm:$0x3]
    %v1847 = vld [vmem:[%s22] sm:$0x3]
    %v1848 = vld [vmem:[#allocation24] sm:$0xff]
    %v1849 = vld [vmem:[#allocation24 + $0x8] sm:$0xff]
    %v1850 = vld [vmem:[#allocation24 + $0x10] sm:$0xff]
    %v1851 = vld [vmem:[#allocation24 + $0x18] sm:$0xff]
    %v1852 = vld [vmem:[#allocation24 + $0x20] sm:$0xff]
    %v1853 = vld [vmem:[#allocation24 + $0x28] sm:$0xff]
    %v1854 = vld [vmem:[#allocation24 + $0x30] sm:$0xff]
    %v1855 = vld [vmem:[#allocation24 + $0x38] sm:$0xff]
    %v1856 = vld [vmem:[#allocation24 + $0x40] sm:$0xff]
    %v1857 = vld [vmem:[#allocation24 + $0x48] sm:$0xff]
    %v1858 = vld [vmem:[#allocation24 + $0x50] sm:$0xff]
    %v1859 = vld [vmem:[#allocation24 + $0x58] sm:$0xff]
    %v1860 = vld [vmem:[#allocation24 + $0x60] sm:$0xff]
    %v1861 = vld [vmem:[#allocation24 + $0x68] sm:$0xff]
    %v1862 = vld [vmem:[#allocation24 + $0x70] sm:$0xff]
    %v1863 = vld [vmem:[#allocation24 + $0x78] sm:$0xff]
    %v1864 = vld [vmem:[%s24] sm:$0x3]
    %v1871 = vperm.slane %v1692, 0
    %v1872 = vperm.slane %v1693, 0
    %v1873 = vperm.slane %v1694, 0
    %v1874 = vperm.slane %v1696, 0
    %v1875 = vperm.slane %v1697, 0
    %v1876 = vperm.slane %v1698, 0
    %v1877 = vunpack.c.l.b16 %v1871
    %v1878 = vunpack.c.l.b16 %v1872
    %v1879 = vunpack.c.l.b16 %v1873
    %v1880 = vunpack.c.l.b16 %v1874
    %v1881 = vunpack.c.l.b16 %v1875
    %v1882 = vunpack.c.l.b16 %v1876
    %v1883 = vsel %vm1116, %v1878, %v1877
    %v1884 = vsel %vm1118, %v1879, %v1883
    %v1885 = vsel %vm1116, %v1881, %v1880
    %v1886 = vsel %vm1118, %v1882, %v1885
    %v1887 = vpack.c.b16 %v1884, %v1884
    %v1888 = vpack.c.b16 %v1886, %v1886
    %v1891 = vsel %vm393, 0, %v1887
    %v1892 = vsel %vm393, 0, %v1888
    %v1895 = vperm.slane %v1695, 0
    %v1896 = vperm.slane %v1699, 0
    %v1897 = vunpack.c.l.b16 %v1895
    %v1898 = vunpack.c.l.b16 %v1896
    %v1899 = vsel %vm1146, %v1879, %v1878
    %v1900 = vsel %vm1116, %v1897, %v1899
    %v1901 = vsel %vm1146, %v1882, %v1881
    %v1902 = vsel %vm1116, %v1898, %v1901
    %v1903 = vpack.c.b16 %v1900, %v1900
    %v1904 = vpack.c.b16 %v1902, %v1902
    %vm1907 = vcmask 1041408
    %vm1908 = vsmask.f32 1280
    %vm1909 = vmand %vm1907, %vm1908
    %v1910 = vsel %vm1909, %v1903, 0
    %v1911 = vsel %vm1909, %v1904, 0
    %v1912 = vsel %vm1146, %v1878, %v1877
    %v1913 = vsel %vm1116, %v1879, %v1912
    %v1914 = vsel %vm1118, %v1897, %v1913
    %v1915 = vsel %vm1120, %v1880, %v1914
    %v1916 = vsel %vm1122, %v1881, %v1915
    %v1917 = vsel %vm1124, %v1882, %v1916
    %v1918 = vsel %vm1126, %v1898, %v1917
    %v1919 = vpack.c.b16 %v1918, %v1918
    %v1937 = vunpack.c.l.b16 %v1716
    %v1938 = vunpack.c.h.b16 %v1716
    %v1939 = vunpack.c.l.b16 %v1717
    %v1940 = vunpack.c.h.b16 %v1717
    %v1941 = vunpack.c.l.b16 %v1718
    %v1942 = vunpack.c.h.b16 %v1718
    %v1943 = vunpack.c.l.b16 %v1719
    %v1944 = vunpack.c.h.b16 %v1719
    %v1945 = vunpack.c.l.b16 %v1720
    %v1946 = vunpack.c.h.b16 %v1720
    %v1947 = vunpack.c.l.b16 %v1721
    %v1948 = vunpack.c.h.b16 %v1721
    %v1949 = vunpack.c.l.b16 %v1722
    %v1950 = vunpack.c.h.b16 %v1722
    %v1951 = vunpack.c.l.b16 %v1723
    %v1952 = vunpack.c.h.b16 %v1723
    %v1953 = vunpack.c.l.b16 %v1724
    %v1954 = vunpack.c.h.b16 %v1724
    %v1955 = vunpack.c.l.b16 %v1725
    %v1956 = vunpack.c.h.b16 %v1725
    %v1957 = vunpack.c.l.b16 %v1726
    %v1958 = vunpack.c.h.b16 %v1726
    %v1959 = vunpack.c.l.b16 %v1727
    %v1960 = vunpack.c.h.b16 %v1727
    %v1961 = vunpack.c.l.b16 %v1728
    %v1962 = vunpack.c.h.b16 %v1728
    %v1963 = vunpack.c.l.b16 %v1729
    %v1964 = vunpack.c.h.b16 %v1729
    %v1965 = vunpack.c.l.b16 %v1730
    %v1966 = vunpack.c.h.b16 %v1730
    %v1967 = vunpack.c.l.b16 %v1731
    %v1968 = vunpack.c.h.b16 %v1731
    %v1969 = vpack.c.b16 %v1939, %v1937
    %v1970 = vpack.c.b16 %v1940, %v1938
    %v1971 = vpack.c.b16 %v1943, %v1941
    %v1972 = vpack.c.b16 %v1944, %v1942
    %v1973 = vpack.c.b16 %v1947, %v1945
    %v1974 = vpack.c.b16 %v1948, %v1946
    %v1975 = vpack.c.b16 %v1951, %v1949
    %v1976 = vpack.c.b16 %v1952, %v1950
    %v1977 = vpack.c.b16 %v1955, %v1953
    %v1978 = vpack.c.b16 %v1956, %v1954
    %v1979 = vpack.c.b16 %v1959, %v1957
    %v1980 = vpack.c.b16 %v1960, %v1958
    %v1981 = vpack.c.b16 %v1963, %v1961
    %v1982 = vpack.c.b16 %v1964, %v1962
    %v1983 = vpack.c.b16 %v1967, %v1965
    %v1984 = vpack.c.b16 %v1968, %v1966
    %2001 = vmatpush.bf16.msra.mxu0 %v1983
    %2002 = vmatpush.bf16.msra.mxu0 %v1981
    %2003 = vmatpush.bf16.msra.mxu0 %v1979
    %2004 = vmatpush.bf16.msra.mxu0 %v1977
    %2005 = vmatpush.bf16.msra.mxu0 %v1975
    %2006 = vmatpush.bf16.msra.mxu0 %v1973
    %2007 = vmatpush.bf16.msra.mxu0 %v1971
    %2008 = vmatpush.bf16.msra.mxu0 %v1969
    %2009 = vmatmul.bf16.gmra.mxu0 %v1919
    %v2010 = vpop.f32.mrf.mxu0
    %v2011 = vadd.f32 0.0, %v2010
    %v2012 = vpop.f32.mrf.mxu0
    %2013 = vdwg.mxu0
    %2014 = vmatpush.bf16.msra.mxu0 %v1984
    %2015 = vmatpush.bf16.msra.mxu0 %v1982
    %2016 = vmatpush.bf16.msra.mxu0 %v1980
    %2017 = vmatpush.bf16.msra.mxu0 %v1978
    %2018 = vmatpush.bf16.msra.mxu0 %v1976
    %2019 = vmatpush.bf16.msra.mxu0 %v1974
    %2020 = vmatpush.bf16.msra.mxu0 %v1972
    %2021 = vmatpush.bf16.msra.mxu0 %v1970
    %2022 = vmatmul.bf16.gmra.mxu0 %v1919
    %v2023 = vpop.f32.mrf.mxu0
    %v2024 = vadd.f32 0.0, %v2023
    %v2025 = vpop.f32.mrf.mxu0
    %2026 = vdwg.mxu0
    %2028 = vst [vmem:[#allocation1] ss:$4 sm:$0xff] %v1891
    %s2030 = scalar_lea.vmem [#allocation1], 1
    %2031 = vst [vmem:[%s2030] ss:$4 sm:$0xff] %v1892
    %v2032 = vld.sshfl [vmem:[#allocation1] sm:$0xff pattern:$0x73625140]
    %v2050 = vunpack.c.l.b16 %v1700
    %v2051 = vunpack.c.h.b16 %v1700
    %v2052 = vunpack.c.l.b16 %v1701
    %v2053 = vunpack.c.h.b16 %v1701
    %v2054 = vunpack.c.l.b16 %v1702
    %v2055 = vunpack.c.h.b16 %v1702
    %v2056 = vunpack.c.l.b16 %v1703
    %v2057 = vunpack.c.h.b16 %v1703
    %v2058 = vunpack.c.l.b16 %v1704
    %v2059 = vunpack.c.h.b16 %v1704
    %v2060 = vunpack.c.l.b16 %v1705
    %v2061 = vunpack.c.h.b16 %v1705
    %v2062 = vunpack.c.l.b16 %v1706
    %v2063 = vunpack.c.h.b16 %v1706
    %v2064 = vunpack.c.l.b16 %v1707
    %v2065 = vunpack.c.h.b16 %v1707
    %v2066 = vunpack.c.l.b16 %v1708
    %v2067 = vunpack.c.h.b16 %v1708
    %v2068 = vunpack.c.l.b16 %v1709
    %v2069 = vunpack.c.h.b16 %v1709
    %v2070 = vunpack.c.l.b16 %v1710
    %v2071 = vunpack.c.h.b16 %v1710
    %v2072 = vunpack.c.l.b16 %v1711
    %v2073 = vunpack.c.h.b16 %v1711
    %v2074 = vunpack.c.l.b16 %v1712
    %v2075 = vunpack.c.h.b16 %v1712
    %v2076 = vunpack.c.l.b16 %v1713
    %v2077 = vunpack.c.h.b16 %v1713
    %v2078 = vunpack.c.l.b16 %v1714
    %v2079 = vunpack.c.h.b16 %v1714
    %v2080 = vunpack.c.l.b16 %v1715
    %v2081 = vunpack.c.h.b16 %v1715
    %v2082 = vpack.c.b16 %v2052, %v2050
    %v2083 = vpack.c.b16 %v2053, %v2051
    %v2084 = vpack.c.b16 %v2056, %v2054
    %v2085 = vpack.c.b16 %v2057, %v2055
    %v2086 = vpack.c.b16 %v2060, %v2058
    %v2087 = vpack.c.b16 %v2061, %v2059
    %v2088 = vpack.c.b16 %v2064, %v2062
    %v2089 = vpack.c.b16 %v2065, %v2063
    %v2090 = vpack.c.b16 %v2068, %v2066
    %v2091 = vpack.c.b16 %v2069, %v2067
    %v2092 = vpack.c.b16 %v2072, %v2070
    %v2093 = vpack.c.b16 %v2073, %v2071
    %v2094 = vpack.c.b16 %v2076, %v2074
    %v2095 = vpack.c.b16 %v2077, %v2075
    %v2096 = vpack.c.b16 %v2080, %v2078
    %v2097 = vpack.c.b16 %v2081, %v2079
    %2114 = vmatpush.bf16.msra.mxu0 %v2096
    %2115 = vmatpush.bf16.msra.mxu0 %v2094
    %2116 = vmatpush.bf16.msra.mxu0 %v2092
    %2117 = vmatpush.bf16.msra.mxu0 %v2090
    %2118 = vmatpush.bf16.msra.mxu0 %v2088
    %2119 = vmatpush.bf16.msra.mxu0 %v2086
    %2120 = vmatpush.bf16.msra.mxu0 %v2084
    %2121 = vmatpush.bf16.msra.mxu0 %v2082
    %2122 = vmatmul.bf16.gmra.mxu0 %v2032
    %v2123 = vpop.f32.mrf.mxu0
    %v2124 = vadd.f32 %v2011, %v2123
    %v2125 = vpop.f32.mrf.mxu0
    %2126 = vdwg.mxu0
    %2127 = vmatpush.bf16.msra.mxu0 %v2097
    %2128 = vmatpush.bf16.msra.mxu0 %v2095
    %2129 = vmatpush.bf16.msra.mxu0 %v2093
    %2130 = vmatpush.bf16.msra.mxu0 %v2091
    %2131 = vmatpush.bf16.msra.mxu0 %v2089
    %2132 = vmatpush.bf16.msra.mxu0 %v2087
    %2133 = vmatpush.bf16.msra.mxu0 %v2085
    %2134 = vmatpush.bf16.msra.mxu0 %v2083
    %2135 = vmatmul.bf16.gmra.mxu0 %v2032
    %v2136 = vpop.f32.mrf.mxu0
    %v2137 = vadd.f32 %v2024, %v2136
    %v2138 = vpop.f32.mrf.mxu0
    %2139 = vdwg.mxu0
    %2141 = vst [vmem:[#allocation1] ss:$4 sm:$0xff] %v1910
    %s2143 = scalar_lea.vmem [#allocation1], 1
    %2144 = vst [vmem:[%s2143] ss:$4 sm:$0xff] %v1911
    %v2145 = vld.sshfl [vmem:[#allocation1] sm:$0xff pattern:$0x73625140]
    %v2163 = vunpack.c.l.b16 %v1732
    %v2164 = vunpack.c.h.b16 %v1732
    %v2165 = vunpack.c.l.b16 %v1733
    %v2166 = vunpack.c.h.b16 %v1733
    %v2167 = vunpack.c.l.b16 %v1734
    %v2168 = vunpack.c.h.b16 %v1734
    %v2169 = vunpack.c.l.b16 %v1735
    %v2170 = vunpack.c.h.b16 %v1735
    %v2171 = vunpack.c.l.b16 %v1736
    %v2172 = vunpack.c.h.b16 %v1736
    %v2173 = vunpack.c.l.b16 %v1737
    %v2174 = vunpack.c.h.b16 %v1737
    %v2175 = vunpack.c.l.b16 %v1738
    %v2176 = vunpack.c.h.b16 %v1738
    %v2177 = vunpack.c.l.b16 %v1739
    %v2178 = vunpack.c.h.b16 %v1739
    %v2179 = vunpack.c.l.b16 %v1740
    %v2180 = vunpack.c.h.b16 %v1740
    %v2181 = vunpack.c.l.b16 %v1741
    %v2182 = vunpack.c.h.b16 %v1741
    %v2183 = vunpack.c.l.b16 %v1742
    %v2184 = vunpack.c.h.b16 %v1742
    %v2185 = vunpack.c.l.b16 %v1743
    %v2186 = vunpack.c.h.b16 %v1743
    %v2187 = vunpack.c.l.b16 %v1744
    %v2188 = vunpack.c.h.b16 %v1744
    %v2189 = vunpack.c.l.b16 %v1745
    %v2190 = vunpack.c.h.b16 %v1745
    %v2191 = vunpack.c.l.b16 %v1746
    %v2192 = vunpack.c.h.b16 %v1746
    %v2193 = vunpack.c.l.b16 %v1747
    %v2194 = vunpack.c.h.b16 %v1747
    %v2195 = vpack.c.b16 %v2165, %v2163
    %v2196 = vpack.c.b16 %v2166, %v2164
    %v2197 = vpack.c.b16 %v2169, %v2167
    %v2198 = vpack.c.b16 %v2170, %v2168
    %v2199 = vpack.c.b16 %v2173, %v2171
    %v2200 = vpack.c.b16 %v2174, %v2172
    %v2201 = vpack.c.b16 %v2177, %v2175
    %v2202 = vpack.c.b16 %v2178, %v2176
    %v2203 = vpack.c.b16 %v2181, %v2179
    %v2204 = vpack.c.b16 %v2182, %v2180
    %v2205 = vpack.c.b16 %v2185, %v2183
    %v2206 = vpack.c.b16 %v2186, %v2184
    %v2207 = vpack.c.b16 %v2189, %v2187
    %v2208 = vpack.c.b16 %v2190, %v2188
    %v2209 = vpack.c.b16 %v2193, %v2191
    %v2210 = vpack.c.b16 %v2194, %v2192
    %2227 = vmatpush.bf16.msra.mxu0 %v2209
    %2228 = vmatpush.bf16.msra.mxu0 %v2207
    %2229 = vmatpush.bf16.msra.mxu0 %v2205
    %2230 = vmatpush.bf16.msra.mxu0 %v2203
    %2231 = vmatpush.bf16.msra.mxu0 %v2201
    %2232 = vmatpush.bf16.msra.mxu0 %v2199
    %2233 = vmatpush.bf16.msra.mxu0 %v2197
    %2234 = vmatpush.bf16.msra.mxu0 %v2195
    %2235 = vmatmul.bf16.gmra.mxu0 %v2145
    %v2236 = vpop.f32.mrf.mxu0
    %v2237 = vadd.f32 0.0, %v2236
    %v2238 = vpop.f32.mrf.mxu0
    %2239 = vdwg.mxu0
    %2240 = vmatpush.bf16.msra.mxu0 %v2210
    %2241 = vmatpush.bf16.msra.mxu0 %v2208
    %2242 = vmatpush.bf16.msra.mxu0 %v2206
    %2243 = vmatpush.bf16.msra.mxu0 %v2204
    %2244 = vmatpush.bf16.msra.mxu0 %v2202
    %2245 = vmatpush.bf16.msra.mxu0 %v2200
    %2246 = vmatpush.bf16.msra.mxu0 %v2198
    %2247 = vmatpush.bf16.msra.mxu0 %v2196
    %2248 = vmatmul.bf16.gmra.mxu0 %v2145
    %v2249 = vpop.f32.mrf.mxu0
    %v2250 = vadd.f32 0.0, %v2249
    %v2251 = vpop.f32.mrf.mxu0
    %2252 = vdwg.mxu0
    %v2253 = vadd.f32 %v2124, %v2237
    %v2254 = vadd.f32 %v2137, %v2250
    %v2256 = vperm.slane %v1748, 0
    %v2257 = vperm.slane %v1748, 1
    %v2260 = vmul.f32 %v2253, %v2256
    %v2261 = vmul.f32 %v2254, %v2257
    %v2263 = vperm.slane %v1749, 0
    %v2264 = vperm.slane %v1749, 1
    %v2267 = vadd.f32 %v2260, %v2263
    %v2268 = vadd.f32 %v2261, %v2264
    %v2269 = vmax.f32 %v2267, 0.0
    %v2270 = vmax.f32 %v2268, 0.0
    %v2271 = vpack.c.bf16 %v2270, %v2269
    %v2273 = vrot.slane %v2271, 2
    %v2276 = vsel %vm1635, %v2271, %v2273
    %vm2277 = vcmask 1043458
    %v2278 = vsel %vm2277, %v2271, %v2273
    %v2280 = vrot.slane %v2278, 2
    %2281 = vst [vmem:[#allocation1] ss:$4 sm:$0xff] %v2276
    %v2282 = vld.sshfl [vmem:[#allocation1] sm:$0xff pattern:$0x73625140]
    %v2283 = vld.sshfl [vmem:[#allocation1 + $0x8] sm:$0xff pattern:$0x73625140]
    %s2285 = scalar_lea.vmem [#allocation1], 32
    %2286 = vst [vmem:[%s2285] ss:$4 sm:$0xff] %v2280
    %v2287 = vld.sshfl [vmem:[#allocation1 + $0x20] sm:$0xff pattern:$0x73625140]
    %v2288 = vld.sshfl [vmem:[#allocation1 + $0x28] sm:$0xff pattern:$0x73625140]
    %v2289 = vshrl.u32 %v2282, 16
    %v2291 = vrot.slane %v2289, 7
    %v2292 = vshll.u32 %v2282, 16
    %v2294 = vor.u32 %v2291, %v2292
    %v2295 = vshrl.u32 %v2283, 16
    %v2297 = vrot.slane %v2295, 7
    %v2298 = vshll.u32 %v2283, 16
    %v2300 = vor.u32 %v2297, %v2298
    %v2301 = vshrl.u32 %v2287, 16
    %v2303 = vrot.slane %v2301, 7
    %v2304 = vshll.u32 %v2287, 16
    %v2306 = vor.u32 %v2303, %v2304
    %v2307 = vshrl.u32 %v2288, 16
    %v2309 = vrot.slane %v2307, 7
    %v2310 = vshll.u32 %v2288, 16
    %v2312 = vor.u32 %v2309, %v2310
    %v2317 = vsel %vm393, 0, %v2294
    %v2318 = vsel %vm393, 0, %v2300
    %v2319 = vsel %vm393, 0, %v2306
    %v2320 = vsel %vm393, 0, %v2312
    %v2323 = vrot.slane %v2318, 6
    %v2324 = vrot.slane %v2320, 6
    %v2327 = vsel %vm1635, %v2317, %v2323
    %v2330 = vsel %vm1635, %v2319, %v2324
    %2331 = vst [vmem:[#allocation1] ss:$4 sm:$0xff] %v2276
    %v2332 = vld.sshfl [vmem:[#allocation1] sm:$0xff pattern:$0x73625140]
    %v2333 = vld.sshfl [vmem:[#allocation1 + $0x8] sm:$0xff pattern:$0x73625140]
    %s2334 = scalar_lea.vmem [#allocation1], 32
    %2335 = vst [vmem:[%s2334] ss:$4 sm:$0xff] %v2280
    %v2336 = vld.sshfl [vmem:[#allocation1 + $0x20] sm:$0xff pattern:$0x73625140]
    %v2337 = vld.sshfl [vmem:[#allocation1 + $0x28] sm:$0xff pattern:$0x73625140]
    %v2338 = vshrl.u32 %v2332, 16
    %v2340 = vshll.u32 %v2332, 16
    %v2342 = vrot.slane %v2340, 1
    %v2343 = vor.u32 %v2338, %v2342
    %v2344 = vshrl.u32 %v2333, 16
    %v2346 = vshll.u32 %v2333, 16
    %v2348 = vrot.slane %v2346, 1
    %v2349 = vor.u32 %v2344, %v2348
    %v2350 = vshrl.u32 %v2336, 16
    %v2352 = vshll.u32 %v2336, 16
    %v2354 = vrot.slane %v2352, 1
    %v2355 = vor.u32 %v2350, %v2354
    %v2356 = vshrl.u32 %v2337, 16
    %v2358 = vshll.u32 %v2337, 16
    %v2360 = vrot.slane %v2358, 1
    %v2361 = vor.u32 %v2356, %v2360
    %v2366 = vsel %vm1909, %v2343, 0
    %v2367 = vsel %vm1909, %v2349, 0
    %v2368 = vsel %vm1909, %v2355, 0
    %v2369 = vsel %vm1909, %v2361, 0
    %v2372 = vrot.slane %v2367, 6
    %v2373 = vrot.slane %v2369, 6
    %v2376 = vsel %vm1635, %v2366, %v2372
    %v2379 = vsel %vm1635, %v2368, %v2373
    %v2380 = vunpack.c.l.b16 %v2271
    %v2381 = vunpack.c.h.b16 %v2271
    %v2382 = vpack.c.b16 %v2380, %v2380
    %v2383 = vpack.c.b16 %v2381, %v2381
    %v2418 = vunpack.c.l.b16 %v1782
    %v2419 = vunpack.c.h.b16 %v1782
    %v2420 = vunpack.c.l.b16 %v1783
    %v2421 = vunpack.c.h.b16 %v1783
    %v2422 = vunpack.c.l.b16 %v1784
    %v2423 = vunpack.c.h.b16 %v1784
    %v2424 = vunpack.c.l.b16 %v1785
    %v2425 = vunpack.c.h.b16 %v1785
    %v2426 = vunpack.c.l.b16 %v1786
    %v2427 = vunpack.c.h.b16 %v1786
    %v2428 = vunpack.c.l.b16 %v1787
    %v2429 = vunpack.c.h.b16 %v1787
    %v2430 = vunpack.c.l.b16 %v1788
    %v2431 = vunpack.c.h.b16 %v1788
    %v2432 = vunpack.c.l.b16 %v1789
    %v2433 = vunpack.c.h.b16 %v1789
    %v2434 = vunpack.c.l.b16 %v1790
    %v2435 = vunpack.c.h.b16 %v1790
    %v2436 = vunpack.c.l.b16 %v1791
    %v2437 = vunpack.c.h.b16 %v1791
    %v2438 = vunpack.c.l.b16 %v1792
    %v2439 = vunpack.c.h.b16 %v1792
    %v2440 = vunpack.c.l.b16 %v1793
    %v2441 = vunpack.c.h.b16 %v1793
    %v2442 = vunpack.c.l.b16 %v1794
    %v2443 = vunpack.c.h.b16 %v1794
    %v2444 = vunpack.c.l.b16 %v1795
    %v2445 = vunpack.c.h.b16 %v1795
    %v2446 = vunpack.c.l.b16 %v1796
    %v2447 = vunpack.c.h.b16 %v1796
    %v2448 = vunpack.c.l.b16 %v1797
    %v2449 = vunpack.c.h.b16 %v1797
    %v2450 = vunpack.c.l.b16 %v1798
    %v2451 = vunpack.c.h.b16 %v1798
    %v2452 = vunpack.c.l.b16 %v1799
    %v2453 = vunpack.c.h.b16 %v1799
    %v2454 = vunpack.c.l.b16 %v1800
    %v2455 = vunpack.c.h.b16 %v1800
    %v2456 = vunpack.c.l.b16 %v1801
    %v2457 = vunpack.c.h.b16 %v1801
    %v2458 = vunpack.c.l.b16 %v1802
    %v2459 = vunpack.c.h.b16 %v1802
    %v2460 = vunpack.c.l.b16 %v1803
    %v2461 = vunpack.c.h.b16 %v1803
    %v2462 = vunpack.c.l.b16 %v1804
    %v2463 = vunpack.c.h.b16 %v1804
    %v2464 = vunpack.c.l.b16 %v1805
    %v2465 = vunpack.c.h.b16 %v1805
    %v2466 = vunpack.c.l.b16 %v1806
    %v2467 = vunpack.c.h.b16 %v1806
    %v2468 = vunpack.c.l.b16 %v1807
    %v2469 = vunpack.c.h.b16 %v1807
    %v2470 = vunpack.c.l.b16 %v1808
    %v2471 = vunpack.c.h.b16 %v1808
    %v2472 = vunpack.c.l.b16 %v1809
    %v2473 = vunpack.c.h.b16 %v1809
    %v2474 = vunpack.c.l.b16 %v1810
    %v2475 = vunpack.c.h.b16 %v1810
    %v2476 = vunpack.c.l.b16 %v1811
    %v2477 = vunpack.c.h.b16 %v1811
    %v2478 = vunpack.c.l.b16 %v1812
    %v2479 = vunpack.c.h.b16 %v1812
    %v2480 = vunpack.c.l.b16 %v1813
    %v2481 = vunpack.c.h.b16 %v1813
    %v2482 = vpack.c.b16 %v2420, %v2418
    %v2483 = vpack.c.b16 %v2421, %v2419
    %v2484 = vpack.c.b16 %v2424, %v2422
    %v2485 = vpack.c.b16 %v2425, %v2423
    %v2486 = vpack.c.b16 %v2428, %v2426
    %v2487 = vpack.c.b16 %v2429, %v2427
    %v2488 = vpack.c.b16 %v2432, %v2430
    %v2489 = vpack.c.b16 %v2433, %v2431
    %v2490 = vpack.c.b16 %v2436, %v2434
    %v2491 = vpack.c.b16 %v2437, %v2435
    %v2492 = vpack.c.b16 %v2440, %v2438
    %v2493 = vpack.c.b16 %v2441, %v2439
    %v2494 = vpack.c.b16 %v2444, %v2442
    %v2495 = vpack.c.b16 %v2445, %v2443
    %v2496 = vpack.c.b16 %v2448, %v2446
    %v2497 = vpack.c.b16 %v2449, %v2447
    %v2498 = vpack.c.b16 %v2452, %v2450
    %v2499 = vpack.c.b16 %v2453, %v2451
    %v2500 = vpack.c.b16 %v2456, %v2454
    %v2501 = vpack.c.b16 %v2457, %v2455
    %v2502 = vpack.c.b16 %v2460, %v2458
    %v2503 = vpack.c.b16 %v2461, %v2459
    %v2504 = vpack.c.b16 %v2464, %v2462
    %v2505 = vpack.c.b16 %v2465, %v2463
    %v2506 = vpack.c.b16 %v2468, %v2466
    %v2507 = vpack.c.b16 %v2469, %v2467
    %v2508 = vpack.c.b16 %v2472, %v2470
    %v2509 = vpack.c.b16 %v2473, %v2471
    %v2510 = vpack.c.b16 %v2476, %v2474
    %v2511 = vpack.c.b16 %v2477, %v2475
    %v2512 = vpack.c.b16 %v2480, %v2478
    %v2513 = vpack.c.b16 %v2481, %v2479
    %2546 = vmatpush.bf16.msra.mxu0 %v2496
    %2547 = vmatpush.bf16.msra.mxu0 %v2494
    %2548 = vmatpush.bf16.msra.mxu0 %v2492
    %2549 = vmatpush.bf16.msra.mxu0 %v2490
    %2550 = vmatpush.bf16.msra.mxu0 %v2488
    %2551 = vmatpush.bf16.msra.mxu0 %v2486
    %2552 = vmatpush.bf16.msra.mxu0 %v2484
    %2553 = vmatpush.bf16.msra.mxu0 %v2482
    %2554 = vmatmul.bf16.gmra.mxu0 %v2382
    %v2555 = vpop.f32.mrf.mxu0
    %v2556 = vadd.f32 0.0, %v2555
    %v2557 = vpop.f32.mrf.mxu0
    %2558 = vdwg.mxu0
    %2559 = vmatpush.bf16.msra.mxu0 %v2512
    %2560 = vmatpush.bf16.msra.mxu0 %v2510
    %2561 = vmatpush.bf16.msra.mxu0 %v2508
    %2562 = vmatpush.bf16.msra.mxu0 %v2506
    %2563 = vmatpush.bf16.msra.mxu0 %v2504
    %2564 = vmatpush.bf16.msra.mxu0 %v2502
    %2565 = vmatpush.bf16.msra.mxu0 %v2500
    %2566 = vmatpush.bf16.msra.mxu0 %v2498
    %2567 = vmatmul.bf16.gmra.mxu0 %v2383
    %v2568 = vpop.f32.mrf.mxu0
    %v2569 = vadd.f32 %v2556, %v2568
    %v2570 = vpop.f32.mrf.mxu0
    %2571 = vdwg.mxu0
    %2572 = vmatpush.bf16.msra.mxu0 %v2497
    %2573 = vmatpush.bf16.msra.mxu0 %v2495
    %2574 = vmatpush.bf16.msra.mxu0 %v2493
    %2575 = vmatpush.bf16.msra.mxu0 %v2491
    %2576 = vmatpush.bf16.msra.mxu0 %v2489
    %2577 = vmatpush.bf16.msra.mxu0 %v2487
    %2578 = vmatpush.bf16.msra.mxu0 %v2485
    %2579 = vmatpush.bf16.msra.mxu0 %v2483
    %2580 = vmatmul.bf16.gmra.mxu0 %v2382
    %v2581 = vpop.f32.mrf.mxu0
    %v2582 = vadd.f32 0.0, %v2581
    %v2583 = vpop.f32.mrf.mxu0
    %2584 = vdwg.mxu0
    %2585 = vmatpush.bf16.msra.mxu0 %v2513
    %2586 = vmatpush.bf16.msra.mxu0 %v2511
    %2587 = vmatpush.bf16.msra.mxu0 %v2509
    %2588 = vmatpush.bf16.msra.mxu0 %v2507
    %2589 = vmatpush.bf16.msra.mxu0 %v2505
    %2590 = vmatpush.bf16.msra.mxu0 %v2503
    %2591 = vmatpush.bf16.msra.mxu0 %v2501
    %2592 = vmatpush.bf16.msra.mxu0 %v2499
    %2593 = vmatmul.bf16.gmra.mxu0 %v2383
    %v2594 = vpop.f32.mrf.mxu0
    %v2595 = vadd.f32 %v2582, %v2594
    %v2596 = vpop.f32.mrf.mxu0
    %2597 = vdwg.mxu0
    %2598 = vst [vmem:[#allocation1] ss:$4 sm:$0xff] %v2327
    %s2599 = scalar_lea.vmem [#allocation1], 1
    %2600 = vst [vmem:[%s2599] ss:$4 sm:$0xff] %v2330
    %v2601 = vld.sshfl [vmem:[#allocation1] sm:$0xff pattern:$0x73625140]
    %v2602 = vld.sshfl [vmem:[#allocation1 + $0x8] sm:$0xff pattern:$0x73625140]
    %v2637 = vunpack.c.l.b16 %v1750
    %v2638 = vunpack.c.h.b16 %v1750
    %v2639 = vunpack.c.l.b16 %v1751
    %v2640 = vunpack.c.h.b16 %v1751
    %v2641 = vunpack.c.l.b16 %v1752
    %v2642 = vunpack.c.h.b16 %v1752
    %v2643 = vunpack.c.l.b16 %v1753
    %v2644 = vunpack.c.h.b16 %v1753
    %v2645 = vunpack.c.l.b16 %v1754
    %v2646 = vunpack.c.h.b16 %v1754
    %v2647 = vunpack.c.l.b16 %v1755
    %v2648 = vunpack.c.h.b16 %v1755
    %v2649 = vunpack.c.l.b16 %v1756
    %v2650 = vunpack.c.h.b16 %v1756
    %v2651 = vunpack.c.l.b16 %v1757
    %v2652 = vunpack.c.h.b16 %v1757
    %v2653 = vunpack.c.l.b16 %v1758
    %v2654 = vunpack.c.h.b16 %v1758
    %v2655 = vunpack.c.l.b16 %v1759
    %v2656 = vunpack.c.h.b16 %v1759
    %v2657 = vunpack.c.l.b16 %v1760
    %v2658 = vunpack.c.h.b16 %v1760
    %v2659 = vunpack.c.l.b16 %v1761
    %v2660 = vunpack.c.h.b16 %v1761
    %v2661 = vunpack.c.l.b16 %v1762
    %v2662 = vunpack.c.h.b16 %v1762
    %v2663 = vunpack.c.l.b16 %v1763
    %v2664 = vunpack.c.h.b16 %v1763
    %v2665 = vunpack.c.l.b16 %v1764
    %v2666 = vunpack.c.h.b16 %v1764
    %v2667 = vunpack.c.l.b16 %v1765
    %v2668 = vunpack.c.h.b16 %v1765
    %v2669 = vunpack.c.l.b16 %v1766
    %v2670 = vunpack.c.h.b16 %v1766
    %v2671 = vunpack.c.l.b16 %v1767
    %v2672 = vunpack.c.h.b16 %v1767
    %v2673 = vunpack.c.l.b16 %v1768
    %v2674 = vunpack.c.h.b16 %v1768
    %v2675 = vunpack.c.l.b16 %v1769
    %v2676 = vunpack.c.h.b16 %v1769
    %v2677 = vunpack.c.l.b16 %v1770
    %v2678 = vunpack.c.h.b16 %v1770
    %v2679 = vunpack.c.l.b16 %v1771
    %v2680 = vunpack.c.h.b16 %v1771
    %v2681 = vunpack.c.l.b16 %v1772
    %v2682 = vunpack.c.h.b16 %v1772
    %v2683 = vunpack.c.l.b16 %v1773
    %v2684 = vunpack.c.h.b16 %v1773
    %v2685 = vunpack.c.l.b16 %v1774
    %v2686 = vunpack.c.h.b16 %v1774
    %v2687 = vunpack.c.l.b16 %v1775
    %v2688 = vunpack.c.h.b16 %v1775
    %v2689 = vunpack.c.l.b16 %v1776
    %v2690 = vunpack.c.h.b16 %v1776
    %v2691 = vunpack.c.l.b16 %v1777
    %v2692 = vunpack.c.h.b16 %v1777
    %v2693 = vunpack.c.l.b16 %v1778
    %v2694 = vunpack.c.h.b16 %v1778
    %v2695 = vunpack.c.l.b16 %v1779
    %v2696 = vunpack.c.h.b16 %v1779
    %v2697 = vunpack.c.l.b16 %v1780
    %v2698 = vunpack.c.h.b16 %v1780
    %v2699 = vunpack.c.l.b16 %v1781
    %v2700 = vunpack.c.h.b16 %v1781
    %v2701 = vpack.c.b16 %v2639, %v2637
    %v2702 = vpack.c.b16 %v2640, %v2638
    %v2703 = vpack.c.b16 %v2643, %v2641
    %v2704 = vpack.c.b16 %v2644, %v2642
    %v2705 = vpack.c.b16 %v2647, %v2645
    %v2706 = vpack.c.b16 %v2648, %v2646
    %v2707 = vpack.c.b16 %v2651, %v2649
    %v2708 = vpack.c.b16 %v2652, %v2650
    %v2709 = vpack.c.b16 %v2655, %v2653
    %v2710 = vpack.c.b16 %v2656, %v2654
    %v2711 = vpack.c.b16 %v2659, %v2657
    %v2712 = vpack.c.b16 %v2660, %v2658
    %v2713 = vpack.c.b16 %v2663, %v2661
    %v2714 = vpack.c.b16 %v2664, %v2662
    %v2715 = vpack.c.b16 %v2667, %v2665
    %v2716 = vpack.c.b16 %v2668, %v2666
    %v2717 = vpack.c.b16 %v2671, %v2669
    %v2718 = vpack.c.b16 %v2672, %v2670
    %v2719 = vpack.c.b16 %v2675, %v2673
    %v2720 = vpack.c.b16 %v2676, %v2674
    %v2721 = vpack.c.b16 %v2679, %v2677
    %v2722 = vpack.c.b16 %v2680, %v2678
    %v2723 = vpack.c.b16 %v2683, %v2681
    %v2724 = vpack.c.b16 %v2684, %v2682
    %v2725 = vpack.c.b16 %v2687, %v2685
    %v2726 = vpack.c.b16 %v2688, %v2686
    %v2727 = vpack.c.b16 %v2691, %v2689
    %v2728 = vpack.c.b16 %v2692, %v2690
    %v2729 = vpack.c.b16 %v2695, %v2693
    %v2730 = vpack.c.b16 %v2696, %v2694
    %v2731 = vpack.c.b16 %v2699, %v2697
    %v2732 = vpack.c.b16 %v2700, %v2698
    %2765 = vmatpush.bf16.msra.mxu0 %v2715
    %2766 = vmatpush.bf16.msra.mxu0 %v2713
    %2767 = vmatpush.bf16.msra.mxu0 %v2711
    %2768 = vmatpush.bf16.msra.mxu0 %v2709
    %2769 = vmatpush.bf16.msra.mxu0 %v2707
    %2770 = vmatpush.bf16.msra.mxu0 %v2705
    %2771 = vmatpush.bf16.msra.mxu0 %v2703
    %2772 = vmatpush.bf16.msra.mxu0 %v2701
    %2773 = vmatmul.bf16.gmra.mxu0 %v2601
    %v2774 = vpop.f32.mrf.mxu0
    %v2775 = vadd.f32 %v2569, %v2774
    %v2776 = vpop.f32.mrf.mxu0
    %2777 = vdwg.mxu0
    %2778 = vmatpush.bf16.msra.mxu0 %v2731
    %2779 = vmatpush.bf16.msra.mxu0 %v2729
    %2780 = vmatpush.bf16.msra.mxu0 %v2727
    %2781 = vmatpush.bf16.msra.mxu0 %v2725
    %2782 = vmatpush.bf16.msra.mxu0 %v2723
    %2783 = vmatpush.bf16.msra.mxu0 %v2721
    %2784 = vmatpush.bf16.msra.mxu0 %v2719
    %2785 = vmatpush.bf16.msra.mxu0 %v2717
    %2786 = vmatmul.bf16.gmra.mxu0 %v2602
    %v2787 = vpop.f32.mrf.mxu0
    %v2788 = vadd.f32 %v2775, %v2787
    %v2789 = vpop.f32.mrf.mxu0
    %2790 = vdwg.mxu0
    %2791 = vmatpush.bf16.msra.mxu0 %v2716
    %2792 = vmatpush.bf16.msra.mxu0 %v2714
    %2793 = vmatpush.bf16.msra.mxu0 %v2712
    %2794 = vmatpush.bf16.msra.mxu0 %v2710
    %2795 = vmatpush.bf16.msra.mxu0 %v2708
    %2796 = vmatpush.bf16.msra.mxu0 %v2706
    %2797 = vmatpush.bf16.msra.mxu0 %v2704
    %2798 = vmatpush.bf16.msra.mxu0 %v2702
    %2799 = vmatmul.bf16.gmra.mxu0 %v2601
    %v2800 = vpop.f32.mrf.mxu0
    %v2801 = vadd.f32 %v2595, %v2800
    %v2802 = vpop.f32.mrf.mxu0
    %2803 = vdwg.mxu0
    %2804 = vmatpush.bf16.msra.mxu0 %v2732
    %2805 = vmatpush.bf16.msra.mxu0 %v2730
    %2806 = vmatpush.bf16.msra.mxu0 %v2728
    %2807 = vmatpush.bf16.msra.mxu0 %v2726
    %2808 = vmatpush.bf16.msra.mxu0 %v2724
    %2809 = vmatpush.bf16.msra.mxu0 %v2722
    %2810 = vmatpush.bf16.msra.mxu0 %v2720
    %2811 = vmatpush.bf16.msra.mxu0 %v2718
    %2812 = vmatmul.bf16.gmra.mxu0 %v2602
    %v2813 = vpop.f32.mrf.mxu0
    %v2814 = vadd.f32 %v2801, %v2813
    %v2815 = vpop.f32.mrf.mxu0
    %2816 = vdwg.mxu0
    %2817 = vst [vmem:[#allocation1] ss:$4 sm:$0xff] %v2376
    %s2818 = scalar_lea.vmem [#allocation1], 1
    %2819 = vst [vmem:[%s2818] ss:$4 sm:$0xff] %v2379
    %v2820 = vld.sshfl [vmem:[#allocation1] sm:$0xff pattern:$0x73625140]
    %v2821 = vld.sshfl [vmem:[#allocation1 + $0x8] sm:$0xff pattern:$0x73625140]
    %v2856 = vunpack.c.l.b16 %v1814
    %v2857 = vunpack.c.h.b16 %v1814
    %v2858 = vunpack.c.l.b16 %v1815
    %v2859 = vunpack.c.h.b16 %v1815
    %v2860 = vunpack.c.l.b16 %v1816
    %v2861 = vunpack.c.h.b16 %v1816
    %v2862 = vunpack.c.l.b16 %v1817
    %v2863 = vunpack.c.h.b16 %v1817
    %v2864 = vunpack.c.l.b16 %v1818
    %v2865 = vunpack.c.h.b16 %v1818
    %v2866 = vunpack.c.l.b16 %v1819
    %v2867 = vunpack.c.h.b16 %v1819
    %v2868 = vunpack.c.l.b16 %v1820
    %v2869 = vunpack.c.h.b16 %v1820
    %v2870 = vunpack.c.l.b16 %v1821
    %v2871 = vunpack.c.h.b16 %v1821
    %v2872 = vunpack.c.l.b16 %v1822
    %v2873 = vunpack.c.h.b16 %v1822
    %v2874 = vunpack.c.l.b16 %v1823
    %v2875 = vunpack.c.h.b16 %v1823
    %v2876 = vunpack.c.l.b16 %v1824
    %v2877 = vunpack.c.h.b16 %v1824
    %v2878 = vunpack.c.l.b16 %v1825
    %v2879 = vunpack.c.h.b16 %v1825
    %v2880 = vunpack.c.l.b16 %v1826
    %v2881 = vunpack.c.h.b16 %v1826
    %v2882 = vunpack.c.l.b16 %v1827
    %v2883 = vunpack.c.h.b16 %v1827
    %v2884 = vunpack.c.l.b16 %v1828
    %v2885 = vunpack.c.h.b16 %v1828
    %v2886 = vunpack.c.l.b16 %v1829
    %v2887 = vunpack.c.h.b16 %v1829
    %v2888 = vunpack.c.l.b16 %v1830
    %v2889 = vunpack.c.h.b16 %v1830
    %v2890 = vunpack.c.l.b16 %v1831
    %v2891 = vunpack.c.h.b16 %v1831
    %v2892 = vunpack.c.l.b16 %v1832
    %v2893 = vunpack.c.h.b16 %v1832
    %v2894 = vunpack.c.l.b16 %v1833
    %v2895 = vunpack.c.h.b16 %v1833
    %v2896 = vunpack.c.l.b16 %v1834
    %v2897 = vunpack.c.h.b16 %v1834
    %v2898 = vunpack.c.l.b16 %v1835
    %v2899 = vunpack.c.h.b16 %v1835
    %v2900 = vunpack.c.l.b16 %v1836
    %v2901 = vunpack.c.h.b16 %v1836
    %v2902 = vunpack.c.l.b16 %v1837
    %v2903 = vunpack.c.h.b16 %v1837
    %v2904 = vunpack.c.l.b16 %v1838
    %v2905 = vunpack.c.h.b16 %v1838
    %v2906 = vunpack.c.l.b16 %v1839
    %v2907 = vunpack.c.h.b16 %v1839
    %v2908 = vunpack.c.l.b16 %v1840
    %v2909 = vunpack.c.h.b16 %v1840
    %v2910 = vunpack.c.l.b16 %v1841
    %v2911 = vunpack.c.h.b16 %v1841
    %v2912 = vunpack.c.l.b16 %v1842
    %v2913 = vunpack.c.h.b16 %v1842
    %v2914 = vunpack.c.l.b16 %v1843
    %v2915 = vunpack.c.h.b16 %v1843
    %v2916 = vunpack.c.l.b16 %v1844
    %v2917 = vunpack.c.h.b16 %v1844
    %v2918 = vunpack.c.l.b16 %v1845
    %v2919 = vunpack.c.h.b16 %v1845
    %v2920 = vpack.c.b16 %v2858, %v2856
    %v2921 = vpack.c.b16 %v2859, %v2857
    %v2922 = vpack.c.b16 %v2862, %v2860
    %v2923 = vpack.c.b16 %v2863, %v2861
    %v2924 = vpack.c.b16 %v2866, %v2864
    %v2925 = vpack.c.b16 %v2867, %v2865
    %v2926 = vpack.c.b16 %v2870, %v2868
    %v2927 = vpack.c.b16 %v2871, %v2869
    %v2928 = vpack.c.b16 %v2874, %v2872
    %v2929 = vpack.c.b16 %v2875, %v2873
    %v2930 = vpack.c.b16 %v2878, %v2876
    %v2931 = vpack.c.b16 %v2879, %v2877
    %v2932 = vpack.c.b16 %v2882, %v2880
    %v2933 = vpack.c.b16 %v2883, %v2881
    %v2934 = vpack.c.b16 %v2886, %v2884
    %v2935 = vpack.c.b16 %v2887, %v2885
    %v2936 = vpack.c.b16 %v2890, %v2888
    %v2937 = vpack.c.b16 %v2891, %v2889
    %v2938 = vpack.c.b16 %v2894, %v2892
    %v2939 = vpack.c.b16 %v2895, %v2893
    %v2940 = vpack.c.b16 %v2898, %v2896
    %v2941 = vpack.c.b16 %v2899, %v2897
    %v2942 = vpack.c.b16 %v2902, %v2900
    %v2943 = vpack.c.b16 %v2903, %v2901
    %v2944 = vpack.c.b16 %v2906, %v2904
    %v2945 = vpack.c.b16 %v2907, %v2905
    %v2946 = vpack.c.b16 %v2910, %v2908
    %v2947 = vpack.c.b16 %v2911, %v2909
    %v2948 = vpack.c.b16 %v2914, %v2912
    %v2949 = vpack.c.b16 %v2915, %v2913
    %v2950 = vpack.c.b16 %v2918, %v2916
    %v2951 = vpack.c.b16 %v2919, %v2917
    %2984 = vmatpush.bf16.msra.mxu0 %v2934
    %2985 = vmatpush.bf16.msra.mxu0 %v2932
    %2986 = vmatpush.bf16.msra.mxu0 %v2930
    %2987 = vmatpush.bf16.msra.mxu0 %v2928
    %2988 = vmatpush.bf16.msra.mxu0 %v2926
    %2989 = vmatpush.bf16.msra.mxu0 %v2924
    %2990 = vmatpush.bf16.msra.mxu0 %v2922
    %2991 = vmatpush.bf16.msra.mxu0 %v2920
    %2992 = vmatmul.bf16.gmra.mxu0 %v2820
    %v2993 = vpop.f32.mrf.mxu0
    %v2994 = vadd.f32 0.0, %v2993
    %v2995 = vpop.f32.mrf.mxu0
    %2996 = vdwg.mxu0
    %2997 = vmatpush.bf16.msra.mxu0 %v2950
    %2998 = vmatpush.bf16.msra.mxu0 %v2948
    %2999 = vmatpush.bf16.msra.mxu0 %v2946
    %3000 = vmatpush.bf16.msra.mxu0 %v2944
    %3001 = vmatpush.bf16.msra.mxu0 %v2942
    %3002 = vmatpush.bf16.msra.mxu0 %v2940
    %3003 = vmatpush.bf16.msra.mxu0 %v2938
    %3004 = vmatpush.bf16.msra.mxu0 %v2936
    %3005 = vmatmul.bf16.gmra.mxu0 %v2821
    %v3006 = vpop.f32.mrf.mxu0
    %v3007 = vadd.f32 %v2994, %v3006
    %v3008 = vpop.f32.mrf.mxu0
    %3009 = vdwg.mxu0
    %3010 = vmatpush.bf16.msra.mxu0 %v2935
    %3011 = vmatpush.bf16.msra.mxu0 %v2933
    %3012 = vmatpush.bf16.msra.mxu0 %v2931
    %3013 = vmatpush.bf16.msra.mxu0 %v2929
    %3014 = vmatpush.bf16.msra.mxu0 %v2927
    %3015 = vmatpush.bf16.msra.mxu0 %v2925
    %3016 = vmatpush.bf16.msra.mxu0 %v2923
    %3017 = vmatpush.bf16.msra.mxu0 %v2921
    %3018 = vmatmul.bf16.gmra.mxu0 %v2820
    %v3019 = vpop.f32.mrf.mxu0
    %v3020 = vadd.f32 0.0, %v3019
    %v3021 = vpop.f32.mrf.mxu0
    %3022 = vdwg.mxu0
    %3023 = vmatpush.bf16.msra.mxu0 %v2951
    %3024 = vmatpush.bf16.msra.mxu0 %v2949
    %3025 = vmatpush.bf16.msra.mxu0 %v2947
    %3026 = vmatpush.bf16.msra.mxu0 %v2945
    %3027 = vmatpush.bf16.msra.mxu0 %v2943
    %3028 = vmatpush.bf16.msra.mxu0 %v2941
    %3029 = vmatpush.bf16.msra.mxu0 %v2939
    %3030 = vmatpush.bf16.msra.mxu0 %v2937
    %3031 = vmatmul.bf16.gmra.mxu0 %v2821
    %v3032 = vpop.f32.mrf.mxu0
    %v3033 = vadd.f32 %v3020, %v3032
    %v3034 = vpop.f32.mrf.mxu0
    %3035 = vdwg.mxu0
    %v3036 = vadd.f32 %v2788, %v3007
    %v3037 = vadd.f32 %v2814, %v3033
    %v3039 = vperm.slane %v1846, 0
    %v3040 = vperm.slane %v1846, 1
    %v3043 = vmul.f32 %v3036, %v3039
    %v3044 = vmul.f32 %v3037, %v3040
    %v3046 = vperm.slane %v1847, 0
    %v3047 = vperm.slane %v1847, 1
    %v3050 = vadd.f32 %v3043, %v3046
    %v3051 = vadd.f32 %v3044, %v3047
    %v3053 = vperm.slane %v1864, 0
    %v3054 = vperm.slane %v1864, 1
    %v3073 = vunpack.c.l.b16 %v1848
    %v3074 = vunpack.c.h.b16 %v1848
    %v3075 = vunpack.c.l.b16 %v1849
    %v3076 = vunpack.c.h.b16 %v1849
    %v3077 = vunpack.c.l.b16 %v1850
    %v3078 = vunpack.c.h.b16 %v1850
    %v3079 = vunpack.c.l.b16 %v1851
    %v3080 = vunpack.c.h.b16 %v1851
    %v3081 = vunpack.c.l.b16 %v1852
    %v3082 = vunpack.c.h.b16 %v1852
    %v3083 = vunpack.c.l.b16 %v1853
    %v3084 = vunpack.c.h.b16 %v1853
    %v3085 = vunpack.c.l.b16 %v1854
    %v3086 = vunpack.c.h.b16 %v1854
    %v3087 = vunpack.c.l.b16 %v1855
    %v3088 = vunpack.c.h.b16 %v1855
    %v3089 = vunpack.c.l.b16 %v1856
    %v3090 = vunpack.c.h.b16 %v1856
    %v3091 = vunpack.c.l.b16 %v1857
    %v3092 = vunpack.c.h.b16 %v1857
    %v3093 = vunpack.c.l.b16 %v1858
    %v3094 = vunpack.c.h.b16 %v1858
    %v3095 = vunpack.c.l.b16 %v1859
    %v3096 = vunpack.c.h.b16 %v1859
    %v3097 = vunpack.c.l.b16 %v1860
    %v3098 = vunpack.c.h.b16 %v1860
    %v3099 = vunpack.c.l.b16 %v1861
    %v3100 = vunpack.c.h.b16 %v1861
    %v3101 = vunpack.c.l.b16 %v1862
    %v3102 = vunpack.c.h.b16 %v1862
    %v3103 = vunpack.c.l.b16 %v1863
    %v3104 = vunpack.c.h.b16 %v1863
    %v3105 = vpack.c.b16 %v3075, %v3073
    %v3106 = vpack.c.b16 %v3076, %v3074
    %v3107 = vpack.c.b16 %v3079, %v3077
    %v3108 = vpack.c.b16 %v3080, %v3078
    %v3109 = vpack.c.b16 %v3083, %v3081
    %v3110 = vpack.c.b16 %v3084, %v3082
    %v3111 = vpack.c.b16 %v3087, %v3085
    %v3112 = vpack.c.b16 %v3088, %v3086
    %v3113 = vpack.c.b16 %v3091, %v3089
    %v3114 = vpack.c.b16 %v3092, %v3090
    %v3115 = vpack.c.b16 %v3095, %v3093
    %v3116 = vpack.c.b16 %v3096, %v3094
    %v3117 = vpack.c.b16 %v3099, %v3097
    %v3118 = vpack.c.b16 %v3100, %v3098
    %v3119 = vpack.c.b16 %v3103, %v3101
    %v3120 = vpack.c.b16 %v3104, %v3102
    %3137 = vmatpush.bf16.msra.mxu0 %v3119
    %3138 = vmatpush.bf16.msra.mxu0 %v3117
    %3139 = vmatpush.bf16.msra.mxu0 %v3115
    %3140 = vmatpush.bf16.msra.mxu0 %v3113
    %3141 = vmatpush.bf16.msra.mxu0 %v3111
    %3142 = vmatpush.bf16.msra.mxu0 %v3109
    %3143 = vmatpush.bf16.msra.mxu0 %v3107
    %3144 = vmatpush.bf16.msra.mxu0 %v3105
    %3145 = vmatmul.bf16.gmra.mxu0 %v1919
    %v3146 = vpop.f32.mrf.mxu0
    %v3147 = vadd.f32 %v3053, %v3146
    %v3148 = vpop.f32.mrf.mxu0
    %3149 = vdwg.mxu0
    %3150 = vmatpush.bf16.msra.mxu0 %v3120
    %3151 = vmatpush.bf16.msra.mxu0 %v3118
    %3152 = vmatpush.bf16.msra.mxu0 %v3116
    %3153 = vmatpush.bf16.msra.mxu0 %v3114
    %3154 = vmatpush.bf16.msra.mxu0 %v3112
    %3155 = vmatpush.bf16.msra.mxu0 %v3110
    %3156 = vmatpush.bf16.msra.mxu0 %v3108
    %3157 = vmatpush.bf16.msra.mxu0 %v3106
    %3158 = vmatmul.bf16.gmra.mxu0 %v1919
    %v3159 = vpop.f32.mrf.mxu0
    %v3160 = vadd.f32 %v3054, %v3159
    %v3161 = vpop.f32.mrf.mxu0
    %3162 = vdwg.mxu0
    %v3163 = vadd.f32 %v3050, %v3147
    %v3164 = vadd.f32 %v3051, %v3160
    %v3165 = vmax.f32 %v3163, 0.0
    %v3166 = vmax.f32 %v3164, 0.0
    %v3169 = vrot.slane %v3166, 6
    %v3170 = vsel %vm1635, %v3165, %v3169
    %v3171 = vsel %vm2277, %v3165, %v3169
    %v3172 = vrot.slane %v3171, 2
    %vm3173 = vcmask 1045508
    %v3174 = vsel %vm3173, %v3165, %v3169
    %v3175 = vrot.slane %v3174, 4
    %vm3176 = vcmask 1045504
    %v3177 = vsel %vm3176, %v3169, %v3165
    %v3178 = vrot.slane %v3177, 6
    %3179 = vst [vmem:[#allocation1] ss:$4 sm:$0xff] %v3170
    %v3180 = vld.sshfl [vmem:[#allocation1] sm:$0xff pattern:$0x73625140]
    %v3181 = vld.sshfl [vmem:[#allocation1 + $0x8] sm:$0xff pattern:$0x73625140]
    %s3182 = scalar_lea.vmem [#allocation1], 32
    %3183 = vst [vmem:[%s3182] ss:$4 sm:$0xff] %v3172
    %v3184 = vld.sshfl [vmem:[#allocation1 + $0x20] sm:$0xff pattern:$0x73625140]
    %v3185 = vld.sshfl [vmem:[#allocation1 + $0x28] sm:$0xff pattern:$0x73625140]
    %3186 = vst [vmem:[#allocation1] ss:$4 sm:$0xff] %v3175
    %v3187 = vld.sshfl [vmem:[#allocation1] sm:$0xff pattern:$0x73625140]
    %v3188 = vld.sshfl [vmem:[#allocation1 + $0x8] sm:$0xff pattern:$0x73625140]
    %3189 = vst [vmem:[%s3182] ss:$4 sm:$0xff] %v3178
    %v3190 = vld.sshfl [vmem:[#allocation1 + $0x20] sm:$0xff pattern:$0x73625140]
    %v3191 = vld.sshfl [vmem:[#allocation1 + $0x28] sm:$0xff pattern:$0x73625140]
    %v3200 = vsel %vm1635, %v3180, -inf
    %v3201 = vrot.slane %v3200, 4
    %v3202 = vmax.f32 %v3200, %v3201
    %v3203 = vrot.slane %v3202, 2
    %v3204 = vmax.f32 %v3202, %v3203
    %v3205 = vrot.slane %v3204, 1
    %v3206 = vmax.f32 %v3204, %v3205
    %v3207 = vsel %vm1635, %v3181, -inf
    %v3208 = vrot.slane %v3207, 4
    %v3209 = vmax.f32 %v3207, %v3208
    %v3210 = vrot.slane %v3209, 2
    %v3211 = vmax.f32 %v3209, %v3210
    %v3212 = vrot.slane %v3211, 1
    %v3213 = vmax.f32 %v3211, %v3212
    %v3214 = vsel %vm1635, %v3184, -inf
    %v3215 = vrot.slane %v3214, 4
    %v3216 = vmax.f32 %v3214, %v3215
    %v3217 = vrot.slane %v3216, 2
    %v3218 = vmax.f32 %v3216, %v3217
    %v3219 = vrot.slane %v3218, 1
    %v3220 = vmax.f32 %v3218, %v3219
    %v3221 = vsel %vm1635, %v3185, -inf
    %v3222 = vrot.slane %v3221, 4
    %v3223 = vmax.f32 %v3221, %v3222
    %v3224 = vrot.slane %v3223, 2
    %v3225 = vmax.f32 %v3223, %v3224
    %v3226 = vrot.slane %v3225, 1
    %v3227 = vmax.f32 %v3225, %v3226
    %v3228 = vsel %vm1635, %v3187, -inf
    %v3229 = vrot.slane %v3228, 4
    %v3230 = vmax.f32 %v3228, %v3229
    %v3231 = vrot.slane %v3230, 2
    %v3232 = vmax.f32 %v3230, %v3231
    %v3233 = vrot.slane %v3232, 1
    %v3234 = vmax.f32 %v3232, %v3233
    %v3235 = vsel %vm1635, %v3188, -inf
    %v3236 = vrot.slane %v3235, 4
    %v3237 = vmax.f32 %v3235, %v3236
    %v3238 = vrot.slane %v3237, 2
    %v3239 = vmax.f32 %v3237, %v3238
    %v3240 = vrot.slane %v3239, 1
    %v3241 = vmax.f32 %v3239, %v3240
    %v3242 = vsel %vm1635, %v3190, -inf
    %v3243 = vrot.slane %v3242, 4
    %v3244 = vmax.f32 %v3242, %v3243
    %v3245 = vrot.slane %v3244, 2
    %v3246 = vmax.f32 %v3244, %v3245
    %v3247 = vrot.slane %v3246, 1
    %v3248 = vmax.f32 %v3246, %v3247
    %v3249 = vsel %vm1635, %v3191, -inf
    %v3250 = vrot.slane %v3249, 4
    %v3251 = vmax.f32 %v3249, %v3250
    %v3252 = vrot.slane %v3251, 2
    %v3253 = vmax.f32 %v3251, %v3252
    %v3254 = vrot.slane %v3253, 1
    %v3255 = vmax.f32 %v3253, %v3254
    %v3256 = vpack.c.bf16 %v3213, %v3206
    %v3257 = vpack.c.bf16 %v3227, %v3220
    %v3258 = vpack.c.bf16 %v3241, %v3234
    %v3259 = vpack.c.bf16 %v3255, %v3248
    %v3264 = vrot.slane %v3256, 3
    %v3265 = vrot.slane %v3257, 3
    %v3266 = vrot.slane %v3258, 3
    %v3267 = vrot.slane %v3259, 3
    %vm3268 = vcmask 1040384
    %v3271 = vsel %vm3268, %v3256, %v3264
    %v3274 = vsel %vm3268, %v3257, %v3265
    %v3277 = vsel %vm3268, %v3258, %v3266
    %v3280 = vsel %vm3268, %v3259, %v3267
    %3281 = vst [vmem:[#allocation1] ss:$4 sm:$0xff] %v3271
    %v3282 = vld [vmem:[#allocation1] sm:$0xff]
    %s3284 = scalar_lea.vmem [#allocation1], 32
    %3285 = vst [vmem:[%s3284] ss:$4 sm:$0xff] %v3274
    %v3286 = vld [vmem:[#allocation1 + $0x20] sm:$0xff]
    %3288 = vst [vmem:[#allocation1] ss:$4 sm:$0xff] %v3277
    %v3289 = vld [vmem:[#allocation1] sm:$0xff]
    %3291 = vst [vmem:[%s3284] ss:$4 sm:$0xff] %v3280
    %v3292 = vld [vmem:[#allocation1 + $0x20] sm:$0xff]
    %v3294 = vunpack.c.l.b16 %v3282
    %v3295 = vunpack.c.h.b16 %v3282
    %v3296 = vunpack.c.l.b16 %v3286
    %v3297 = vunpack.c.h.b16 %v3286
    %v3298 = vunpack.c.l.b16 %v3289
    %v3299 = vunpack.c.h.b16 %v3289
    %v3300 = vunpack.c.l.b16 %v3292
    %v3301 = vunpack.c.h.b16 %v3292
    %v3302 = vrot.slane %v3296, 7
    %v3303 = vsel %vm1146, %v3302, %v3294
    %v3304 = vrot.slane %v3297, 7
    %v3305 = vsel %vm1146, %v3304, %v3295
    %v3306 = vrot.slane %v3300, 7
    %v3307 = vsel %vm1146, %v3306, %v3298
    %v3308 = vrot.slane %v3301, 7
    %v3309 = vsel %vm1146, %v3308, %v3299
    %v3310 = vpack.c.b16 %v3305, %v3303
    %v3311 = vpack.c.b16 %v3309, %v3307
    %v3312 = vrot.slane %v3310, 3
    %v3313 = vrot.slane %v3311, 3
    %v3316 = vsel %vm3268, %v3310, %v3312
    %v3319 = vsel %vm3268, %v3311, %v3313
    %3322 = vst [vmem:[%s25] sm:$0x3] %v3316
    %3323 = vst [vmem:[%s25 + $0x2] sm:$0x3] %v3319
    // Predicated region
    $region162: #{_lambda_.2} parent=1 // pred_check
      _
    $region163: #{_lambda_.2} parent=1 // pred_check_branch
      %3325 = sbr.rel (0) target = $region165
    $region164: #{_lambda_.2} parent=1 // pred_region
      _
    $region165: #{_lambda_.2} parent=1 // pred_fallthru
      _
    // Predicated region
    $region166: #{_lambda_.2} parent=1 // pred_check
      _
    $region167: #{_lambda_.2} parent=1 // pred_check_branch
      %3327 = sbr.rel (0) target = $region169
    $region168: #{_lambda_.2} parent=1 // pred_region
      _
    $region169: #{_lambda_.2} parent=1 // pred_fallthru
      _
    %3328 = vsyncpa [#allocation3], 1
    %3329 = vsyncpa [#allocation5], 1
    %3330 = vsyncpa [#allocation8], 1
    %3331 = vsyncpa [#allocation11], 1
    %3332 = vsyncpa [#allocation14], 1
    %3333 = vsyncpa [#allocation17], 1
    %3334 = vsyncpa [#allocation20], 1
    %3335 = vsyncpa [#allocation23], 1

// kernel: _lambda_.3
$region0: #{_lambda_.3}
  #allocation0 [shape = 'u32[]', space=smem, size = 0x4, offset = 0x4, fixed_abs, tag = 'smem constant byte address 0x4 - core index']
  #allocation1 [shape = 'u32[72,128]{1,0:T(1,128)}', space=vmem, size = 0x9000, scoped, tag = 'internal scratch']
  #allocation2 [shape = 'f32[2,2,1024]{2,1,0:T(2,128)}', space=vmem, size = 0x4000, scoped, tag = 'scratch operand']
  %s0 = inlined_call_operand.vmem [shape: bf16[2,2,256], index: 0, kind: input, shape index: {}]
  %s1 = inlined_call_operand.vmem [shape: bf16[256,768], index: 1, kind: input, shape index: {}]
  %s2 = inlined_call_operand.hbm [shape: f32[1,768], index: 2, kind: input, shape index: {}]
  %s3 = inlined_call_operand.hbm [shape: bf16[256,256], index: 3, kind: input, shape index: {}]
  %s4 = inlined_call_operand.hbm [shape: f32[1,256], index: 4, kind: input, shape index: {}]
  %s5 = inlined_call_operand.hbm [shape: bf16[256,1024], index: 5, kind: input, shape index: {}]
  %s6 = inlined_call_operand.hbm [shape: bf16[256,1024], index: 6, kind: input, shape index: {}]
  %s7 = inlined_call_operand.hbm [shape: f32[1,1024], index: 7, kind: input, shape index: {}]
  %s8 = inlined_call_operand.hbm [shape: bf16[256,1024], index: 8, kind: input, shape index: {}]
  %s9 = inlined_call_operand.vmem [shape: bf16[256,1024], index: 9, kind: input, shape index: {}]
  %s10 = inlined_call_operand.vmem [shape: f32[1,1024], index: 10, kind: input, shape index: {}]
  %s11 = inlined_call_operand.hbm [shape: bf16[256,128], index: 11, kind: input, shape index: {}]
  %s12 = inlined_call_operand.hbm [shape: f32[1,128], index: 12, kind: input, shape index: {}]
  %s13 = inlined_call_operand.hbm [shape: bf16[128,128], index: 13, kind: input, shape index: {}]
  %s14 = inlined_call_operand.hbm [shape: f32[1,128], index: 14, kind: input, shape index: {}]
  %s15 = inlined_call_operand.hbm [shape: f32[2,128], index: 15, kind: output, shape index: {}]
  %s16 = sld [smem:[#allocation0]]
  $region114: #{_lambda_.3} parent=0
    _
  %s18 = ssub.s32 1, %s16
  %s19 = scalar_select 0, %s18, %s16
  $region1: #{_lambda_.3} parent=0
    #allocation3 [shape = 'u8[3072]{0}', space=vmem, size = 0xc00, scoped, tag = 'input window, operand 2, single buffered']
    #allocation4 [shape = 's32[1]{0}', space=sflag, size = 0x4, scoped, tag = 'scoped memory for _lambda_.3']
    #allocation5 [shape = 's32[1]{0}', space=sflag, size = 0x4, scoped, tag = 'scoped memory for _lambda_.3']
    #allocation6 [shape = 'u8[131072]{0}', space=vmem, size = 0x20000, scoped, tag = 'input window, operand 3, single buffered']
    #allocation7 [shape = 's32[1]{0}', space=sflag, size = 0x4, scoped, tag = 'scoped memory for _lambda_.3']
    #allocation8 [shape = 'u8[1024]{0}', space=vmem, size = 0x400, scoped, tag = 'input window, operand 4, single buffered']
    #allocation9 [shape = 'u8[524288]{0}', space=vmem, size = 0x80000, scoped, tag = 'input window, operand 5, single buffered']
    #allocation10 [shape = 's32[1]{0}', space=sflag, size = 0x4, scoped, tag = 'scoped memory for _lambda_.3']
    #allocation11 [shape = 'u8[524288]{0}', space=vmem, size = 0x80000, scoped, tag = 'input window, operand 6, single buffered']
    #allocation12 [shape = 'u8[4096]{0}', space=vmem, size = 0x1000, scoped, tag = 'input window, operand 7, single buffered']
    #allocation13 [shape = 's32[1]{0}', space=sflag, size = 0x4, scoped, tag = 'scoped memory for _lambda_.3']
    #allocation14 [shape = 'u8[524288]{0}', space=vmem, size = 0x80000, scoped, tag = 'input window, operand 8, single buffered']
    #allocation15 [shape = 'u8[65536]{0}', space=vmem, size = 0x10000, scoped, tag = 'input window, operand 11, single buffered']
    #allocation16 [shape = 's32[1]{0}', space=sflag, size = 0x4, scoped, tag = 'scoped memory for _lambda_.3']
    #allocation17 [shape = 'u8[512]{0}', space=vmem, size = 0x400, scoped, tag = 'input window, operand 12, single buffered']
    #allocation18 [shape = 'u8[32768]{0}', space=vmem, size = 0x8000, scoped, tag = 'input window, operand 13, single buffered']
    #allocation19 [shape = 's32[1]{0}', space=sflag, size = 0x4, scoped, tag = 'scoped memory for _lambda_.3']
    #allocation20 [shape = 'u8[512]{0}', space=vmem, size = 0x400, scoped, tag = 'input window, operand 14, single buffered']
    #allocation21 [shape = 'u8[1024]{0}', space=vmem, size = 0x400, scoped, tag = 'output window, operand 0, single buffered']
    %20 = vsyncpa [#allocation4], 0
    %21 = vsyncpa [#allocation7], 0
    %22 = vsyncpa [#allocation10], 0
    %23 = vsyncpa [#allocation13], 0
    %24 = vsyncpa [#allocation16], 0
    %25 = vsyncpa [#allocation19], 0
    %26 = vsyncpa [#allocation5], 0
    // Predicated region
    $region2: #{_lambda_.3} parent=1 // pred_check
      _
    $region3: #{_lambda_.3} parent=1 // pred_check_branch
      %28 = sbr.rel (0) target = $region5
    $region4: #{_lambda_.3} parent=1 // pred_region
      _
    $region5: #{_lambda_.3} parent=1 // pred_fallthru
      _
    // Predicated region
    $region6: #{_lambda_.3} parent=1 // pred_check
      _
    $region7: #{_lambda_.3} parent=1 // pred_check_branch
      %30 = sbr.rel (0) target = $region9
    $region8: #{_lambda_.3} parent=1 // pred_region
      _
    $region9: #{_lambda_.3} parent=1 // pred_fallthru
      _
    // Predicated region
    $region10: #{_lambda_.3} parent=1 // pred_check
      _
    $region11: #{_lambda_.3} parent=1 // pred_check_branch
      %32 = sbr.rel (0) target = $region13
    $region12: #{_lambda_.3} parent=1 // pred_region
      %34 = vsyncadd [#allocation4], 0
      %s36 = sshll.u32 %s2, 4
      %s37 = int_to_ptr.hbm [resolvable:$true] %s36
      %s38 = sshll.u32 [#allocation3], 4
      %s39 = int_to_ptr.vmem [resolvable:$true] %s38
      %41 = dma.hbm_to_vmem [thread:$0]  %s37, 96, %s39, [#allocation4]
    $region13: #{_lambda_.3} parent=1 // pred_fallthru
      _
    // Predicated region
    $region14: #{_lambda_.3} parent=1 // pred_check
      _
    $region15: #{_lambda_.3} parent=1 // pred_check_branch
      %43 = sbr.rel (0) target = $region17
    $region16: #{_lambda_.3} parent=1 // pred_region
      %45 = vsyncadd [#allocation7], 0
      %s46 = sshll.u32 %s3, 4
      %s47 = int_to_ptr.hbm [resolvable:$true] %s46
      %s48 = sshll.u32 [#allocation6], 4
      %s49 = int_to_ptr.vmem [resolvable:$true] %s48
      %54 = dma.hbm_to_vmem [thread:$0]  %s47, 4096, %s49, [#allocation7], 128, 128, 8
    $region17: #{_lambda_.3} parent=1 // pred_fallthru
      _
    // Predicated region
    $region18: #{_lambda_.3} parent=1 // pred_check
      _
    $region19: #{_lambda_.3} parent=1 // pred_check_branch
      %56 = sbr.rel (0) target = $region21
    $region20: #{_lambda_.3} parent=1 // pred_region
      %58 = vsyncadd [#allocation7], 0
      %s60 = sshll.u32 %s4, 4
      %s61 = int_to_ptr.hbm [resolvable:$true] %s60
      %s62 = sshll.u32 [#allocation8], 4
      %s63 = int_to_ptr.vmem [resolvable:$true] %s62
      %65 = dma.hbm_to_vmem [thread:$0]  %s61, 32, %s63, [#allocation7]
    $region21: #{_lambda_.3} parent=1 // pred_fallthru
      _
    // Predicated region
    $region22: #{_lambda_.3} parent=1 // pred_check
      _
    $region23: #{_lambda_.3} parent=1 // pred_check_branch
      %67 = sbr.rel (0) target = $region25
    $region24: #{_lambda_.3} parent=1 // pred_region
      %69 = vsyncadd [#allocation10], 0
      %s70 = sshll.u32 %s5, 4
      %s71 = int_to_ptr.hbm [resolvable:$true] %s70
      %s72 = sshll.u32 [#allocation9], 4
      %s73 = int_to_ptr.vmem [resolvable:$true] %s72
      %78 = dma.hbm_to_vmem [thread:$0]  %s71, 16384, %s73, [#allocation10], 512, 512, 32
    $region25: #{_lambda_.3} parent=1 // pred_fallthru
      _
    // Predicated region
    $region26: #{_lambda_.3} parent=1 // pred_check
      _
    $region27: #{_lambda_.3} parent=1 // pred_check_branch
      %80 = sbr.rel (0) target = $region29
    $region28: #{_lambda_.3} parent=1 // pred_region
      %82 = vsyncadd [#allocation10], 0
      %s83 = sshll.u32 %s6, 4
      %s84 = int_to_ptr.hbm [resolvable:$true] %s83
      %s85 = sshll.u32 [#allocation11], 4
      %s86 = int_to_ptr.vmem [resolvable:$true] %s85
      %91 = dma.hbm_to_vmem [thread:$0]  %s84, 16384, %s86, [#allocation10], 512, 512, 32
    $region29: #{_lambda_.3} parent=1 // pred_fallthru
      _
    // Predicated region
    $region30: #{_lambda_.3} parent=1 // pred_check
      _
    $region31: #{_lambda_.3} parent=1 // pred_check_branch
      %93 = sbr.rel (0) target = $region33
    $region32: #{_lambda_.3} parent=1 // pred_region
      %95 = vsyncadd [#allocation13], 0
      %s97 = sshll.u32 %s7, 4
      %s98 = int_to_ptr.hbm [resolvable:$true] %s97
      %s99 = sshll.u32 [#allocation12], 4
      %s100 = int_to_ptr.vmem [resolvable:$true] %s99
      %102 = dma.hbm_to_vmem [thread:$0]  %s98, 128, %s100, [#allocation13]
    $region33: #{_lambda_.3} parent=1 // pred_fallthru
      _
    // Predicated region
    $region34: #{_lambda_.3} parent=1 // pred_check
      _
    $region35: #{_lambda_.3} parent=1 // pred_check_branch
      %104 = sbr.rel (0) target = $region37
    $region36: #{_lambda_.3} parent=1 // pred_region
      %106 = vsyncadd [#allocation13], 0
      %s107 = sshll.u32 %s8, 4
      %s108 = int_to_ptr.hbm [resolvable:$true] %s107
      %s109 = sshll.u32 [#allocation14], 4
      %s110 = int_to_ptr.vmem [resolvable:$true] %s109
      %115 = dma.hbm_to_vmem [thread:$0]  %s108, 16384, %s110, [#allocation13], 512, 512, 32
    $region37: #{_lambda_.3} parent=1 // pred_fallthru
      _
    // Predicated region
    $region38: #{_lambda_.3} parent=1 // pred_check
      _
    $region39: #{_lambda_.3} parent=1 // pred_check_branch
      %117 = sbr.rel (0) target = $region41
    $region40: #{_lambda_.3} parent=1 // pred_region
      _
    $region41: #{_lambda_.3} parent=1 // pred_fallthru
      _
    // Predicated region
    $region42: #{_lambda_.3} parent=1 // pred_check
      _
    $region43: #{_lambda_.3} parent=1 // pred_check_branch
      %119 = sbr.rel (0) target = $region45
    $region44: #{_lambda_.3} parent=1 // pred_region
      _
    $region45: #{_lambda_.3} parent=1 // pred_fallthru
      _
    // Predicated region
    $region46: #{_lambda_.3} parent=1 // pred_check
      _
    $region47: #{_lambda_.3} parent=1 // pred_check_branch
      %121 = sbr.rel (0) target = $region49
    $region48: #{_lambda_.3} parent=1 // pred_region
      %123 = vsyncadd [#allocation16], 0
      %s124 = sshll.u32 %s11, 4
      %s125 = int_to_ptr.hbm [resolvable:$true] %s124
      %s126 = sshll.u32 [#allocation15], 4
      %s127 = int_to_ptr.vmem [resolvable:$true] %s126
      %132 = dma.hbm_to_vmem [thread:$0]  %s125, 2048, %s127, [#allocation16], 64, 64, 4
    $region49: #{_lambda_.3} parent=1 // pred_fallthru
      _
    // Predicated region
    $region50: #{_lambda_.3} parent=1 // pred_check
      _
    $region51: #{_lambda_.3} parent=1 // pred_check_branch
      %134 = sbr.rel (0) target = $region53
    $region52: #{_lambda_.3} parent=1 // pred_region
      %136 = vsyncadd [#allocation16], 0
      %s138 = sshll.u32 %s12, 4
      %s139 = int_to_ptr.hbm [resolvable:$true] %s138
      %s140 = sshll.u32 [#allocation17], 4
      %s141 = int_to_ptr.vmem [resolvable:$true] %s140
      %143 = dma.hbm_to_vmem [thread:$0]  %s139, 16, %s141, [#allocation16]
    $region53: #{_lambda_.3} parent=1 // pred_fallthru
      _
    // Predicated region
    $region54: #{_lambda_.3} parent=1 // pred_check
      _
    $region55: #{_lambda_.3} parent=1 // pred_check_branch
      %145 = sbr.rel (0) target = $region57
    $region56: #{_lambda_.3} parent=1 // pred_region
      %147 = vsyncadd [#allocation19], 0
      %s148 = sshll.u32 %s13, 4
      %s149 = int_to_ptr.hbm [resolvable:$true] %s148
      %s150 = sshll.u32 [#allocation18], 4
      %s151 = int_to_ptr.vmem [resolvable:$true] %s150
      %156 = dma.hbm_to_vmem [thread:$0]  %s149, 1024, %s151, [#allocation19], 64, 64, 4
    $region57: #{_lambda_.3} parent=1 // pred_fallthru
      _
    // Predicated region
    $region58: #{_lambda_.3} parent=1 // pred_check
      _
    $region59: #{_lambda_.3} parent=1 // pred_check_branch
      %158 = sbr.rel (0) target = $region61
    $region60: #{_lambda_.3} parent=1 // pred_region
      %160 = vsyncadd [#allocation19], 0
      %s162 = sshll.u32 %s14, 4
      %s163 = int_to_ptr.hbm [resolvable:$true] %s162
      %s164 = sshll.u32 [#allocation20], 4
      %s165 = int_to_ptr.vmem [resolvable:$true] %s164
      %167 = dma.hbm_to_vmem [thread:$0]  %s163, 16, %s165, [#allocation19]
    $region61: #{_lambda_.3} parent=1 // pred_fallthru
      _
    // Predicated region
    $region62: #{_lambda_.3} parent=1 // pred_check
      _
    $region63: #{_lambda_.3} parent=1 // pred_check_branch
      %169 = sbr.rel (0) target = $region65
    $region64: #{_lambda_.3} parent=1 // pred_region
      %171 = dma.done [#allocation4], 96
    $region65: #{_lambda_.3} parent=1 // pred_fallthru
      _
    // Predicated region
    $region66: #{_lambda_.3} parent=1 // pred_check
      _
    $region67: #{_lambda_.3} parent=1 // pred_check_branch
      %173 = sbr.rel (0) target = $region69
    $region68: #{_lambda_.3} parent=1 // pred_region
      %175 = dma.done [#allocation7], 4096
    $region69: #{_lambda_.3} parent=1 // pred_fallthru
      _
    // Predicated region
    $region70: #{_lambda_.3} parent=1 // pred_check
      _
    $region71: #{_lambda_.3} parent=1 // pred_check_branch
      %177 = sbr.rel (0) target = $region73
    $region72: #{_lambda_.3} parent=1 // pred_region
      %179 = dma.done [#allocation7], 32
    $region73: #{_lambda_.3} parent=1 // pred_fallthru
      _
    // Predicated region
    $region74: #{_lambda_.3} parent=1 // pred_check
      _
    $region75: #{_lambda_.3} parent=1 // pred_check_branch
      %181 = sbr.rel (0) target = $region77
    $region76: #{_lambda_.3} parent=1 // pred_region
      %183 = dma.done [#allocation10], 16384
    $region77: #{_lambda_.3} parent=1 // pred_fallthru
      _
    // Predicated region
    $region78: #{_lambda_.3} parent=1 // pred_check
      _
    $region79: #{_lambda_.3} parent=1 // pred_check_branch
      %185 = sbr.rel (0) target = $region81
    $region80: #{_lambda_.3} parent=1 // pred_region
      %187 = dma.done [#allocation10], 16384
    $region81: #{_lambda_.3} parent=1 // pred_fallthru
      _
    // Predicated region
    $region82: #{_lambda_.3} parent=1 // pred_check
      _
    $region83: #{_lambda_.3} parent=1 // pred_check_branch
      %189 = sbr.rel (0) target = $region85
    $region84: #{_lambda_.3} parent=1 // pred_region
      %191 = dma.done [#allocation13], 128
    $region85: #{_lambda_.3} parent=1 // pred_fallthru
      _
    // Predicated region
    $region86: #{_lambda_.3} parent=1 // pred_check
      _
    $region87: #{_lambda_.3} parent=1 // pred_check_branch
      %193 = sbr.rel (0) target = $region89
    $region88: #{_lambda_.3} parent=1 // pred_region
      %195 = dma.done [#allocation13], 16384
    $region89: #{_lambda_.3} parent=1 // pred_fallthru
      _
    // Predicated region
    $region90: #{_lambda_.3} parent=1 // pred_check
      _
    $region91: #{_lambda_.3} parent=1 // pred_check_branch
      %197 = sbr.rel (0) target = $region93
    $region92: #{_lambda_.3} parent=1 // pred_region
      %199 = dma.done [#allocation16], 2048
    $region93: #{_lambda_.3} parent=1 // pred_fallthru
      _
    // Predicated region
    $region94: #{_lambda_.3} parent=1 // pred_check
      _
    $region95: #{_lambda_.3} parent=1 // pred_check_branch
      %201 = sbr.rel (0) target = $region97
    $region96: #{_lambda_.3} parent=1 // pred_region
      %203 = dma.done [#allocation16], 16
    $region97: #{_lambda_.3} parent=1 // pred_fallthru
      _
    // Predicated region
    $region98: #{_lambda_.3} parent=1 // pred_check
      _
    $region99: #{_lambda_.3} parent=1 // pred_check_branch
      %205 = sbr.rel (0) target = $region101
    $region100: #{_lambda_.3} parent=1 // pred_region
      %207 = dma.done [#allocation19], 1024
    $region101: #{_lambda_.3} parent=1 // pred_fallthru
      _
    // Predicated region
    $region102: #{_lambda_.3} parent=1 // pred_check
      _
    $region103: #{_lambda_.3} parent=1 // pred_check_branch
      %209 = sbr.rel (0) target = $region105
    $region104: #{_lambda_.3} parent=1 // pred_region
      %211 = dma.done [#allocation19], 16
    $region105: #{_lambda_.3} parent=1 // pred_fallthru
      _
    %v213 = vld [vmem:[%s0] sm:$0x3]
    %v214 = vld [vmem:[%s0 + $0x2] sm:$0x3]
    %v215 = vld [vmem:[%s1] sm:$0xff]
    %v216 = vld [vmem:[%s1 + $0x8] sm:$0xff]
    %v217 = vld [vmem:[%s1 + $0x10] sm:$0xff]
    %v218 = vld [vmem:[%s1 + $0x18] sm:$0xff]
    %v219 = vld [vmem:[%s1 + $0x20] sm:$0xff]
    %v220 = vld [vmem:[%s1 + $0x28] sm:$0xff]
    %v221 = vld [vmem:[%s1 + $0x30] sm:$0xff]
    %v222 = vld [vmem:[%s1 + $0x38] sm:$0xff]
    %v223 = vld [vmem:[%s1 + $0x40] sm:$0xff]
    %v224 = vld [vmem:[%s1 + $0x48] sm:$0xff]
    %v225 = vld [vmem:[%s1 + $0x50] sm:$0xff]
    %v226 = vld [vmem:[%s1 + $0x58] sm:$0xff]
    %v227 = vld [vmem:[%s1 + $0x60] sm:$0xff]
    %v228 = vld [vmem:[%s1 + $0x68] sm:$0xff]
    %v229 = vld [vmem:[%s1 + $0x70] sm:$0xff]
    %v230 = vld [vmem:[%s1 + $0x78] sm:$0xff]
    %v231 = vld [vmem:[%s1 + $0x80] sm:$0xff]
    %v232 = vld [vmem:[%s1 + $0x88] sm:$0xff]
    %v233 = vld [vmem:[%s1 + $0x90] sm:$0xff]
    %v234 = vld [vmem:[%s1 + $0x98] sm:$0xff]
    %v235 = vld [vmem:[%s1 + $0xa0] sm:$0xff]
    %v236 = vld [vmem:[%s1 + $0xa8] sm:$0xff]
    %v237 = vld [vmem:[%s1 + $0xb0] sm:$0xff]
    %v238 = vld [vmem:[%s1 + $0xb8] sm:$0xff]
    %v239 = vld [vmem:[%s1 + $0xc0] sm:$0xff]
    %v240 = vld [vmem:[%s1 + $0xc8] sm:$0xff]
    %v241 = vld [vmem:[%s1 + $0xd0] sm:$0xff]
    %v242 = vld [vmem:[%s1 + $0xd8] sm:$0xff]
    %v243 = vld [vmem:[%s1 + $0xe0] sm:$0xff]
    %v244 = vld [vmem:[%s1 + $0xe8] sm:$0xff]
    %v245 = vld [vmem:[%s1 + $0xf0] sm:$0xff]
    %v246 = vld [vmem:[%s1 + $0xf8] sm:$0xff]
    %v247 = vld [vmem:[%s1 + $0x100] sm:$0xff]
    %v248 = vld [vmem:[%s1 + $0x108] sm:$0xff]
    %v249 = vld [vmem:[%s1 + $0x110] sm:$0xff]
    %v250 = vld [vmem:[%s1 + $0x118] sm:$0xff]
    %v251 = vld [vmem:[%s1 + $0x120] sm:$0xff]
    %v252 = vld [vmem:[%s1 + $0x128] sm:$0xff]
    %v253 = vld [vmem:[%s1 + $0x130] sm:$0xff]
    %v254 = vld [vmem:[%s1 + $0x138] sm:$0xff]
    %v255 = vld [vmem:[%s1 + $0x140] sm:$0xff]
    %v256 = vld [vmem:[%s1 + $0x148] sm:$0xff]
    %v257 = vld [vmem:[%s1 + $0x150] sm:$0xff]
    %v258 = vld [vmem:[%s1 + $0x158] sm:$0xff]
    %v259 = vld [vmem:[%s1 + $0x160] sm:$0xff]
    %v260 = vld [vmem:[%s1 + $0x168] sm:$0xff]
    %v261 = vld [vmem:[%s1 + $0x170] sm:$0xff]
    %v262 = vld [vmem:[%s1 + $0x178] sm:$0xff]
    %v263 = vld [vmem:[%s1 + $0x180] sm:$0xff]
    %v264 = vld [vmem:[%s1 + $0x188] sm:$0xff]
    %v265 = vld [vmem:[%s1 + $0x190] sm:$0xff]
    %v266 = vld [vmem:[%s1 + $0x198] sm:$0xff]
    %v267 = vld [vmem:[%s1 + $0x1a0] sm:$0xff]
    %v268 = vld [vmem:[%s1 + $0x1a8] sm:$0xff]
    %v269 = vld [vmem:[%s1 + $0x1b0] sm:$0xff]
    %v270 = vld [vmem:[%s1 + $0x1b8] sm:$0xff]
    %v271 = vld [vmem:[%s1 + $0x1c0] sm:$0xff]
    %v272 = vld [vmem:[%s1 + $0x1c8] sm:$0xff]
    %v273 = vld [vmem:[%s1 + $0x1d0] sm:$0xff]
    %v274 = vld [vmem:[%s1 + $0x1d8] sm:$0xff]
    %v275 = vld [vmem:[%s1 + $0x1e0] sm:$0xff]
    %v276 = vld [vmem:[%s1 + $0x1e8] sm:$0xff]
    %v277 = vld [vmem:[%s1 + $0x1f0] sm:$0xff]
    %v278 = vld [vmem:[%s1 + $0x1f8] sm:$0xff]
    %v279 = vld [vmem:[%s1 + $0x200] sm:$0xff]
    %v280 = vld [vmem:[%s1 + $0x208] sm:$0xff]
    %v281 = vld [vmem:[%s1 + $0x210] sm:$0xff]
    %v282 = vld [vmem:[%s1 + $0x218] sm:$0xff]
    %v283 = vld [vmem:[%s1 + $0x220] sm:$0xff]
    %v284 = vld [vmem:[%s1 + $0x228] sm:$0xff]
    %v285 = vld [vmem:[%s1 + $0x230] sm:$0xff]
    %v286 = vld [vmem:[%s1 + $0x238] sm:$0xff]
    %v287 = vld [vmem:[%s1 + $0x240] sm:$0xff]
    %v288 = vld [vmem:[%s1 + $0x248] sm:$0xff]
    %v289 = vld [vmem:[%s1 + $0x250] sm:$0xff]
    %v290 = vld [vmem:[%s1 + $0x258] sm:$0xff]
    %v291 = vld [vmem:[%s1 + $0x260] sm:$0xff]
    %v292 = vld [vmem:[%s1 + $0x268] sm:$0xff]
    %v293 = vld [vmem:[%s1 + $0x270] sm:$0xff]
    %v294 = vld [vmem:[%s1 + $0x278] sm:$0xff]
    %v295 = vld [vmem:[%s1 + $0x280] sm:$0xff]
    %v296 = vld [vmem:[%s1 + $0x288] sm:$0xff]
    %v297 = vld [vmem:[%s1 + $0x290] sm:$0xff]
    %v298 = vld [vmem:[%s1 + $0x298] sm:$0xff]
    %v299 = vld [vmem:[%s1 + $0x2a0] sm:$0xff]
    %v300 = vld [vmem:[%s1 + $0x2a8] sm:$0xff]
    %v301 = vld [vmem:[%s1 + $0x2b0] sm:$0xff]
    %v302 = vld [vmem:[%s1 + $0x2b8] sm:$0xff]
    %v303 = vld [vmem:[%s1 + $0x2c0] sm:$0xff]
    %v304 = vld [vmem:[%s1 + $0x2c8] sm:$0xff]
    %v305 = vld [vmem:[%s1 + $0x2d0] sm:$0xff]
    %v306 = vld [vmem:[%s1 + $0x2d8] sm:$0xff]
    %v307 = vld [vmem:[%s1 + $0x2e0] sm:$0xff]
    %v308 = vld [vmem:[%s1 + $0x2e8] sm:$0xff]
    %v309 = vld [vmem:[%s1 + $0x2f0] sm:$0xff]
    %v310 = vld [vmem:[%s1 + $0x2f8] sm:$0xff]
    %v311 = vld [vmem:[#allocation3] sm:$0x3f]
    %v313 = vperm.slane %v311, 0
    %v314 = vperm.slane %v311, 1
    %v315 = vperm.slane %v311, 2
    %v316 = vperm.slane %v311, 3
    %v317 = vperm.slane %v311, 4
    %v318 = vperm.slane %v311, 5
    %326 = vst [vmem:[#allocation1] ss:$9 sm:$0xff] %v213
    %s328 = scalar_lea.vmem [#allocation1], 1
    %329 = vst [vmem:[%s328] ss:$9 sm:$0xff] %v214
    %v330 = vld [vmem:[#allocation1] sm:$0xff]
    %v331 = vld [vmem:[#allocation1 + $0x9] sm:$0xff]
    %v430 = vunpack.c.l.b16 %v215
    %v431 = vunpack.c.h.b16 %v215
    %v432 = vunpack.c.l.b16 %v216
    %v433 = vunpack.c.h.b16 %v216
    %v434 = vunpack.c.l.b16 %v217
    %v435 = vunpack.c.h.b16 %v217
    %v436 = vunpack.c.l.b16 %v218
    %v437 = vunpack.c.h.b16 %v218
    %v438 = vunpack.c.l.b16 %v219
    %v439 = vunpack.c.h.b16 %v219
    %v440 = vunpack.c.l.b16 %v220
    %v441 = vunpack.c.h.b16 %v220
    %v442 = vunpack.c.l.b16 %v221
    %v443 = vunpack.c.h.b16 %v221
    %v444 = vunpack.c.l.b16 %v222
    %v445 = vunpack.c.h.b16 %v222
    %v446 = vunpack.c.l.b16 %v223
    %v447 = vunpack.c.h.b16 %v223
    %v448 = vunpack.c.l.b16 %v224
    %v449 = vunpack.c.h.b16 %v224
    %v450 = vunpack.c.l.b16 %v225
    %v451 = vunpack.c.h.b16 %v225
    %v452 = vunpack.c.l.b16 %v226
    %v453 = vunpack.c.h.b16 %v226
    %v454 = vunpack.c.l.b16 %v227
    %v455 = vunpack.c.h.b16 %v227
    %v456 = vunpack.c.l.b16 %v228
    %v457 = vunpack.c.h.b16 %v228
    %v458 = vunpack.c.l.b16 %v229
    %v459 = vunpack.c.h.b16 %v229
    %v460 = vunpack.c.l.b16 %v230
    %v461 = vunpack.c.h.b16 %v230
    %v462 = vunpack.c.l.b16 %v231
    %v463 = vunpack.c.h.b16 %v231
    %v464 = vunpack.c.l.b16 %v232
    %v465 = vunpack.c.h.b16 %v232
    %v466 = vunpack.c.l.b16 %v233
    %v467 = vunpack.c.h.b16 %v233
    %v468 = vunpack.c.l.b16 %v234
    %v469 = vunpack.c.h.b16 %v234
    %v470 = vunpack.c.l.b16 %v235
    %v471 = vunpack.c.h.b16 %v235
    %v472 = vunpack.c.l.b16 %v236
    %v473 = vunpack.c.h.b16 %v236
    %v474 = vunpack.c.l.b16 %v237
    %v475 = vunpack.c.h.b16 %v237
    %v476 = vunpack.c.l.b16 %v238
    %v477 = vunpack.c.h.b16 %v238
    %v478 = vunpack.c.l.b16 %v239
    %v479 = vunpack.c.h.b16 %v239
    %v480 = vunpack.c.l.b16 %v240
    %v481 = vunpack.c.h.b16 %v240
    %v482 = vunpack.c.l.b16 %v241
    %v483 = vunpack.c.h.b16 %v241
    %v484 = vunpack.c.l.b16 %v242
    %v485 = vunpack.c.h.b16 %v242
    %v486 = vunpack.c.l.b16 %v243
    %v487 = vunpack.c.h.b16 %v243
    %v488 = vunpack.c.l.b16 %v244
    %v489 = vunpack.c.h.b16 %v244
    %v490 = vunpack.c.l.b16 %v245
    %v491 = vunpack.c.h.b16 %v245
    %v492 = vunpack.c.l.b16 %v246
    %v493 = vunpack.c.h.b16 %v246
    %v494 = vunpack.c.l.b16 %v247
    %v495 = vunpack.c.h.b16 %v247
    %v496 = vunpack.c.l.b16 %v248
    %v497 = vunpack.c.h.b16 %v248
    %v498 = vunpack.c.l.b16 %v249
    %v499 = vunpack.c.h.b16 %v249
    %v500 = vunpack.c.l.b16 %v250
    %v501 = vunpack.c.h.b16 %v250
    %v502 = vunpack.c.l.b16 %v251
    %v503 = vunpack.c.h.b16 %v251
    %v504 = vunpack.c.l.b16 %v252
    %v505 = vunpack.c.h.b16 %v252
    %v506 = vunpack.c.l.b16 %v253
    %v507 = vunpack.c.h.b16 %v253
    %v508 = vunpack.c.l.b16 %v254
    %v509 = vunpack.c.h.b16 %v254
    %v510 = vunpack.c.l.b16 %v255
    %v511 = vunpack.c.h.b16 %v255
    %v512 = vunpack.c.l.b16 %v256
    %v513 = vunpack.c.h.b16 %v256
    %v514 = vunpack.c.l.b16 %v257
    %v515 = vunpack.c.h.b16 %v257
    %v516 = vunpack.c.l.b16 %v258
    %v517 = vunpack.c.h.b16 %v258
    %v518 = vunpack.c.l.b16 %v259
    %v519 = vunpack.c.h.b16 %v259
    %v520 = vunpack.c.l.b16 %v260
    %v521 = vunpack.c.h.b16 %v260
    %v522 = vunpack.c.l.b16 %v261
    %v523 = vunpack.c.h.b16 %v261
    %v524 = vunpack.c.l.b16 %v262
    %v525 = vunpack.c.h.b16 %v262
    %v526 = vunpack.c.l.b16 %v263
    %v527 = vunpack.c.h.b16 %v263
    %v528 = vunpack.c.l.b16 %v264
    %v529 = vunpack.c.h.b16 %v264
    %v530 = vunpack.c.l.b16 %v265
    %v531 = vunpack.c.h.b16 %v265
    %v532 = vunpack.c.l.b16 %v266
    %v533 = vunpack.c.h.b16 %v266
    %v534 = vunpack.c.l.b16 %v267
    %v535 = vunpack.c.h.b16 %v267
    %v536 = vunpack.c.l.b16 %v268
    %v537 = vunpack.c.h.b16 %v268
    %v538 = vunpack.c.l.b16 %v269
    %v539 = vunpack.c.h.b16 %v269
    %v540 = vunpack.c.l.b16 %v270
    %v541 = vunpack.c.h.b16 %v270
    %v542 = vunpack.c.l.b16 %v271
    %v543 = vunpack.c.h.b16 %v271
    %v544 = vunpack.c.l.b16 %v272
    %v545 = vunpack.c.h.b16 %v272
    %v546 = vunpack.c.l.b16 %v273
    %v547 = vunpack.c.h.b16 %v273
    %v548 = vunpack.c.l.b16 %v274
    %v549 = vunpack.c.h.b16 %v274
    %v550 = vunpack.c.l.b16 %v275
    %v551 = vunpack.c.h.b16 %v275
    %v552 = vunpack.c.l.b16 %v276
    %v553 = vunpack.c.h.b16 %v276
    %v554 = vunpack.c.l.b16 %v277
    %v555 = vunpack.c.h.b16 %v277
    %v556 = vunpack.c.l.b16 %v278
    %v557 = vunpack.c.h.b16 %v278
    %v558 = vunpack.c.l.b16 %v279
    %v559 = vunpack.c.h.b16 %v279
    %v560 = vunpack.c.l.b16 %v280
    %v561 = vunpack.c.h.b16 %v280
    %v562 = vunpack.c.l.b16 %v281
    %v563 = vunpack.c.h.b16 %v281
    %v564 = vunpack.c.l.b16 %v282
    %v565 = vunpack.c.h.b16 %v282
    %v566 = vunpack.c.l.b16 %v283
    %v567 = vunpack.c.h.b16 %v283
    %v568 = vunpack.c.l.b16 %v284
    %v569 = vunpack.c.h.b16 %v284
    %v570 = vunpack.c.l.b16 %v285
    %v571 = vunpack.c.h.b16 %v285
    %v572 = vunpack.c.l.b16 %v286
    %v573 = vunpack.c.h.b16 %v286
    %v574 = vunpack.c.l.b16 %v287
    %v575 = vunpack.c.h.b16 %v287
    %v576 = vunpack.c.l.b16 %v288
    %v577 = vunpack.c.h.b16 %v288
    %v578 = vunpack.c.l.b16 %v289
    %v579 = vunpack.c.h.b16 %v289
    %v580 = vunpack.c.l.b16 %v290
    %v581 = vunpack.c.h.b16 %v290
    %v582 = vunpack.c.l.b16 %v291
    %v583 = vunpack.c.h.b16 %v291
    %v584 = vunpack.c.l.b16 %v292
    %v585 = vunpack.c.h.b16 %v292
    %v586 = vunpack.c.l.b16 %v293
    %v587 = vunpack.c.h.b16 %v293
    %v588 = vunpack.c.l.b16 %v294
    %v589 = vunpack.c.h.b16 %v294
    %v590 = vunpack.c.l.b16 %v295
    %v591 = vunpack.c.h.b16 %v295
    %v592 = vunpack.c.l.b16 %v296
    %v593 = vunpack.c.h.b16 %v296
    %v594 = vunpack.c.l.b16 %v297
    %v595 = vunpack.c.h.b16 %v297
    %v596 = vunpack.c.l.b16 %v298
    %v597 = vunpack.c.h.b16 %v298
    %v598 = vunpack.c.l.b16 %v299
    %v599 = vunpack.c.h.b16 %v299
    %v600 = vunpack.c.l.b16 %v300
    %v601 = vunpack.c.h.b16 %v300
    %v602 = vunpack.c.l.b16 %v301
    %v603 = vunpack.c.h.b16 %v301
    %v604 = vunpack.c.l.b16 %v302
    %v605 = vunpack.c.h.b16 %v302
    %v606 = vunpack.c.l.b16 %v303
    %v607 = vunpack.c.h.b16 %v303
    %v608 = vunpack.c.l.b16 %v304
    %v609 = vunpack.c.h.b16 %v304
    %v610 = vunpack.c.l.b16 %v305
    %v611 = vunpack.c.h.b16 %v305
    %v612 = vunpack.c.l.b16 %v306
    %v613 = vunpack.c.h.b16 %v306
    %v614 = vunpack.c.l.b16 %v307
    %v615 = vunpack.c.h.b16 %v307
    %v616 = vunpack.c.l.b16 %v308
    %v617 = vunpack.c.h.b16 %v308
    %v618 = vunpack.c.l.b16 %v309
    %v619 = vunpack.c.h.b16 %v309
    %v620 = vunpack.c.l.b16 %v310
    %v621 = vunpack.c.h.b16 %v310
    %v622 = vpack.c.b16 %v436, %v430
    %v623 = vpack.c.b16 %v437, %v431
    %v624 = vpack.c.b16 %v438, %v432
    %v625 = vpack.c.b16 %v439, %v433
    %v626 = vpack.c.b16 %v440, %v434
    %v627 = vpack.c.b16 %v441, %v435
    %v628 = vpack.c.b16 %v448, %v442
    %v629 = vpack.c.b16 %v449, %v443
    %v630 = vpack.c.b16 %v450, %v444
    %v631 = vpack.c.b16 %v451, %v445
    %v632 = vpack.c.b16 %v452, %v446
    %v633 = vpack.c.b16 %v453, %v447
    %v634 = vpack.c.b16 %v460, %v454
    %v635 = vpack.c.b16 %v461, %v455
    %v636 = vpack.c.b16 %v462, %v456
    %v637 = vpack.c.b16 %v463, %v457
    %v638 = vpack.c.b16 %v464, %v458
    %v639 = vpack.c.b16 %v465, %v459
    %v640 = vpack.c.b16 %v472, %v466
    %v641 = vpack.c.b16 %v473, %v467
    %v642 = vpack.c.b16 %v474, %v468
    %v643 = vpack.c.b16 %v475, %v469
    %v644 = vpack.c.b16 %v476, %v470
    %v645 = vpack.c.b16 %v477, %v471
    %v646 = vpack.c.b16 %v484, %v478
    %v647 = vpack.c.b16 %v485, %v479
    %v648 = vpack.c.b16 %v486, %v480
    %v649 = vpack.c.b16 %v487, %v481
    %v650 = vpack.c.b16 %v488, %v482
    %v651 = vpack.c.b16 %v489, %v483
    %v652 = vpack.c.b16 %v496, %v490
    %v653 = vpack.c.b16 %v497, %v491
    %v654 = vpack.c.b16 %v498, %v492
    %v655 = vpack.c.b16 %v499, %v493
    %v656 = vpack.c.b16 %v500, %v494
    %v657 = vpack.c.b16 %v501, %v495
    %v658 = vpack.c.b16 %v508, %v502
    %v659 = vpack.c.b16 %v509, %v503
    %v660 = vpack.c.b16 %v510, %v504
    %v661 = vpack.c.b16 %v511, %v505
    %v662 = vpack.c.b16 %v512, %v506
    %v663 = vpack.c.b16 %v513, %v507
    %v664 = vpack.c.b16 %v520, %v514
    %v665 = vpack.c.b16 %v521, %v515
    %v666 = vpack.c.b16 %v522, %v516
    %v667 = vpack.c.b16 %v523, %v517
    %v668 = vpack.c.b16 %v524, %v518
    %v669 = vpack.c.b16 %v525, %v519
    %v670 = vpack.c.b16 %v532, %v526
    %v671 = vpack.c.b16 %v533, %v527
    %v672 = vpack.c.b16 %v534, %v528
    %v673 = vpack.c.b16 %v535, %v529
    %v674 = vpack.c.b16 %v536, %v530
    %v675 = vpack.c.b16 %v537, %v531
    %v676 = vpack.c.b16 %v544, %v538
    %v677 = vpack.c.b16 %v545, %v539
    %v678 = vpack.c.b16 %v546, %v540
    %v679 = vpack.c.b16 %v547, %v541
    %v680 = vpack.c.b16 %v548, %v542
    %v681 = vpack.c.b16 %v549, %v543
    %v682 = vpack.c.b16 %v556, %v550
    %v683 = vpack.c.b16 %v557, %v551
    %v684 = vpack.c.b16 %v558, %v552
    %v685 = vpack.c.b16 %v559, %v553
    %v686 = vpack.c.b16 %v560, %v554
    %v687 = vpack.c.b16 %v561, %v555
    %v688 = vpack.c.b16 %v568, %v562
    %v689 = vpack.c.b16 %v569, %v563
    %v690 = vpack.c.b16 %v570, %v564
    %v691 = vpack.c.b16 %v571, %v565
    %v692 = vpack.c.b16 %v572, %v566
    %v693 = vpack.c.b16 %v573, %v567
    %v694 = vpack.c.b16 %v580, %v574
    %v695 = vpack.c.b16 %v581, %v575
    %v696 = vpack.c.b16 %v582, %v576
    %v697 = vpack.c.b16 %v583, %v577
    %v698 = vpack.c.b16 %v584, %v578
    %v699 = vpack.c.b16 %v585, %v579
    %v700 = vpack.c.b16 %v592, %v586
    %v701 = vpack.c.b16 %v593, %v587
    %v702 = vpack.c.b16 %v594, %v588
    %v703 = vpack.c.b16 %v595, %v589
    %v704 = vpack.c.b16 %v596, %v590
    %v705 = vpack.c.b16 %v597, %v591
    %v706 = vpack.c.b16 %v604, %v598
    %v707 = vpack.c.b16 %v605, %v599
    %v708 = vpack.c.b16 %v606, %v600
    %v709 = vpack.c.b16 %v607, %v601
    %v710 = vpack.c.b16 %v608, %v602
    %v711 = vpack.c.b16 %v609, %v603
    %v712 = vpack.c.b16 %v616, %v610
    %v713 = vpack.c.b16 %v617, %v611
    %v714 = vpack.c.b16 %v618, %v612
    %v715 = vpack.c.b16 %v619, %v613
    %v716 = vpack.c.b16 %v620, %v614
    %v717 = vpack.c.b16 %v621, %v615
    %814 = vmatpush.bf16.msra.mxu0 %v664
    %815 = vmatpush.bf16.msra.mxu0 %v658
    %816 = vmatpush.bf16.msra.mxu0 %v652
    %817 = vmatpush.bf16.msra.mxu0 %v646
    %818 = vmatpush.bf16.msra.mxu0 %v640
    %819 = vmatpush.bf16.msra.mxu0 %v634
    %820 = vmatpush.bf16.msra.mxu0 %v628
    %821 = vmatpush.bf16.msra.mxu0 %v622
    %822 = vmatmul.bf16.gmra.mxu0 %v330
    %v823 = vpop.f32.mrf.mxu0
    %v824 = vadd.f32 %v313, %v823
    %v825 = vpop.f32.mrf.mxu0
    %826 = vdwg.mxu0
    %827 = vmatpush.bf16.msra.mxu0 %v712
    %828 = vmatpush.bf16.msra.mxu0 %v706
    %829 = vmatpush.bf16.msra.mxu0 %v700
    %830 = vmatpush.bf16.msra.mxu0 %v694
    %831 = vmatpush.bf16.msra.mxu0 %v688
    %832 = vmatpush.bf16.msra.mxu0 %v682
    %833 = vmatpush.bf16.msra.mxu0 %v676
    %834 = vmatpush.bf16.msra.mxu0 %v670
    %835 = vmatmul.bf16.gmra.mxu0 %v331
    %v836 = vpop.f32.mrf.mxu0
    %v837 = vadd.f32 %v824, %v836
    %v838 = vpop.f32.mrf.mxu0
    %839 = vdwg.mxu0
    %840 = vmatpush.bf16.msra.mxu0 %v665
    %841 = vmatpush.bf16.msra.mxu0 %v659
    %842 = vmatpush.bf16.msra.mxu0 %v653
    %843 = vmatpush.bf16.msra.mxu0 %v647
    %844 = vmatpush.bf16.msra.mxu0 %v641
    %845 = vmatpush.bf16.msra.mxu0 %v635
    %846 = vmatpush.bf16.msra.mxu0 %v629
    %847 = vmatpush.bf16.msra.mxu0 %v623
    %848 = vmatmul.bf16.gmra.mxu0 %v330
    %v849 = vpop.f32.mrf.mxu0
    %v850 = vadd.f32 %v314, %v849
    %v851 = vpop.f32.mrf.mxu0
    %852 = vdwg.mxu0
    %853 = vmatpush.bf16.msra.mxu0 %v713
    %854 = vmatpush.bf16.msra.mxu0 %v707
    %855 = vmatpush.bf16.msra.mxu0 %v701
    %856 = vmatpush.bf16.msra.mxu0 %v695
    %857 = vmatpush.bf16.msra.mxu0 %v689
    %858 = vmatpush.bf16.msra.mxu0 %v683
    %859 = vmatpush.bf16.msra.mxu0 %v677
    %860 = vmatpush.bf16.msra.mxu0 %v671
    %861 = vmatmul.bf16.gmra.mxu0 %v331
    %v862 = vpop.f32.mrf.mxu0
    %v863 = vadd.f32 %v850, %v862
    %v864 = vpop.f32.mrf.mxu0
    %865 = vdwg.mxu0
    %866 = vmatpush.bf16.msra.mxu0 %v666
    %867 = vmatpush.bf16.msra.mxu0 %v660
    %868 = vmatpush.bf16.msra.mxu0 %v654
    %869 = vmatpush.bf16.msra.mxu0 %v648
    %870 = vmatpush.bf16.msra.mxu0 %v642
    %871 = vmatpush.bf16.msra.mxu0 %v636
    %872 = vmatpush.bf16.msra.mxu0 %v630
    %873 = vmatpush.bf16.msra.mxu0 %v624
    %874 = vmatmul.bf16.gmra.mxu0 %v330
    %v875 = vpop.f32.mrf.mxu0
    %v876 = vadd.f32 %v315, %v875
    %v877 = vpop.f32.mrf.mxu0
    %878 = vdwg.mxu0
    %879 = vmatpush.bf16.msra.mxu0 %v714
    %880 = vmatpush.bf16.msra.mxu0 %v708
    %881 = vmatpush.bf16.msra.mxu0 %v702
    %882 = vmatpush.bf16.msra.mxu0 %v696
    %883 = vmatpush.bf16.msra.mxu0 %v690
    %884 = vmatpush.bf16.msra.mxu0 %v684
    %885 = vmatpush.bf16.msra.mxu0 %v678
    %886 = vmatpush.bf16.msra.mxu0 %v672
    %887 = vmatmul.bf16.gmra.mxu0 %v331
    %v888 = vpop.f32.mrf.mxu0
    %v889 = vadd.f32 %v876, %v888
    %v890 = vpop.f32.mrf.mxu0
    %891 = vdwg.mxu0
    %892 = vmatpush.bf16.msra.mxu0 %v667
    %893 = vmatpush.bf16.msra.mxu0 %v661
    %894 = vmatpush.bf16.msra.mxu0 %v655
    %895 = vmatpush.bf16.msra.mxu0 %v649
    %896 = vmatpush.bf16.msra.mxu0 %v643
    %897 = vmatpush.bf16.msra.mxu0 %v637
    %898 = vmatpush.bf16.msra.mxu0 %v631
    %899 = vmatpush.bf16.msra.mxu0 %v625
    %900 = vmatmul.bf16.gmra.mxu0 %v330
    %v901 = vpop.f32.mrf.mxu0
    %v902 = vadd.f32 %v316, %v901
    %v903 = vpop.f32.mrf.mxu0
    %904 = vdwg.mxu0
    %905 = vmatpush.bf16.msra.mxu0 %v715
    %906 = vmatpush.bf16.msra.mxu0 %v709
    %907 = vmatpush.bf16.msra.mxu0 %v703
    %908 = vmatpush.bf16.msra.mxu0 %v697
    %909 = vmatpush.bf16.msra.mxu0 %v691
    %910 = vmatpush.bf16.msra.mxu0 %v685
    %911 = vmatpush.bf16.msra.mxu0 %v679
    %912 = vmatpush.bf16.msra.mxu0 %v673
    %913 = vmatmul.bf16.gmra.mxu0 %v331
    %v914 = vpop.f32.mrf.mxu0
    %v915 = vadd.f32 %v902, %v914
    %v916 = vpop.f32.mrf.mxu0
    %917 = vdwg.mxu0
    %918 = vmatpush.bf16.msra.mxu0 %v668
    %919 = vmatpush.bf16.msra.mxu0 %v662
    %920 = vmatpush.bf16.msra.mxu0 %v656
    %921 = vmatpush.bf16.msra.mxu0 %v650
    %922 = vmatpush.bf16.msra.mxu0 %v644
    %923 = vmatpush.bf16.msra.mxu0 %v638
    %924 = vmatpush.bf16.msra.mxu0 %v632
    %925 = vmatpush.bf16.msra.mxu0 %v626
    %926 = vmatmul.bf16.gmra.mxu0 %v330
    %v927 = vpop.f32.mrf.mxu0
    %v928 = vadd.f32 %v317, %v927
    %v929 = vpop.f32.mrf.mxu0
    %930 = vdwg.mxu0
    %931 = vmatpush.bf16.msra.mxu0 %v716
    %932 = vmatpush.bf16.msra.mxu0 %v710
    %933 = vmatpush.bf16.msra.mxu0 %v704
    %934 = vmatpush.bf16.msra.mxu0 %v698
    %935 = vmatpush.bf16.msra.mxu0 %v692
    %936 = vmatpush.bf16.msra.mxu0 %v686
    %937 = vmatpush.bf16.msra.mxu0 %v680
    %938 = vmatpush.bf16.msra.mxu0 %v674
    %939 = vmatmul.bf16.gmra.mxu0 %v331
    %v940 = vpop.f32.mrf.mxu0
    %v941 = vadd.f32 %v928, %v940
    %v942 = vpop.f32.mrf.mxu0
    %943 = vdwg.mxu0
    %944 = vmatpush.bf16.msra.mxu0 %v669
    %945 = vmatpush.bf16.msra.mxu0 %v663
    %946 = vmatpush.bf16.msra.mxu0 %v657
    %947 = vmatpush.bf16.msra.mxu0 %v651
    %948 = vmatpush.bf16.msra.mxu0 %v645
    %949 = vmatpush.bf16.msra.mxu0 %v639
    %950 = vmatpush.bf16.msra.mxu0 %v633
    %951 = vmatpush.bf16.msra.mxu0 %v627
    %952 = vmatmul.bf16.gmra.mxu0 %v330
    %v953 = vpop.f32.mrf.mxu0
    %v954 = vadd.f32 %v318, %v953
    %v955 = vpop.f32.mrf.mxu0
    %956 = vdwg.mxu0
    %957 = vmatpush.bf16.msra.mxu0 %v717
    %958 = vmatpush.bf16.msra.mxu0 %v711
    %959 = vmatpush.bf16.msra.mxu0 %v705
    %960 = vmatpush.bf16.msra.mxu0 %v699
    %961 = vmatpush.bf16.msra.mxu0 %v693
    %962 = vmatpush.bf16.msra.mxu0 %v687
    %963 = vmatpush.bf16.msra.mxu0 %v681
    %964 = vmatpush.bf16.msra.mxu0 %v675
    %965 = vmatmul.bf16.gmra.mxu0 %v331
    %v966 = vpop.f32.mrf.mxu0
    %v967 = vadd.f32 %v954, %v966
    %v968 = vpop.f32.mrf.mxu0
    %969 = vdwg.mxu0
    %v976 = vrot.slane %v863, 6
    %v977 = vrot.slane %v889, 4
    %v978 = vrot.slane %v915, 2
    %v979 = vrot.slane %v967, 6
    %vm980 = vcmask 1041408
    %v981 = vsel %vm980, %v837, %v976
    %vm982 = vcmask 1045508
    %v983 = vsel %vm982, %v977, %v978
    %vm984 = vcmask 1043456
    %v985 = vsel %vm984, %v981, %v983
    %v986 = vsel %vm980, %v941, %v979
    %vm987 = vcmask 1043458
    %v988 = vsel %vm987, %v837, %v976
    %vm989 = vcmask 1045504
    %v990 = vsel %vm989, %v978, %v977
    %vm991 = vcmask 1045506
    %v992 = vsel %vm991, %v988, %v990
    %v993 = vrot.slane %v992, 2
    %v994 = vsel %vm987, %v941, %v979
    %v995 = vrot.slane %v994, 2
    %v998 = vmul.f32 %v985, 0.17677669
    %v999 = vmul.f32 %v993, 0.17677669
    %v1000 = vld [vmem:[#allocation6] sm:$0xff]
    %v1001 = vld [vmem:[#allocation6 + $0x8] sm:$0xff]
    %v1002 = vld [vmem:[#allocation6 + $0x10] sm:$0xff]
    %v1003 = vld [vmem:[#allocation6 + $0x18] sm:$0xff]
    %v1004 = vld [vmem:[#allocation6 + $0x20] sm:$0xff]
    %v1005 = vld [vmem:[#allocation6 + $0x28] sm:$0xff]
    %v1006 = vld [vmem:[#allocation6 + $0x30] sm:$0xff]
    %v1007 = vld [vmem:[#allocation6 + $0x38] sm:$0xff]
    %v1008 = vld [vmem:[#allocation6 + $0x40] sm:$0xff]
    %v1009 = vld [vmem:[#allocation6 + $0x48] sm:$0xff]
    %v1010 = vld [vmem:[#allocation6 + $0x50] sm:$0xff]
    %v1011 = vld [vmem:[#allocation6 + $0x58] sm:$0xff]
    %v1012 = vld [vmem:[#allocation6 + $0x60] sm:$0xff]
    %v1013 = vld [vmem:[#allocation6 + $0x68] sm:$0xff]
    %v1014 = vld [vmem:[#allocation6 + $0x70] sm:$0xff]
    %v1015 = vld [vmem:[#allocation6 + $0x78] sm:$0xff]
    %v1016 = vld [vmem:[#allocation6 + $0x80] sm:$0xff]
    %v1017 = vld [vmem:[#allocation6 + $0x88] sm:$0xff]
    %v1018 = vld [vmem:[#allocation6 + $0x90] sm:$0xff]
    %v1019 = vld [vmem:[#allocation6 + $0x98] sm:$0xff]
    %v1020 = vld [vmem:[#allocation6 + $0xa0] sm:$0xff]
    %v1021 = vld [vmem:[#allocation6 + $0xa8] sm:$0xff]
    %v1022 = vld [vmem:[#allocation6 + $0xb0] sm:$0xff]
    %v1023 = vld [vmem:[#allocation6 + $0xb8] sm:$0xff]
    %v1024 = vld [vmem:[#allocation6 + $0xc0] sm:$0xff]
    %v1025 = vld [vmem:[#allocation6 + $0xc8] sm:$0xff]
    %v1026 = vld [vmem:[#allocation6 + $0xd0] sm:$0xff]
    %v1027 = vld [vmem:[#allocation6 + $0xd8] sm:$0xff]
    %v1028 = vld [vmem:[#allocation6 + $0xe0] sm:$0xff]
    %v1029 = vld [vmem:[#allocation6 + $0xe8] sm:$0xff]
    %v1030 = vld [vmem:[#allocation6 + $0xf0] sm:$0xff]
    %v1031 = vld [vmem:[#allocation6 + $0xf8] sm:$0xff]
    %v1032 = vrot.slane %v985, 4
    %vm1033 = vcmask 261120
    %v1035 = vsel %vm1033, %v998, 0
    %v1037 = vsel %vm1033, %v1032, 0
    %1039 = vmatpush.xpose.msra.mxu0 0.0
    %1040 = vmatpush.xpose.msra.mxu0 0.0
    %1041 = vmatpush.xpose.msra.mxu0 0.0
    %1042 = vmatpush.xpose.msra.mxu0 0.0
    %1043 = vmatpush.xpose.msra.mxu0 0.0
    %1044 = vmatpush.xpose.msra.mxu0 0.0
    %1045 = vmatpush.xpose.msra.mxu0 0.0
    %1046 = vmatpush.xpose.msra.mxu0 0.0
    %1047 = vmatpush.xpose.msra.mxu0 0.0
    %1048 = vmatpush.xpose.msra.mxu0 0.0
    %1049 = vmatpush.xpose.msra.mxu0 0.0
    %1050 = vmatpush.xpose.msra.mxu0 0.0
    %1051 = vmatpush.xpose.msra.mxu0 0.0
    %1052 = vmatpush.xpose.msra.mxu0 0.0
    %1053 = vmatpush.xpose.msra.mxu0 0.0
    %1054 = vmatpush.xpose.msra.mxu0 %v1037
    %1055 = vmatmul.f32.gmra.mxu0 %v1035
    %v1056 = vpop.f32.mrf.mxu0
    %v1057 = vadd.f32 0.0, %v1056
    %1058 = vdwg.mxu0
    %v1059 = vrot.slane %v993, 4
    %v1061 = vsel %vm1033, %v999, 0
    %v1063 = vsel %vm1033, %v1059, 0
    %1065 = vmatpush.xpose.msra.mxu0 0.0
    %1066 = vmatpush.xpose.msra.mxu0 0.0
    %1067 = vmatpush.xpose.msra.mxu0 0.0
    %1068 = vmatpush.xpose.msra.mxu0 0.0
    %1069 = vmatpush.xpose.msra.mxu0 0.0
    %1070 = vmatpush.xpose.msra.mxu0 0.0
    %1071 = vmatpush.xpose.msra.mxu0 0.0
    %1072 = vmatpush.xpose.msra.mxu0 0.0
    %1073 = vmatpush.xpose.msra.mxu0 0.0
    %1074 = vmatpush.xpose.msra.mxu0 0.0
    %1075 = vmatpush.xpose.msra.mxu0 0.0
    %1076 = vmatpush.xpose.msra.mxu0 0.0
    %1077 = vmatpush.xpose.msra.mxu0 0.0
    %1078 = vmatpush.xpose.msra.mxu0 0.0
    %1079 = vmatpush.xpose.msra.mxu0 0.0
    %1080 = vmatpush.xpose.msra.mxu0 %v1063
    %1081 = vmatmul.f32.gmra.mxu0 %v1061
    %v1082 = vpop.f32.mrf.mxu0
    %v1083 = vadd.f32 0.0, %v1082
    %1084 = vdwg.mxu0
    %vm1085 = vcmask 9216
    %v1086 = vsel %vm1085, %v1057, -inf
    %1087 = vmax.xlane.f32.xlu0 %v1086
    %v1088 = vpop.xlane.xlu0 %1087
    %v1089 = vsel %vm1085, %v1083, -inf
    %1090 = vmax.xlane.f32.xlu0 %v1089
    %v1091 = vpop.xlane.xlu0 %1090
    %v1092 = vsub.f32 %v1057, %v1088
    %v1093 = vsub.f32 %v1083, %v1091
    %v1094 = vmul.f32 %v1092, 1.442695
    %v1095 = vpow.pop %v1094
    %v1096 = vmul.f32 %v1093, 1.442695
    %v1097 = vpow.pop %v1096
    %v1098 = vsel %vm1085, %v1095, 0.0
    %1099 = vadd.xlane.f32.xlu0 %v1098
    %v1100 = vpop.xlane.xlu0 %1099
    %v1101 = vsel %vm1085, %v1097, 0.0
    %1102 = vadd.xlane.f32.xlu0 %v1101
    %v1103 = vpop.xlane.xlu0 %1102
    %v1104 = vrcp.pop %v1100
    %v1105 = vrcp.pop %v1103
    %v1106 = vmul.f32 %v1095, %v1104
    %v1107 = vmul.f32 %v1097, %v1105
    %vm1108 = vcmask 15360
    %v1110 = vsel %vm1108, %v1106, 0
    %v1112 = vsel %vm980, %v986, 0
    %1114 = vmatpush.msra.mxu0 0.0
    %1115 = vmatpush.msra.mxu0 0.0
    %1116 = vmatpush.msra.mxu0 0.0
    %1117 = vmatpush.msra.mxu0 0.0
    %1118 = vmatpush.msra.mxu0 0.0
    %1119 = vmatpush.msra.mxu0 0.0
    %1120 = vmatpush.msra.mxu0 0.0
    %1121 = vmatpush.msra.mxu0 0.0
    %1122 = vmatpush.msra.mxu0 0.0
    %1123 = vmatpush.msra.mxu0 0.0
    %1124 = vmatpush.msra.mxu0 0.0
    %1125 = vmatpush.msra.mxu0 0.0
    %1126 = vmatpush.msra.mxu0 0.0
    %1127 = vmatpush.msra.mxu0 0.0
    %1128 = vmatpush.msra.mxu0 0.0
    %1129 = vmatpush.msra.mxu0 %v1112
    %1130 = vmatmul.f32.gmra.mxu0 %v1110
    %v1131 = vpop.f32.mrf.mxu0
    %v1132 = vadd.f32 0.0, %v1131
    %1133 = vdwg.mxu0
    %v1135 = vsel %vm1108, %v1107, 0
    %v1137 = vsel %vm980, %v995, 0
    %1139 = vmatpush.msra.mxu0 0.0
    %1140 = vmatpush.msra.mxu0 0.0
    %1141 = vmatpush.msra.mxu0 0.0
    %1142 = vmatpush.msra.mxu0 0.0
    %1143 = vmatpush.msra.mxu0 0.0
    %1144 = vmatpush.msra.mxu0 0.0
    %1145 = vmatpush.msra.mxu0 0.0
    %1146 = vmatpush.msra.mxu0 0.0
    %1147 = vmatpush.msra.mxu0 0.0
    %1148 = vmatpush.msra.mxu0 0.0
    %1149 = vmatpush.msra.mxu0 0.0
    %1150 = vmatpush.msra.mxu0 0.0
    %1151 = vmatpush.msra.mxu0 0.0
    %1152 = vmatpush.msra.mxu0 0.0
    %1153 = vmatpush.msra.mxu0 0.0
    %1154 = vmatpush.msra.mxu0 %v1137
    %1155 = vmatmul.f32.gmra.mxu0 %v1135
    %v1156 = vpop.f32.mrf.mxu0
    %v1157 = vadd.f32 0.0, %v1156
    %1158 = vdwg.mxu0
    %1161 = vst [vmem:[#allocation1] ss:$4 sm:$0xff] %v1132
    %s1162 = scalar_lea.vmem [#allocation1], 1
    %1163 = vst [vmem:[%s1162] ss:$4 sm:$0xff] %v1157
    %v1164 = vld.sshfl [vmem:[#allocation1] sm:$0xff pattern:$0x73625140]
    %v1166 = vpack.c.bf16 %v1164, %v1164
    %1167 = vrot.lane.b32.xlu0 %v985, 96
    %v1168 = vpop.permute.xlu0 %1167
    %v1169 = vrot.slane %v1168, 4
    %1170 = vst [vmem:[#allocation1] ss:$4 sm:$0xff] %v998
    %v1171 = vld.sshfl [vmem:[#allocation1] sm:$0xff pattern:$0x73625140]
    %1172 = vrot.lane.b32.xlu0 %v1171, 96
    %v1173 = vpop.permute.xlu0 %1172
    %v1174 = vsel %vm1033, %v1173, 0
    %v1176 = vsel %vm1033, %v1169, 0
    %1178 = vmatpush.xpose.msra.mxu0 0.0
    %1179 = vmatpush.xpose.msra.mxu0 0.0
    %1180 = vmatpush.xpose.msra.mxu0 0.0
    %1181 = vmatpush.xpose.msra.mxu0 0.0
    %1182 = vmatpush.xpose.msra.mxu0 0.0
    %1183 = vmatpush.xpose.msra.mxu0 0.0
    %1184 = vmatpush.xpose.msra.mxu0 0.0
    %1185 = vmatpush.xpose.msra.mxu0 0.0
    %1186 = vmatpush.xpose.msra.mxu0 0.0
    %1187 = vmatpush.xpose.msra.mxu0 0.0
    %1188 = vmatpush.xpose.msra.mxu0 0.0
    %1189 = vmatpush.xpose.msra.mxu0 0.0
    %1190 = vmatpush.xpose.msra.mxu0 0.0
    %1191 = vmatpush.xpose.msra.mxu0 0.0
    %1192 = vmatpush.xpose.msra.mxu0 0.0
    %1193 = vmatpush.xpose.msra.mxu0 %v1176
    %1194 = vmatmul.f32.gmra.mxu0 %v1174
    %v1195 = vpop.f32.mrf.mxu0
    %v1196 = vadd.f32 0.0, %v1195
    %1197 = vdwg.mxu0
    %1198 = vrot.lane.b32.xlu0 %v993, 96
    %v1199 = vpop.permute.xlu0 %1198
    %v1200 = vrot.slane %v1199, 4
    %1201 = vst [vmem:[#allocation1] ss:$4 sm:$0xff] %v999
    %v1202 = vld.sshfl [vmem:[#allocation1] sm:$0xff pattern:$0x73625140]
    %1203 = vrot.lane.b32.xlu0 %v1202, 96
    %v1204 = vpop.permute.xlu0 %1203
    %v1205 = vsel %vm1033, %v1204, 0
    %v1207 = vsel %vm1033, %v1200, 0
    %1209 = vmatpush.xpose.msra.mxu0 0.0
    %1210 = vmatpush.xpose.msra.mxu0 0.0
    %1211 = vmatpush.xpose.msra.mxu0 0.0
    %1212 = vmatpush.xpose.msra.mxu0 0.0
    %1213 = vmatpush.xpose.msra.mxu0 0.0
    %1214 = vmatpush.xpose.msra.mxu0 0.0
    %1215 = vmatpush.xpose.msra.mxu0 0.0
    %1216 = vmatpush.xpose.msra.mxu0 0.0
    %1217 = vmatpush.xpose.msra.mxu0 0.0
    %1218 = vmatpush.xpose.msra.mxu0 0.0
    %1219 = vmatpush.xpose.msra.mxu0 0.0
    %1220 = vmatpush.xpose.msra.mxu0 0.0
    %1221 = vmatpush.xpose.msra.mxu0 0.0
    %1222 = vmatpush.xpose.msra.mxu0 0.0
    %1223 = vmatpush.xpose.msra.mxu0 0.0
    %1224 = vmatpush.xpose.msra.mxu0 %v1207
    %1225 = vmatmul.f32.gmra.mxu0 %v1205
    %v1226 = vpop.f32.mrf.mxu0
    %v1227 = vadd.f32 0.0, %v1226
    %1228 = vdwg.mxu0
    %v1229 = vsel %vm1085, %v1196, -inf
    %1230 = vmax.xlane.f32.xlu0 %v1229
    %v1231 = vpop.xlane.xlu0 %1230
    %v1232 = vsel %vm1085, %v1227, -inf
    %1233 = vmax.xlane.f32.xlu0 %v1232
    %v1234 = vpop.xlane.xlu0 %1233
    %v1235 = vsub.f32 %v1196, %v1231
    %v1236 = vsub.f32 %v1227, %v1234
    %v1237 = vmul.f32 %v1235, 1.442695
    %v1238 = vpow.pop %v1237
    %v1239 = vmul.f32 %v1236, 1.442695
    %v1240 = vpow.pop %v1239
    %v1241 = vsel %vm1085, %v1238, 0.0
    %1242 = vadd.xlane.f32.xlu0 %v1241
    %v1243 = vpop.xlane.xlu0 %1242
    %v1244 = vsel %vm1085, %v1240, 0.0
    %1245 = vadd.xlane.f32.xlu0 %v1244
    %v1246 = vpop.xlane.xlu0 %1245
    %v1247 = vrcp.pop %v1243
    %v1248 = vrcp.pop %v1246
    %v1249 = vmul.f32 %v1238, %v1247
    %v1250 = vmul.f32 %v1240, %v1248
    %1251 = vst [vmem:[#allocation1] ss:$4 sm:$0xff] %v986
    %v1252 = vld.sshfl [vmem:[#allocation1] sm:$0xff pattern:$0x73625140]
    %1253 = vrot.lane.b32.xlu0 %v1252, 96
    %v1254 = vpop.permute.xlu0 %1253
    %v1256 = vsel %vm1108, %v1249, 0
    %v1258 = vsel %vm980, %v1254, 0
    %1260 = vmatpush.msra.mxu0 0.0
    %1261 = vmatpush.msra.mxu0 0.0
    %1262 = vmatpush.msra.mxu0 0.0
    %1263 = vmatpush.msra.mxu0 0.0
    %1264 = vmatpush.msra.mxu0 0.0
    %1265 = vmatpush.msra.mxu0 0.0
    %1266 = vmatpush.msra.mxu0 0.0
    %1267 = vmatpush.msra.mxu0 0.0
    %1268 = vmatpush.msra.mxu0 0.0
    %1269 = vmatpush.msra.mxu0 0.0
    %1270 = vmatpush.msra.mxu0 0.0
    %1271 = vmatpush.msra.mxu0 0.0
    %1272 = vmatpush.msra.mxu0 0.0
    %1273 = vmatpush.msra.mxu0 0.0
    %1274 = vmatpush.msra.mxu0 0.0
    %1275 = vmatpush.msra.mxu0 %v1258
    %1276 = vmatmul.f32.gmra.mxu0 %v1256
    %v1277 = vpop.f32.mrf.mxu0
    %v1278 = vadd.f32 0.0, %v1277
    %1279 = vdwg.mxu0
    %1280 = vst [vmem:[#allocation1] ss:$4 sm:$0xff] %v995
    %v1281 = vld.sshfl [vmem:[#allocation1] sm:$0xff pattern:$0x73625140]
    %1282 = vrot.lane.b32.xlu0 %v1281, 96
    %v1283 = vpop.permute.xlu0 %1282
    %v1285 = vsel %vm1108, %v1250, 0
    %v1287 = vsel %vm980, %v1283, 0
    %1289 = vmatpush.msra.mxu0 0.0
    %1290 = vmatpush.msra.mxu0 0.0
    %1291 = vmatpush.msra.mxu0 0.0
    %1292 = vmatpush.msra.mxu0 0.0
    %1293 = vmatpush.msra.mxu0 0.0
    %1294 = vmatpush.msra.mxu0 0.0
    %1295 = vmatpush.msra.mxu0 0.0
    %1296 = vmatpush.msra.mxu0 0.0
    %1297 = vmatpush.msra.mxu0 0.0
    %1298 = vmatpush.msra.mxu0 0.0
    %1299 = vmatpush.msra.mxu0 0.0
    %1300 = vmatpush.msra.mxu0 0.0
    %1301 = vmatpush.msra.mxu0 0.0
    %1302 = vmatpush.msra.mxu0 0.0
    %1303 = vmatpush.msra.mxu0 0.0
    %1304 = vmatpush.msra.mxu0 %v1287
    %1305 = vmatmul.f32.gmra.mxu0 %v1285
    %v1306 = vpop.f32.mrf.mxu0
    %v1307 = vadd.f32 0.0, %v1306
    %1308 = vdwg.mxu0
    %1311 = vst [vmem:[#allocation1] ss:$4 sm:$0xff] %v1278
    %s1312 = scalar_lea.vmem [#allocation1], 1
    %1313 = vst [vmem:[%s1312] ss:$4 sm:$0xff] %v1307
    %v1314 = vld.sshfl [vmem:[#allocation1] sm:$0xff pattern:$0x73625140]
    %v1316 = vpack.c.bf16 %v1314, %v1314
    %v1321 = vunpack.c.l.b16 %v1004
    %v1322 = vunpack.c.h.b16 %v1004
    %v1323 = vunpack.c.l.b16 %v1005
    %v1324 = vunpack.c.h.b16 %v1005
    %v1325 = vunpack.c.l.b16 %v1006
    %v1326 = vunpack.c.h.b16 %v1006
    %v1327 = vunpack.c.l.b16 %v1007
    %v1328 = vunpack.c.h.b16 %v1007
    %v1329 = vpack.c.b16 %v1323, %v1321
    %v1330 = vpack.c.b16 %v1324, %v1322
    %v1331 = vpack.c.b16 %v1327, %v1325
    %v1332 = vpack.c.b16 %v1328, %v1326
    %v1338 = vsel %vm1033, %v1316, 0
    %1340 = vmatpush.bf16.msra.mxu0 0
    %1341 = vmatpush.bf16.msra.mxu0 0
    %1342 = vmatpush.bf16.msra.mxu0 0
    %1343 = vmatpush.bf16.msra.mxu0 0
    %1344 = vmatpush.bf16.msra.mxu0 0
    %1345 = vmatpush.bf16.msra.mxu0 0
    %1346 = vmatpush.bf16.msra.mxu0 %v1331
    %1347 = vmatpush.bf16.msra.mxu0 %v1329
    %1348 = vmatmul.bf16.gmra.mxu0 %v1338
    %v1349 = vpop.f32.mrf.mxu0
    %v1350 = vadd.f32 0.0, %v1349
    %v1351 = vpop.f32.mrf.mxu0
    %1352 = vdwg.mxu0
    %1353 = vmatpush.bf16.msra.mxu0 0
    %1354 = vmatpush.bf16.msra.mxu0 0
    %1355 = vmatpush.bf16.msra.mxu0 0
    %1356 = vmatpush.bf16.msra.mxu0 0
    %1357 = vmatpush.bf16.msra.mxu0 0
    %1358 = vmatpush.bf16.msra.mxu0 0
    %1359 = vmatpush.bf16.msra.mxu0 %v1332
    %1360 = vmatpush.bf16.msra.mxu0 %v1330
    %1361 = vmatmul.bf16.gmra.mxu0 %v1338
    %v1362 = vpop.f32.mrf.mxu0
    %v1363 = vadd.f32 0.0, %v1362
    %v1364 = vpop.f32.mrf.mxu0
    %1365 = vdwg.mxu0
    %v1370 = vunpack.c.l.b16 %v1000
    %v1371 = vunpack.c.h.b16 %v1000
    %v1372 = vunpack.c.l.b16 %v1001
    %v1373 = vunpack.c.h.b16 %v1001
    %v1374 = vunpack.c.l.b16 %v1002
    %v1375 = vunpack.c.h.b16 %v1002
    %v1376 = vunpack.c.l.b16 %v1003
    %v1377 = vunpack.c.h.b16 %v1003
    %v1378 = vpack.c.b16 %v1372, %v1370
    %v1379 = vpack.c.b16 %v1373, %v1371
    %v1380 = vpack.c.b16 %v1376, %v1374
    %v1381 = vpack.c.b16 %v1377, %v1375
    %v1387 = vsel %vm1033, %v1166, 0
    %1389 = vmatpush.bf16.msra.mxu0 0
    %1390 = vmatpush.bf16.msra.mxu0 0
    %1391 = vmatpush.bf16.msra.mxu0 0
    %1392 = vmatpush.bf16.msra.mxu0 0
    %1393 = vmatpush.bf16.msra.mxu0 0
    %1394 = vmatpush.bf16.msra.mxu0 0
    %1395 = vmatpush.bf16.msra.mxu0 %v1380
    %1396 = vmatpush.bf16.msra.mxu0 %v1378
    %1397 = vmatmul.bf16.gmra.mxu0 %v1387
    %v1398 = vpop.f32.mrf.mxu0
    %v1399 = vadd.f32 %v1350, %v1398
    %v1400 = vpop.f32.mrf.mxu0
    %1401 = vdwg.mxu0
    %1402 = vmatpush.bf16.msra.mxu0 0
    %1403 = vmatpush.bf16.msra.mxu0 0
    %1404 = vmatpush.bf16.msra.mxu0 0
    %1405 = vmatpush.bf16.msra.mxu0 0
    %1406 = vmatpush.bf16.msra.mxu0 0
    %1407 = vmatpush.bf16.msra.mxu0 0
    %1408 = vmatpush.bf16.msra.mxu0 %v1381
    %1409 = vmatpush.bf16.msra.mxu0 %v1379
    %1410 = vmatmul.bf16.gmra.mxu0 %v1387
    %v1411 = vpop.f32.mrf.mxu0
    %v1412 = vadd.f32 %v1363, %v1411
    %v1413 = vpop.f32.mrf.mxu0
    %1414 = vdwg.mxu0
    %1415 = vrot.lane.b32.xlu0 %v985, 64
    %v1416 = vpop.permute.xlu0 %1415
    %v1417 = vrot.slane %v1416, 4
    %1418 = vst [vmem:[#allocation1] ss:$4 sm:$0xff] %v998
    %v1419 = vld.sshfl [vmem:[#allocation1] sm:$0xff pattern:$0x73625140]
    %1420 = vrot.lane.b32.xlu0 %v1419, 64
    %v1421 = vpop.permute.xlu0 %1420
    %v1422 = vsel %vm1033, %v1421, 0
    %v1424 = vsel %vm1033, %v1417, 0
    %1426 = vmatpush.xpose.msra.mxu0 0.0
    %1427 = vmatpush.xpose.msra.mxu0 0.0
    %1428 = vmatpush.xpose.msra.mxu0 0.0
    %1429 = vmatpush.xpose.msra.mxu0 0.0
    %1430 = vmatpush.xpose.msra.mxu0 0.0
    %1431 = vmatpush.xpose.msra.mxu0 0.0
    %1432 = vmatpush.xpose.msra.mxu0 0.0
    %1433 = vmatpush.xpose.msra.mxu0 0.0
    %1434 = vmatpush.xpose.msra.mxu0 0.0
    %1435 = vmatpush.xpose.msra.mxu0 0.0
    %1436 = vmatpush.xpose.msra.mxu0 0.0
    %1437 = vmatpush.xpose.msra.mxu0 0.0
    %1438 = vmatpush.xpose.msra.mxu0 0.0
    %1439 = vmatpush.xpose.msra.mxu0 0.0
    %1440 = vmatpush.xpose.msra.mxu0 0.0
    %1441 = vmatpush.xpose.msra.mxu0 %v1424
    %1442 = vmatmul.f32.gmra.mxu0 %v1422
    %v1443 = vpop.f32.mrf.mxu0
    %v1444 = vadd.f32 0.0, %v1443
    %1445 = vdwg.mxu0
    %1446 = vrot.lane.b32.xlu0 %v993, 64
    %v1447 = vpop.permute.xlu0 %1446
    %v1448 = vrot.slane %v1447, 4
    %1449 = vst [vmem:[#allocation1] ss:$4 sm:$0xff] %v999
    %v1450 = vld.sshfl [vmem:[#allocation1] sm:$0xff pattern:$0x73625140]
    %1451 = vrot.lane.b32.xlu0 %v1450, 64
    %v1452 = vpop.permute.xlu0 %1451
    %v1453 = vsel %vm1033, %v1452, 0
    %v1455 = vsel %vm1033, %v1448, 0
    %1457 = vmatpush.xpose.msra.mxu0 0.0
    %1458 = vmatpush.xpose.msra.mxu0 0.0
    %1459 = vmatpush.xpose.msra.mxu0 0.0
    %1460 = vmatpush.xpose.msra.mxu0 0.0
    %1461 = vmatpush.xpose.msra.mxu0 0.0
    %1462 = vmatpush.xpose.msra.mxu0 0.0
    %1463 = vmatpush.xpose.msra.mxu0 0.0
    %1464 = vmatpush.xpose.msra.mxu0 0.0
    %1465 = vmatpush.xpose.msra.mxu0 0.0
    %1466 = vmatpush.xpose.msra.mxu0 0.0
    %1467 = vmatpush.xpose.msra.mxu0 0.0
    %1468 = vmatpush.xpose.msra.mxu0 0.0
    %1469 = vmatpush.xpose.msra.mxu0 0.0
    %1470 = vmatpush.xpose.msra.mxu0 0.0
    %1471 = vmatpush.xpose.msra.mxu0 0.0
    %1472 = vmatpush.xpose.msra.mxu0 %v1455
    %1473 = vmatmul.f32.gmra.mxu0 %v1453
    %v1474 = vpop.f32.mrf.mxu0
    %v1475 = vadd.f32 0.0, %v1474
    %1476 = vdwg.mxu0
    %v1477 = vsel %vm1085, %v1444, -inf
    %1478 = vmax.xlane.f32.xlu0 %v1477
    %v1479 = vpop.xlane.xlu0 %1478
    %v1480 = vsel %vm1085, %v1475, -inf
    %1481 = vmax.xlane.f32.xlu0 %v1480
    %v1482 = vpop.xlane.xlu0 %1481
    %v1483 = vsub.f32 %v1444, %v1479
    %v1484 = vsub.f32 %v1475, %v1482
    %v1485 = vmul.f32 %v1483, 1.442695
    %v1486 = vpow.pop %v1485
    %v1487 = vmul.f32 %v1484, 1.442695
    %v1488 = vpow.pop %v1487
    %v1489 = vsel %vm1085, %v1486, 0.0
    %1490 = vadd.xlane.f32.xlu0 %v1489
    %v1491 = vpop.xlane.xlu0 %1490
    %v1492 = vsel %vm1085, %v1488, 0.0
    %1493 = vadd.xlane.f32.xlu0 %v1492
    %v1494 = vpop.xlane.xlu0 %1493
    %v1495 = vrcp.pop %v1491
    %v1496 = vrcp.pop %v1494
    %v1497 = vmul.f32 %v1486, %v1495
    %v1498 = vmul.f32 %v1488, %v1496
    %1499 = vst [vmem:[#allocation1] ss:$4 sm:$0xff] %v986
    %v1500 = vld.sshfl [vmem:[#allocation1] sm:$0xff pattern:$0x73625140]
    %1501 = vrot.lane.b32.xlu0 %v1500, 64
    %v1502 = vpop.permute.xlu0 %1501
    %v1504 = vsel %vm1108, %v1497, 0
    %v1506 = vsel %vm980, %v1502, 0
    %1508 = vmatpush.msra.mxu0 0.0
    %1509 = vmatpush.msra.mxu0 0.0
    %1510 = vmatpush.msra.mxu0 0.0
    %1511 = vmatpush.msra.mxu0 0.0
    %1512 = vmatpush.msra.mxu0 0.0
    %1513 = vmatpush.msra.mxu0 0.0
    %1514 = vmatpush.msra.mxu0 0.0
    %1515 = vmatpush.msra.mxu0 0.0
    %1516 = vmatpush.msra.mxu0 0.0
    %1517 = vmatpush.msra.mxu0 0.0
    %1518 = vmatpush.msra.mxu0 0.0
    %1519 = vmatpush.msra.mxu0 0.0
    %1520 = vmatpush.msra.mxu0 0.0
    %1521 = vmatpush.msra.mxu0 0.0
    %1522 = vmatpush.msra.mxu0 0.0
    %1523 = vmatpush.msra.mxu0 %v1506
    %1524 = vmatmul.f32.gmra.mxu0 %v1504
    %v1525 = vpop.f32.mrf.mxu0
    %v1526 = vadd.f32 0.0, %v1525
    %1527 = vdwg.mxu0
    %1528 = vst [vmem:[#allocation1] ss:$4 sm:$0xff] %v995
    %v1529 = vld.sshfl [vmem:[#allocation1] sm:$0xff pattern:$0x73625140]
    %1530 = vrot.lane.b32.xlu0 %v1529, 64
    %v1531 = vpop.permute.xlu0 %1530
    %v1533 = vsel %vm1108, %v1498, 0
    %v1535 = vsel %vm980, %v1531, 0
    %1537 = vmatpush.msra.mxu0 0.0
    %1538 = vmatpush.msra.mxu0 0.0
    %1539 = vmatpush.msra.mxu0 0.0
    %1540 = vmatpush.msra.mxu0 0.0
    %1541 = vmatpush.msra.mxu0 0.0
    %1542 = vmatpush.msra.mxu0 0.0
    %1543 = vmatpush.msra.mxu0 0.0
    %1544 = vmatpush.msra.mxu0 0.0
    %1545 = vmatpush.msra.mxu0 0.0
    %1546 = vmatpush.msra.mxu0 0.0
    %1547 = vmatpush.msra.mxu0 0.0
    %1548 = vmatpush.msra.mxu0 0.0
    %1549 = vmatpush.msra.mxu0 0.0
    %1550 = vmatpush.msra.mxu0 0.0
    %1551 = vmatpush.msra.mxu0 0.0
    %1552 = vmatpush.msra.mxu0 %v1535
    %1553 = vmatmul.f32.gmra.mxu0 %v1533
    %v1554 = vpop.f32.mrf.mxu0
    %v1555 = vadd.f32 0.0, %v1554
    %1556 = vdwg.mxu0
    %1559 = vst [vmem:[#allocation1] ss:$4 sm:$0xff] %v1526
    %s1560 = scalar_lea.vmem [#allocation1], 1
    %1561 = vst [vmem:[%s1560] ss:$4 sm:$0xff] %v1555
    %v1562 = vld.sshfl [vmem:[#allocation1] sm:$0xff pattern:$0x73625140]
    %v1564 = vpack.c.bf16 %v1562, %v1562
    %v1569 = vunpack.c.l.b16 %v1008
    %v1570 = vunpack.c.h.b16 %v1008
    %v1571 = vunpack.c.l.b16 %v1009
    %v1572 = vunpack.c.h.b16 %v1009
    %v1573 = vunpack.c.l.b16 %v1010
    %v1574 = vunpack.c.h.b16 %v1010
    %v1575 = vunpack.c.l.b16 %v1011
    %v1576 = vunpack.c.h.b16 %v1011
    %v1577 = vpack.c.b16 %v1571, %v1569
    %v1578 = vpack.c.b16 %v1572, %v1570
    %v1579 = vpack.c.b16 %v1575, %v1573
    %v1580 = vpack.c.b16 %v1576, %v1574
    %v1586 = vsel %vm1033, %v1564, 0
    %1588 = vmatpush.bf16.msra.mxu0 0
    %1589 = vmatpush.bf16.msra.mxu0 0
    %1590 = vmatpush.bf16.msra.mxu0 0
    %1591 = vmatpush.bf16.msra.mxu0 0
    %1592 = vmatpush.bf16.msra.mxu0 0
    %1593 = vmatpush.bf16.msra.mxu0 0
    %1594 = vmatpush.bf16.msra.mxu0 %v1579
    %1595 = vmatpush.bf16.msra.mxu0 %v1577
    %1596 = vmatmul.bf16.gmra.mxu0 %v1586
    %v1597 = vpop.f32.mrf.mxu0
    %v1598 = vadd.f32 0.0, %v1597
    %v1599 = vpop.f32.mrf.mxu0
    %1600 = vdwg.mxu0
    %1601 = vmatpush.bf16.msra.mxu0 0
    %1602 = vmatpush.bf16.msra.mxu0 0
    %1603 = vmatpush.bf16.msra.mxu0 0
    %1604 = vmatpush.bf16.msra.mxu0 0
    %1605 = vmatpush.bf16.msra.mxu0 0
    %1606 = vmatpush.bf16.msra.mxu0 0
    %1607 = vmatpush.bf16.msra.mxu0 %v1580
    %1608 = vmatpush.bf16.msra.mxu0 %v1578
    %1609 = vmatmul.bf16.gmra.mxu0 %v1586
    %v1610 = vpop.f32.mrf.mxu0
    %v1611 = vadd.f32 0.0, %v1610
    %v1612 = vpop.f32.mrf.mxu0
    %1613 = vdwg.mxu0
    %v1614 = vadd.f32 %v1399, %v1598
    %v1615 = vadd.f32 %v1412, %v1611
    %1616 = vrot.lane.b32.xlu0 %v985, 32
    %v1617 = vpop.permute.xlu0 %1616
    %v1618 = vrot.slane %v1617, 4
    %1619 = vst [vmem:[#allocation1] ss:$4 sm:$0xff] %v998
    %v1620 = vld.sshfl [vmem:[#allocation1] sm:$0xff pattern:$0x73625140]
    %1621 = vrot.lane.b32.xlu0 %v1620, 32
    %v1622 = vpop.permute.xlu0 %1621
    %v1623 = vsel %vm1033, %v1622, 0
    %v1625 = vsel %vm1033, %v1618, 0
    %1627 = vmatpush.xpose.msra.mxu0 0.0
    %1628 = vmatpush.xpose.msra.mxu0 0.0
    %1629 = vmatpush.xpose.msra.mxu0 0.0
    %1630 = vmatpush.xpose.msra.mxu0 0.0
    %1631 = vmatpush.xpose.msra.mxu0 0.0
    %1632 = vmatpush.xpose.msra.mxu0 0.0
    %1633 = vmatpush.xpose.msra.mxu0 0.0
    %1634 = vmatpush.xpose.msra.mxu0 0.0
    %1635 = vmatpush.xpose.msra.mxu0 0.0
    %1636 = vmatpush.xpose.msra.mxu0 0.0
    %1637 = vmatpush.xpose.msra.mxu0 0.0
    %1638 = vmatpush.xpose.msra.mxu0 0.0
    %1639 = vmatpush.xpose.msra.mxu0 0.0
    %1640 = vmatpush.xpose.msra.mxu0 0.0
    %1641 = vmatpush.xpose.msra.mxu0 0.0
    %1642 = vmatpush.xpose.msra.mxu0 %v1625
    %1643 = vmatmul.f32.gmra.mxu0 %v1623
    %v1644 = vpop.f32.mrf.mxu0
    %v1645 = vadd.f32 0.0, %v1644
    %1646 = vdwg.mxu0
    %1647 = vrot.lane.b32.xlu0 %v993, 32
    %v1648 = vpop.permute.xlu0 %1647
    %v1649 = vrot.slane %v1648, 4
    %1650 = vst [vmem:[#allocation1] ss:$4 sm:$0xff] %v999
    %v1651 = vld.sshfl [vmem:[#allocation1] sm:$0xff pattern:$0x73625140]
    %1652 = vrot.lane.b32.xlu0 %v1651, 32
    %v1653 = vpop.permute.xlu0 %1652
    %v1654 = vsel %vm1033, %v1653, 0
    %v1656 = vsel %vm1033, %v1649, 0
    %1658 = vmatpush.xpose.msra.mxu0 0.0
    %1659 = vmatpush.xpose.msra.mxu0 0.0
    %1660 = vmatpush.xpose.msra.mxu0 0.0
    %1661 = vmatpush.xpose.msra.mxu0 0.0
    %1662 = vmatpush.xpose.msra.mxu0 0.0
    %1663 = vmatpush.xpose.msra.mxu0 0.0
    %1664 = vmatpush.xpose.msra.mxu0 0.0
    %1665 = vmatpush.xpose.msra.mxu0 0.0
    %1666 = vmatpush.xpose.msra.mxu0 0.0
    %1667 = vmatpush.xpose.msra.mxu0 0.0
    %1668 = vmatpush.xpose.msra.mxu0 0.0
    %1669 = vmatpush.xpose.msra.mxu0 0.0
    %1670 = vmatpush.xpose.msra.mxu0 0.0
    %1671 = vmatpush.xpose.msra.mxu0 0.0
    %1672 = vmatpush.xpose.msra.mxu0 0.0
    %1673 = vmatpush.xpose.msra.mxu0 %v1656
    %1674 = vmatmul.f32.gmra.mxu0 %v1654
    %v1675 = vpop.f32.mrf.mxu0
    %v1676 = vadd.f32 0.0, %v1675
    %1677 = vdwg.mxu0
    %v1678 = vsel %vm1085, %v1645, -inf
    %1679 = vmax.xlane.f32.xlu0 %v1678
    %v1680 = vpop.xlane.xlu0 %1679
    %v1681 = vsel %vm1085, %v1676, -inf
    %1682 = vmax.xlane.f32.xlu0 %v1681
    %v1683 = vpop.xlane.xlu0 %1682
    %v1684 = vsub.f32 %v1645, %v1680
    %v1685 = vsub.f32 %v1676, %v1683
    %v1686 = vmul.f32 %v1684, 1.442695
    %v1687 = vpow.pop %v1686
    %v1688 = vmul.f32 %v1685, 1.442695
    %v1689 = vpow.pop %v1688
    %v1690 = vsel %vm1085, %v1687, 0.0
    %1691 = vadd.xlane.f32.xlu0 %v1690
    %v1692 = vpop.xlane.xlu0 %1691
    %v1693 = vsel %vm1085, %v1689, 0.0
    %1694 = vadd.xlane.f32.xlu0 %v1693
    %v1695 = vpop.xlane.xlu0 %1694
    %v1696 = vrcp.pop %v1692
    %v1697 = vrcp.pop %v1695
    %v1698 = vmul.f32 %v1687, %v1696
    %v1699 = vmul.f32 %v1689, %v1697
    %1700 = vst [vmem:[#allocation1] ss:$4 sm:$0xff] %v986
    %v1701 = vld.sshfl [vmem:[#allocation1] sm:$0xff pattern:$0x73625140]
    %1702 = vrot.lane.b32.xlu0 %v1701, 32
    %v1703 = vpop.permute.xlu0 %1702
    %v1705 = vsel %vm1108, %v1698, 0
    %v1707 = vsel %vm980, %v1703, 0
    %1709 = vmatpush.msra.mxu0 0.0
    %1710 = vmatpush.msra.mxu0 0.0
    %1711 = vmatpush.msra.mxu0 0.0
    %1712 = vmatpush.msra.mxu0 0.0
    %1713 = vmatpush.msra.mxu0 0.0
    %1714 = vmatpush.msra.mxu0 0.0
    %1715 = vmatpush.msra.mxu0 0.0
    %1716 = vmatpush.msra.mxu0 0.0
    %1717 = vmatpush.msra.mxu0 0.0
    %1718 = vmatpush.msra.mxu0 0.0
    %1719 = vmatpush.msra.mxu0 0.0
    %1720 = vmatpush.msra.mxu0 0.0
    %1721 = vmatpush.msra.mxu0 0.0
    %1722 = vmatpush.msra.mxu0 0.0
    %1723 = vmatpush.msra.mxu0 0.0
    %1724 = vmatpush.msra.mxu0 %v1707
    %1725 = vmatmul.f32.gmra.mxu0 %v1705
    %v1726 = vpop.f32.mrf.mxu0
    %v1727 = vadd.f32 0.0, %v1726
    %1728 = vdwg.mxu0
    %1729 = vst [vmem:[#allocation1] ss:$4 sm:$0xff] %v995
    %v1730 = vld.sshfl [vmem:[#allocation1] sm:$0xff pattern:$0x73625140]
    %1731 = vrot.lane.b32.xlu0 %v1730, 32
    %v1732 = vpop.permute.xlu0 %1731
    %v1734 = vsel %vm1108, %v1699, 0
    %v1736 = vsel %vm980, %v1732, 0
    %1738 = vmatpush.msra.mxu0 0.0
    %1739 = vmatpush.msra.mxu0 0.0
    %1740 = vmatpush.msra.mxu0 0.0
    %1741 = vmatpush.msra.mxu0 0.0
    %1742 = vmatpush.msra.mxu0 0.0
    %1743 = vmatpush.msra.mxu0 0.0
    %1744 = vmatpush.msra.mxu0 0.0
    %1745 = vmatpush.msra.mxu0 0.0
    %1746 = vmatpush.msra.mxu0 0.0
    %1747 = vmatpush.msra.mxu0 0.0
    %1748 = vmatpush.msra.mxu0 0.0
    %1749 = vmatpush.msra.mxu0 0.0
    %1750 = vmatpush.msra.mxu0 0.0
    %1751 = vmatpush.msra.mxu0 0.0
    %1752 = vmatpush.msra.mxu0 0.0
    %1753 = vmatpush.msra.mxu0 %v1736
    %1754 = vmatmul.f32.gmra.mxu0 %v1734
    %v1755 = vpop.f32.mrf.mxu0
    %v1756 = vadd.f32 0.0, %v1755
    %1757 = vdwg.mxu0
    %1760 = vst [vmem:[#allocation1] ss:$4 sm:$0xff] %v1727
    %s1761 = scalar_lea.vmem [#allocation1], 1
    %1762 = vst [vmem:[%s1761] ss:$4 sm:$0xff] %v1756
    %v1763 = vld.sshfl [vmem:[#allocation1] sm:$0xff pattern:$0x73625140]
    %v1765 = vpack.c.bf16 %v1763, %v1763
    %v1770 = vunpack.c.l.b16 %v1012
    %v1771 = vunpack.c.h.b16 %v1012
    %v1772 = vunpack.c.l.b16 %v1013
    %v1773 = vunpack.c.h.b16 %v1013
    %v1774 = vunpack.c.l.b16 %v1014
    %v1775 = vunpack.c.h.b16 %v1014
    %v1776 = vunpack.c.l.b16 %v1015
    %v1777 = vunpack.c.h.b16 %v1015
    %v1778 = vpack.c.b16 %v1772, %v1770
    %v1779 = vpack.c.b16 %v1773, %v1771
    %v1780 = vpack.c.b16 %v1776, %v1774
    %v1781 = vpack.c.b16 %v1777, %v1775
    %v1787 = vsel %vm1033, %v1765, 0
    %1789 = vmatpush.bf16.msra.mxu0 0
    %1790 = vmatpush.bf16.msra.mxu0 0
    %1791 = vmatpush.bf16.msra.mxu0 0
    %1792 = vmatpush.bf16.msra.mxu0 0
    %1793 = vmatpush.bf16.msra.mxu0 0
    %1794 = vmatpush.bf16.msra.mxu0 0
    %1795 = vmatpush.bf16.msra.mxu0 %v1780
    %1796 = vmatpush.bf16.msra.mxu0 %v1778
    %1797 = vmatmul.bf16.gmra.mxu0 %v1787
    %v1798 = vpop.f32.mrf.mxu0
    %v1799 = vadd.f32 0.0, %v1798
    %v1800 = vpop.f32.mrf.mxu0
    %1801 = vdwg.mxu0
    %1802 = vmatpush.bf16.msra.mxu0 0
    %1803 = vmatpush.bf16.msra.mxu0 0
    %1804 = vmatpush.bf16.msra.mxu0 0
    %1805 = vmatpush.bf16.msra.mxu0 0
    %1806 = vmatpush.bf16.msra.mxu0 0
    %1807 = vmatpush.bf16.msra.mxu0 0
    %1808 = vmatpush.bf16.msra.mxu0 %v1781
    %1809 = vmatpush.bf16.msra.mxu0 %v1779
    %1810 = vmatmul.bf16.gmra.mxu0 %v1787
    %v1811 = vpop.f32.mrf.mxu0
    %v1812 = vadd.f32 0.0, %v1811
    %v1813 = vpop.f32.mrf.mxu0
    %1814 = vdwg.mxu0
    %v1815 = vadd.f32 %v1614, %v1799
    %v1816 = vadd.f32 %v1615, %v1812
    %v1817 = vrot.slane %v998, 2
    %v1818 = vrot.slane %v985, 6
    %v1819 = vsel %vm1033, %v1817, 0
    %v1821 = vsel %vm1033, %v1818, 0
    %1823 = vmatpush.xpose.msra.mxu0 0.0
    %1824 = vmatpush.xpose.msra.mxu0 0.0
    %1825 = vmatpush.xpose.msra.mxu0 0.0
    %1826 = vmatpush.xpose.msra.mxu0 0.0
    %1827 = vmatpush.xpose.msra.mxu0 0.0
    %1828 = vmatpush.xpose.msra.mxu0 0.0
    %1829 = vmatpush.xpose.msra.mxu0 0.0
    %1830 = vmatpush.xpose.msra.mxu0 0.0
    %1831 = vmatpush.xpose.msra.mxu0 0.0
    %1832 = vmatpush.xpose.msra.mxu0 0.0
    %1833 = vmatpush.xpose.msra.mxu0 0.0
    %1834 = vmatpush.xpose.msra.mxu0 0.0
    %1835 = vmatpush.xpose.msra.mxu0 0.0
    %1836 = vmatpush.xpose.msra.mxu0 0.0
    %1837 = vmatpush.xpose.msra.mxu0 0.0
    %1838 = vmatpush.xpose.msra.mxu0 %v1821
    %1839 = vmatmul.f32.gmra.mxu0 %v1819
    %v1840 = vpop.f32.mrf.mxu0
    %v1841 = vadd.f32 0.0, %v1840
    %1842 = vdwg.mxu0
    %v1843 = vrot.slane %v999, 2
    %v1844 = vrot.slane %v993, 6
    %v1845 = vsel %vm1033, %v1843, 0
    %v1847 = vsel %vm1033, %v1844, 0
    %1849 = vmatpush.xpose.msra.mxu0 0.0
    %1850 = vmatpush.xpose.msra.mxu0 0.0
    %1851 = vmatpush.xpose.msra.mxu0 0.0
    %1852 = vmatpush.xpose.msra.mxu0 0.0
    %1853 = vmatpush.xpose.msra.mxu0 0.0
    %1854 = vmatpush.xpose.msra.mxu0 0.0
    %1855 = vmatpush.xpose.msra.mxu0 0.0
    %1856 = vmatpush.xpose.msra.mxu0 0.0
    %1857 = vmatpush.xpose.msra.mxu0 0.0
    %1858 = vmatpush.xpose.msra.mxu0 0.0
    %1859 = vmatpush.xpose.msra.mxu0 0.0
    %1860 = vmatpush.xpose.msra.mxu0 0.0
    %1861 = vmatpush.xpose.msra.mxu0 0.0
    %1862 = vmatpush.xpose.msra.mxu0 0.0
    %1863 = vmatpush.xpose.msra.mxu0 0.0
    %1864 = vmatpush.xpose.msra.mxu0 %v1847
    %1865 = vmatmul.f32.gmra.mxu0 %v1845
    %v1866 = vpop.f32.mrf.mxu0
    %v1867 = vadd.f32 0.0, %v1866
    %1868 = vdwg.mxu0
    %v1869 = vsel %vm1085, %v1841, -inf
    %1870 = vmax.xlane.f32.xlu0 %v1869
    %v1871 = vpop.xlane.xlu0 %1870
    %v1872 = vsel %vm1085, %v1867, -inf
    %1873 = vmax.xlane.f32.xlu0 %v1872
    %v1874 = vpop.xlane.xlu0 %1873
    %v1875 = vsub.f32 %v1841, %v1871
    %v1876 = vsub.f32 %v1867, %v1874
    %v1877 = vmul.f32 %v1875, 1.442695
    %v1878 = vpow.pop %v1877
    %v1879 = vmul.f32 %v1876, 1.442695
    %v1880 = vpow.pop %v1879
    %v1881 = vsel %vm1085, %v1878, 0.0
    %1882 = vadd.xlane.f32.xlu0 %v1881
    %v1883 = vpop.xlane.xlu0 %1882
    %v1884 = vsel %vm1085, %v1880, 0.0
    %1885 = vadd.xlane.f32.xlu0 %v1884
    %v1886 = vpop.xlane.xlu0 %1885
    %v1887 = vrcp.pop %v1883
    %v1888 = vrcp.pop %v1886
    %v1889 = vmul.f32 %v1878, %v1887
    %v1890 = vmul.f32 %v1880, %v1888
    %v1891 = vrot.slane %v986, 2
    %v1893 = vsel %vm1108, %v1889, 0
    %v1895 = vsel %vm980, %v1891, 0
    %1897 = vmatpush.msra.mxu0 0.0
    %1898 = vmatpush.msra.mxu0 0.0
    %1899 = vmatpush.msra.mxu0 0.0
    %1900 = vmatpush.msra.mxu0 0.0
    %1901 = vmatpush.msra.mxu0 0.0
    %1902 = vmatpush.msra.mxu0 0.0
    %1903 = vmatpush.msra.mxu0 0.0
    %1904 = vmatpush.msra.mxu0 0.0
    %1905 = vmatpush.msra.mxu0 0.0
    %1906 = vmatpush.msra.mxu0 0.0
    %1907 = vmatpush.msra.mxu0 0.0
    %1908 = vmatpush.msra.mxu0 0.0
    %1909 = vmatpush.msra.mxu0 0.0
    %1910 = vmatpush.msra.mxu0 0.0
    %1911 = vmatpush.msra.mxu0 0.0
    %1912 = vmatpush.msra.mxu0 %v1895
    %1913 = vmatmul.f32.gmra.mxu0 %v1893
    %v1914 = vpop.f32.mrf.mxu0
    %v1915 = vadd.f32 0.0, %v1914
    %1916 = vdwg.mxu0
    %v1917 = vrot.slane %v995, 2
    %v1919 = vsel %vm1108, %v1890, 0
    %v1921 = vsel %vm980, %v1917, 0
    %1923 = vmatpush.msra.mxu0 0.0
    %1924 = vmatpush.msra.mxu0 0.0
    %1925 = vmatpush.msra.mxu0 0.0
    %1926 = vmatpush.msra.mxu0 0.0
    %1927 = vmatpush.msra.mxu0 0.0
    %1928 = vmatpush.msra.mxu0 0.0
    %1929 = vmatpush.msra.mxu0 0.0
    %1930 = vmatpush.msra.mxu0 0.0
    %1931 = vmatpush.msra.mxu0 0.0
    %1932 = vmatpush.msra.mxu0 0.0
    %1933 = vmatpush.msra.mxu0 0.0
    %1934 = vmatpush.msra.mxu0 0.0
    %1935 = vmatpush.msra.mxu0 0.0
    %1936 = vmatpush.msra.mxu0 0.0
    %1937 = vmatpush.msra.mxu0 0.0
    %1938 = vmatpush.msra.mxu0 %v1921
    %1939 = vmatmul.f32.gmra.mxu0 %v1919
    %v1940 = vpop.f32.mrf.mxu0
    %v1941 = vadd.f32 0.0, %v1940
    %1942 = vdwg.mxu0
    %1945 = vst [vmem:[#allocation1] ss:$4 sm:$0xff] %v1915
    %s1946 = scalar_lea.vmem [#allocation1], 1
    %1947 = vst [vmem:[%s1946] ss:$4 sm:$0xff] %v1941
    %v1948 = vld.sshfl [vmem:[#allocation1] sm:$0xff pattern:$0x73625140]
    %v1950 = vpack.c.bf16 %v1948, %v1948
    %v1955 = vunpack.c.l.b16 %v1016
    %v1956 = vunpack.c.h.b16 %v1016
    %v1957 = vunpack.c.l.b16 %v1017
    %v1958 = vunpack.c.h.b16 %v1017
    %v1959 = vunpack.c.l.b16 %v1018
    %v1960 = vunpack.c.h.b16 %v1018
    %v1961 = vunpack.c.l.b16 %v1019
    %v1962 = vunpack.c.h.b16 %v1019
    %v1963 = vpack.c.b16 %v1957, %v1955
    %v1964 = vpack.c.b16 %v1958, %v1956
    %v1965 = vpack.c.b16 %v1961, %v1959
    %v1966 = vpack.c.b16 %v1962, %v1960
    %v1972 = vsel %vm1033, %v1950, 0
    %1974 = vmatpush.bf16.msra.mxu0 0
    %1975 = vmatpush.bf16.msra.mxu0 0
    %1976 = vmatpush.bf16.msra.mxu0 0
    %1977 = vmatpush.bf16.msra.mxu0 0
    %1978 = vmatpush.bf16.msra.mxu0 0
    %1979 = vmatpush.bf16.msra.mxu0 0
    %1980 = vmatpush.bf16.msra.mxu0 %v1965
    %1981 = vmatpush.bf16.msra.mxu0 %v1963
    %1982 = vmatmul.bf16.gmra.mxu0 %v1972
    %v1983 = vpop.f32.mrf.mxu0
    %v1984 = vadd.f32 0.0, %v1983
    %v1985 = vpop.f32.mrf.mxu0
    %1986 = vdwg.mxu0
    %1987 = vmatpush.bf16.msra.mxu0 0
    %1988 = vmatpush.bf16.msra.mxu0 0
    %1989 = vmatpush.bf16.msra.mxu0 0
    %1990 = vmatpush.bf16.msra.mxu0 0
    %1991 = vmatpush.bf16.msra.mxu0 0
    %1992 = vmatpush.bf16.msra.mxu0 0
    %1993 = vmatpush.bf16.msra.mxu0 %v1966
    %1994 = vmatpush.bf16.msra.mxu0 %v1964
    %1995 = vmatmul.bf16.gmra.mxu0 %v1972
    %v1996 = vpop.f32.mrf.mxu0
    %v1997 = vadd.f32 0.0, %v1996
    %v1998 = vpop.f32.mrf.mxu0
    %1999 = vdwg.mxu0
    %v2000 = vadd.f32 %v1815, %v1984
    %v2001 = vadd.f32 %v1816, %v1997
    %2002 = vrot.lane.b32.xlu0 %v998, 96
    %v2003 = vpop.permute.xlu0 %2002
    %v2004 = vrot.slane %v2003, 2
    %v2005 = vrot.slane %v1168, 6
    %v2006 = vsel %vm1033, %v2004, 0
    %v2008 = vsel %vm1033, %v2005, 0
    %2010 = vmatpush.xpose.msra.mxu0 0.0
    %2011 = vmatpush.xpose.msra.mxu0 0.0
    %2012 = vmatpush.xpose.msra.mxu0 0.0
    %2013 = vmatpush.xpose.msra.mxu0 0.0
    %2014 = vmatpush.xpose.msra.mxu0 0.0
    %2015 = vmatpush.xpose.msra.mxu0 0.0
    %2016 = vmatpush.xpose.msra.mxu0 0.0
    %2017 = vmatpush.xpose.msra.mxu0 0.0
    %2018 = vmatpush.xpose.msra.mxu0 0.0
    %2019 = vmatpush.xpose.msra.mxu0 0.0
    %2020 = vmatpush.xpose.msra.mxu0 0.0
    %2021 = vmatpush.xpose.msra.mxu0 0.0
    %2022 = vmatpush.xpose.msra.mxu0 0.0
    %2023 = vmatpush.xpose.msra.mxu0 0.0
    %2024 = vmatpush.xpose.msra.mxu0 0.0
    %2025 = vmatpush.xpose.msra.mxu0 %v2008
    %2026 = vmatmul.f32.gmra.mxu0 %v2006
    %v2027 = vpop.f32.mrf.mxu0
    %v2028 = vadd.f32 0.0, %v2027
    %2029 = vdwg.mxu0
    %2030 = vrot.lane.b32.xlu0 %v999, 96
    %v2031 = vpop.permute.xlu0 %2030
    %v2032 = vrot.slane %v2031, 2
    %v2033 = vrot.slane %v1199, 6
    %v2034 = vsel %vm1033, %v2032, 0
    %v2036 = vsel %vm1033, %v2033, 0
    %2038 = vmatpush.xpose.msra.mxu0 0.0
    %2039 = vmatpush.xpose.msra.mxu0 0.0
    %2040 = vmatpush.xpose.msra.mxu0 0.0
    %2041 = vmatpush.xpose.msra.mxu0 0.0
    %2042 = vmatpush.xpose.msra.mxu0 0.0
    %2043 = vmatpush.xpose.msra.mxu0 0.0
    %2044 = vmatpush.xpose.msra.mxu0 0.0
    %2045 = vmatpush.xpose.msra.mxu0 0.0
    %2046 = vmatpush.xpose.msra.mxu0 0.0
    %2047 = vmatpush.xpose.msra.mxu0 0.0
    %2048 = vmatpush.xpose.msra.mxu0 0.0
    %2049 = vmatpush.xpose.msra.mxu0 0.0
    %2050 = vmatpush.xpose.msra.mxu0 0.0
    %2051 = vmatpush.xpose.msra.mxu0 0.0
    %2052 = vmatpush.xpose.msra.mxu0 0.0
    %2053 = vmatpush.xpose.msra.mxu0 %v2036
    %2054 = vmatmul.f32.gmra.mxu0 %v2034
    %v2055 = vpop.f32.mrf.mxu0
    %v2056 = vadd.f32 0.0, %v2055
    %2057 = vdwg.mxu0
    %v2058 = vsel %vm1085, %v2028, -inf
    %2059 = vmax.xlane.f32.xlu0 %v2058
    %v2060 = vpop.xlane.xlu0 %2059
    %v2061 = vsel %vm1085, %v2056, -inf
    %2062 = vmax.xlane.f32.xlu0 %v2061
    %v2063 = vpop.xlane.xlu0 %2062
    %v2064 = vsub.f32 %v2028, %v2060
    %v2065 = vsub.f32 %v2056, %v2063
    %v2066 = vmul.f32 %v2064, 1.442695
    %v2067 = vpow.pop %v2066
    %v2068 = vmul.f32 %v2065, 1.442695
    %v2069 = vpow.pop %v2068
    %v2070 = vsel %vm1085, %v2067, 0.0
    %2071 = vadd.xlane.f32.xlu0 %v2070
    %v2072 = vpop.xlane.xlu0 %2071
    %v2073 = vsel %vm1085, %v2069, 0.0
    %2074 = vadd.xlane.f32.xlu0 %v2073
    %v2075 = vpop.xlane.xlu0 %2074
    %v2076 = vrcp.pop %v2072
    %v2077 = vrcp.pop %v2075
    %v2078 = vmul.f32 %v2067, %v2076
    %v2079 = vmul.f32 %v2069, %v2077
    %2080 = vrot.lane.b32.xlu0 %v986, 96
    %v2081 = vpop.permute.xlu0 %2080
    %v2082 = vrot.slane %v2081, 2
    %v2084 = vsel %vm1108, %v2078, 0
    %v2086 = vsel %vm980, %v2082, 0
    %2088 = vmatpush.msra.mxu0 0.0
    %2089 = vmatpush.msra.mxu0 0.0
    %2090 = vmatpush.msra.mxu0 0.0
    %2091 = vmatpush.msra.mxu0 0.0
    %2092 = vmatpush.msra.mxu0 0.0
    %2093 = vmatpush.msra.mxu0 0.0
    %2094 = vmatpush.msra.mxu0 0.0
    %2095 = vmatpush.msra.mxu0 0.0
    %2096 = vmatpush.msra.mxu0 0.0
    %2097 = vmatpush.msra.mxu0 0.0
    %2098 = vmatpush.msra.mxu0 0.0
    %2099 = vmatpush.msra.mxu0 0.0
    %2100 = vmatpush.msra.mxu0 0.0
    %2101 = vmatpush.msra.mxu0 0.0
    %2102 = vmatpush.msra.mxu0 0.0
    %2103 = vmatpush.msra.mxu0 %v2086
    %2104 = vmatmul.f32.gmra.mxu0 %v2084
    %v2105 = vpop.f32.mrf.mxu0
    %v2106 = vadd.f32 0.0, %v2105
    %2107 = vdwg.mxu0
    %2108 = vrot.lane.b32.xlu0 %v995, 96
    %v2109 = vpop.permute.xlu0 %2108
    %v2110 = vrot.slane %v2109, 2
    %v2112 = vsel %vm1108, %v2079, 0
    %v2114 = vsel %vm980, %v2110, 0
    %2116 = vmatpush.msra.mxu0 0.0
    %2117 = vmatpush.msra.mxu0 0.0
    %2118 = vmatpush.msra.mxu0 0.0
    %2119 = vmatpush.msra.mxu0 0.0
    %2120 = vmatpush.msra.mxu0 0.0
    %2121 = vmatpush.msra.mxu0 0.0
    %2122 = vmatpush.msra.mxu0 0.0
    %2123 = vmatpush.msra.mxu0 0.0
    %2124 = vmatpush.msra.mxu0 0.0
    %2125 = vmatpush.msra.mxu0 0.0
    %2126 = vmatpush.msra.mxu0 0.0
    %2127 = vmatpush.msra.mxu0 0.0
    %2128 = vmatpush.msra.mxu0 0.0
    %2129 = vmatpush.msra.mxu0 0.0
    %2130 = vmatpush.msra.mxu0 0.0
    %2131 = vmatpush.msra.mxu0 %v2114
    %2132 = vmatmul.f32.gmra.mxu0 %v2112
    %v2133 = vpop.f32.mrf.mxu0
    %v2134 = vadd.f32 0.0, %v2133
    %2135 = vdwg.mxu0
    %2138 = vst [vmem:[#allocation1] ss:$4 sm:$0xff] %v2106
    %s2139 = scalar_lea.vmem [#allocation1], 1
    %2140 = vst [vmem:[%s2139] ss:$4 sm:$0xff] %v2134
    %v2141 = vld.sshfl [vmem:[#allocation1] sm:$0xff pattern:$0x73625140]
    %v2143 = vpack.c.bf16 %v2141, %v2141
    %v2148 = vunpack.c.l.b16 %v1020
    %v2149 = vunpack.c.h.b16 %v1020
    %v2150 = vunpack.c.l.b16 %v1021
    %v2151 = vunpack.c.h.b16 %v1021
    %v2152 = vunpack.c.l.b16 %v1022
    %v2153 = vunpack.c.h.b16 %v1022
    %v2154 = vunpack.c.l.b16 %v1023
    %v2155 = vunpack.c.h.b16 %v1023
    %v2156 = vpack.c.b16 %v2150, %v2148
    %v2157 = vpack.c.b16 %v2151, %v2149
    %v2158 = vpack.c.b16 %v2154, %v2152
    %v2159 = vpack.c.b16 %v2155, %v2153
    %v2165 = vsel %vm1033, %v2143, 0
    %2167 = vmatpush.bf16.msra.mxu0 0
    %2168 = vmatpush.bf16.msra.mxu0 0
    %2169 = vmatpush.bf16.msra.mxu0 0
    %2170 = vmatpush.bf16.msra.mxu0 0
    %2171 = vmatpush.bf16.msra.mxu0 0
    %2172 = vmatpush.bf16.msra.mxu0 0
    %2173 = vmatpush.bf16.msra.mxu0 %v2158
    %2174 = vmatpush.bf16.msra.mxu0 %v2156
    %2175 = vmatmul.bf16.gmra.mxu0 %v2165
    %v2176 = vpop.f32.mrf.mxu0
    %v2177 = vadd.f32 0.0, %v2176
    %v2178 = vpop.f32.mrf.mxu0
    %2179 = vdwg.mxu0
    %2180 = vmatpush.bf16.msra.mxu0 0
    %2181 = vmatpush.bf16.msra.mxu0 0
    %2182 = vmatpush.bf16.msra.mxu0 0
    %2183 = vmatpush.bf16.msra.mxu0 0
    %2184 = vmatpush.bf16.msra.mxu0 0
    %2185 = vmatpush.bf16.msra.mxu0 0
    %2186 = vmatpush.bf16.msra.mxu0 %v2159
    %2187 = vmatpush.bf16.msra.mxu0 %v2157
    %2188 = vmatmul.bf16.gmra.mxu0 %v2165
    %v2189 = vpop.f32.mrf.mxu0
    %v2190 = vadd.f32 0.0, %v2189
    %v2191 = vpop.f32.mrf.mxu0
    %2192 = vdwg.mxu0
    %v2193 = vadd.f32 %v2000, %v2177
    %v2194 = vadd.f32 %v2001, %v2190
    %2195 = vrot.lane.b32.xlu0 %v998, 64
    %v2196 = vpop.permute.xlu0 %2195
    %v2197 = vrot.slane %v2196, 2
    %v2198 = vrot.slane %v1416, 6
    %v2199 = vsel %vm1033, %v2197, 0
    %v2201 = vsel %vm1033, %v2198, 0
    %2203 = vmatpush.xpose.msra.mxu0 0.0
    %2204 = vmatpush.xpose.msra.mxu0 0.0
    %2205 = vmatpush.xpose.msra.mxu0 0.0
    %2206 = vmatpush.xpose.msra.mxu0 0.0
    %2207 = vmatpush.xpose.msra.mxu0 0.0
    %2208 = vmatpush.xpose.msra.mxu0 0.0
    %2209 = vmatpush.xpose.msra.mxu0 0.0
    %2210 = vmatpush.xpose.msra.mxu0 0.0
    %2211 = vmatpush.xpose.msra.mxu0 0.0
    %2212 = vmatpush.xpose.msra.mxu0 0.0
    %2213 = vmatpush.xpose.msra.mxu0 0.0
    %2214 = vmatpush.xpose.msra.mxu0 0.0
    %2215 = vmatpush.xpose.msra.mxu0 0.0
    %2216 = vmatpush.xpose.msra.mxu0 0.0
    %2217 = vmatpush.xpose.msra.mxu0 0.0
    %2218 = vmatpush.xpose.msra.mxu0 %v2201
    %2219 = vmatmul.f32.gmra.mxu0 %v2199
    %v2220 = vpop.f32.mrf.mxu0
    %v2221 = vadd.f32 0.0, %v2220
    %2222 = vdwg.mxu0
    %2223 = vrot.lane.b32.xlu0 %v999, 64
    %v2224 = vpop.permute.xlu0 %2223
    %v2225 = vrot.slane %v2224, 2
    %v2226 = vrot.slane %v1447, 6
    %v2227 = vsel %vm1033, %v2225, 0
    %v2229 = vsel %vm1033, %v2226, 0
    %2231 = vmatpush.xpose.msra.mxu0 0.0
    %2232 = vmatpush.xpose.msra.mxu0 0.0
    %2233 = vmatpush.xpose.msra.mxu0 0.0
    %2234 = vmatpush.xpose.msra.mxu0 0.0
    %2235 = vmatpush.xpose.msra.mxu0 0.0
    %2236 = vmatpush.xpose.msra.mxu0 0.0
    %2237 = vmatpush.xpose.msra.mxu0 0.0
    %2238 = vmatpush.xpose.msra.mxu0 0.0
    %2239 = vmatpush.xpose.msra.mxu0 0.0
    %2240 = vmatpush.xpose.msra.mxu0 0.0
    %2241 = vmatpush.xpose.msra.mxu0 0.0
    %2242 = vmatpush.xpose.msra.mxu0 0.0
    %2243 = vmatpush.xpose.msra.mxu0 0.0
    %2244 = vmatpush.xpose.msra.mxu0 0.0
    %2245 = vmatpush.xpose.msra.mxu0 0.0
    %2246 = vmatpush.xpose.msra.mxu0 %v2229
    %2247 = vmatmul.f32.gmra.mxu0 %v2227
    %v2248 = vpop.f32.mrf.mxu0
    %v2249 = vadd.f32 0.0, %v2248
    %2250 = vdwg.mxu0
    %v2251 = vsel %vm1085, %v2221, -inf
    %2252 = vmax.xlane.f32.xlu0 %v2251
    %v2253 = vpop.xlane.xlu0 %2252
    %v2254 = vsel %vm1085, %v2249, -inf
    %2255 = vmax.xlane.f32.xlu0 %v2254
    %v2256 = vpop.xlane.xlu0 %2255
    %v2257 = vsub.f32 %v2221, %v2253
    %v2258 = vsub.f32 %v2249, %v2256
    %v2259 = vmul.f32 %v2257, 1.442695
    %v2260 = vpow.pop %v2259
    %v2261 = vmul.f32 %v2258, 1.442695
    %v2262 = vpow.pop %v2261
    %v2263 = vsel %vm1085, %v2260, 0.0
    %2264 = vadd.xlane.f32.xlu0 %v2263
    %v2265 = vpop.xlane.xlu0 %2264
    %v2266 = vsel %vm1085, %v2262, 0.0
    %2267 = vadd.xlane.f32.xlu0 %v2266
    %v2268 = vpop.xlane.xlu0 %2267
    %v2269 = vrcp.pop %v2265
    %v2270 = vrcp.pop %v2268
    %v2271 = vmul.f32 %v2260, %v2269
    %v2272 = vmul.f32 %v2262, %v2270
    %2273 = vrot.lane.b32.xlu0 %v986, 64
    %v2274 = vpop.permute.xlu0 %2273
    %v2275 = vrot.slane %v2274, 2
    %v2277 = vsel %vm1108, %v2271, 0
    %v2279 = vsel %vm980, %v2275, 0
    %2281 = vmatpush.msra.mxu0 0.0
    %2282 = vmatpush.msra.mxu0 0.0
    %2283 = vmatpush.msra.mxu0 0.0
    %2284 = vmatpush.msra.mxu0 0.0
    %2285 = vmatpush.msra.mxu0 0.0
    %2286 = vmatpush.msra.mxu0 0.0
    %2287 = vmatpush.msra.mxu0 0.0
    %2288 = vmatpush.msra.mxu0 0.0
    %2289 = vmatpush.msra.mxu0 0.0
    %2290 = vmatpush.msra.mxu0 0.0
    %2291 = vmatpush.msra.mxu0 0.0
    %2292 = vmatpush.msra.mxu0 0.0
    %2293 = vmatpush.msra.mxu0 0.0
    %2294 = vmatpush.msra.mxu0 0.0
    %2295 = vmatpush.msra.mxu0 0.0
    %2296 = vmatpush.msra.mxu0 %v2279
    %2297 = vmatmul.f32.gmra.mxu0 %v2277
    %v2298 = vpop.f32.mrf.mxu0
    %v2299 = vadd.f32 0.0, %v2298
    %2300 = vdwg.mxu0
    %2301 = vrot.lane.b32.xlu0 %v995, 64
    %v2302 = vpop.permute.xlu0 %2301
    %v2303 = vrot.slane %v2302, 2
    %v2305 = vsel %vm1108, %v2272, 0
    %v2307 = vsel %vm980, %v2303, 0
    %2309 = vmatpush.msra.mxu0 0.0
    %2310 = vmatpush.msra.mxu0 0.0
    %2311 = vmatpush.msra.mxu0 0.0
    %2312 = vmatpush.msra.mxu0 0.0
    %2313 = vmatpush.msra.mxu0 0.0
    %2314 = vmatpush.msra.mxu0 0.0
    %2315 = vmatpush.msra.mxu0 0.0
    %2316 = vmatpush.msra.mxu0 0.0
    %2317 = vmatpush.msra.mxu0 0.0
    %2318 = vmatpush.msra.mxu0 0.0
    %2319 = vmatpush.msra.mxu0 0.0
    %2320 = vmatpush.msra.mxu0 0.0
    %2321 = vmatpush.msra.mxu0 0.0
    %2322 = vmatpush.msra.mxu0 0.0
    %2323 = vmatpush.msra.mxu0 0.0
    %2324 = vmatpush.msra.mxu0 %v2307
    %2325 = vmatmul.f32.gmra.mxu0 %v2305
    %v2326 = vpop.f32.mrf.mxu0
    %v2327 = vadd.f32 0.0, %v2326
    %2328 = vdwg.mxu0
    %2331 = vst [vmem:[#allocation1] ss:$4 sm:$0xff] %v2299
    %s2332 = scalar_lea.vmem [#allocation1], 1
    %2333 = vst [vmem:[%s2332] ss:$4 sm:$0xff] %v2327
    %v2334 = vld.sshfl [vmem:[#allocation1] sm:$0xff pattern:$0x73625140]
    %v2336 = vpack.c.bf16 %v2334, %v2334
    %v2341 = vunpack.c.l.b16 %v1024
    %v2342 = vunpack.c.h.b16 %v1024
    %v2343 = vunpack.c.l.b16 %v1025
    %v2344 = vunpack.c.h.b16 %v1025
    %v2345 = vunpack.c.l.b16 %v1026
    %v2346 = vunpack.c.h.b16 %v1026
    %v2347 = vunpack.c.l.b16 %v1027
    %v2348 = vunpack.c.h.b16 %v1027
    %v2349 = vpack.c.b16 %v2343, %v2341
    %v2350 = vpack.c.b16 %v2344, %v2342
    %v2351 = vpack.c.b16 %v2347, %v2345
    %v2352 = vpack.c.b16 %v2348, %v2346
    %v2358 = vsel %vm1033, %v2336, 0
    %2360 = vmatpush.bf16.msra.mxu0 0
    %2361 = vmatpush.bf16.msra.mxu0 0
    %2362 = vmatpush.bf16.msra.mxu0 0
    %2363 = vmatpush.bf16.msra.mxu0 0
    %2364 = vmatpush.bf16.msra.mxu0 0
    %2365 = vmatpush.bf16.msra.mxu0 0
    %2366 = vmatpush.bf16.msra.mxu0 %v2351
    %2367 = vmatpush.bf16.msra.mxu0 %v2349
    %2368 = vmatmul.bf16.gmra.mxu0 %v2358
    %v2369 = vpop.f32.mrf.mxu0
    %v2370 = vadd.f32 0.0, %v2369
    %v2371 = vpop.f32.mrf.mxu0
    %2372 = vdwg.mxu0
    %2373 = vmatpush.bf16.msra.mxu0 0
    %2374 = vmatpush.bf16.msra.mxu0 0
    %2375 = vmatpush.bf16.msra.mxu0 0
    %2376 = vmatpush.bf16.msra.mxu0 0
    %2377 = vmatpush.bf16.msra.mxu0 0
    %2378 = vmatpush.bf16.msra.mxu0 0
    %2379 = vmatpush.bf16.msra.mxu0 %v2352
    %2380 = vmatpush.bf16.msra.mxu0 %v2350
    %2381 = vmatmul.bf16.gmra.mxu0 %v2358
    %v2382 = vpop.f32.mrf.mxu0
    %v2383 = vadd.f32 0.0, %v2382
    %v2384 = vpop.f32.mrf.mxu0
    %2385 = vdwg.mxu0
    %v2386 = vadd.f32 %v2193, %v2370
    %v2387 = vadd.f32 %v2194, %v2383
    %2388 = vrot.lane.b32.xlu0 %v998, 32
    %v2389 = vpop.permute.xlu0 %2388
    %v2390 = vrot.slane %v2389, 2
    %v2391 = vrot.slane %v1617, 6
    %v2392 = vsel %vm1033, %v2390, 0
    %v2394 = vsel %vm1033, %v2391, 0
    %2396 = vmatpush.xpose.msra.mxu0 0.0
    %2397 = vmatpush.xpose.msra.mxu0 0.0
    %2398 = vmatpush.xpose.msra.mxu0 0.0
    %2399 = vmatpush.xpose.msra.mxu0 0.0
    %2400 = vmatpush.xpose.msra.mxu0 0.0
    %2401 = vmatpush.xpose.msra.mxu0 0.0
    %2402 = vmatpush.xpose.msra.mxu0 0.0
    %2403 = vmatpush.xpose.msra.mxu0 0.0
    %2404 = vmatpush.xpose.msra.mxu0 0.0
    %2405 = vmatpush.xpose.msra.mxu0 0.0
    %2406 = vmatpush.xpose.msra.mxu0 0.0
    %2407 = vmatpush.xpose.msra.mxu0 0.0
    %2408 = vmatpush.xpose.msra.mxu0 0.0
    %2409 = vmatpush.xpose.msra.mxu0 0.0
    %2410 = vmatpush.xpose.msra.mxu0 0.0
    %2411 = vmatpush.xpose.msra.mxu0 %v2394
    %2412 = vmatmul.f32.gmra.mxu0 %v2392
    %v2413 = vpop.f32.mrf.mxu0
    %v2414 = vadd.f32 0.0, %v2413
    %2415 = vdwg.mxu0
    %2416 = vrot.lane.b32.xlu0 %v999, 32
    %v2417 = vpop.permute.xlu0 %2416
    %v2418 = vrot.slane %v2417, 2
    %v2419 = vrot.slane %v1648, 6
    %v2420 = vsel %vm1033, %v2418, 0
    %v2422 = vsel %vm1033, %v2419, 0
    %2424 = vmatpush.xpose.msra.mxu0 0.0
    %2425 = vmatpush.xpose.msra.mxu0 0.0
    %2426 = vmatpush.xpose.msra.mxu0 0.0
    %2427 = vmatpush.xpose.msra.mxu0 0.0
    %2428 = vmatpush.xpose.msra.mxu0 0.0
    %2429 = vmatpush.xpose.msra.mxu0 0.0
    %2430 = vmatpush.xpose.msra.mxu0 0.0
    %2431 = vmatpush.xpose.msra.mxu0 0.0
    %2432 = vmatpush.xpose.msra.mxu0 0.0
    %2433 = vmatpush.xpose.msra.mxu0 0.0
    %2434 = vmatpush.xpose.msra.mxu0 0.0
    %2435 = vmatpush.xpose.msra.mxu0 0.0
    %2436 = vmatpush.xpose.msra.mxu0 0.0
    %2437 = vmatpush.xpose.msra.mxu0 0.0
    %2438 = vmatpush.xpose.msra.mxu0 0.0
    %2439 = vmatpush.xpose.msra.mxu0 %v2422
    %2440 = vmatmul.f32.gmra.mxu0 %v2420
    %v2441 = vpop.f32.mrf.mxu0
    %v2442 = vadd.f32 0.0, %v2441
    %2443 = vdwg.mxu0
    %v2444 = vsel %vm1085, %v2414, -inf
    %2445 = vmax.xlane.f32.xlu0 %v2444
    %v2446 = vpop.xlane.xlu0 %2445
    %v2447 = vsel %vm1085, %v2442, -inf
    %2448 = vmax.xlane.f32.xlu0 %v2447
    %v2449 = vpop.xlane.xlu0 %2448
    %v2450 = vsub.f32 %v2414, %v2446
    %v2451 = vsub.f32 %v2442, %v2449
    %v2452 = vmul.f32 %v2450, 1.442695
    %v2453 = vpow.pop %v2452
    %v2454 = vmul.f32 %v2451, 1.442695
    %v2455 = vpow.pop %v2454
    %v2456 = vsel %vm1085, %v2453, 0.0
    %2457 = vadd.xlane.f32.xlu0 %v2456
    %v2458 = vpop.xlane.xlu0 %2457
    %v2459 = vsel %vm1085, %v2455, 0.0
    %2460 = vadd.xlane.f32.xlu0 %v2459
    %v2461 = vpop.xlane.xlu0 %2460
    %v2462 = vrcp.pop %v2458
    %v2463 = vrcp.pop %v2461
    %v2464 = vmul.f32 %v2453, %v2462
    %v2465 = vmul.f32 %v2455, %v2463
    %2466 = vrot.lane.b32.xlu0 %v986, 32
    %v2467 = vpop.permute.xlu0 %2466
    %v2468 = vrot.slane %v2467, 2
    %v2470 = vsel %vm1108, %v2464, 0
    %v2472 = vsel %vm980, %v2468, 0
    %2474 = vmatpush.msra.mxu0 0.0
    %2475 = vmatpush.msra.mxu0 0.0
    %2476 = vmatpush.msra.mxu0 0.0
    %2477 = vmatpush.msra.mxu0 0.0
    %2478 = vmatpush.msra.mxu0 0.0
    %2479 = vmatpush.msra.mxu0 0.0
    %2480 = vmatpush.msra.mxu0 0.0
    %2481 = vmatpush.msra.mxu0 0.0
    %2482 = vmatpush.msra.mxu0 0.0
    %2483 = vmatpush.msra.mxu0 0.0
    %2484 = vmatpush.msra.mxu0 0.0
    %2485 = vmatpush.msra.mxu0 0.0
    %2486 = vmatpush.msra.mxu0 0.0
    %2487 = vmatpush.msra.mxu0 0.0
    %2488 = vmatpush.msra.mxu0 0.0
    %2489 = vmatpush.msra.mxu0 %v2472
    %2490 = vmatmul.f32.gmra.mxu0 %v2470
    %v2491 = vpop.f32.mrf.mxu0
    %v2492 = vadd.f32 0.0, %v2491
    %2493 = vdwg.mxu0
    %2494 = vrot.lane.b32.xlu0 %v995, 32
    %v2495 = vpop.permute.xlu0 %2494
    %v2496 = vrot.slane %v2495, 2
    %v2498 = vsel %vm1108, %v2465, 0
    %v2500 = vsel %vm980, %v2496, 0
    %2502 = vmatpush.msra.mxu0 0.0
    %2503 = vmatpush.msra.mxu0 0.0
    %2504 = vmatpush.msra.mxu0 0.0
    %2505 = vmatpush.msra.mxu0 0.0
    %2506 = vmatpush.msra.mxu0 0.0
    %2507 = vmatpush.msra.mxu0 0.0
    %2508 = vmatpush.msra.mxu0 0.0
    %2509 = vmatpush.msra.mxu0 0.0
    %2510 = vmatpush.msra.mxu0 0.0
    %2511 = vmatpush.msra.mxu0 0.0
    %2512 = vmatpush.msra.mxu0 0.0
    %2513 = vmatpush.msra.mxu0 0.0
    %2514 = vmatpush.msra.mxu0 0.0
    %2515 = vmatpush.msra.mxu0 0.0
    %2516 = vmatpush.msra.mxu0 0.0
    %2517 = vmatpush.msra.mxu0 %v2500
    %2518 = vmatmul.f32.gmra.mxu0 %v2498
    %v2519 = vpop.f32.mrf.mxu0
    %v2520 = vadd.f32 0.0, %v2519
    %2521 = vdwg.mxu0
    %2524 = vst [vmem:[#allocation1] ss:$4 sm:$0xff] %v2492
    %s2525 = scalar_lea.vmem [#allocation1], 1
    %2526 = vst [vmem:[%s2525] ss:$4 sm:$0xff] %v2520
    %v2527 = vld.sshfl [vmem:[#allocation1] sm:$0xff pattern:$0x73625140]
    %v2529 = vpack.c.bf16 %v2527, %v2527
    %v2534 = vunpack.c.l.b16 %v1028
    %v2535 = vunpack.c.h.b16 %v1028
    %v2536 = vunpack.c.l.b16 %v1029
    %v2537 = vunpack.c.h.b16 %v1029
    %v2538 = vunpack.c.l.b16 %v1030
    %v2539 = vunpack.c.h.b16 %v1030
    %v2540 = vunpack.c.l.b16 %v1031
    %v2541 = vunpack.c.h.b16 %v1031
    %v2542 = vpack.c.b16 %v2536, %v2534
    %v2543 = vpack.c.b16 %v2537, %v2535
    %v2544 = vpack.c.b16 %v2540, %v2538
    %v2545 = vpack.c.b16 %v2541, %v2539
    %v2551 = vsel %vm1033, %v2529, 0
    %2553 = vmatpush.bf16.msra.mxu0 0
    %2554 = vmatpush.bf16.msra.mxu0 0
    %2555 = vmatpush.bf16.msra.mxu0 0
    %2556 = vmatpush.bf16.msra.mxu0 0
    %2557 = vmatpush.bf16.msra.mxu0 0
    %2558 = vmatpush.bf16.msra.mxu0 0
    %2559 = vmatpush.bf16.msra.mxu0 %v2544
    %2560 = vmatpush.bf16.msra.mxu0 %v2542
    %2561 = vmatmul.bf16.gmra.mxu0 %v2551
    %v2562 = vpop.f32.mrf.mxu0
    %v2563 = vadd.f32 0.0, %v2562
    %v2564 = vpop.f32.mrf.mxu0
    %2565 = vdwg.mxu0
    %2566 = vmatpush.bf16.msra.mxu0 0
    %2567 = vmatpush.bf16.msra.mxu0 0
    %2568 = vmatpush.bf16.msra.mxu0 0
    %2569 = vmatpush.bf16.msra.mxu0 0
    %2570 = vmatpush.bf16.msra.mxu0 0
    %2571 = vmatpush.bf16.msra.mxu0 0
    %2572 = vmatpush.bf16.msra.mxu0 %v2545
    %2573 = vmatpush.bf16.msra.mxu0 %v2543
    %2574 = vmatmul.bf16.gmra.mxu0 %v2551
    %v2575 = vpop.f32.mrf.mxu0
    %v2576 = vadd.f32 0.0, %v2575
    %v2577 = vpop.f32.mrf.mxu0
    %2578 = vdwg.mxu0
    %v2579 = vadd.f32 %v2386, %v2563
    %v2580 = vadd.f32 %v2387, %v2576
    %v2581 = vld [vmem:[#allocation8] sm:$0x3]
    %v2583 = vperm.slane %v2581, 0
    %v2584 = vperm.slane %v2581, 1
    %v2587 = vadd.f32 %v2579, %v2583
    %v2588 = vadd.f32 %v2580, %v2584
    %v2591 = vrot.slane %v2588, 6
    %v2592 = vsel %vm980, %v2587, %v2591
    %v2593 = vsel %vm987, %v2587, %v2591
    %v2594 = vrot.slane %v2593, 2
    %v2597 = vrot.slane %v2594, 4
    %vm2598 = vcmask 1047556
    %v2599 = vsel %vm2598, %v2597, %v2592
    %v2601 = vunpack.c.l.s4 1934713408
    %v2602 = vunpack.c.0.s8 %v2601
    %v2603 = vperm.slane %v2599, %v2602
    %v2604 = vrot.slane %v2603, 4
    %v2605 = vsel %vm2598, 0.0, %v2604
    %2608 = vst [vmem:[#allocation1] ss:$4 sm:$0xff] %v2603
    %s2609 = scalar_lea.vmem [#allocation1], 1
    %2610 = vst [vmem:[%s2609] ss:$4 sm:$0xff] %v2605
    %v2611 = vld.sshfl [vmem:[#allocation1] sm:$0xff pattern:$0x73625140]
    %v2612 = vld.sshfl [vmem:[#allocation1 + $0x8] sm:$0xff pattern:$0x73625140]
    %v2615 = vpack.c.bf16 %v2611, %v2611
    %v2616 = vpack.c.bf16 %v2612, %v2612
    %v2617 = vld [vmem:[#allocation9] sm:$0xff]
    %v2618 = vld [vmem:[#allocation9 + $0x8] sm:$0xff]
    %v2619 = vld [vmem:[#allocation9 + $0x10] sm:$0xff]
    %v2620 = vld [vmem:[#allocation9 + $0x18] sm:$0xff]
    %v2621 = vld [vmem:[#allocation9 + $0x20] sm:$0xff]
    %v2622 = vld [vmem:[#allocation9 + $0x28] sm:$0xff]
    %v2623 = vld [vmem:[#allocation9 + $0x30] sm:$0xff]
    %v2624 = vld [vmem:[#allocation9 + $0x38] sm:$0xff]
    %v2625 = vld [vmem:[#allocation9 + $0x40] sm:$0xff]
    %v2626 = vld [vmem:[#allocation9 + $0x48] sm:$0xff]
    %v2627 = vld [vmem:[#allocation9 + $0x50] sm:$0xff]
    %v2628 = vld [vmem:[#allocation9 + $0x58] sm:$0xff]
    %v2629 = vld [vmem:[#allocation9 + $0x60] sm:$0xff]
    %v2630 = vld [vmem:[#allocation9 + $0x68] sm:$0xff]
    %v2631 = vld [vmem:[#allocation9 + $0x70] sm:$0xff]
    %v2632 = vld [vmem:[#allocation9 + $0x78] sm:$0xff]
    %v2633 = vld [vmem:[#allocation9 + $0x80] sm:$0xff]
    %v2634 = vld [vmem:[#allocation9 + $0x88] sm:$0xff]
    %v2635 = vld [vmem:[#allocation9 + $0x90] sm:$0xff]
    %v2636 = vld [vmem:[#allocation9 + $0x98] sm:$0xff]
    %v2637 = vld [vmem:[#allocation9 + $0xa0] sm:$0xff]
    %v2638 = vld [vmem:[#allocation9 + $0xa8] sm:$0xff]
    %v2639 = vld [vmem:[#allocation9 + $0xb0] sm:$0xff]
    %v2640 = vld [vmem:[#allocation9 + $0xb8] sm:$0xff]
    %v2641 = vld [vmem:[#allocation9 + $0xc0] sm:$0xff]
    %v2642 = vld [vmem:[#allocation9 + $0xc8] sm:$0xff]
    %v2643 = vld [vmem:[#allocation9 + $0xd0] sm:$0xff]
    %v2644 = vld [vmem:[#allocation9 + $0xd8] sm:$0xff]
    %v2645 = vld [vmem:[#allocation9 + $0xe0] sm:$0xff]
    %v2646 = vld [vmem:[#allocation9 + $0xe8] sm:$0xff]
    %v2647 = vld [vmem:[#allocation9 + $0xf0] sm:$0xff]
    %v2648 = vld [vmem:[#allocation9 + $0xf8] sm:$0xff]
    %v2649 = vld [vmem:[#allocation9 + $0x100] sm:$0xff]
    %v2650 = vld [vmem:[#allocation9 + $0x108] sm:$0xff]
    %v2651 = vld [vmem:[#allocation9 + $0x110] sm:$0xff]
    %v2652 = vld [vmem:[#allocation9 + $0x118] sm:$0xff]
    %v2653 = vld [vmem:[#allocation9 + $0x120] sm:$0xff]
    %v2654 = vld [vmem:[#allocation9 + $0x128] sm:$0xff]
    %v2655 = vld [vmem:[#allocation9 + $0x130] sm:$0xff]
    %v2656 = vld [vmem:[#allocation9 + $0x138] sm:$0xff]
    %v2657 = vld [vmem:[#allocation9 + $0x140] sm:$0xff]
    %v2658 = vld [vmem:[#allocation9 + $0x148] sm:$0xff]
    %v2659 = vld [vmem:[#allocation9 + $0x150] sm:$0xff]
    %v2660 = vld [vmem:[#allocation9 + $0x158] sm:$0xff]
    %v2661 = vld [vmem:[#allocation9 + $0x160] sm:$0xff]
    %v2662 = vld [vmem:[#allocation9 + $0x168] sm:$0xff]
    %v2663 = vld [vmem:[#allocation9 + $0x170] sm:$0xff]
    %v2664 = vld [vmem:[#allocation9 + $0x178] sm:$0xff]
    %v2665 = vld [vmem:[#allocation9 + $0x180] sm:$0xff]
    %v2666 = vld [vmem:[#allocation9 + $0x188] sm:$0xff]
    %v2667 = vld [vmem:[#allocation9 + $0x190] sm:$0xff]
    %v2668 = vld [vmem:[#allocation9 + $0x198] sm:$0xff]
    %v2669 = vld [vmem:[#allocation9 + $0x1a0] sm:$0xff]
    %v2670 = vld [vmem:[#allocation9 + $0x1a8] sm:$0xff]
    %v2671 = vld [vmem:[#allocation9 + $0x1b0] sm:$0xff]
    %v2672 = vld [vmem:[#allocation9 + $0x1b8] sm:$0xff]
    %v2673 = vld [vmem:[#allocation9 + $0x1c0] sm:$0xff]
    %v2674 = vld [vmem:[#allocation9 + $0x1c8] sm:$0xff]
    %v2675 = vld [vmem:[#allocation9 + $0x1d0] sm:$0xff]
    %v2676 = vld [vmem:[#allocation9 + $0x1d8] sm:$0xff]
    %v2677 = vld [vmem:[#allocation9 + $0x1e0] sm:$0xff]
    %v2678 = vld [vmem:[#allocation9 + $0x1e8] sm:$0xff]
    %v2679 = vld [vmem:[#allocation9 + $0x1f0] sm:$0xff]
    %v2680 = vld [vmem:[#allocation9 + $0x1f8] sm:$0xff]
    %v2681 = vld [vmem:[#allocation9 + $0x200] sm:$0xff]
    %v2682 = vld [vmem:[#allocation9 + $0x208] sm:$0xff]
    %v2683 = vld [vmem:[#allocation9 + $0x210] sm:$0xff]
    %v2684 = vld [vmem:[#allocation9 + $0x218] sm:$0xff]
    %v2685 = vld [vmem:[#allocation9 + $0x220] sm:$0xff]
    %v2686 = vld [vmem:[#allocation9 + $0x228] sm:$0xff]
    %v2687 = vld [vmem:[#allocation9 + $0x230] sm:$0xff]
    %v2688 = vld [vmem:[#allocation9 + $0x238] sm:$0xff]
    %v2689 = vld [vmem:[#allocation9 + $0x240] sm:$0xff]
    %v2690 = vld [vmem:[#allocation9 + $0x248] sm:$0xff]
    %v2691 = vld [vmem:[#allocation9 + $0x250] sm:$0xff]
    %v2692 = vld [vmem:[#allocation9 + $0x258] sm:$0xff]
    %v2693 = vld [vmem:[#allocation9 + $0x260] sm:$0xff]
    %v2694 = vld [vmem:[#allocation9 + $0x268] sm:$0xff]
    %v2695 = vld [vmem:[#allocation9 + $0x270] sm:$0xff]
    %v2696 = vld [vmem:[#allocation9 + $0x278] sm:$0xff]
    %v2697 = vld [vmem:[#allocation9 + $0x280] sm:$0xff]
    %v2698 = vld [vmem:[#allocation9 + $0x288] sm:$0xff]
    %v2699 = vld [vmem:[#allocation9 + $0x290] sm:$0xff]
    %v2700 = vld [vmem:[#allocation9 + $0x298] sm:$0xff]
    %v2701 = vld [vmem:[#allocation9 + $0x2a0] sm:$0xff]
    %v2702 = vld [vmem:[#allocation9 + $0x2a8] sm:$0xff]
    %v2703 = vld [vmem:[#allocation9 + $0x2b0] sm:$0xff]
    %v2704 = vld [vmem:[#allocation9 + $0x2b8] sm:$0xff]
    %v2705 = vld [vmem:[#allocation9 + $0x2c0] sm:$0xff]
    %v2706 = vld [vmem:[#allocation9 + $0x2c8] sm:$0xff]
    %v2707 = vld [vmem:[#allocation9 + $0x2d0] sm:$0xff]
    %v2708 = vld [vmem:[#allocation9 + $0x2d8] sm:$0xff]
    %v2709 = vld [vmem:[#allocation9 + $0x2e0] sm:$0xff]
    %v2710 = vld [vmem:[#allocation9 + $0x2e8] sm:$0xff]
    %v2711 = vld [vmem:[#allocation9 + $0x2f0] sm:$0xff]
    %v2712 = vld [vmem:[#allocation9 + $0x2f8] sm:$0xff]
    %v2713 = vld [vmem:[#allocation9 + $0x300] sm:$0xff]
    %v2714 = vld [vmem:[#allocation9 + $0x308] sm:$0xff]
    %v2715 = vld [vmem:[#allocation9 + $0x310] sm:$0xff]
    %v2716 = vld [vmem:[#allocation9 + $0x318] sm:$0xff]
    %v2717 = vld [vmem:[#allocation9 + $0x320] sm:$0xff]
    %v2718 = vld [vmem:[#allocation9 + $0x328] sm:$0xff]
    %v2719 = vld [vmem:[#allocation9 + $0x330] sm:$0xff]
    %v2720 = vld [vmem:[#allocation9 + $0x338] sm:$0xff]
    %v2721 = vld [vmem:[#allocation9 + $0x340] sm:$0xff]
    %v2722 = vld [vmem:[#allocation9 + $0x348] sm:$0xff]
    %v2723 = vld [vmem:[#allocation9 + $0x350] sm:$0xff]
    %v2724 = vld [vmem:[#allocation9 + $0x358] sm:$0xff]
    %v2725 = vld [vmem:[#allocation9 + $0x360] sm:$0xff]
    %v2726 = vld [vmem:[#allocation9 + $0x368] sm:$0xff]
    %v2727 = vld [vmem:[#allocation9 + $0x370] sm:$0xff]
    %v2728 = vld [vmem:[#allocation9 + $0x378] sm:$0xff]
    %v2729 = vld [vmem:[#allocation9 + $0x380] sm:$0xff]
    %v2730 = vld [vmem:[#allocation9 + $0x388] sm:$0xff]
    %v2731 = vld [vmem:[#allocation9 + $0x390] sm:$0xff]
    %v2732 = vld [vmem:[#allocation9 + $0x398] sm:$0xff]
    %v2733 = vld [vmem:[#allocation9 + $0x3a0] sm:$0xff]
    %v2734 = vld [vmem:[#allocation9 + $0x3a8] sm:$0xff]
    %v2735 = vld [vmem:[#allocation9 + $0x3b0] sm:$0xff]
    %v2736 = vld [vmem:[#allocation9 + $0x3b8] sm:$0xff]
    %v2737 = vld [vmem:[#allocation9 + $0x3c0] sm:$0xff]
    %v2738 = vld [vmem:[#allocation9 + $0x3c8] sm:$0xff]
    %v2739 = vld [vmem:[#allocation9 + $0x3d0] sm:$0xff]
    %v2740 = vld [vmem:[#allocation9 + $0x3d8] sm:$0xff]
    %v2741 = vld [vmem:[#allocation9 + $0x3e0] sm:$0xff]
    %v2742 = vld [vmem:[#allocation9 + $0x3e8] sm:$0xff]
    %v2743 = vld [vmem:[#allocation9 + $0x3f0] sm:$0xff]
    %v2744 = vld [vmem:[#allocation9 + $0x3f8] sm:$0xff]
    %v2745 = vld [vmem:[#allocation12] sm:$0xff]
    %v2747 = vperm.slane %v2745, 0
    %v2748 = vperm.slane %v2745, 1
    %v2749 = vperm.slane %v2745, 2
    %v2750 = vperm.slane %v2745, 3
    %v2751 = vperm.slane %v2745, 4
    %v2752 = vperm.slane %v2745, 5
    %v2753 = vperm.slane %v2745, 6
    %v2754 = vperm.slane %v2745, 7
    %v2891 = vunpack.c.l.b16 %v2617
    %v2892 = vunpack.c.h.b16 %v2617
    %v2893 = vunpack.c.l.b16 %v2618
    %v2894 = vunpack.c.h.b16 %v2618
    %v2895 = vunpack.c.l.b16 %v2619
    %v2896 = vunpack.c.h.b16 %v2619
    %v2897 = vunpack.c.l.b16 %v2620
    %v2898 = vunpack.c.h.b16 %v2620
    %v2899 = vunpack.c.l.b16 %v2621
    %v2900 = vunpack.c.h.b16 %v2621
    %v2901 = vunpack.c.l.b16 %v2622
    %v2902 = vunpack.c.h.b16 %v2622
    %v2903 = vunpack.c.l.b16 %v2623
    %v2904 = vunpack.c.h.b16 %v2623
    %v2905 = vunpack.c.l.b16 %v2624
    %v2906 = vunpack.c.h.b16 %v2624
    %v2907 = vunpack.c.l.b16 %v2625
    %v2908 = vunpack.c.h.b16 %v2625
    %v2909 = vunpack.c.l.b16 %v2626
    %v2910 = vunpack.c.h.b16 %v2626
    %v2911 = vunpack.c.l.b16 %v2627
    %v2912 = vunpack.c.h.b16 %v2627
    %v2913 = vunpack.c.l.b16 %v2628
    %v2914 = vunpack.c.h.b16 %v2628
    %v2915 = vunpack.c.l.b16 %v2629
    %v2916 = vunpack.c.h.b16 %v2629
    %v2917 = vunpack.c.l.b16 %v2630
    %v2918 = vunpack.c.h.b16 %v2630
    %v2919 = vunpack.c.l.b16 %v2631
    %v2920 = vunpack.c.h.b16 %v2631
    %v2921 = vunpack.c.l.b16 %v2632
    %v2922 = vunpack.c.h.b16 %v2632
    %v2923 = vunpack.c.l.b16 %v2633
    %v2924 = vunpack.c.h.b16 %v2633
    %v2925 = vunpack.c.l.b16 %v2634
    %v2926 = vunpack.c.h.b16 %v2634
    %v2927 = vunpack.c.l.b16 %v2635
    %v2928 = vunpack.c.h.b16 %v2635
    %v2929 = vunpack.c.l.b16 %v2636
    %v2930 = vunpack.c.h.b16 %v2636
    %v2931 = vunpack.c.l.b16 %v2637
    %v2932 = vunpack.c.h.b16 %v2637
    %v2933 = vunpack.c.l.b16 %v2638
    %v2934 = vunpack.c.h.b16 %v2638
    %v2935 = vunpack.c.l.b16 %v2639
    %v2936 = vunpack.c.h.b16 %v2639
    %v2937 = vunpack.c.l.b16 %v2640
    %v2938 = vunpack.c.h.b16 %v2640
    %v2939 = vunpack.c.l.b16 %v2641
    %v2940 = vunpack.c.h.b16 %v2641
    %v2941 = vunpack.c.l.b16 %v2642
    %v2942 = vunpack.c.h.b16 %v2642
    %v2943 = vunpack.c.l.b16 %v2643
    %v2944 = vunpack.c.h.b16 %v2643
    %v2945 = vunpack.c.l.b16 %v2644
    %v2946 = vunpack.c.h.b16 %v2644
    %v2947 = vunpack.c.l.b16 %v2645
    %v2948 = vunpack.c.h.b16 %v2645
    %v2949 = vunpack.c.l.b16 %v2646
    %v2950 = vunpack.c.h.b16 %v2646
    %v2951 = vunpack.c.l.b16 %v2647
    %v2952 = vunpack.c.h.b16 %v2647
    %v2953 = vunpack.c.l.b16 %v2648
    %v2954 = vunpack.c.h.b16 %v2648
    %v2955 = vunpack.c.l.b16 %v2649
    %v2956 = vunpack.c.h.b16 %v2649
    %v2957 = vunpack.c.l.b16 %v2650
    %v2958 = vunpack.c.h.b16 %v2650
    %v2959 = vunpack.c.l.b16 %v2651
    %v2960 = vunpack.c.h.b16 %v2651
    %v2961 = vunpack.c.l.b16 %v2652
    %v2962 = vunpack.c.h.b16 %v2652
    %v2963 = vunpack.c.l.b16 %v2653
    %v2964 = vunpack.c.h.b16 %v2653
    %v2965 = vunpack.c.l.b16 %v2654
    %v2966 = vunpack.c.h.b16 %v2654
    %v2967 = vunpack.c.l.b16 %v2655
    %v2968 = vunpack.c.h.b16 %v2655
    %v2969 = vunpack.c.l.b16 %v2656
    %v2970 = vunpack.c.h.b16 %v2656
    %v2971 = vunpack.c.l.b16 %v2657
    %v2972 = vunpack.c.h.b16 %v2657
    %v2973 = vunpack.c.l.b16 %v2658
    %v2974 = vunpack.c.h.b16 %v2658
    %v2975 = vunpack.c.l.b16 %v2659
    %v2976 = vunpack.c.h.b16 %v2659
    %v2977 = vunpack.c.l.b16 %v2660
    %v2978 = vunpack.c.h.b16 %v2660
    %v2979 = vunpack.c.l.b16 %v2661
    %v2980 = vunpack.c.h.b16 %v2661
    %v2981 = vunpack.c.l.b16 %v2662
    %v2982 = vunpack.c.h.b16 %v2662
    %v2983 = vunpack.c.l.b16 %v2663
    %v2984 = vunpack.c.h.b16 %v2663
    %v2985 = vunpack.c.l.b16 %v2664
    %v2986 = vunpack.c.h.b16 %v2664
    %v2987 = vunpack.c.l.b16 %v2665
    %v2988 = vunpack.c.h.b16 %v2665
    %v2989 = vunpack.c.l.b16 %v2666
    %v2990 = vunpack.c.h.b16 %v2666
    %v2991 = vunpack.c.l.b16 %v2667
    %v2992 = vunpack.c.h.b16 %v2667
    %v2993 = vunpack.c.l.b16 %v2668
    %v2994 = vunpack.c.h.b16 %v2668
    %v2995 = vunpack.c.l.b16 %v2669
    %v2996 = vunpack.c.h.b16 %v2669
    %v2997 = vunpack.c.l.b16 %v2670
    %v2998 = vunpack.c.h.b16 %v2670
    %v2999 = vunpack.c.l.b16 %v2671
    %v3000 = vunpack.c.h.b16 %v2671
    %v3001 = vunpack.c.l.b16 %v2672
    %v3002 = vunpack.c.h.b16 %v2672
    %v3003 = vunpack.c.l.b16 %v2673
    %v3004 = vunpack.c.h.b16 %v2673
    %v3005 = vunpack.c.l.b16 %v2674
    %v3006 = vunpack.c.h.b16 %v2674
    %v3007 = vunpack.c.l.b16 %v2675
    %v3008 = vunpack.c.h.b16 %v2675
    %v3009 = vunpack.c.l.b16 %v2676
    %v3010 = vunpack.c.h.b16 %v2676
    %v3011 = vunpack.c.l.b16 %v2677
    %v3012 = vunpack.c.h.b16 %v2677
    %v3013 = vunpack.c.l.b16 %v2678
    %v3014 = vunpack.c.h.b16 %v2678
    %v3015 = vunpack.c.l.b16 %v2679
    %v3016 = vunpack.c.h.b16 %v2679
    %v3017 = vunpack.c.l.b16 %v2680
    %v3018 = vunpack.c.h.b16 %v2680
    %v3019 = vunpack.c.l.b16 %v2681
    %v3020 = vunpack.c.h.b16 %v2681
    %v3021 = vunpack.c.l.b16 %v2682
    %v3022 = vunpack.c.h.b16 %v2682
    %v3023 = vunpack.c.l.b16 %v2683
    %v3024 = vunpack.c.h.b16 %v2683
    %v3025 = vunpack.c.l.b16 %v2684
    %v3026 = vunpack.c.h.b16 %v2684
    %v3027 = vunpack.c.l.b16 %v2685
    %v3028 = vunpack.c.h.b16 %v2685
    %v3029 = vunpack.c.l.b16 %v2686
    %v3030 = vunpack.c.h.b16 %v2686
    %v3031 = vunpack.c.l.b16 %v2687
    %v3032 = vunpack.c.h.b16 %v2687
    %v3033 = vunpack.c.l.b16 %v2688
    %v3034 = vunpack.c.h.b16 %v2688
    %v3035 = vunpack.c.l.b16 %v2689
    %v3036 = vunpack.c.h.b16 %v2689
    %v3037 = vunpack.c.l.b16 %v2690
    %v3038 = vunpack.c.h.b16 %v2690
    %v3039 = vunpack.c.l.b16 %v2691
    %v3040 = vunpack.c.h.b16 %v2691
    %v3041 = vunpack.c.l.b16 %v2692
    %v3042 = vunpack.c.h.b16 %v2692
    %v3043 = vunpack.c.l.b16 %v2693
    %v3044 = vunpack.c.h.b16 %v2693
    %v3045 = vunpack.c.l.b16 %v2694
    %v3046 = vunpack.c.h.b16 %v2694
    %v3047 = vunpack.c.l.b16 %v2695
    %v3048 = vunpack.c.h.b16 %v2695
    %v3049 = vunpack.c.l.b16 %v2696
    %v3050 = vunpack.c.h.b16 %v2696
    %v3051 = vunpack.c.l.b16 %v2697
    %v3052 = vunpack.c.h.b16 %v2697
    %v3053 = vunpack.c.l.b16 %v2698
    %v3054 = vunpack.c.h.b16 %v2698
    %v3055 = vunpack.c.l.b16 %v2699
    %v3056 = vunpack.c.h.b16 %v2699
    %v3057 = vunpack.c.l.b16 %v2700
    %v3058 = vunpack.c.h.b16 %v2700
    %v3059 = vunpack.c.l.b16 %v2701
    %v3060 = vunpack.c.h.b16 %v2701
    %v3061 = vunpack.c.l.b16 %v2702
    %v3062 = vunpack.c.h.b16 %v2702
    %v3063 = vunpack.c.l.b16 %v2703
    %v3064 = vunpack.c.h.b16 %v2703
    %v3065 = vunpack.c.l.b16 %v2704
    %v3066 = vunpack.c.h.b16 %v2704
    %v3067 = vunpack.c.l.b16 %v2705
    %v3068 = vunpack.c.h.b16 %v2705
    %v3069 = vunpack.c.l.b16 %v2706
    %v3070 = vunpack.c.h.b16 %v2706
    %v3071 = vunpack.c.l.b16 %v2707
    %v3072 = vunpack.c.h.b16 %v2707
    %v3073 = vunpack.c.l.b16 %v2708
    %v3074 = vunpack.c.h.b16 %v2708
    %v3075 = vunpack.c.l.b16 %v2709
    %v3076 = vunpack.c.h.b16 %v2709
    %v3077 = vunpack.c.l.b16 %v2710
    %v3078 = vunpack.c.h.b16 %v2710
    %v3079 = vunpack.c.l.b16 %v2711
    %v3080 = vunpack.c.h.b16 %v2711
    %v3081 = vunpack.c.l.b16 %v2712
    %v3082 = vunpack.c.h.b16 %v2712
    %v3083 = vunpack.c.l.b16 %v2713
    %v3084 = vunpack.c.h.b16 %v2713
    %v3085 = vunpack.c.l.b16 %v2714
    %v3086 = vunpack.c.h.b16 %v2714
    %v3087 = vunpack.c.l.b16 %v2715
    %v3088 = vunpack.c.h.b16 %v2715
    %v3089 = vunpack.c.l.b16 %v2716
    %v3090 = vunpack.c.h.b16 %v2716
    %v3091 = vunpack.c.l.b16 %v2717
    %v3092 = vunpack.c.h.b16 %v2717
    %v3093 = vunpack.c.l.b16 %v2718
    %v3094 = vunpack.c.h.b16 %v2718
    %v3095 = vunpack.c.l.b16 %v2719
    %v3096 = vunpack.c.h.b16 %v2719
    %v3097 = vunpack.c.l.b16 %v2720
    %v3098 = vunpack.c.h.b16 %v2720
    %v3099 = vunpack.c.l.b16 %v2721
    %v3100 = vunpack.c.h.b16 %v2721
    %v3101 = vunpack.c.l.b16 %v2722
    %v3102 = vunpack.c.h.b16 %v2722
    %v3103 = vunpack.c.l.b16 %v2723
    %v3104 = vunpack.c.h.b16 %v2723
    %v3105 = vunpack.c.l.b16 %v2724
    %v3106 = vunpack.c.h.b16 %v2724
    %v3107 = vunpack.c.l.b16 %v2725
    %v3108 = vunpack.c.h.b16 %v2725
    %v3109 = vunpack.c.l.b16 %v2726
    %v3110 = vunpack.c.h.b16 %v2726
    %v3111 = vunpack.c.l.b16 %v2727
    %v3112 = vunpack.c.h.b16 %v2727
    %v3113 = vunpack.c.l.b16 %v2728
    %v3114 = vunpack.c.h.b16 %v2728
    %v3115 = vunpack.c.l.b16 %v2729
    %v3116 = vunpack.c.h.b16 %v2729
    %v3117 = vunpack.c.l.b16 %v2730
    %v3118 = vunpack.c.h.b16 %v2730
    %v3119 = vunpack.c.l.b16 %v2731
    %v3120 = vunpack.c.h.b16 %v2731
    %v3121 = vunpack.c.l.b16 %v2732
    %v3122 = vunpack.c.h.b16 %v2732
    %v3123 = vunpack.c.l.b16 %v2733
    %v3124 = vunpack.c.h.b16 %v2733
    %v3125 = vunpack.c.l.b16 %v2734
    %v3126 = vunpack.c.h.b16 %v2734
    %v3127 = vunpack.c.l.b16 %v2735
    %v3128 = vunpack.c.h.b16 %v2735
    %v3129 = vunpack.c.l.b16 %v2736
    %v3130 = vunpack.c.h.b16 %v2736
    %v3131 = vunpack.c.l.b16 %v2737
    %v3132 = vunpack.c.h.b16 %v2737
    %v3133 = vunpack.c.l.b16 %v2738
    %v3134 = vunpack.c.h.b16 %v2738
    %v3135 = vunpack.c.l.b16 %v2739
    %v3136 = vunpack.c.h.b16 %v2739
    %v3137 = vunpack.c.l.b16 %v2740
    %v3138 = vunpack.c.h.b16 %v2740
    %v3139 = vunpack.c.l.b16 %v2741
    %v3140 = vunpack.c.h.b16 %v2741
    %v3141 = vunpack.c.l.b16 %v2742
    %v3142 = vunpack.c.h.b16 %v2742
    %v3143 = vunpack.c.l.b16 %v2743
    %v3144 = vunpack.c.h.b16 %v2743
    %v3145 = vunpack.c.l.b16 %v2744
    %v3146 = vunpack.c.h.b16 %v2744
    %v3147 = vpack.c.b16 %v2899, %v2891
    %v3148 = vpack.c.b16 %v2900, %v2892
    %v3149 = vpack.c.b16 %v2901, %v2893
    %v3150 = vpack.c.b16 %v2902, %v2894
    %v3151 = vpack.c.b16 %v2903, %v2895
    %v3152 = vpack.c.b16 %v2904, %v2896
    %v3153 = vpack.c.b16 %v2905, %v2897
    %v3154 = vpack.c.b16 %v2906, %v2898
    %v3155 = vpack.c.b16 %v2915, %v2907
    %v3156 = vpack.c.b16 %v2916, %v2908
    %v3157 = vpack.c.b16 %v2917, %v2909
    %v3158 = vpack.c.b16 %v2918, %v2910
    %v3159 = vpack.c.b16 %v2919, %v2911
    %v3160 = vpack.c.b16 %v2920, %v2912
    %v3161 = vpack.c.b16 %v2921, %v2913
    %v3162 = vpack.c.b16 %v2922, %v2914
    %v3163 = vpack.c.b16 %v2931, %v2923
    %v3164 = vpack.c.b16 %v2932, %v2924
    %v3165 = vpack.c.b16 %v2933, %v2925
    %v3166 = vpack.c.b16 %v2934, %v2926
    %v3167 = vpack.c.b16 %v2935, %v2927
    %v3168 = vpack.c.b16 %v2936, %v2928
    %v3169 = vpack.c.b16 %v2937, %v2929
    %v3170 = vpack.c.b16 %v2938, %v2930
    %v3171 = vpack.c.b16 %v2947, %v2939
    %v3172 = vpack.c.b16 %v2948, %v2940
    %v3173 = vpack.c.b16 %v2949, %v2941
    %v3174 = vpack.c.b16 %v2950, %v2942
    %v3175 = vpack.c.b16 %v2951, %v2943
    %v3176 = vpack.c.b16 %v2952, %v2944
    %v3177 = vpack.c.b16 %v2953, %v2945
    %v3178 = vpack.c.b16 %v2954, %v2946
    %v3179 = vpack.c.b16 %v2963, %v2955
    %v3180 = vpack.c.b16 %v2964, %v2956
    %v3181 = vpack.c.b16 %v2965, %v2957
    %v3182 = vpack.c.b16 %v2966, %v2958
    %v3183 = vpack.c.b16 %v2967, %v2959
    %v3184 = vpack.c.b16 %v2968, %v2960
    %v3185 = vpack.c.b16 %v2969, %v2961
    %v3186 = vpack.c.b16 %v2970, %v2962
    %v3187 = vpack.c.b16 %v2979, %v2971
    %v3188 = vpack.c.b16 %v2980, %v2972
    %v3189 = vpack.c.b16 %v2981, %v2973
    %v3190 = vpack.c.b16 %v2982, %v2974
    %v3191 = vpack.c.b16 %v2983, %v2975
    %v3192 = vpack.c.b16 %v2984, %v2976
    %v3193 = vpack.c.b16 %v2985, %v2977
    %v3194 = vpack.c.b16 %v2986, %v2978
    %v3195 = vpack.c.b16 %v2995, %v2987
    %v3196 = vpack.c.b16 %v2996, %v2988
    %v3197 = vpack.c.b16 %v2997, %v2989
    %v3198 = vpack.c.b16 %v2998, %v2990
    %v3199 = vpack.c.b16 %v2999, %v2991
    %v3200 = vpack.c.b16 %v3000, %v2992
    %v3201 = vpack.c.b16 %v3001, %v2993
    %v3202 = vpack.c.b16 %v3002, %v2994
    %v3203 = vpack.c.b16 %v3011, %v3003
    %v3204 = vpack.c.b16 %v3012, %v3004
    %v3205 = vpack.c.b16 %v3013, %v3005
    %v3206 = vpack.c.b16 %v3014, %v3006
    %v3207 = vpack.c.b16 %v3015, %v3007
    %v3208 = vpack.c.b16 %v3016, %v3008
    %v3209 = vpack.c.b16 %v3017, %v3009
    %v3210 = vpack.c.b16 %v3018, %v3010
    %v3211 = vpack.c.b16 %v3027, %v3019
    %v3212 = vpack.c.b16 %v3028, %v3020
    %v3213 = vpack.c.b16 %v3029, %v3021
    %v3214 = vpack.c.b16 %v3030, %v3022
    %v3215 = vpack.c.b16 %v3031, %v3023
    %v3216 = vpack.c.b16 %v3032, %v3024
    %v3217 = vpack.c.b16 %v3033, %v3025
    %v3218 = vpack.c.b16 %v3034, %v3026
    %v3219 = vpack.c.b16 %v3043, %v3035
    %v3220 = vpack.c.b16 %v3044, %v3036
    %v3221 = vpack.c.b16 %v3045, %v3037
    %v3222 = vpack.c.b16 %v3046, %v3038
    %v3223 = vpack.c.b16 %v3047, %v3039
    %v3224 = vpack.c.b16 %v3048, %v3040
    %v3225 = vpack.c.b16 %v3049, %v3041
    %v3226 = vpack.c.b16 %v3050, %v3042
    %v3227 = vpack.c.b16 %v3059, %v3051
    %v3228 = vpack.c.b16 %v3060, %v3052
    %v3229 = vpack.c.b16 %v3061, %v3053
    %v3230 = vpack.c.b16 %v3062, %v3054
    %v3231 = vpack.c.b16 %v3063, %v3055
    %v3232 = vpack.c.b16 %v3064, %v3056
    %v3233 = vpack.c.b16 %v3065, %v3057
    %v3234 = vpack.c.b16 %v3066, %v3058
    %v3235 = vpack.c.b16 %v3075, %v3067
    %v3236 = vpack.c.b16 %v3076, %v3068
    %v3237 = vpack.c.b16 %v3077, %v3069
    %v3238 = vpack.c.b16 %v3078, %v3070
    %v3239 = vpack.c.b16 %v3079, %v3071
    %v3240 = vpack.c.b16 %v3080, %v3072
    %v3241 = vpack.c.b16 %v3081, %v3073
    %v3242 = vpack.c.b16 %v3082, %v3074
    %v3243 = vpack.c.b16 %v3091, %v3083
    %v3244 = vpack.c.b16 %v3092, %v3084
    %v3245 = vpack.c.b16 %v3093, %v3085
    %v3246 = vpack.c.b16 %v3094, %v3086
    %v3247 = vpack.c.b16 %v3095, %v3087
    %v3248 = vpack.c.b16 %v3096, %v3088
    %v3249 = vpack.c.b16 %v3097, %v3089
    %v3250 = vpack.c.b16 %v3098, %v3090
    %v3251 = vpack.c.b16 %v3107, %v3099
    %v3252 = vpack.c.b16 %v3108, %v3100
    %v3253 = vpack.c.b16 %v3109, %v3101
    %v3254 = vpack.c.b16 %v3110, %v3102
    %v3255 = vpack.c.b16 %v3111, %v3103
    %v3256 = vpack.c.b16 %v3112, %v3104
    %v3257 = vpack.c.b16 %v3113, %v3105
    %v3258 = vpack.c.b16 %v3114, %v3106
    %v3259 = vpack.c.b16 %v3123, %v3115
    %v3260 = vpack.c.b16 %v3124, %v3116
    %v3261 = vpack.c.b16 %v3125, %v3117
    %v3262 = vpack.c.b16 %v3126, %v3118
    %v3263 = vpack.c.b16 %v3127, %v3119
    %v3264 = vpack.c.b16 %v3128, %v3120
    %v3265 = vpack.c.b16 %v3129, %v3121
    %v3266 = vpack.c.b16 %v3130, %v3122
    %v3267 = vpack.c.b16 %v3139, %v3131
    %v3268 = vpack.c.b16 %v3140, %v3132
    %v3269 = vpack.c.b16 %v3141, %v3133
    %v3270 = vpack.c.b16 %v3142, %v3134
    %v3271 = vpack.c.b16 %v3143, %v3135
    %v3272 = vpack.c.b16 %v3144, %v3136
    %v3273 = vpack.c.b16 %v3145, %v3137
    %v3274 = vpack.c.b16 %v3146, %v3138
    %3403 = vmatpush.bf16.msra.mxu0 %v3203
    %3404 = vmatpush.bf16.msra.mxu0 %v3195
    %3405 = vmatpush.bf16.msra.mxu0 %v3187
    %3406 = vmatpush.bf16.msra.mxu0 %v3179
    %3407 = vmatpush.bf16.msra.mxu0 %v3171
    %3408 = vmatpush.bf16.msra.mxu0 %v3163
    %3409 = vmatpush.bf16.msra.mxu0 %v3155
    %3410 = vmatpush.bf16.msra.mxu0 %v3147
    %3411 = vmatmul.bf16.gmra.mxu0 %v2615
    %v3412 = vpop.f32.mrf.mxu0
    %v3413 = vadd.f32 %v2747, %v3412
    %v3414 = vpop.f32.mrf.mxu0
    %3415 = vdwg.mxu0
    %3416 = vmatpush.bf16.msra.mxu0 %v3267
    %3417 = vmatpush.bf16.msra.mxu0 %v3259
    %3418 = vmatpush.bf16.msra.mxu0 %v3251
    %3419 = vmatpush.bf16.msra.mxu0 %v3243
    %3420 = vmatpush.bf16.msra.mxu0 %v3235
    %3421 = vmatpush.bf16.msra.mxu0 %v3227
    %3422 = vmatpush.bf16.msra.mxu0 %v3219
    %3423 = vmatpush.bf16.msra.mxu0 %v3211
    %3424 = vmatmul.bf16.gmra.mxu0 %v2616
    %v3425 = vpop.f32.mrf.mxu0
    %v3426 = vadd.f32 %v3413, %v3425
    %v3427 = vpop.f32.mrf.mxu0
    %3428 = vdwg.mxu0
    %3429 = vmatpush.bf16.msra.mxu0 %v3204
    %3430 = vmatpush.bf16.msra.mxu0 %v3196
    %3431 = vmatpush.bf16.msra.mxu0 %v3188
    %3432 = vmatpush.bf16.msra.mxu0 %v3180
    %3433 = vmatpush.bf16.msra.mxu0 %v3172
    %3434 = vmatpush.bf16.msra.mxu0 %v3164
    %3435 = vmatpush.bf16.msra.mxu0 %v3156
    %3436 = vmatpush.bf16.msra.mxu0 %v3148
    %3437 = vmatmul.bf16.gmra.mxu0 %v2615
    %v3438 = vpop.f32.mrf.mxu0
    %v3439 = vadd.f32 %v2748, %v3438
    %v3440 = vpop.f32.mrf.mxu0
    %3441 = vdwg.mxu0
    %3442 = vmatpush.bf16.msra.mxu0 %v3268
    %3443 = vmatpush.bf16.msra.mxu0 %v3260
    %3444 = vmatpush.bf16.msra.mxu0 %v3252
    %3445 = vmatpush.bf16.msra.mxu0 %v3244
    %3446 = vmatpush.bf16.msra.mxu0 %v3236
    %3447 = vmatpush.bf16.msra.mxu0 %v3228
    %3448 = vmatpush.bf16.msra.mxu0 %v3220
    %3449 = vmatpush.bf16.msra.mxu0 %v3212
    %3450 = vmatmul.bf16.gmra.mxu0 %v2616
    %v3451 = vpop.f32.mrf.mxu0
    %v3452 = vadd.f32 %v3439, %v3451
    %v3453 = vpop.f32.mrf.mxu0
    %3454 = vdwg.mxu0
    %3455 = vmatpush.bf16.msra.mxu0 %v3205
    %3456 = vmatpush.bf16.msra.mxu0 %v3197
    %3457 = vmatpush.bf16.msra.mxu0 %v3189
    %3458 = vmatpush.bf16.msra.mxu0 %v3181
    %3459 = vmatpush.bf16.msra.mxu0 %v3173
    %3460 = vmatpush.bf16.msra.mxu0 %v3165
    %3461 = vmatpush.bf16.msra.mxu0 %v3157
    %3462 = vmatpush.bf16.msra.mxu0 %v3149
    %3463 = vmatmul.bf16.gmra.mxu0 %v2615
    %v3464 = vpop.f32.mrf.mxu0
    %v3465 = vadd.f32 %v2749, %v3464
    %v3466 = vpop.f32.mrf.mxu0
    %3467 = vdwg.mxu0
    %3468 = vmatpush.bf16.msra.mxu0 %v3269
    %3469 = vmatpush.bf16.msra.mxu0 %v3261
    %3470 = vmatpush.bf16.msra.mxu0 %v3253
    %3471 = vmatpush.bf16.msra.mxu0 %v3245
    %3472 = vmatpush.bf16.msra.mxu0 %v3237
    %3473 = vmatpush.bf16.msra.mxu0 %v3229
    %3474 = vmatpush.bf16.msra.mxu0 %v3221
    %3475 = vmatpush.bf16.msra.mxu0 %v3213
    %3476 = vmatmul.bf16.gmra.mxu0 %v2616
    %v3477 = vpop.f32.mrf.mxu0
    %v3478 = vadd.f32 %v3465, %v3477
    %v3479 = vpop.f32.mrf.mxu0
    %3480 = vdwg.mxu0
    %3481 = vmatpush.bf16.msra.mxu0 %v3206
    %3482 = vmatpush.bf16.msra.mxu0 %v3198
    %3483 = vmatpush.bf16.msra.mxu0 %v3190
    %3484 = vmatpush.bf16.msra.mxu0 %v3182
    %3485 = vmatpush.bf16.msra.mxu0 %v3174
    %3486 = vmatpush.bf16.msra.mxu0 %v3166
    %3487 = vmatpush.bf16.msra.mxu0 %v3158
    %3488 = vmatpush.bf16.msra.mxu0 %v3150
    %3489 = vmatmul.bf16.gmra.mxu0 %v2615
    %v3490 = vpop.f32.mrf.mxu0
    %v3491 = vadd.f32 %v2750, %v3490
    %v3492 = vpop.f32.mrf.mxu0
    %3493 = vdwg.mxu0
    %3494 = vmatpush.bf16.msra.mxu0 %v3270
    %3495 = vmatpush.bf16.msra.mxu0 %v3262
    %3496 = vmatpush.bf16.msra.mxu0 %v3254
    %3497 = vmatpush.bf16.msra.mxu0 %v3246
    %3498 = vmatpush.bf16.msra.mxu0 %v3238
    %3499 = vmatpush.bf16.msra.mxu0 %v3230
    %3500 = vmatpush.bf16.msra.mxu0 %v3222
    %3501 = vmatpush.bf16.msra.mxu0 %v3214
    %3502 = vmatmul.bf16.gmra.mxu0 %v2616
    %v3503 = vpop.f32.mrf.mxu0
    %v3504 = vadd.f32 %v3491, %v3503
    %v3505 = vpop.f32.mrf.mxu0
    %3506 = vdwg.mxu0
    %3507 = vmatpush.bf16.msra.mxu0 %v3207
    %3508 = vmatpush.bf16.msra.mxu0 %v3199
    %3509 = vmatpush.bf16.msra.mxu0 %v3191
    %3510 = vmatpush.bf16.msra.mxu0 %v3183
    %3511 = vmatpush.bf16.msra.mxu0 %v3175
    %3512 = vmatpush.bf16.msra.mxu0 %v3167
    %3513 = vmatpush.bf16.msra.mxu0 %v3159
    %3514 = vmatpush.bf16.msra.mxu0 %v3151
    %3515 = vmatmul.bf16.gmra.mxu0 %v2615
    %v3516 = vpop.f32.mrf.mxu0
    %v3517 = vadd.f32 %v2751, %v3516
    %v3518 = vpop.f32.mrf.mxu0
    %3519 = vdwg.mxu0
    %3520 = vmatpush.bf16.msra.mxu0 %v3271
    %3521 = vmatpush.bf16.msra.mxu0 %v3263
    %3522 = vmatpush.bf16.msra.mxu0 %v3255
    %3523 = vmatpush.bf16.msra.mxu0 %v3247
    %3524 = vmatpush.bf16.msra.mxu0 %v3239
    %3525 = vmatpush.bf16.msra.mxu0 %v3231
    %3526 = vmatpush.bf16.msra.mxu0 %v3223
    %3527 = vmatpush.bf16.msra.mxu0 %v3215
    %3528 = vmatmul.bf16.gmra.mxu0 %v2616
    %v3529 = vpop.f32.mrf.mxu0
    %v3530 = vadd.f32 %v3517, %v3529
    %v3531 = vpop.f32.mrf.mxu0
    %3532 = vdwg.mxu0
    %3533 = vmatpush.bf16.msra.mxu0 %v3208
    %3534 = vmatpush.bf16.msra.mxu0 %v3200
    %3535 = vmatpush.bf16.msra.mxu0 %v3192
    %3536 = vmatpush.bf16.msra.mxu0 %v3184
    %3537 = vmatpush.bf16.msra.mxu0 %v3176
    %3538 = vmatpush.bf16.msra.mxu0 %v3168
    %3539 = vmatpush.bf16.msra.mxu0 %v3160
    %3540 = vmatpush.bf16.msra.mxu0 %v3152
    %3541 = vmatmul.bf16.gmra.mxu0 %v2615
    %v3542 = vpop.f32.mrf.mxu0
    %v3543 = vadd.f32 %v2752, %v3542
    %v3544 = vpop.f32.mrf.mxu0
    %3545 = vdwg.mxu0
    %3546 = vmatpush.bf16.msra.mxu0 %v3272
    %3547 = vmatpush.bf16.msra.mxu0 %v3264
    %3548 = vmatpush.bf16.msra.mxu0 %v3256
    %3549 = vmatpush.bf16.msra.mxu0 %v3248
    %3550 = vmatpush.bf16.msra.mxu0 %v3240
    %3551 = vmatpush.bf16.msra.mxu0 %v3232
    %3552 = vmatpush.bf16.msra.mxu0 %v3224
    %3553 = vmatpush.bf16.msra.mxu0 %v3216
    %3554 = vmatmul.bf16.gmra.mxu0 %v2616
    %v3555 = vpop.f32.mrf.mxu0
    %v3556 = vadd.f32 %v3543, %v3555
    %v3557 = vpop.f32.mrf.mxu0
    %3558 = vdwg.mxu0
    %3559 = vmatpush.bf16.msra.mxu0 %v3209
    %3560 = vmatpush.bf16.msra.mxu0 %v3201
    %3561 = vmatpush.bf16.msra.mxu0 %v3193
    %3562 = vmatpush.bf16.msra.mxu0 %v3185
    %3563 = vmatpush.bf16.msra.mxu0 %v3177
    %3564 = vmatpush.bf16.msra.mxu0 %v3169
    %3565 = vmatpush.bf16.msra.mxu0 %v3161
    %3566 = vmatpush.bf16.msra.mxu0 %v3153
    %3567 = vmatmul.bf16.gmra.mxu0 %v2615
    %v3568 = vpop.f32.mrf.mxu0
    %v3569 = vadd.f32 %v2753, %v3568
    %v3570 = vpop.f32.mrf.mxu0
    %3571 = vdwg.mxu0
    %3572 = vmatpush.bf16.msra.mxu0 %v3273
    %3573 = vmatpush.bf16.msra.mxu0 %v3265
    %3574 = vmatpush.bf16.msra.mxu0 %v3257
    %3575 = vmatpush.bf16.msra.mxu0 %v3249
    %3576 = vmatpush.bf16.msra.mxu0 %v3241
    %3577 = vmatpush.bf16.msra.mxu0 %v3233
    %3578 = vmatpush.bf16.msra.mxu0 %v3225
    %3579 = vmatpush.bf16.msra.mxu0 %v3217
    %3580 = vmatmul.bf16.gmra.mxu0 %v2616
    %v3581 = vpop.f32.mrf.mxu0
    %v3582 = vadd.f32 %v3569, %v3581
    %v3583 = vpop.f32.mrf.mxu0
    %3584 = vdwg.mxu0
    %3585 = vmatpush.bf16.msra.mxu0 %v3210
    %3586 = vmatpush.bf16.msra.mxu0 %v3202
    %3587 = vmatpush.bf16.msra.mxu0 %v3194
    %3588 = vmatpush.bf16.msra.mxu0 %v3186
    %3589 = vmatpush.bf16.msra.mxu0 %v3178
    %3590 = vmatpush.bf16.msra.mxu0 %v3170
    %3591 = vmatpush.bf16.msra.mxu0 %v3162
    %3592 = vmatpush.bf16.msra.mxu0 %v3154
    %3593 = vmatmul.bf16.gmra.mxu0 %v2615
    %v3594 = vpop.f32.mrf.mxu0
    %v3595 = vadd.f32 %v2754, %v3594
    %v3596 = vpop.f32.mrf.mxu0
    %3597 = vdwg.mxu0
    %3598 = vmatpush.bf16.msra.mxu0 %v3274
    %3599 = vmatpush.bf16.msra.mxu0 %v3266
    %3600 = vmatpush.bf16.msra.mxu0 %v3258
    %3601 = vmatpush.bf16.msra.mxu0 %v3250
    %3602 = vmatpush.bf16.msra.mxu0 %v3242
    %3603 = vmatpush.bf16.msra.mxu0 %v3234
    %3604 = vmatpush.bf16.msra.mxu0 %v3226
    %3605 = vmatpush.bf16.msra.mxu0 %v3218
    %3606 = vmatmul.bf16.gmra.mxu0 %v2616
    %v3607 = vpop.f32.mrf.mxu0
    %v3608 = vadd.f32 %v3595, %v3607
    %v3609 = vpop.f32.mrf.mxu0
    %3610 = vdwg.mxu0
    %v3619 = vrot.slane %v3452, 6
    %v3620 = vrot.slane %v3478, 4
    %v3621 = vrot.slane %v3504, 2
    %v3622 = vrot.slane %v3556, 6
    %v3623 = vrot.slane %v3582, 4
    %v3624 = vrot.slane %v3608, 2
    %v3625 = vsel %vm980, %v3426, %v3619
    %v3626 = vsel %vm982, %v3620, %v3621
    %v3627 = vsel %vm984, %v3625, %v3626
    %v3628 = vsel %vm980, %v3530, %v3622
    %v3629 = vsel %vm982, %v3623, %v3624
    %v3630 = vsel %vm984, %v3628, %v3629
    %v3631 = vsel %vm987, %v3426, %v3619
    %v3632 = vsel %vm989, %v3621, %v3620
    %v3633 = vsel %vm991, %v3631, %v3632
    %v3634 = vrot.slane %v3633, 2
    %v3635 = vsel %vm987, %v3530, %v3622
    %v3636 = vsel %vm989, %v3624, %v3623
    %v3637 = vsel %vm991, %v3635, %v3636
    %v3638 = vrot.slane %v3637, 2
    %3643 = vst [vmem:[#allocation2] sm:$0xff] %v3627
    %3644 = vst [vmem:[#allocation2 + $0x8] sm:$0xff] %v3630
    %3645 = vst [vmem:[#allocation2 + $0x10] sm:$0xff] %v3634
    %3646 = vst [vmem:[#allocation2 + $0x18] sm:$0xff] %v3638
    %v3647 = vld [vmem:[#allocation11] sm:$0xff]
    %v3648 = vld [vmem:[#allocation11 + $0x8] sm:$0xff]
    %v3649 = vld [vmem:[#allocation11 + $0x10] sm:$0xff]
    %v3650 = vld [vmem:[#allocation11 + $0x18] sm:$0xff]
    %v3651 = vld [vmem:[#allocation11 + $0x20] sm:$0xff]
    %v3652 = vld [vmem:[#allocation11 + $0x28] sm:$0xff]
    %v3653 = vld [vmem:[#allocation11 + $0x30] sm:$0xff]
    %v3654 = vld [vmem:[#allocation11 + $0x38] sm:$0xff]
    %v3655 = vld [vmem:[#allocation11 + $0x40] sm:$0xff]
    %v3656 = vld [vmem:[#allocation11 + $0x48] sm:$0xff]
    %v3657 = vld [vmem:[#allocation11 + $0x50] sm:$0xff]
    %v3658 = vld [vmem:[#allocation11 + $0x58] sm:$0xff]
    %v3659 = vld [vmem:[#allocation11 + $0x60] sm:$0xff]
    %v3660 = vld [vmem:[#allocation11 + $0x68] sm:$0xff]
    %v3661 = vld [vmem:[#allocation11 + $0x70] sm:$0xff]
    %v3662 = vld [vmem:[#allocation11 + $0x78] sm:$0xff]
    %v3663 = vld [vmem:[#allocation11 + $0x80] sm:$0xff]
    %v3664 = vld [vmem:[#allocation11 + $0x88] sm:$0xff]
    %v3665 = vld [vmem:[#allocation11 + $0x90] sm:$0xff]
    %v3666 = vld [vmem:[#allocation11 + $0x98] sm:$0xff]
    %v3667 = vld [vmem:[#allocation11 + $0xa0] sm:$0xff]
    %v3668 = vld [vmem:[#allocation11 + $0xa8] sm:$0xff]
    %v3669 = vld [vmem:[#allocation11 + $0xb0] sm:$0xff]
    %v3670 = vld [vmem:[#allocation11 + $0xb8] sm:$0xff]
    %v3671 = vld [vmem:[#allocation11 + $0xc0] sm:$0xff]
    %v3672 = vld [vmem:[#allocation11 + $0xc8] sm:$0xff]
    %v3673 = vld [vmem:[#allocation11 + $0xd0] sm:$0xff]
    %v3674 = vld [vmem:[#allocation11 + $0xd8] sm:$0xff]
    %v3675 = vld [vmem:[#allocation11 + $0xe0] sm:$0xff]
    %v3676 = vld [vmem:[#allocation11 + $0xe8] sm:$0xff]
    %v3677 = vld [vmem:[#allocation11 + $0xf0] sm:$0xff]
    %v3678 = vld [vmem:[#allocation11 + $0xf8] sm:$0xff]
    %v3679 = vld [vmem:[#allocation11 + $0x100] sm:$0xff]
    %v3680 = vld [vmem:[#allocation11 + $0x108] sm:$0xff]
    %v3681 = vld [vmem:[#allocation11 + $0x110] sm:$0xff]
    %v3682 = vld [vmem:[#allocation11 + $0x118] sm:$0xff]
    %v3683 = vld [vmem:[#allocation11 + $0x120] sm:$0xff]
    %v3684 = vld [vmem:[#allocation11 + $0x128] sm:$0xff]
    %v3685 = vld [vmem:[#allocation11 + $0x130] sm:$0xff]
    %v3686 = vld [vmem:[#allocation11 + $0x138] sm:$0xff]
    %v3687 = vld [vmem:[#allocation11 + $0x140] sm:$0xff]
    %v3688 = vld [vmem:[#allocation11 + $0x148] sm:$0xff]
    %v3689 = vld [vmem:[#allocation11 + $0x150] sm:$0xff]
    %v3690 = vld [vmem:[#allocation11 + $0x158] sm:$0xff]
    %v3691 = vld [vmem:[#allocation11 + $0x160] sm:$0xff]
    %v3692 = vld [vmem:[#allocation11 + $0x168] sm:$0xff]
    %v3693 = vld [vmem:[#allocation11 + $0x170] sm:$0xff]
    %v3694 = vld [vmem:[#allocation11 + $0x178] sm:$0xff]
    %v3695 = vld [vmem:[#allocation11 + $0x180] sm:$0xff]
    %v3696 = vld [vmem:[#allocation11 + $0x188] sm:$0xff]
    %v3697 = vld [vmem:[#allocation11 + $0x190] sm:$0xff]
    %v3698 = vld [vmem:[#allocation11 + $0x198] sm:$0xff]
    %v3699 = vld [vmem:[#allocation11 + $0x1a0] sm:$0xff]
    %v3700 = vld [vmem:[#allocation11 + $0x1a8] sm:$0xff]
    %v3701 = vld [vmem:[#allocation11 + $0x1b0] sm:$0xff]
    %v3702 = vld [vmem:[#allocation11 + $0x1b8] sm:$0xff]
    %v3703 = vld [vmem:[#allocation11 + $0x1c0] sm:$0xff]
    %v3704 = vld [vmem:[#allocation11 + $0x1c8] sm:$0xff]
    %v3705 = vld [vmem:[#allocation11 + $0x1d0] sm:$0xff]
    %v3706 = vld [vmem:[#allocation11 + $0x1d8] sm:$0xff]
    %v3707 = vld [vmem:[#allocation11 + $0x1e0] sm:$0xff]
    %v3708 = vld [vmem:[#allocation11 + $0x1e8] sm:$0xff]
    %v3709 = vld [vmem:[#allocation11 + $0x1f0] sm:$0xff]
    %v3710 = vld [vmem:[#allocation11 + $0x1f8] sm:$0xff]
    %v3711 = vld [vmem:[#allocation11 + $0x200] sm:$0xff]
    %v3712 = vld [vmem:[#allocation11 + $0x208] sm:$0xff]
    %v3713 = vld [vmem:[#allocation11 + $0x210] sm:$0xff]
    %v3714 = vld [vmem:[#allocation11 + $0x218] sm:$0xff]
    %v3715 = vld [vmem:[#allocation11 + $0x220] sm:$0xff]
    %v3716 = vld [vmem:[#allocation11 + $0x228] sm:$0xff]
    %v3717 = vld [vmem:[#allocation11 + $0x230] sm:$0xff]
    %v3718 = vld [vmem:[#allocation11 + $0x238] sm:$0xff]
    %v3719 = vld [vmem:[#allocation11 + $0x240] sm:$0xff]
    %v3720 = vld [vmem:[#allocation11 + $0x248] sm:$0xff]
    %v3721 = vld [vmem:[#allocation11 + $0x250] sm:$0xff]
    %v3722 = vld [vmem:[#allocation11 + $0x258] sm:$0xff]
    %v3723 = vld [vmem:[#allocation11 + $0x260] sm:$0xff]
    %v3724 = vld [vmem:[#allocation11 + $0x268] sm:$0xff]
    %v3725 = vld [vmem:[#allocation11 + $0x270] sm:$0xff]
    %v3726 = vld [vmem:[#allocation11 + $0x278] sm:$0xff]
    %v3727 = vld [vmem:[#allocation11 + $0x280] sm:$0xff]
    %v3728 = vld [vmem:[#allocation11 + $0x288] sm:$0xff]
    %v3729 = vld [vmem:[#allocation11 + $0x290] sm:$0xff]
    %v3730 = vld [vmem:[#allocation11 + $0x298] sm:$0xff]
    %v3731 = vld [vmem:[#allocation11 + $0x2a0] sm:$0xff]
    %v3732 = vld [vmem:[#allocation11 + $0x2a8] sm:$0xff]
    %v3733 = vld [vmem:[#allocation11 + $0x2b0] sm:$0xff]
    %v3734 = vld [vmem:[#allocation11 + $0x2b8] sm:$0xff]
    %v3735 = vld [vmem:[#allocation11 + $0x2c0] sm:$0xff]
    %v3736 = vld [vmem:[#allocation11 + $0x2c8] sm:$0xff]
    %v3737 = vld [vmem:[#allocation11 + $0x2d0] sm:$0xff]
    %v3738 = vld [vmem:[#allocation11 + $0x2d8] sm:$0xff]
    %v3739 = vld [vmem:[#allocation11 + $0x2e0] sm:$0xff]
    %v3740 = vld [vmem:[#allocation11 + $0x2e8] sm:$0xff]
    %v3741 = vld [vmem:[#allocation11 + $0x2f0] sm:$0xff]
    %v3742 = vld [vmem:[#allocation11 + $0x2f8] sm:$0xff]
    %v3743 = vld [vmem:[#allocation11 + $0x300] sm:$0xff]
    %v3744 = vld [vmem:[#allocation11 + $0x308] sm:$0xff]
    %v3745 = vld [vmem:[#allocation11 + $0x310] sm:$0xff]
    %v3746 = vld [vmem:[#allocation11 + $0x318] sm:$0xff]
    %v3747 = vld [vmem:[#allocation11 + $0x320] sm:$0xff]
    %v3748 = vld [vmem:[#allocation11 + $0x328] sm:$0xff]
    %v3749 = vld [vmem:[#allocation11 + $0x330] sm:$0xff]
    %v3750 = vld [vmem:[#allocation11 + $0x338] sm:$0xff]
    %v3751 = vld [vmem:[#allocation11 + $0x340] sm:$0xff]
    %v3752 = vld [vmem:[#allocation11 + $0x348] sm:$0xff]
    %v3753 = vld [vmem:[#allocation11 + $0x350] sm:$0xff]
    %v3754 = vld [vmem:[#allocation11 + $0x358] sm:$0xff]
    %v3755 = vld [vmem:[#allocation11 + $0x360] sm:$0xff]
    %v3756 = vld [vmem:[#allocation11 + $0x368] sm:$0xff]
    %v3757 = vld [vmem:[#allocation11 + $0x370] sm:$0xff]
    %v3758 = vld [vmem:[#allocation11 + $0x378] sm:$0xff]
    %v3759 = vld [vmem:[#allocation11 + $0x380] sm:$0xff]
    %v3760 = vld [vmem:[#allocation11 + $0x388] sm:$0xff]
    %v3761 = vld [vmem:[#allocation11 + $0x390] sm:$0xff]
    %v3762 = vld [vmem:[#allocation11 + $0x398] sm:$0xff]
    %v3763 = vld [vmem:[#allocation11 + $0x3a0] sm:$0xff]
    %v3764 = vld [vmem:[#allocation11 + $0x3a8] sm:$0xff]
    %v3765 = vld [vmem:[#allocation11 + $0x3b0] sm:$0xff]
    %v3766 = vld [vmem:[#allocation11 + $0x3b8] sm:$0xff]
    %v3767 = vld [vmem:[#allocation11 + $0x3c0] sm:$0xff]
    %v3768 = vld [vmem:[#allocation11 + $0x3c8] sm:$0xff]
    %v3769 = vld [vmem:[#allocation11 + $0x3d0] sm:$0xff]
    %v3770 = vld [vmem:[#allocation11 + $0x3d8] sm:$0xff]
    %v3771 = vld [vmem:[#allocation11 + $0x3e0] sm:$0xff]
    %v3772 = vld [vmem:[#allocation11 + $0x3e8] sm:$0xff]
    %v3773 = vld [vmem:[#allocation11 + $0x3f0] sm:$0xff]
    %v3774 = vld [vmem:[#allocation11 + $0x3f8] sm:$0xff]
    %v3775 = vld [vmem:[#allocation14] sm:$0xff]
    %v3776 = vld [vmem:[#allocation14 + $0x8] sm:$0xff]
    %v3777 = vld [vmem:[#allocation14 + $0x10] sm:$0xff]
    %v3778 = vld [vmem:[#allocation14 + $0x18] sm:$0xff]
    %v3779 = vld [vmem:[#allocation14 + $0x20] sm:$0xff]
    %v3780 = vld [vmem:[#allocation14 + $0x28] sm:$0xff]
    %v3781 = vld [vmem:[#allocation14 + $0x30] sm:$0xff]
    %v3782 = vld [vmem:[#allocation14 + $0x38] sm:$0xff]
    %v3783 = vld [vmem:[#allocation14 + $0x40] sm:$0xff]
    %v3784 = vld [vmem:[#allocation14 + $0x48] sm:$0xff]
    %v3785 = vld [vmem:[#allocation14 + $0x50] sm:$0xff]
    %v3786 = vld [vmem:[#allocation14 + $0x58] sm:$0xff]
    %v3787 = vld [vmem:[#allocation14 + $0x60] sm:$0xff]
    %v3788 = vld [vmem:[#allocation14 + $0x68] sm:$0xff]
    %v3789 = vld [vmem:[#allocation14 + $0x70] sm:$0xff]
    %v3790 = vld [vmem:[#allocation14 + $0x78] sm:$0xff]
    %v3791 = vld [vmem:[#allocation14 + $0x80] sm:$0xff]
    %v3792 = vld [vmem:[#allocation14 + $0x88] sm:$0xff]
    %v3793 = vld [vmem:[#allocation14 + $0x90] sm:$0xff]
    %v3794 = vld [vmem:[#allocation14 + $0x98] sm:$0xff]
    %v3795 = vld [vmem:[#allocation14 + $0xa0] sm:$0xff]
    %v3796 = vld [vmem:[#allocation14 + $0xa8] sm:$0xff]
    %v3797 = vld [vmem:[#allocation14 + $0xb0] sm:$0xff]
    %v3798 = vld [vmem:[#allocation14 + $0xb8] sm:$0xff]
    %v3799 = vld [vmem:[#allocation14 + $0xc0] sm:$0xff]
    %v3800 = vld [vmem:[#allocation14 + $0xc8] sm:$0xff]
    %v3801 = vld [vmem:[#allocation14 + $0xd0] sm:$0xff]
    %v3802 = vld [vmem:[#allocation14 + $0xd8] sm:$0xff]
    %v3803 = vld [vmem:[#allocation14 + $0xe0] sm:$0xff]
    %v3804 = vld [vmem:[#allocation14 + $0xe8] sm:$0xff]
    %v3805 = vld [vmem:[#allocation14 + $0xf0] sm:$0xff]
    %v3806 = vld [vmem:[#allocation14 + $0xf8] sm:$0xff]
    %v3807 = vld [vmem:[#allocation14 + $0x100] sm:$0xff]
    %v3808 = vld [vmem:[#allocation14 + $0x108] sm:$0xff]
    %v3809 = vld [vmem:[#allocation14 + $0x110] sm:$0xff]
    %v3810 = vld [vmem:[#allocation14 + $0x118] sm:$0xff]
    %v3811 = vld [vmem:[#allocation14 + $0x120] sm:$0xff]
    %v3812 = vld [vmem:[#allocation14 + $0x128] sm:$0xff]
    %v3813 = vld [vmem:[#allocation14 + $0x130] sm:$0xff]
    %v3814 = vld [vmem:[#allocation14 + $0x138] sm:$0xff]
    %v3815 = vld [vmem:[#allocation14 + $0x140] sm:$0xff]
    %v3816 = vld [vmem:[#allocation14 + $0x148] sm:$0xff]
    %v3817 = vld [vmem:[#allocation14 + $0x150] sm:$0xff]
    %v3818 = vld [vmem:[#allocation14 + $0x158] sm:$0xff]
    %v3819 = vld [vmem:[#allocation14 + $0x160] sm:$0xff]
    %v3820 = vld [vmem:[#allocation14 + $0x168] sm:$0xff]
    %v3821 = vld [vmem:[#allocation14 + $0x170] sm:$0xff]
    %v3822 = vld [vmem:[#allocation14 + $0x178] sm:$0xff]
    %v3823 = vld [vmem:[#allocation14 + $0x180] sm:$0xff]
    %v3824 = vld [vmem:[#allocation14 + $0x188] sm:$0xff]
    %v3825 = vld [vmem:[#allocation14 + $0x190] sm:$0xff]
    %v3826 = vld [vmem:[#allocation14 + $0x198] sm:$0xff]
    %v3827 = vld [vmem:[#allocation14 + $0x1a0] sm:$0xff]
    %v3828 = vld [vmem:[#allocation14 + $0x1a8] sm:$0xff]
    %v3829 = vld [vmem:[#allocation14 + $0x1b0] sm:$0xff]
    %v3830 = vld [vmem:[#allocation14 + $0x1b8] sm:$0xff]
    %v3831 = vld [vmem:[#allocation14 + $0x1c0] sm:$0xff]
    %v3832 = vld [vmem:[#allocation14 + $0x1c8] sm:$0xff]
    %v3833 = vld [vmem:[#allocation14 + $0x1d0] sm:$0xff]
    %v3834 = vld [vmem:[#allocation14 + $0x1d8] sm:$0xff]
    %v3835 = vld [vmem:[#allocation14 + $0x1e0] sm:$0xff]
    %v3836 = vld [vmem:[#allocation14 + $0x1e8] sm:$0xff]
    %v3837 = vld [vmem:[#allocation14 + $0x1f0] sm:$0xff]
    %v3838 = vld [vmem:[#allocation14 + $0x1f8] sm:$0xff]
    %v3839 = vld [vmem:[#allocation14 + $0x200] sm:$0xff]
    %v3840 = vld [vmem:[#allocation14 + $0x208] sm:$0xff]
    %v3841 = vld [vmem:[#allocation14 + $0x210] sm:$0xff]
    %v3842 = vld [vmem:[#allocation14 + $0x218] sm:$0xff]
    %v3843 = vld [vmem:[#allocation14 + $0x220] sm:$0xff]
    %v3844 = vld [vmem:[#allocation14 + $0x228] sm:$0xff]
    %v3845 = vld [vmem:[#allocation14 + $0x230] sm:$0xff]
    %v3846 = vld [vmem:[#allocation14 + $0x238] sm:$0xff]
    %v3847 = vld [vmem:[#allocation14 + $0x240] sm:$0xff]
    %v3848 = vld [vmem:[#allocation14 + $0x248] sm:$0xff]
    %v3849 = vld [vmem:[#allocation14 + $0x250] sm:$0xff]
    %v3850 = vld [vmem:[#allocation14 + $0x258] sm:$0xff]
    %v3851 = vld [vmem:[#allocation14 + $0x260] sm:$0xff]
    %v3852 = vld [vmem:[#allocation14 + $0x268] sm:$0xff]
    %v3853 = vld [vmem:[#allocation14 + $0x270] sm:$0xff]
    %v3854 = vld [vmem:[#allocation14 + $0x278] sm:$0xff]
    %v3855 = vld [vmem:[#allocation14 + $0x280] sm:$0xff]
    %v3856 = vld [vmem:[#allocation14 + $0x288] sm:$0xff]
    %v3857 = vld [vmem:[#allocation14 + $0x290] sm:$0xff]
    %v3858 = vld [vmem:[#allocation14 + $0x298] sm:$0xff]
    %v3859 = vld [vmem:[#allocation14 + $0x2a0] sm:$0xff]
    %v3860 = vld [vmem:[#allocation14 + $0x2a8] sm:$0xff]
    %v3861 = vld [vmem:[#allocation14 + $0x2b0] sm:$0xff]
    %v3862 = vld [vmem:[#allocation14 + $0x2b8] sm:$0xff]
    %v3863 = vld [vmem:[#allocation14 + $0x2c0] sm:$0xff]
    %v3864 = vld [vmem:[#allocation14 + $0x2c8] sm:$0xff]
    %v3865 = vld [vmem:[#allocation14 + $0x2d0] sm:$0xff]
    %v3866 = vld [vmem:[#allocation14 + $0x2d8] sm:$0xff]
    %v3867 = vld [vmem:[#allocation14 + $0x2e0] sm:$0xff]
    %v3868 = vld [vmem:[#allocation14 + $0x2e8] sm:$0xff]
    %v3869 = vld [vmem:[#allocation14 + $0x2f0] sm:$0xff]
    %v3870 = vld [vmem:[#allocation14 + $0x2f8] sm:$0xff]
    %v3871 = vld [vmem:[#allocation14 + $0x300] sm:$0xff]
    %v3872 = vld [vmem:[#allocation14 + $0x308] sm:$0xff]
    %v3873 = vld [vmem:[#allocation14 + $0x310] sm:$0xff]
    %v3874 = vld [vmem:[#allocation14 + $0x318] sm:$0xff]
    %v3875 = vld [vmem:[#allocation14 + $0x320] sm:$0xff]
    %v3876 = vld [vmem:[#allocation14 + $0x328] sm:$0xff]
    %v3877 = vld [vmem:[#allocation14 + $0x330] sm:$0xff]
    %v3878 = vld [vmem:[#allocation14 + $0x338] sm:$0xff]
    %v3879 = vld [vmem:[#allocation14 + $0x340] sm:$0xff]
    %v3880 = vld [vmem:[#allocation14 + $0x348] sm:$0xff]
    %v3881 = vld [vmem:[#allocation14 + $0x350] sm:$0xff]
    %v3882 = vld [vmem:[#allocation14 + $0x358] sm:$0xff]
    %v3883 = vld [vmem:[#allocation14 + $0x360] sm:$0xff]
    %v3884 = vld [vmem:[#allocation14 + $0x368] sm:$0xff]
    %v3885 = vld [vmem:[#allocation14 + $0x370] sm:$0xff]
    %v3886 = vld [vmem:[#allocation14 + $0x378] sm:$0xff]
    %v3887 = vld [vmem:[#allocation14 + $0x380] sm:$0xff]
    %v3888 = vld [vmem:[#allocation14 + $0x388] sm:$0xff]
    %v3889 = vld [vmem:[#allocation14 + $0x390] sm:$0xff]
    %v3890 = vld [vmem:[#allocation14 + $0x398] sm:$0xff]
    %v3891 = vld [vmem:[#allocation14 + $0x3a0] sm:$0xff]
    %v3892 = vld [vmem:[#allocation14 + $0x3a8] sm:$0xff]
    %v3893 = vld [vmem:[#allocation14 + $0x3b0] sm:$0xff]
    %v3894 = vld [vmem:[#allocation14 + $0x3b8] sm:$0xff]
    %v3895 = vld [vmem:[#allocation14 + $0x3c0] sm:$0xff]
    %v3896 = vld [vmem:[#allocation14 + $0x3c8] sm:$0xff]
    %v3897 = vld [vmem:[#allocation14 + $0x3d0] sm:$0xff]
    %v3898 = vld [vmem:[#allocation14 + $0x3d8] sm:$0xff]
    %v3899 = vld [vmem:[#allocation14 + $0x3e0] sm:$0xff]
    %v3900 = vld [vmem:[#allocation14 + $0x3e8] sm:$0xff]
    %v3901 = vld [vmem:[#allocation14 + $0x3f0] sm:$0xff]
    %v3902 = vld [vmem:[#allocation14 + $0x3f8] sm:$0xff]
    %v3903 = vld [vmem:[%s9] sm:$0xff]
    %v3904 = vld [vmem:[%s9 + $0x8] sm:$0xff]
    %v3905 = vld [vmem:[%s9 + $0x10] sm:$0xff]
    %v3906 = vld [vmem:[%s9 + $0x18] sm:$0xff]
    %v3907 = vld [vmem:[%s9 + $0x20] sm:$0xff]
    %v3908 = vld [vmem:[%s9 + $0x28] sm:$0xff]
    %v3909 = vld [vmem:[%s9 + $0x30] sm:$0xff]
    %v3910 = vld [vmem:[%s9 + $0x38] sm:$0xff]
    %v3911 = vld [vmem:[%s9 + $0x40] sm:$0xff]
    %v3912 = vld [vmem:[%s9 + $0x48] sm:$0xff]
    %v3913 = vld [vmem:[%s9 + $0x50] sm:$0xff]
    %v3914 = vld [vmem:[%s9 + $0x58] sm:$0xff]
    %v3915 = vld [vmem:[%s9 + $0x60] sm:$0xff]
    %v3916 = vld [vmem:[%s9 + $0x68] sm:$0xff]
    %v3917 = vld [vmem:[%s9 + $0x70] sm:$0xff]
    %v3918 = vld [vmem:[%s9 + $0x78] sm:$0xff]
    %v3919 = vld [vmem:[%s9 + $0x80] sm:$0xff]
    %v3920 = vld [vmem:[%s9 + $0x88] sm:$0xff]
    %v3921 = vld [vmem:[%s9 + $0x90] sm:$0xff]
    %v3922 = vld [vmem:[%s9 + $0x98] sm:$0xff]
    %v3923 = vld [vmem:[%s9 + $0xa0] sm:$0xff]
    %v3924 = vld [vmem:[%s9 + $0xa8] sm:$0xff]
    %v3925 = vld [vmem:[%s9 + $0xb0] sm:$0xff]
    %v3926 = vld [vmem:[%s9 + $0xb8] sm:$0xff]
    %v3927 = vld [vmem:[%s9 + $0xc0] sm:$0xff]
    %v3928 = vld [vmem:[%s9 + $0xc8] sm:$0xff]
    %v3929 = vld [vmem:[%s9 + $0xd0] sm:$0xff]
    %v3930 = vld [vmem:[%s9 + $0xd8] sm:$0xff]
    %v3931 = vld [vmem:[%s9 + $0xe0] sm:$0xff]
    %v3932 = vld [vmem:[%s9 + $0xe8] sm:$0xff]
    %v3933 = vld [vmem:[%s9 + $0xf0] sm:$0xff]
    %v3934 = vld [vmem:[%s9 + $0xf8] sm:$0xff]
    %v3935 = vld [vmem:[%s9 + $0x100] sm:$0xff]
    %v3936 = vld [vmem:[%s9 + $0x108] sm:$0xff]
    %v3937 = vld [vmem:[%s9 + $0x110] sm:$0xff]
    %v3938 = vld [vmem:[%s9 + $0x118] sm:$0xff]
    %v3939 = vld [vmem:[%s9 + $0x120] sm:$0xff]
    %v3940 = vld [vmem:[%s9 + $0x128] sm:$0xff]
    %v3941 = vld [vmem:[%s9 + $0x130] sm:$0xff]
    %v3942 = vld [vmem:[%s9 + $0x138] sm:$0xff]
    %v3943 = vld [vmem:[%s9 + $0x140] sm:$0xff]
    %v3944 = vld [vmem:[%s9 + $0x148] sm:$0xff]
    %v3945 = vld [vmem:[%s9 + $0x150] sm:$0xff]
    %v3946 = vld [vmem:[%s9 + $0x158] sm:$0xff]
    %v3947 = vld [vmem:[%s9 + $0x160] sm:$0xff]
    %v3948 = vld [vmem:[%s9 + $0x168] sm:$0xff]
    %v3949 = vld [vmem:[%s9 + $0x170] sm:$0xff]
    %v3950 = vld [vmem:[%s9 + $0x178] sm:$0xff]
    %v3951 = vld [vmem:[%s9 + $0x180] sm:$0xff]
    %v3952 = vld [vmem:[%s9 + $0x188] sm:$0xff]
    %v3953 = vld [vmem:[%s9 + $0x190] sm:$0xff]
    %v3954 = vld [vmem:[%s9 + $0x198] sm:$0xff]
    %v3955 = vld [vmem:[%s9 + $0x1a0] sm:$0xff]
    %v3956 = vld [vmem:[%s9 + $0x1a8] sm:$0xff]
    %v3957 = vld [vmem:[%s9 + $0x1b0] sm:$0xff]
    %v3958 = vld [vmem:[%s9 + $0x1b8] sm:$0xff]
    %v3959 = vld [vmem:[%s9 + $0x1c0] sm:$0xff]
    %v3960 = vld [vmem:[%s9 + $0x1c8] sm:$0xff]
    %v3961 = vld [vmem:[%s9 + $0x1d0] sm:$0xff]
    %v3962 = vld [vmem:[%s9 + $0x1d8] sm:$0xff]
    %v3963 = vld [vmem:[%s9 + $0x1e0] sm:$0xff]
    %v3964 = vld [vmem:[%s9 + $0x1e8] sm:$0xff]
    %v3965 = vld [vmem:[%s9 + $0x1f0] sm:$0xff]
    %v3966 = vld [vmem:[%s9 + $0x1f8] sm:$0xff]
    %v3967 = vld [vmem:[%s9 + $0x200] sm:$0xff]
    %v3968 = vld [vmem:[%s9 + $0x208] sm:$0xff]
    %v3969 = vld [vmem:[%s9 + $0x210] sm:$0xff]
    %v3970 = vld [vmem:[%s9 + $0x218] sm:$0xff]
    %v3971 = vld [vmem:[%s9 + $0x220] sm:$0xff]
    %v3972 = vld [vmem:[%s9 + $0x228] sm:$0xff]
    %v3973 = vld [vmem:[%s9 + $0x230] sm:$0xff]
    %v3974 = vld [vmem:[%s9 + $0x238] sm:$0xff]
    %v3975 = vld [vmem:[%s9 + $0x240] sm:$0xff]
    %v3976 = vld [vmem:[%s9 + $0x248] sm:$0xff]
    %v3977 = vld [vmem:[%s9 + $0x250] sm:$0xff]
    %v3978 = vld [vmem:[%s9 + $0x258] sm:$0xff]
    %v3979 = vld [vmem:[%s9 + $0x260] sm:$0xff]
    %v3980 = vld [vmem:[%s9 + $0x268] sm:$0xff]
    %v3981 = vld [vmem:[%s9 + $0x270] sm:$0xff]
    %v3982 = vld [vmem:[%s9 + $0x278] sm:$0xff]
    %v3983 = vld [vmem:[%s9 + $0x280] sm:$0xff]
    %v3984 = vld [vmem:[%s9 + $0x288] sm:$0xff]
    %v3985 = vld [vmem:[%s9 + $0x290] sm:$0xff]
    %v3986 = vld [vmem:[%s9 + $0x298] sm:$0xff]
    %v3987 = vld [vmem:[%s9 + $0x2a0] sm:$0xff]
    %v3988 = vld [vmem:[%s9 + $0x2a8] sm:$0xff]
    %v3989 = vld [vmem:[%s9 + $0x2b0] sm:$0xff]
    %v3990 = vld [vmem:[%s9 + $0x2b8] sm:$0xff]
    %v3991 = vld [vmem:[%s9 + $0x2c0] sm:$0xff]
    %v3992 = vld [vmem:[%s9 + $0x2c8] sm:$0xff]
    %v3993 = vld [vmem:[%s9 + $0x2d0] sm:$0xff]
    %v3994 = vld [vmem:[%s9 + $0x2d8] sm:$0xff]
    %v3995 = vld [vmem:[%s9 + $0x2e0] sm:$0xff]
    %v3996 = vld [vmem:[%s9 + $0x2e8] sm:$0xff]
    %v3997 = vld [vmem:[%s9 + $0x2f0] sm:$0xff]
    %v3998 = vld [vmem:[%s9 + $0x2f8] sm:$0xff]
    %v3999 = vld [vmem:[%s9 + $0x300] sm:$0xff]
    %v4000 = vld [vmem:[%s9 + $0x308] sm:$0xff]
    %v4001 = vld [vmem:[%s9 + $0x310] sm:$0xff]
    %v4002 = vld [vmem:[%s9 + $0x318] sm:$0xff]
    %v4003 = vld [vmem:[%s9 + $0x320] sm:$0xff]
    %v4004 = vld [vmem:[%s9 + $0x328] sm:$0xff]
    %v4005 = vld [vmem:[%s9 + $0x330] sm:$0xff]
    %v4006 = vld [vmem:[%s9 + $0x338] sm:$0xff]
    %v4007 = vld [vmem:[%s9 + $0x340] sm:$0xff]
    %v4008 = vld [vmem:[%s9 + $0x348] sm:$0xff]
    %v4009 = vld [vmem:[%s9 + $0x350] sm:$0xff]
    %v4010 = vld [vmem:[%s9 + $0x358] sm:$0xff]
    %v4011 = vld [vmem:[%s9 + $0x360] sm:$0xff]
    %v4012 = vld [vmem:[%s9 + $0x368] sm:$0xff]
    %v4013 = vld [vmem:[%s9 + $0x370] sm:$0xff]
    %v4014 = vld [vmem:[%s9 + $0x378] sm:$0xff]
    %v4015 = vld [vmem:[%s9 + $0x380] sm:$0xff]
    %v4016 = vld [vmem:[%s9 + $0x388] sm:$0xff]
    %v4017 = vld [vmem:[%s9 + $0x390] sm:$0xff]
    %v4018 = vld [vmem:[%s9 + $0x398] sm:$0xff]
    %v4019 = vld [vmem:[%s9 + $0x3a0] sm:$0xff]
    %v4020 = vld [vmem:[%s9 + $0x3a8] sm:$0xff]
    %v4021 = vld [vmem:[%s9 + $0x3b0] sm:$0xff]
    %v4022 = vld [vmem:[%s9 + $0x3b8] sm:$0xff]
    %v4023 = vld [vmem:[%s9 + $0x3c0] sm:$0xff]
    %v4024 = vld [vmem:[%s9 + $0x3c8] sm:$0xff]
    %v4025 = vld [vmem:[%s9 + $0x3d0] sm:$0xff]
    %v4026 = vld [vmem:[%s9 + $0x3d8] sm:$0xff]
    %v4027 = vld [vmem:[%s9 + $0x3e0] sm:$0xff]
    %v4028 = vld [vmem:[%s9 + $0x3e8] sm:$0xff]
    %v4029 = vld [vmem:[%s9 + $0x3f0] sm:$0xff]
    %v4030 = vld [vmem:[%s9 + $0x3f8] sm:$0xff]
    %v4031 = vld [vmem:[%s10] sm:$0xff]
    %v4032 = vld [vmem:[#allocation2] sm:$0xff]
    %v4033 = vld [vmem:[#allocation2 + $0x8] sm:$0xff]
    %v4162 = vunpack.c.l.b16 %v3647
    %v4163 = vunpack.c.h.b16 %v3647
    %v4164 = vunpack.c.l.b16 %v3648
    %v4165 = vunpack.c.h.b16 %v3648
    %v4166 = vunpack.c.l.b16 %v3649
    %v4167 = vunpack.c.h.b16 %v3649
    %v4168 = vunpack.c.l.b16 %v3650
    %v4169 = vunpack.c.h.b16 %v3650
    %v4170 = vunpack.c.l.b16 %v3651
    %v4171 = vunpack.c.h.b16 %v3651
    %v4172 = vunpack.c.l.b16 %v3652
    %v4173 = vunpack.c.h.b16 %v3652
    %v4174 = vunpack.c.l.b16 %v3653
    %v4175 = vunpack.c.h.b16 %v3653
    %v4176 = vunpack.c.l.b16 %v3654
    %v4177 = vunpack.c.h.b16 %v3654
    %v4178 = vunpack.c.l.b16 %v3655
    %v4179 = vunpack.c.h.b16 %v3655
    %v4180 = vunpack.c.l.b16 %v3656
    %v4181 = vunpack.c.h.b16 %v3656
    %v4182 = vunpack.c.l.b16 %v3657
    %v4183 = vunpack.c.h.b16 %v3657
    %v4184 = vunpack.c.l.b16 %v3658
    %v4185 = vunpack.c.h.b16 %v3658
    %v4186 = vunpack.c.l.b16 %v3659
    %v4187 = vunpack.c.h.b16 %v3659
    %v4188 = vunpack.c.l.b16 %v3660
    %v4189 = vunpack.c.h.b16 %v3660
    %v4190 = vunpack.c.l.b16 %v3661
    %v4191 = vunpack.c.h.b16 %v3661
    %v4192 = vunpack.c.l.b16 %v3662
    %v4193 = vunpack.c.h.b16 %v3662
    %v4194 = vunpack.c.l.b16 %v3663
    %v4195 = vunpack.c.h.b16 %v3663
    %v4196 = vunpack.c.l.b16 %v3664
    %v4197 = vunpack.c.h.b16 %v3664
    %v4198 = vunpack.c.l.b16 %v3665
    %v4199 = vunpack.c.h.b16 %v3665
    %v4200 = vunpack.c.l.b16 %v3666
    %v4201 = vunpack.c.h.b16 %v3666
    %v4202 = vunpack.c.l.b16 %v3667
    %v4203 = vunpack.c.h.b16 %v3667
    %v4204 = vunpack.c.l.b16 %v3668
    %v4205 = vunpack.c.h.b16 %v3668
    %v4206 = vunpack.c.l.b16 %v3669
    %v4207 = vunpack.c.h.b16 %v3669
    %v4208 = vunpack.c.l.b16 %v3670
    %v4209 = vunpack.c.h.b16 %v3670
    %v4210 = vunpack.c.l.b16 %v3671
    %v4211 = vunpack.c.h.b16 %v3671
    %v4212 = vunpack.c.l.b16 %v3672
    %v4213 = vunpack.c.h.b16 %v3672
    %v4214 = vunpack.c.l.b16 %v3673
    %v4215 = vunpack.c.h.b16 %v3673
    %v4216 = vunpack.c.l.b16 %v3674
    %v4217 = vunpack.c.h.b16 %v3674
    %v4218 = vunpack.c.l.b16 %v3675
    %v4219 = vunpack.c.h.b16 %v3675
    %v4220 = vunpack.c.l.b16 %v3676
    %v4221 = vunpack.c.h.b16 %v3676
    %v4222 = vunpack.c.l.b16 %v3677
    %v4223 = vunpack.c.h.b16 %v3677
    %v4224 = vunpack.c.l.b16 %v3678
    %v4225 = vunpack.c.h.b16 %v3678
    %v4226 = vunpack.c.l.b16 %v3679
    %v4227 = vunpack.c.h.b16 %v3679
    %v4228 = vunpack.c.l.b16 %v3680
    %v4229 = vunpack.c.h.b16 %v3680
    %v4230 = vunpack.c.l.b16 %v3681
    %v4231 = vunpack.c.h.b16 %v3681
    %v4232 = vunpack.c.l.b16 %v3682
    %v4233 = vunpack.c.h.b16 %v3682
    %v4234 = vunpack.c.l.b16 %v3683
    %v4235 = vunpack.c.h.b16 %v3683
    %v4236 = vunpack.c.l.b16 %v3684
    %v4237 = vunpack.c.h.b16 %v3684
    %v4238 = vunpack.c.l.b16 %v3685
    %v4239 = vunpack.c.h.b16 %v3685
    %v4240 = vunpack.c.l.b16 %v3686
    %v4241 = vunpack.c.h.b16 %v3686
    %v4242 = vunpack.c.l.b16 %v3687
    %v4243 = vunpack.c.h.b16 %v3687
    %v4244 = vunpack.c.l.b16 %v3688
    %v4245 = vunpack.c.h.b16 %v3688
    %v4246 = vunpack.c.l.b16 %v3689
    %v4247 = vunpack.c.h.b16 %v3689
    %v4248 = vunpack.c.l.b16 %v3690
    %v4249 = vunpack.c.h.b16 %v3690
    %v4250 = vunpack.c.l.b16 %v3691
    %v4251 = vunpack.c.h.b16 %v3691
    %v4252 = vunpack.c.l.b16 %v3692
    %v4253 = vunpack.c.h.b16 %v3692
    %v4254 = vunpack.c.l.b16 %v3693
    %v4255 = vunpack.c.h.b16 %v3693
    %v4256 = vunpack.c.l.b16 %v3694
    %v4257 = vunpack.c.h.b16 %v3694
    %v4258 = vunpack.c.l.b16 %v3695
    %v4259 = vunpack.c.h.b16 %v3695
    %v4260 = vunpack.c.l.b16 %v3696
    %v4261 = vunpack.c.h.b16 %v3696
    %v4262 = vunpack.c.l.b16 %v3697
    %v4263 = vunpack.c.h.b16 %v3697
    %v4264 = vunpack.c.l.b16 %v3698
    %v4265 = vunpack.c.h.b16 %v3698
    %v4266 = vunpack.c.l.b16 %v3699
    %v4267 = vunpack.c.h.b16 %v3699
    %v4268 = vunpack.c.l.b16 %v3700
    %v4269 = vunpack.c.h.b16 %v3700
    %v4270 = vunpack.c.l.b16 %v3701
    %v4271 = vunpack.c.h.b16 %v3701
    %v4272 = vunpack.c.l.b16 %v3702
    %v4273 = vunpack.c.h.b16 %v3702
    %v4274 = vunpack.c.l.b16 %v3703
    %v4275 = vunpack.c.h.b16 %v3703
    %v4276 = vunpack.c.l.b16 %v3704
    %v4277 = vunpack.c.h.b16 %v3704
    %v4278 = vunpack.c.l.b16 %v3705
    %v4279 = vunpack.c.h.b16 %v3705
    %v4280 = vunpack.c.l.b16 %v3706
    %v4281 = vunpack.c.h.b16 %v3706
    %v4282 = vunpack.c.l.b16 %v3707
    %v4283 = vunpack.c.h.b16 %v3707
    %v4284 = vunpack.c.l.b16 %v3708
    %v4285 = vunpack.c.h.b16 %v3708
    %v4286 = vunpack.c.l.b16 %v3709
    %v4287 = vunpack.c.h.b16 %v3709
    %v4288 = vunpack.c.l.b16 %v3710
    %v4289 = vunpack.c.h.b16 %v3710
    %v4290 = vunpack.c.l.b16 %v3711
    %v4291 = vunpack.c.h.b16 %v3711
    %v4292 = vunpack.c.l.b16 %v3712
    %v4293 = vunpack.c.h.b16 %v3712
    %v4294 = vunpack.c.l.b16 %v3713
    %v4295 = vunpack.c.h.b16 %v3713
    %v4296 = vunpack.c.l.b16 %v3714
    %v4297 = vunpack.c.h.b16 %v3714
    %v4298 = vunpack.c.l.b16 %v3715
    %v4299 = vunpack.c.h.b16 %v3715
    %v4300 = vunpack.c.l.b16 %v3716
    %v4301 = vunpack.c.h.b16 %v3716
    %v4302 = vunpack.c.l.b16 %v3717
    %v4303 = vunpack.c.h.b16 %v3717
    %v4304 = vunpack.c.l.b16 %v3718
    %v4305 = vunpack.c.h.b16 %v3718
    %v4306 = vunpack.c.l.b16 %v3719
    %v4307 = vunpack.c.h.b16 %v3719
    %v4308 = vunpack.c.l.b16 %v3720
    %v4309 = vunpack.c.h.b16 %v3720
    %v4310 = vunpack.c.l.b16 %v3721
    %v4311 = vunpack.c.h.b16 %v3721
    %v4312 = vunpack.c.l.b16 %v3722
    %v4313 = vunpack.c.h.b16 %v3722
    %v4314 = vunpack.c.l.b16 %v3723
    %v4315 = vunpack.c.h.b16 %v3723
    %v4316 = vunpack.c.l.b16 %v3724
    %v4317 = vunpack.c.h.b16 %v3724
    %v4318 = vunpack.c.l.b16 %v3725
    %v4319 = vunpack.c.h.b16 %v3725
    %v4320 = vunpack.c.l.b16 %v3726
    %v4321 = vunpack.c.h.b16 %v3726
    %v4322 = vunpack.c.l.b16 %v3727
    %v4323 = vunpack.c.h.b16 %v3727
    %v4324 = vunpack.c.l.b16 %v3728
    %v4325 = vunpack.c.h.b16 %v3728
    %v4326 = vunpack.c.l.b16 %v3729
    %v4327 = vunpack.c.h.b16 %v3729
    %v4328 = vunpack.c.l.b16 %v3730
    %v4329 = vunpack.c.h.b16 %v3730
    %v4330 = vunpack.c.l.b16 %v3731
    %v4331 = vunpack.c.h.b16 %v3731
    %v4332 = vunpack.c.l.b16 %v3732
    %v4333 = vunpack.c.h.b16 %v3732
    %v4334 = vunpack.c.l.b16 %v3733
    %v4335 = vunpack.c.h.b16 %v3733
    %v4336 = vunpack.c.l.b16 %v3734
    %v4337 = vunpack.c.h.b16 %v3734
    %v4338 = vunpack.c.l.b16 %v3735
    %v4339 = vunpack.c.h.b16 %v3735
    %v4340 = vunpack.c.l.b16 %v3736
    %v4341 = vunpack.c.h.b16 %v3736
    %v4342 = vunpack.c.l.b16 %v3737
    %v4343 = vunpack.c.h.b16 %v3737
    %v4344 = vunpack.c.l.b16 %v3738
    %v4345 = vunpack.c.h.b16 %v3738
    %v4346 = vunpack.c.l.b16 %v3739
    %v4347 = vunpack.c.h.b16 %v3739
    %v4348 = vunpack.c.l.b16 %v3740
    %v4349 = vunpack.c.h.b16 %v3740
    %v4350 = vunpack.c.l.b16 %v3741
    %v4351 = vunpack.c.h.b16 %v3741
    %v4352 = vunpack.c.l.b16 %v3742
    %v4353 = vunpack.c.h.b16 %v3742
    %v4354 = vunpack.c.l.b16 %v3743
    %v4355 = vunpack.c.h.b16 %v3743
    %v4356 = vunpack.c.l.b16 %v3744
    %v4357 = vunpack.c.h.b16 %v3744
    %v4358 = vunpack.c.l.b16 %v3745
    %v4359 = vunpack.c.h.b16 %v3745
    %v4360 = vunpack.c.l.b16 %v3746
    %v4361 = vunpack.c.h.b16 %v3746
    %v4362 = vunpack.c.l.b16 %v3747
    %v4363 = vunpack.c.h.b16 %v3747
    %v4364 = vunpack.c.l.b16 %v3748
    %v4365 = vunpack.c.h.b16 %v3748
    %v4366 = vunpack.c.l.b16 %v3749
    %v4367 = vunpack.c.h.b16 %v3749
    %v4368 = vunpack.c.l.b16 %v3750
    %v4369 = vunpack.c.h.b16 %v3750
    %v4370 = vunpack.c.l.b16 %v3751
    %v4371 = vunpack.c.h.b16 %v3751
    %v4372 = vunpack.c.l.b16 %v3752
    %v4373 = vunpack.c.h.b16 %v3752
    %v4374 = vunpack.c.l.b16 %v3753
    %v4375 = vunpack.c.h.b16 %v3753
    %v4376 = vunpack.c.l.b16 %v3754
    %v4377 = vunpack.c.h.b16 %v3754
    %v4378 = vunpack.c.l.b16 %v3755
    %v4379 = vunpack.c.h.b16 %v3755
    %v4380 = vunpack.c.l.b16 %v3756
    %v4381 = vunpack.c.h.b16 %v3756
    %v4382 = vunpack.c.l.b16 %v3757
    %v4383 = vunpack.c.h.b16 %v3757
    %v4384 = vunpack.c.l.b16 %v3758
    %v4385 = vunpack.c.h.b16 %v3758
    %v4386 = vunpack.c.l.b16 %v3759
    %v4387 = vunpack.c.h.b16 %v3759
    %v4388 = vunpack.c.l.b16 %v3760
    %v4389 = vunpack.c.h.b16 %v3760
    %v4390 = vunpack.c.l.b16 %v3761
    %v4391 = vunpack.c.h.b16 %v3761
    %v4392 = vunpack.c.l.b16 %v3762
    %v4393 = vunpack.c.h.b16 %v3762
    %v4394 = vunpack.c.l.b16 %v3763
    %v4395 = vunpack.c.h.b16 %v3763
    %v4396 = vunpack.c.l.b16 %v3764
    %v4397 = vunpack.c.h.b16 %v3764
    %v4398 = vunpack.c.l.b16 %v3765
    %v4399 = vunpack.c.h.b16 %v3765
    %v4400 = vunpack.c.l.b16 %v3766
    %v4401 = vunpack.c.h.b16 %v3766
    %v4402 = vunpack.c.l.b16 %v3767
    %v4403 = vunpack.c.h.b16 %v3767
    %v4404 = vunpack.c.l.b16 %v3768
    %v4405 = vunpack.c.h.b16 %v3768
    %v4406 = vunpack.c.l.b16 %v3769
    %v4407 = vunpack.c.h.b16 %v3769
    %v4408 = vunpack.c.l.b16 %v3770
    %v4409 = vunpack.c.h.b16 %v3770
    %v4410 = vunpack.c.l.b16 %v3771
    %v4411 = vunpack.c.h.b16 %v3771
    %v4412 = vunpack.c.l.b16 %v3772
    %v4413 = vunpack.c.h.b16 %v3772
    %v4414 = vunpack.c.l.b16 %v3773
    %v4415 = vunpack.c.h.b16 %v3773
    %v4416 = vunpack.c.l.b16 %v3774
    %v4417 = vunpack.c.h.b16 %v3774
    %v4418 = vpack.c.b16 %v4170, %v4162
    %v4419 = vpack.c.b16 %v4171, %v4163
    %v4420 = vpack.c.b16 %v4172, %v4164
    %v4421 = vpack.c.b16 %v4173, %v4165
    %v4422 = vpack.c.b16 %v4174, %v4166
    %v4423 = vpack.c.b16 %v4175, %v4167
    %v4424 = vpack.c.b16 %v4176, %v4168
    %v4425 = vpack.c.b16 %v4177, %v4169
    %v4426 = vpack.c.b16 %v4186, %v4178
    %v4427 = vpack.c.b16 %v4187, %v4179
    %v4428 = vpack.c.b16 %v4188, %v4180
    %v4429 = vpack.c.b16 %v4189, %v4181
    %v4430 = vpack.c.b16 %v4190, %v4182
    %v4431 = vpack.c.b16 %v4191, %v4183
    %v4432 = vpack.c.b16 %v4192, %v4184
    %v4433 = vpack.c.b16 %v4193, %v4185
    %v4434 = vpack.c.b16 %v4202, %v4194
    %v4435 = vpack.c.b16 %v4203, %v4195
    %v4436 = vpack.c.b16 %v4204, %v4196
    %v4437 = vpack.c.b16 %v4205, %v4197
    %v4438 = vpack.c.b16 %v4206, %v4198
    %v4439 = vpack.c.b16 %v4207, %v4199
    %v4440 = vpack.c.b16 %v4208, %v4200
    %v4441 = vpack.c.b16 %v4209, %v4201
    %v4442 = vpack.c.b16 %v4218, %v4210
    %v4443 = vpack.c.b16 %v4219, %v4211
    %v4444 = vpack.c.b16 %v4220, %v4212
    %v4445 = vpack.c.b16 %v4221, %v4213
    %v4446 = vpack.c.b16 %v4222, %v4214
    %v4447 = vpack.c.b16 %v4223, %v4215
    %v4448 = vpack.c.b16 %v4224, %v4216
    %v4449 = vpack.c.b16 %v4225, %v4217
    %v4450 = vpack.c.b16 %v4234, %v4226
    %v4451 = vpack.c.b16 %v4235, %v4227
    %v4452 = vpack.c.b16 %v4236, %v4228
    %v4453 = vpack.c.b16 %v4237, %v4229
    %v4454 = vpack.c.b16 %v4238, %v4230
    %v4455 = vpack.c.b16 %v4239, %v4231
    %v4456 = vpack.c.b16 %v4240, %v4232
    %v4457 = vpack.c.b16 %v4241, %v4233
    %v4458 = vpack.c.b16 %v4250, %v4242
    %v4459 = vpack.c.b16 %v4251, %v4243
    %v4460 = vpack.c.b16 %v4252, %v4244
    %v4461 = vpack.c.b16 %v4253, %v4245
    %v4462 = vpack.c.b16 %v4254, %v4246
    %v4463 = vpack.c.b16 %v4255, %v4247
    %v4464 = vpack.c.b16 %v4256, %v4248
    %v4465 = vpack.c.b16 %v4257, %v4249
    %v4466 = vpack.c.b16 %v4266, %v4258
    %v4467 = vpack.c.b16 %v4267, %v4259
    %v4468 = vpack.c.b16 %v4268, %v4260
    %v4469 = vpack.c.b16 %v4269, %v4261
    %v4470 = vpack.c.b16 %v4270, %v4262
    %v4471 = vpack.c.b16 %v4271, %v4263
    %v4472 = vpack.c.b16 %v4272, %v4264
    %v4473 = vpack.c.b16 %v4273, %v4265
    %v4474 = vpack.c.b16 %v4282, %v4274
    %v4475 = vpack.c.b16 %v4283, %v4275
    %v4476 = vpack.c.b16 %v4284, %v4276
    %v4477 = vpack.c.b16 %v4285, %v4277
    %v4478 = vpack.c.b16 %v4286, %v4278
    %v4479 = vpack.c.b16 %v4287, %v4279
    %v4480 = vpack.c.b16 %v4288, %v4280
    %v4481 = vpack.c.b16 %v4289, %v4281
    %v4482 = vpack.c.b16 %v4298, %v4290
    %v4483 = vpack.c.b16 %v4299, %v4291
    %v4484 = vpack.c.b16 %v4300, %v4292
    %v4485 = vpack.c.b16 %v4301, %v4293
    %v4486 = vpack.c.b16 %v4302, %v4294
    %v4487 = vpack.c.b16 %v4303, %v4295
    %v4488 = vpack.c.b16 %v4304, %v4296
    %v4489 = vpack.c.b16 %v4305, %v4297
    %v4490 = vpack.c.b16 %v4314, %v4306
    %v4491 = vpack.c.b16 %v4315, %v4307
    %v4492 = vpack.c.b16 %v4316, %v4308
    %v4493 = vpack.c.b16 %v4317, %v4309
    %v4494 = vpack.c.b16 %v4318, %v4310
    %v4495 = vpack.c.b16 %v4319, %v4311
    %v4496 = vpack.c.b16 %v4320, %v4312
    %v4497 = vpack.c.b16 %v4321, %v4313
    %v4498 = vpack.c.b16 %v4330, %v4322
    %v4499 = vpack.c.b16 %v4331, %v4323
    %v4500 = vpack.c.b16 %v4332, %v4324
    %v4501 = vpack.c.b16 %v4333, %v4325
    %v4502 = vpack.c.b16 %v4334, %v4326
    %v4503 = vpack.c.b16 %v4335, %v4327
    %v4504 = vpack.c.b16 %v4336, %v4328
    %v4505 = vpack.c.b16 %v4337, %v4329
    %v4506 = vpack.c.b16 %v4346, %v4338
    %v4507 = vpack.c.b16 %v4347, %v4339
    %v4508 = vpack.c.b16 %v4348, %v4340
    %v4509 = vpack.c.b16 %v4349, %v4341
    %v4510 = vpack.c.b16 %v4350, %v4342
    %v4511 = vpack.c.b16 %v4351, %v4343
    %v4512 = vpack.c.b16 %v4352, %v4344
    %v4513 = vpack.c.b16 %v4353, %v4345
    %v4514 = vpack.c.b16 %v4362, %v4354
    %v4515 = vpack.c.b16 %v4363, %v4355
    %v4516 = vpack.c.b16 %v4364, %v4356
    %v4517 = vpack.c.b16 %v4365, %v4357
    %v4518 = vpack.c.b16 %v4366, %v4358
    %v4519 = vpack.c.b16 %v4367, %v4359
    %v4520 = vpack.c.b16 %v4368, %v4360
    %v4521 = vpack.c.b16 %v4369, %v4361
    %v4522 = vpack.c.b16 %v4378, %v4370
    %v4523 = vpack.c.b16 %v4379, %v4371
    %v4524 = vpack.c.b16 %v4380, %v4372
    %v4525 = vpack.c.b16 %v4381, %v4373
    %v4526 = vpack.c.b16 %v4382, %v4374
    %v4527 = vpack.c.b16 %v4383, %v4375
    %v4528 = vpack.c.b16 %v4384, %v4376
    %v4529 = vpack.c.b16 %v4385, %v4377
    %v4530 = vpack.c.b16 %v4394, %v4386
    %v4531 = vpack.c.b16 %v4395, %v4387
    %v4532 = vpack.c.b16 %v4396, %v4388
    %v4533 = vpack.c.b16 %v4397, %v4389
    %v4534 = vpack.c.b16 %v4398, %v4390
    %v4535 = vpack.c.b16 %v4399, %v4391
    %v4536 = vpack.c.b16 %v4400, %v4392
    %v4537 = vpack.c.b16 %v4401, %v4393
    %v4538 = vpack.c.b16 %v4410, %v4402
    %v4539 = vpack.c.b16 %v4411, %v4403
    %v4540 = vpack.c.b16 %v4412, %v4404
    %v4541 = vpack.c.b16 %v4413, %v4405
    %v4542 = vpack.c.b16 %v4414, %v4406
    %v4543 = vpack.c.b16 %v4415, %v4407
    %v4544 = vpack.c.b16 %v4416, %v4408
    %v4545 = vpack.c.b16 %v4417, %v4409
    %4674 = vmatpush.bf16.msra.mxu0 %v4474
    %4675 = vmatpush.bf16.msra.mxu0 %v4466
    %4676 = vmatpush.bf16.msra.mxu0 %v4458
    %4677 = vmatpush.bf16.msra.mxu0 %v4450
    %4678 = vmatpush.bf16.msra.mxu0 %v4442
    %4679 = vmatpush.bf16.msra.mxu0 %v4434
    %4680 = vmatpush.bf16.msra.mxu0 %v4426
    %4681 = vmatpush.bf16.msra.mxu0 %v4418
    %4682 = vmatmul.bf16.gmra.mxu0 0
    %v4683 = vpop.f32.mrf.mxu0
    %v4684 = vadd.f32 0.0, %v4683
    %v4685 = vpop.f32.mrf.mxu0
    %4686 = vdwg.mxu0
    %4687 = vmatpush.bf16.msra.mxu0 %v4538
    %4688 = vmatpush.bf16.msra.mxu0 %v4530
    %4689 = vmatpush.bf16.msra.mxu0 %v4522
    %4690 = vmatpush.bf16.msra.mxu0 %v4514
    %4691 = vmatpush.bf16.msra.mxu0 %v4506
    %4692 = vmatpush.bf16.msra.mxu0 %v4498
    %4693 = vmatpush.bf16.msra.mxu0 %v4490
    %4694 = vmatpush.bf16.msra.mxu0 %v4482
    %4695 = vmatmul.bf16.gmra.mxu0 0
    %v4696 = vpop.f32.mrf.mxu0
    %v4697 = vadd.f32 %v4684, %v4696
    %v4698 = vpop.f32.mrf.mxu0
    %4699 = vdwg.mxu0
    %4700 = vmatpush.bf16.msra.mxu0 %v4475
    %4701 = vmatpush.bf16.msra.mxu0 %v4467
    %4702 = vmatpush.bf16.msra.mxu0 %v4459
    %4703 = vmatpush.bf16.msra.mxu0 %v4451
    %4704 = vmatpush.bf16.msra.mxu0 %v4443
    %4705 = vmatpush.bf16.msra.mxu0 %v4435
    %4706 = vmatpush.bf16.msra.mxu0 %v4427
    %4707 = vmatpush.bf16.msra.mxu0 %v4419
    %4708 = vmatmul.bf16.gmra.mxu0 0
    %v4709 = vpop.f32.mrf.mxu0
    %v4710 = vadd.f32 0.0, %v4709
    %v4711 = vpop.f32.mrf.mxu0
    %4712 = vdwg.mxu0
    %4713 = vmatpush.bf16.msra.mxu0 %v4539
    %4714 = vmatpush.bf16.msra.mxu0 %v4531
    %4715 = vmatpush.bf16.msra.mxu0 %v4523
    %4716 = vmatpush.bf16.msra.mxu0 %v4515
    %4717 = vmatpush.bf16.msra.mxu0 %v4507
    %4718 = vmatpush.bf16.msra.mxu0 %v4499
    %4719 = vmatpush.bf16.msra.mxu0 %v4491
    %4720 = vmatpush.bf16.msra.mxu0 %v4483
    %4721 = vmatmul.bf16.gmra.mxu0 0
    %v4722 = vpop.f32.mrf.mxu0
    %v4723 = vadd.f32 %v4710, %v4722
    %v4724 = vpop.f32.mrf.mxu0
    %4725 = vdwg.mxu0
    %4726 = vmatpush.bf16.msra.mxu0 %v4476
    %4727 = vmatpush.bf16.msra.mxu0 %v4468
    %4728 = vmatpush.bf16.msra.mxu0 %v4460
    %4729 = vmatpush.bf16.msra.mxu0 %v4452
    %4730 = vmatpush.bf16.msra.mxu0 %v4444
    %4731 = vmatpush.bf16.msra.mxu0 %v4436
    %4732 = vmatpush.bf16.msra.mxu0 %v4428
    %4733 = vmatpush.bf16.msra.mxu0 %v4420
    %4734 = vmatmul.bf16.gmra.mxu0 0
    %v4735 = vpop.f32.mrf.mxu0
    %v4736 = vadd.f32 0.0, %v4735
    %v4737 = vpop.f32.mrf.mxu0
    %4738 = vdwg.mxu0
    %4739 = vmatpush.bf16.msra.mxu0 %v4540
    %4740 = vmatpush.bf16.msra.mxu0 %v4532
    %4741 = vmatpush.bf16.msra.mxu0 %v4524
    %4742 = vmatpush.bf16.msra.mxu0 %v4516
    %4743 = vmatpush.bf16.msra.mxu0 %v4508
    %4744 = vmatpush.bf16.msra.mxu0 %v4500
    %4745 = vmatpush.bf16.msra.mxu0 %v4492
    %4746 = vmatpush.bf16.msra.mxu0 %v4484
    %4747 = vmatmul.bf16.gmra.mxu0 0
    %v4748 = vpop.f32.mrf.mxu0
    %v4749 = vadd.f32 %v4736, %v4748
    %v4750 = vpop.f32.mrf.mxu0
    %4751 = vdwg.mxu0
    %4752 = vmatpush.bf16.msra.mxu0 %v4477
    %4753 = vmatpush.bf16.msra.mxu0 %v4469
    %4754 = vmatpush.bf16.msra.mxu0 %v4461
    %4755 = vmatpush.bf16.msra.mxu0 %v4453
    %4756 = vmatpush.bf16.msra.mxu0 %v4445
    %4757 = vmatpush.bf16.msra.mxu0 %v4437
    %4758 = vmatpush.bf16.msra.mxu0 %v4429
    %4759 = vmatpush.bf16.msra.mxu0 %v4421
    %4760 = vmatmul.bf16.gmra.mxu0 0
    %v4761 = vpop.f32.mrf.mxu0
    %v4762 = vadd.f32 0.0, %v4761
    %v4763 = vpop.f32.mrf.mxu0
    %4764 = vdwg.mxu0
    %4765 = vmatpush.bf16.msra.mxu0 %v4541
    %4766 = vmatpush.bf16.msra.mxu0 %v4533
    %4767 = vmatpush.bf16.msra.mxu0 %v4525
    %4768 = vmatpush.bf16.msra.mxu0 %v4517
    %4769 = vmatpush.bf16.msra.mxu0 %v4509
    %4770 = vmatpush.bf16.msra.mxu0 %v4501
    %4771 = vmatpush.bf16.msra.mxu0 %v4493
    %4772 = vmatpush.bf16.msra.mxu0 %v4485
    %4773 = vmatmul.bf16.gmra.mxu0 0
    %v4774 = vpop.f32.mrf.mxu0
    %v4775 = vadd.f32 %v4762, %v4774
    %v4776 = vpop.f32.mrf.mxu0
    %4777 = vdwg.mxu0
    %4778 = vmatpush.bf16.msra.mxu0 %v4478
    %4779 = vmatpush.bf16.msra.mxu0 %v4470
    %4780 = vmatpush.bf16.msra.mxu0 %v4462
    %4781 = vmatpush.bf16.msra.mxu0 %v4454
    %4782 = vmatpush.bf16.msra.mxu0 %v4446
    %4783 = vmatpush.bf16.msra.mxu0 %v4438
    %4784 = vmatpush.bf16.msra.mxu0 %v4430
    %4785 = vmatpush.bf16.msra.mxu0 %v4422
    %4786 = vmatmul.bf16.gmra.mxu0 0
    %v4787 = vpop.f32.mrf.mxu0
    %v4788 = vadd.f32 0.0, %v4787
    %v4789 = vpop.f32.mrf.mxu0
    %4790 = vdwg.mxu0
    %4791 = vmatpush.bf16.msra.mxu0 %v4542
    %4792 = vmatpush.bf16.msra.mxu0 %v4534
    %4793 = vmatpush.bf16.msra.mxu0 %v4526
    %4794 = vmatpush.bf16.msra.mxu0 %v4518
    %4795 = vmatpush.bf16.msra.mxu0 %v4510
    %4796 = vmatpush.bf16.msra.mxu0 %v4502
    %4797 = vmatpush.bf16.msra.mxu0 %v4494
    %4798 = vmatpush.bf16.msra.mxu0 %v4486
    %4799 = vmatmul.bf16.gmra.mxu0 0
    %v4800 = vpop.f32.mrf.mxu0
    %v4801 = vadd.f32 %v4788, %v4800
    %v4802 = vpop.f32.mrf.mxu0
    %4803 = vdwg.mxu0
    %4804 = vmatpush.bf16.msra.mxu0 %v4479
    %4805 = vmatpush.bf16.msra.mxu0 %v4471
    %4806 = vmatpush.bf16.msra.mxu0 %v4463
    %4807 = vmatpush.bf16.msra.mxu0 %v4455
    %4808 = vmatpush.bf16.msra.mxu0 %v4447
    %4809 = vmatpush.bf16.msra.mxu0 %v4439
    %4810 = vmatpush.bf16.msra.mxu0 %v4431
    %4811 = vmatpush.bf16.msra.mxu0 %v4423
    %4812 = vmatmul.bf16.gmra.mxu0 0
    %v4813 = vpop.f32.mrf.mxu0
    %v4814 = vadd.f32 0.0, %v4813
    %v4815 = vpop.f32.mrf.mxu0
    %4816 = vdwg.mxu0
    %4817 = vmatpush.bf16.msra.mxu0 %v4543
    %4818 = vmatpush.bf16.msra.mxu0 %v4535
    %4819 = vmatpush.bf16.msra.mxu0 %v4527
    %4820 = vmatpush.bf16.msra.mxu0 %v4519
    %4821 = vmatpush.bf16.msra.mxu0 %v4511
    %4822 = vmatpush.bf16.msra.mxu0 %v4503
    %4823 = vmatpush.bf16.msra.mxu0 %v4495
    %4824 = vmatpush.bf16.msra.mxu0 %v4487
    %4825 = vmatmul.bf16.gmra.mxu0 0
    %v4826 = vpop.f32.mrf.mxu0
    %v4827 = vadd.f32 %v4814, %v4826
    %v4828 = vpop.f32.mrf.mxu0
    %4829 = vdwg.mxu0
    %4830 = vmatpush.bf16.msra.mxu0 %v4480
    %4831 = vmatpush.bf16.msra.mxu0 %v4472
    %4832 = vmatpush.bf16.msra.mxu0 %v4464
    %4833 = vmatpush.bf16.msra.mxu0 %v4456
    %4834 = vmatpush.bf16.msra.mxu0 %v4448
    %4835 = vmatpush.bf16.msra.mxu0 %v4440
    %4836 = vmatpush.bf16.msra.mxu0 %v4432
    %4837 = vmatpush.bf16.msra.mxu0 %v4424
    %4838 = vmatmul.bf16.gmra.mxu0 0
    %v4839 = vpop.f32.mrf.mxu0
    %v4840 = vadd.f32 0.0, %v4839
    %v4841 = vpop.f32.mrf.mxu0
    %4842 = vdwg.mxu0
    %4843 = vmatpush.bf16.msra.mxu0 %v4544
    %4844 = vmatpush.bf16.msra.mxu0 %v4536
    %4845 = vmatpush.bf16.msra.mxu0 %v4528
    %4846 = vmatpush.bf16.msra.mxu0 %v4520
    %4847 = vmatpush.bf16.msra.mxu0 %v4512
    %4848 = vmatpush.bf16.msra.mxu0 %v4504
    %4849 = vmatpush.bf16.msra.mxu0 %v4496
    %4850 = vmatpush.bf16.msra.mxu0 %v4488
    %4851 = vmatmul.bf16.gmra.mxu0 0
    %v4852 = vpop.f32.mrf.mxu0
    %v4853 = vadd.f32 %v4840, %v4852
    %v4854 = vpop.f32.mrf.mxu0
    %4855 = vdwg.mxu0
    %4856 = vmatpush.bf16.msra.mxu0 %v4481
    %4857 = vmatpush.bf16.msra.mxu0 %v4473
    %4858 = vmatpush.bf16.msra.mxu0 %v4465
    %4859 = vmatpush.bf16.msra.mxu0 %v4457
    %4860 = vmatpush.bf16.msra.mxu0 %v4449
    %4861 = vmatpush.bf16.msra.mxu0 %v4441
    %4862 = vmatpush.bf16.msra.mxu0 %v4433
    %4863 = vmatpush.bf16.msra.mxu0 %v4425
    %4864 = vmatmul.bf16.gmra.mxu0 0
    %v4865 = vpop.f32.mrf.mxu0
    %v4866 = vadd.f32 0.0, %v4865
    %v4867 = vpop.f32.mrf.mxu0
    %4868 = vdwg.mxu0
    %4869 = vmatpush.bf16.msra.mxu0 %v4545
    %4870 = vmatpush.bf16.msra.mxu0 %v4537
    %4871 = vmatpush.bf16.msra.mxu0 %v4529
    %4872 = vmatpush.bf16.msra.mxu0 %v4521
    %4873 = vmatpush.bf16.msra.mxu0 %v4513
    %4874 = vmatpush.bf16.msra.mxu0 %v4505
    %4875 = vmatpush.bf16.msra.mxu0 %v4497
    %4876 = vmatpush.bf16.msra.mxu0 %v4489
    %4877 = vmatmul.bf16.gmra.mxu0 0
    %v4878 = vpop.f32.mrf.mxu0
    %v4879 = vadd.f32 %v4866, %v4878
    %v4880 = vpop.f32.mrf.mxu0
    %4881 = vdwg.mxu0
    %v4890 = vrot.slane %v4723, 6
    %v4891 = vrot.slane %v4749, 4
    %v4892 = vrot.slane %v4775, 2
    %v4893 = vrot.slane %v4827, 6
    %v4894 = vrot.slane %v4853, 4
    %v4895 = vrot.slane %v4879, 2
    %v4896 = vsel %vm980, %v4697, %v4890
    %v4897 = vsel %vm982, %v4891, %v4892
    %v4898 = vsel %vm984, %v4896, %v4897
    %v4899 = vsel %vm980, %v4801, %v4893
    %v4900 = vsel %vm982, %v4894, %v4895
    %v4901 = vsel %vm984, %v4899, %v4900
    %v4904 = vadd.f32 %v4032, %v4898
    %v4905 = vadd.f32 %v4033, %v4901
    %v4906 = vxor.u32 %v4904, 2147483648
    %v4907 = vmul.f32 %v4906, 1.442695
    %v4908 = vpow.pop %v4907
    %v4909 = vadd.f32 %v4908, 1.0
    %v4910 = vrcp.pop %v4909
    %v4911 = vmul.f32 %v4909, %v4910
    %v4912 = vsub.f32 1.0, %v4911
    %v4913 = vmul.f32 %v4910, %v4912
    %v4914 = vadd.f32 %v4910, %v4913
    %vm4915 = vweird.f32 %v4909
    %vm4916 = vweird.f32 %v4910
    %vm4917 = vmor %vm4915, %vm4916
    %v4918 = vsel %vm4917, %v4910, %v4914
    %v4919 = vand.u32 2147483647, %v4909
    %vm4920 = vcmp.eq.f32.partialorder %v4919, 8.507059e+37
    %v4921 = vand.u32 %v4909, 2147483648
    %v4922 = vor.u32 1.1754944e-38, %v4921
    %v4923 = vsel %vm4920, %v4922, %v4918
    %v4924 = vmul.f32 1.0, %v4923
    %v4926 = vrot.slane %v4904, 4
    %v4928 = vxor.u32 %v4926, 2147483648
    %v4929 = vmul.f32 %v4928, 1.442695
    %v4930 = vpow.pop %v4929
    %v4931 = vadd.f32 %v4930, 1.0
    %v4932 = vrcp.pop %v4931
    %v4933 = vmul.f32 %v4931, %v4932
    %v4934 = vsub.f32 1.0, %v4933
    %v4935 = vmul.f32 %v4932, %v4934
    %v4936 = vadd.f32 %v4932, %v4935
    %vm4937 = vweird.f32 %v4931
    %vm4938 = vweird.f32 %v4932
    %vm4939 = vmor %vm4937, %vm4938
    %v4940 = vsel %vm4939, %v4932, %v4936
    %v4941 = vand.u32 2147483647, %v4931
    %vm4942 = vcmp.eq.f32.partialorder %v4941, 8.507059e+37
    %v4943 = vand.u32 %v4931, 2147483648
    %v4944 = vor.u32 1.1754944e-38, %v4943
    %v4945 = vsel %vm4942, %v4944, %v4940
    %v4946 = vmul.f32 1.0, %v4945
    %v4947 = vtanh.pop %v4905
    %v4949 = vrot.slane %v4905, 4
    %v4951 = vxor.u32 %v4949, 2147483648
    %v4952 = vmul.f32 %v4951, 1.442695
    %v4953 = vpow.pop %v4952
    %v4954 = vadd.f32 %v4953, 1.0
    %v4955 = vrcp.pop %v4954
    %v4956 = vmul.f32 %v4954, %v4955
    %v4957 = vsub.f32 1.0, %v4956
    %v4958 = vmul.f32 %v4955, %v4957
    %v4959 = vadd.f32 %v4955, %v4958
    %vm4960 = vweird.f32 %v4954
    %vm4961 = vweird.f32 %v4955
    %vm4962 = vmor %vm4960, %vm4961
    %v4963 = vsel %vm4962, %v4955, %v4959
    %v4964 = vand.u32 2147483647, %v4954
    %vm4965 = vcmp.eq.f32.partialorder %v4964, 8.507059e+37
    %v4966 = vand.u32 %v4954, 2147483648
    %v4967 = vor.u32 1.1754944e-38, %v4966
    %v4968 = vsel %vm4965, %v4967, %v4963
    %v4969 = vmul.f32 1.0, %v4968
    %v4970 = vmul.f32 %v4946, 0.0
    %v4971 = vmul.f32 %v4924, %v4947
    %v4972 = vadd.f32 %v4970, %v4971
    %v4973 = vtanh.pop %v4972
    %v4974 = vmul.f32 %v4969, %v4973
    %4976 = vst [vmem:[#allocation1] ss:$4 sm:$0xff] %v4974
    %v4977 = vld.sshfl [vmem:[#allocation1] sm:$0xff pattern:$0x73625140]
    %v4978 = vld.sshfl [vmem:[#allocation1 + $0x8] sm:$0xff pattern:$0x73625140]
    %v4981 = vpack.c.bf16 %v4977, %v4977
    %v4982 = vpack.c.bf16 %v4978, %v4978
    %v5111 = vunpack.c.l.b16 %v3903
    %v5112 = vunpack.c.h.b16 %v3903
    %v5113 = vunpack.c.l.b16 %v3904
    %v5114 = vunpack.c.h.b16 %v3904
    %v5115 = vunpack.c.l.b16 %v3905
    %v5116 = vunpack.c.h.b16 %v3905
    %v5117 = vunpack.c.l.b16 %v3906
    %v5118 = vunpack.c.h.b16 %v3906
    %v5119 = vunpack.c.l.b16 %v3907
    %v5120 = vunpack.c.h.b16 %v3907
    %v5121 = vunpack.c.l.b16 %v3908
    %v5122 = vunpack.c.h.b16 %v3908
    %v5123 = vunpack.c.l.b16 %v3909
    %v5124 = vunpack.c.h.b16 %v3909
    %v5125 = vunpack.c.l.b16 %v3910
    %v5126 = vunpack.c.h.b16 %v3910
    %v5127 = vunpack.c.l.b16 %v3911
    %v5128 = vunpack.c.h.b16 %v3911
    %v5129 = vunpack.c.l.b16 %v3912
    %v5130 = vunpack.c.h.b16 %v3912
    %v5131 = vunpack.c.l.b16 %v3913
    %v5132 = vunpack.c.h.b16 %v3913
    %v5133 = vunpack.c.l.b16 %v3914
    %v5134 = vunpack.c.h.b16 %v3914
    %v5135 = vunpack.c.l.b16 %v3915
    %v5136 = vunpack.c.h.b16 %v3915
    %v5137 = vunpack.c.l.b16 %v3916
    %v5138 = vunpack.c.h.b16 %v3916
    %v5139 = vunpack.c.l.b16 %v3917
    %v5140 = vunpack.c.h.b16 %v3917
    %v5141 = vunpack.c.l.b16 %v3918
    %v5142 = vunpack.c.h.b16 %v3918
    %v5143 = vunpack.c.l.b16 %v3919
    %v5144 = vunpack.c.h.b16 %v3919
    %v5145 = vunpack.c.l.b16 %v3920
    %v5146 = vunpack.c.h.b16 %v3920
    %v5147 = vunpack.c.l.b16 %v3921
    %v5148 = vunpack.c.h.b16 %v3921
    %v5149 = vunpack.c.l.b16 %v3922
    %v5150 = vunpack.c.h.b16 %v3922
    %v5151 = vunpack.c.l.b16 %v3923
    %v5152 = vunpack.c.h.b16 %v3923
    %v5153 = vunpack.c.l.b16 %v3924
    %v5154 = vunpack.c.h.b16 %v3924
    %v5155 = vunpack.c.l.b16 %v3925
    %v5156 = vunpack.c.h.b16 %v3925
    %v5157 = vunpack.c.l.b16 %v3926
    %v5158 = vunpack.c.h.b16 %v3926
    %v5159 = vunpack.c.l.b16 %v3927
    %v5160 = vunpack.c.h.b16 %v3927
    %v5161 = vunpack.c.l.b16 %v3928
    %v5162 = vunpack.c.h.b16 %v3928
    %v5163 = vunpack.c.l.b16 %v3929
    %v5164 = vunpack.c.h.b16 %v3929
    %v5165 = vunpack.c.l.b16 %v3930
    %v5166 = vunpack.c.h.b16 %v3930
    %v5167 = vunpack.c.l.b16 %v3931
    %v5168 = vunpack.c.h.b16 %v3931
    %v5169 = vunpack.c.l.b16 %v3932
    %v5170 = vunpack.c.h.b16 %v3932
    %v5171 = vunpack.c.l.b16 %v3933
    %v5172 = vunpack.c.h.b16 %v3933
    %v5173 = vunpack.c.l.b16 %v3934
    %v5174 = vunpack.c.h.b16 %v3934
    %v5175 = vunpack.c.l.b16 %v3935
    %v5176 = vunpack.c.h.b16 %v3935
    %v5177 = vunpack.c.l.b16 %v3936
    %v5178 = vunpack.c.h.b16 %v3936
    %v5179 = vunpack.c.l.b16 %v3937
    %v5180 = vunpack.c.h.b16 %v3937
    %v5181 = vunpack.c.l.b16 %v3938
    %v5182 = vunpack.c.h.b16 %v3938
    %v5183 = vunpack.c.l.b16 %v3939
    %v5184 = vunpack.c.h.b16 %v3939
    %v5185 = vunpack.c.l.b16 %v3940
    %v5186 = vunpack.c.h.b16 %v3940
    %v5187 = vunpack.c.l.b16 %v3941
    %v5188 = vunpack.c.h.b16 %v3941
    %v5189 = vunpack.c.l.b16 %v3942
    %v5190 = vunpack.c.h.b16 %v3942
    %v5191 = vunpack.c.l.b16 %v3943
    %v5192 = vunpack.c.h.b16 %v3943
    %v5193 = vunpack.c.l.b16 %v3944
    %v5194 = vunpack.c.h.b16 %v3944
    %v5195 = vunpack.c.l.b16 %v3945
    %v5196 = vunpack.c.h.b16 %v3945
    %v5197 = vunpack.c.l.b16 %v3946
    %v5198 = vunpack.c.h.b16 %v3946
    %v5199 = vunpack.c.l.b16 %v3947
    %v5200 = vunpack.c.h.b16 %v3947
    %v5201 = vunpack.c.l.b16 %v3948
    %v5202 = vunpack.c.h.b16 %v3948
    %v5203 = vunpack.c.l.b16 %v3949
    %v5204 = vunpack.c.h.b16 %v3949
    %v5205 = vunpack.c.l.b16 %v3950
    %v5206 = vunpack.c.h.b16 %v3950
    %v5207 = vunpack.c.l.b16 %v3951
    %v5208 = vunpack.c.h.b16 %v3951
    %v5209 = vunpack.c.l.b16 %v3952
    %v5210 = vunpack.c.h.b16 %v3952
    %v5211 = vunpack.c.l.b16 %v3953
    %v5212 = vunpack.c.h.b16 %v3953
    %v5213 = vunpack.c.l.b16 %v3954
    %v5214 = vunpack.c.h.b16 %v3954
    %v5215 = vunpack.c.l.b16 %v3955
    %v5216 = vunpack.c.h.b16 %v3955
    %v5217 = vunpack.c.l.b16 %v3956
    %v5218 = vunpack.c.h.b16 %v3956
    %v5219 = vunpack.c.l.b16 %v3957
    %v5220 = vunpack.c.h.b16 %v3957
    %v5221 = vunpack.c.l.b16 %v3958
    %v5222 = vunpack.c.h.b16 %v3958
    %v5223 = vunpack.c.l.b16 %v3959
    %v5224 = vunpack.c.h.b16 %v3959
    %v5225 = vunpack.c.l.b16 %v3960
    %v5226 = vunpack.c.h.b16 %v3960
    %v5227 = vunpack.c.l.b16 %v3961
    %v5228 = vunpack.c.h.b16 %v3961
    %v5229 = vunpack.c.l.b16 %v3962
    %v5230 = vunpack.c.h.b16 %v3962
    %v5231 = vunpack.c.l.b16 %v3963
    %v5232 = vunpack.c.h.b16 %v3963
    %v5233 = vunpack.c.l.b16 %v3964
    %v5234 = vunpack.c.h.b16 %v3964
    %v5235 = vunpack.c.l.b16 %v3965
    %v5236 = vunpack.c.h.b16 %v3965
    %v5237 = vunpack.c.l.b16 %v3966
    %v5238 = vunpack.c.h.b16 %v3966
    %v5239 = vunpack.c.l.b16 %v3967
    %v5240 = vunpack.c.h.b16 %v3967
    %v5241 = vunpack.c.l.b16 %v3968
    %v5242 = vunpack.c.h.b16 %v3968
    %v5243 = vunpack.c.l.b16 %v3969
    %v5244 = vunpack.c.h.b16 %v3969
    %v5245 = vunpack.c.l.b16 %v3970
    %v5246 = vunpack.c.h.b16 %v3970
    %v5247 = vunpack.c.l.b16 %v3971
    %v5248 = vunpack.c.h.b16 %v3971
    %v5249 = vunpack.c.l.b16 %v3972
    %v5250 = vunpack.c.h.b16 %v3972
    %v5251 = vunpack.c.l.b16 %v3973
    %v5252 = vunpack.c.h.b16 %v3973
    %v5253 = vunpack.c.l.b16 %v3974
    %v5254 = vunpack.c.h.b16 %v3974
    %v5255 = vunpack.c.l.b16 %v3975
    %v5256 = vunpack.c.h.b16 %v3975
    %v5257 = vunpack.c.l.b16 %v3976
    %v5258 = vunpack.c.h.b16 %v3976
    %v5259 = vunpack.c.l.b16 %v3977
    %v5260 = vunpack.c.h.b16 %v3977
    %v5261 = vunpack.c.l.b16 %v3978
    %v5262 = vunpack.c.h.b16 %v3978
    %v5263 = vunpack.c.l.b16 %v3979
    %v5264 = vunpack.c.h.b16 %v3979
    %v5265 = vunpack.c.l.b16 %v3980
    %v5266 = vunpack.c.h.b16 %v3980
    %v5267 = vunpack.c.l.b16 %v3981
    %v5268 = vunpack.c.h.b16 %v3981
    %v5269 = vunpack.c.l.b16 %v3982
    %v5270 = vunpack.c.h.b16 %v3982
    %v5271 = vunpack.c.l.b16 %v3983
    %v5272 = vunpack.c.h.b16 %v3983
    %v5273 = vunpack.c.l.b16 %v3984
    %v5274 = vunpack.c.h.b16 %v3984
    %v5275 = vunpack.c.l.b16 %v3985
    %v5276 = vunpack.c.h.b16 %v3985
    %v5277 = vunpack.c.l.b16 %v3986
    %v5278 = vunpack.c.h.b16 %v3986
    %v5279 = vunpack.c.l.b16 %v3987
    %v5280 = vunpack.c.h.b16 %v3987
    %v5281 = vunpack.c.l.b16 %v3988
    %v5282 = vunpack.c.h.b16 %v3988
    %v5283 = vunpack.c.l.b16 %v3989
    %v5284 = vunpack.c.h.b16 %v3989
    %v5285 = vunpack.c.l.b16 %v3990
    %v5286 = vunpack.c.h.b16 %v3990
    %v5287 = vunpack.c.l.b16 %v3991
    %v5288 = vunpack.c.h.b16 %v3991
    %v5289 = vunpack.c.l.b16 %v3992
    %v5290 = vunpack.c.h.b16 %v3992
    %v5291 = vunpack.c.l.b16 %v3993
    %v5292 = vunpack.c.h.b16 %v3993
    %v5293 = vunpack.c.l.b16 %v3994
    %v5294 = vunpack.c.h.b16 %v3994
    %v5295 = vunpack.c.l.b16 %v3995
    %v5296 = vunpack.c.h.b16 %v3995
    %v5297 = vunpack.c.l.b16 %v3996
    %v5298 = vunpack.c.h.b16 %v3996
    %v5299 = vunpack.c.l.b16 %v3997
    %v5300 = vunpack.c.h.b16 %v3997
    %v5301 = vunpack.c.l.b16 %v3998
    %v5302 = vunpack.c.h.b16 %v3998
    %v5303 = vunpack.c.l.b16 %v3999
    %v5304 = vunpack.c.h.b16 %v3999
    %v5305 = vunpack.c.l.b16 %v4000
    %v5306 = vunpack.c.h.b16 %v4000
    %v5307 = vunpack.c.l.b16 %v4001
    %v5308 = vunpack.c.h.b16 %v4001
    %v5309 = vunpack.c.l.b16 %v4002
    %v5310 = vunpack.c.h.b16 %v4002
    %v5311 = vunpack.c.l.b16 %v4003
    %v5312 = vunpack.c.h.b16 %v4003
    %v5313 = vunpack.c.l.b16 %v4004
    %v5314 = vunpack.c.h.b16 %v4004
    %v5315 = vunpack.c.l.b16 %v4005
    %v5316 = vunpack.c.h.b16 %v4005
    %v5317 = vunpack.c.l.b16 %v4006
    %v5318 = vunpack.c.h.b16 %v4006
    %v5319 = vunpack.c.l.b16 %v4007
    %v5320 = vunpack.c.h.b16 %v4007
    %v5321 = vunpack.c.l.b16 %v4008
    %v5322 = vunpack.c.h.b16 %v4008
    %v5323 = vunpack.c.l.b16 %v4009
    %v5324 = vunpack.c.h.b16 %v4009
    %v5325 = vunpack.c.l.b16 %v4010
    %v5326 = vunpack.c.h.b16 %v4010
    %v5327 = vunpack.c.l.b16 %v4011
    %v5328 = vunpack.c.h.b16 %v4011
    %v5329 = vunpack.c.l.b16 %v4012
    %v5330 = vunpack.c.h.b16 %v4012
    %v5331 = vunpack.c.l.b16 %v4013
    %v5332 = vunpack.c.h.b16 %v4013
    %v5333 = vunpack.c.l.b16 %v4014
    %v5334 = vunpack.c.h.b16 %v4014
    %v5335 = vunpack.c.l.b16 %v4015
    %v5336 = vunpack.c.h.b16 %v4015
    %v5337 = vunpack.c.l.b16 %v4016
    %v5338 = vunpack.c.h.b16 %v4016
    %v5339 = vunpack.c.l.b16 %v4017
    %v5340 = vunpack.c.h.b16 %v4017
    %v5341 = vunpack.c.l.b16 %v4018
    %v5342 = vunpack.c.h.b16 %v4018
    %v5343 = vunpack.c.l.b16 %v4019
    %v5344 = vunpack.c.h.b16 %v4019
    %v5345 = vunpack.c.l.b16 %v4020
    %v5346 = vunpack.c.h.b16 %v4020
    %v5347 = vunpack.c.l.b16 %v4021
    %v5348 = vunpack.c.h.b16 %v4021
    %v5349 = vunpack.c.l.b16 %v4022
    %v5350 = vunpack.c.h.b16 %v4022
    %v5351 = vunpack.c.l.b16 %v4023
    %v5352 = vunpack.c.h.b16 %v4023
    %v5353 = vunpack.c.l.b16 %v4024
    %v5354 = vunpack.c.h.b16 %v4024
    %v5355 = vunpack.c.l.b16 %v4025
    %v5356 = vunpack.c.h.b16 %v4025
    %v5357 = vunpack.c.l.b16 %v4026
    %v5358 = vunpack.c.h.b16 %v4026
    %v5359 = vunpack.c.l.b16 %v4027
    %v5360 = vunpack.c.h.b16 %v4027
    %v5361 = vunpack.c.l.b16 %v4028
    %v5362 = vunpack.c.h.b16 %v4028
    %v5363 = vunpack.c.l.b16 %v4029
    %v5364 = vunpack.c.h.b16 %v4029
    %v5365 = vunpack.c.l.b16 %v4030
    %v5366 = vunpack.c.h.b16 %v4030
    %v5367 = vpack.c.b16 %v5119, %v5111
    %v5368 = vpack.c.b16 %v5120, %v5112
    %v5369 = vpack.c.b16 %v5121, %v5113
    %v5370 = vpack.c.b16 %v5122, %v5114
    %v5371 = vpack.c.b16 %v5123, %v5115
    %v5372 = vpack.c.b16 %v5124, %v5116
    %v5373 = vpack.c.b16 %v5125, %v5117
    %v5374 = vpack.c.b16 %v5126, %v5118
    %v5375 = vpack.c.b16 %v5135, %v5127
    %v5376 = vpack.c.b16 %v5136, %v5128
    %v5377 = vpack.c.b16 %v5137, %v5129
    %v5378 = vpack.c.b16 %v5138, %v5130
    %v5379 = vpack.c.b16 %v5139, %v5131
    %v5380 = vpack.c.b16 %v5140, %v5132
    %v5381 = vpack.c.b16 %v5141, %v5133
    %v5382 = vpack.c.b16 %v5142, %v5134
    %v5383 = vpack.c.b16 %v5151, %v5143
    %v5384 = vpack.c.b16 %v5152, %v5144
    %v5385 = vpack.c.b16 %v5153, %v5145
    %v5386 = vpack.c.b16 %v5154, %v5146
    %v5387 = vpack.c.b16 %v5155, %v5147
    %v5388 = vpack.c.b16 %v5156, %v5148
    %v5389 = vpack.c.b16 %v5157, %v5149
    %v5390 = vpack.c.b16 %v5158, %v5150
    %v5391 = vpack.c.b16 %v5167, %v5159
    %v5392 = vpack.c.b16 %v5168, %v5160
    %v5393 = vpack.c.b16 %v5169, %v5161
    %v5394 = vpack.c.b16 %v5170, %v5162
    %v5395 = vpack.c.b16 %v5171, %v5163
    %v5396 = vpack.c.b16 %v5172, %v5164
    %v5397 = vpack.c.b16 %v5173, %v5165
    %v5398 = vpack.c.b16 %v5174, %v5166
    %v5399 = vpack.c.b16 %v5183, %v5175
    %v5400 = vpack.c.b16 %v5184, %v5176
    %v5401 = vpack.c.b16 %v5185, %v5177
    %v5402 = vpack.c.b16 %v5186, %v5178
    %v5403 = vpack.c.b16 %v5187, %v5179
    %v5404 = vpack.c.b16 %v5188, %v5180
    %v5405 = vpack.c.b16 %v5189, %v5181
    %v5406 = vpack.c.b16 %v5190, %v5182
    %v5407 = vpack.c.b16 %v5199, %v5191
    %v5408 = vpack.c.b16 %v5200, %v5192
    %v5409 = vpack.c.b16 %v5201, %v5193
    %v5410 = vpack.c.b16 %v5202, %v5194
    %v5411 = vpack.c.b16 %v5203, %v5195
    %v5412 = vpack.c.b16 %v5204, %v5196
    %v5413 = vpack.c.b16 %v5205, %v5197
    %v5414 = vpack.c.b16 %v5206, %v5198
    %v5415 = vpack.c.b16 %v5215, %v5207
    %v5416 = vpack.c.b16 %v5216, %v5208
    %v5417 = vpack.c.b16 %v5217, %v5209
    %v5418 = vpack.c.b16 %v5218, %v5210
    %v5419 = vpack.c.b16 %v5219, %v5211
    %v5420 = vpack.c.b16 %v5220, %v5212
    %v5421 = vpack.c.b16 %v5221, %v5213
    %v5422 = vpack.c.b16 %v5222, %v5214
    %v5423 = vpack.c.b16 %v5231, %v5223
    %v5424 = vpack.c.b16 %v5232, %v5224
    %v5425 = vpack.c.b16 %v5233, %v5225
    %v5426 = vpack.c.b16 %v5234, %v5226
    %v5427 = vpack.c.b16 %v5235, %v5227
    %v5428 = vpack.c.b16 %v5236, %v5228
    %v5429 = vpack.c.b16 %v5237, %v5229
    %v5430 = vpack.c.b16 %v5238, %v5230
    %v5431 = vpack.c.b16 %v5247, %v5239
    %v5432 = vpack.c.b16 %v5248, %v5240
    %v5433 = vpack.c.b16 %v5249, %v5241
    %v5434 = vpack.c.b16 %v5250, %v5242
    %v5435 = vpack.c.b16 %v5251, %v5243
    %v5436 = vpack.c.b16 %v5252, %v5244
    %v5437 = vpack.c.b16 %v5253, %v5245
    %v5438 = vpack.c.b16 %v5254, %v5246
    %v5439 = vpack.c.b16 %v5263, %v5255
    %v5440 = vpack.c.b16 %v5264, %v5256
    %v5441 = vpack.c.b16 %v5265, %v5257
    %v5442 = vpack.c.b16 %v5266, %v5258
    %v5443 = vpack.c.b16 %v5267, %v5259
    %v5444 = vpack.c.b16 %v5268, %v5260
    %v5445 = vpack.c.b16 %v5269, %v5261
    %v5446 = vpack.c.b16 %v5270, %v5262
    %v5447 = vpack.c.b16 %v5279, %v5271
    %v5448 = vpack.c.b16 %v5280, %v5272
    %v5449 = vpack.c.b16 %v5281, %v5273
    %v5450 = vpack.c.b16 %v5282, %v5274
    %v5451 = vpack.c.b16 %v5283, %v5275
    %v5452 = vpack.c.b16 %v5284, %v5276
    %v5453 = vpack.c.b16 %v5285, %v5277
    %v5454 = vpack.c.b16 %v5286, %v5278
    %v5455 = vpack.c.b16 %v5295, %v5287
    %v5456 = vpack.c.b16 %v5296, %v5288
    %v5457 = vpack.c.b16 %v5297, %v5289
    %v5458 = vpack.c.b16 %v5298, %v5290
    %v5459 = vpack.c.b16 %v5299, %v5291
    %v5460 = vpack.c.b16 %v5300, %v5292
    %v5461 = vpack.c.b16 %v5301, %v5293
    %v5462 = vpack.c.b16 %v5302, %v5294
    %v5463 = vpack.c.b16 %v5311, %v5303
    %v5464 = vpack.c.b16 %v5312, %v5304
    %v5465 = vpack.c.b16 %v5313, %v5305
    %v5466 = vpack.c.b16 %v5314, %v5306
    %v5467 = vpack.c.b16 %v5315, %v5307
    %v5468 = vpack.c.b16 %v5316, %v5308
    %v5469 = vpack.c.b16 %v5317, %v5309
    %v5470 = vpack.c.b16 %v5318, %v5310
    %v5471 = vpack.c.b16 %v5327, %v5319
    %v5472 = vpack.c.b16 %v5328, %v5320
    %v5473 = vpack.c.b16 %v5329, %v5321
    %v5474 = vpack.c.b16 %v5330, %v5322
    %v5475 = vpack.c.b16 %v5331, %v5323
    %v5476 = vpack.c.b16 %v5332, %v5324
    %v5477 = vpack.c.b16 %v5333, %v5325
    %v5478 = vpack.c.b16 %v5334, %v5326
    %v5479 = vpack.c.b16 %v5343, %v5335
    %v5480 = vpack.c.b16 %v5344, %v5336
    %v5481 = vpack.c.b16 %v5345, %v5337
    %v5482 = vpack.c.b16 %v5346, %v5338
    %v5483 = vpack.c.b16 %v5347, %v5339
    %v5484 = vpack.c.b16 %v5348, %v5340
    %v5485 = vpack.c.b16 %v5349, %v5341
    %v5486 = vpack.c.b16 %v5350, %v5342
    %v5487 = vpack.c.b16 %v5359, %v5351
    %v5488 = vpack.c.b16 %v5360, %v5352
    %v5489 = vpack.c.b16 %v5361, %v5353
    %v5490 = vpack.c.b16 %v5362, %v5354
    %v5491 = vpack.c.b16 %v5363, %v5355
    %v5492 = vpack.c.b16 %v5364, %v5356
    %v5493 = vpack.c.b16 %v5365, %v5357
    %v5494 = vpack.c.b16 %v5366, %v5358
    %5623 = vmatpush.bf16.msra.mxu0 %v5423
    %5624 = vmatpush.bf16.msra.mxu0 %v5415
    %5625 = vmatpush.bf16.msra.mxu0 %v5407
    %5626 = vmatpush.bf16.msra.mxu0 %v5399
    %5627 = vmatpush.bf16.msra.mxu0 %v5391
    %5628 = vmatpush.bf16.msra.mxu0 %v5383
    %5629 = vmatpush.bf16.msra.mxu0 %v5375
    %5630 = vmatpush.bf16.msra.mxu0 %v5367
    %5631 = vmatmul.bf16.gmra.mxu0 0
    %v5632 = vpop.f32.mrf.mxu0
    %v5633 = vadd.f32 0.0, %v5632
    %v5634 = vpop.f32.mrf.mxu0
    %5635 = vdwg.mxu0
    %5636 = vmatpush.bf16.msra.mxu0 %v5487
    %5637 = vmatpush.bf16.msra.mxu0 %v5479
    %5638 = vmatpush.bf16.msra.mxu0 %v5471
    %5639 = vmatpush.bf16.msra.mxu0 %v5463
    %5640 = vmatpush.bf16.msra.mxu0 %v5455
    %5641 = vmatpush.bf16.msra.mxu0 %v5447
    %5642 = vmatpush.bf16.msra.mxu0 %v5439
    %5643 = vmatpush.bf16.msra.mxu0 %v5431
    %5644 = vmatmul.bf16.gmra.mxu0 0
    %v5645 = vpop.f32.mrf.mxu0
    %v5646 = vadd.f32 %v5633, %v5645
    %v5647 = vpop.f32.mrf.mxu0
    %5648 = vdwg.mxu0
    %5649 = vmatpush.bf16.msra.mxu0 %v5424
    %5650 = vmatpush.bf16.msra.mxu0 %v5416
    %5651 = vmatpush.bf16.msra.mxu0 %v5408
    %5652 = vmatpush.bf16.msra.mxu0 %v5400
    %5653 = vmatpush.bf16.msra.mxu0 %v5392
    %5654 = vmatpush.bf16.msra.mxu0 %v5384
    %5655 = vmatpush.bf16.msra.mxu0 %v5376
    %5656 = vmatpush.bf16.msra.mxu0 %v5368
    %5657 = vmatmul.bf16.gmra.mxu0 0
    %v5658 = vpop.f32.mrf.mxu0
    %v5659 = vadd.f32 0.0, %v5658
    %v5660 = vpop.f32.mrf.mxu0
    %5661 = vdwg.mxu0
    %5662 = vmatpush.bf16.msra.mxu0 %v5488
    %5663 = vmatpush.bf16.msra.mxu0 %v5480
    %5664 = vmatpush.bf16.msra.mxu0 %v5472
    %5665 = vmatpush.bf16.msra.mxu0 %v5464
    %5666 = vmatpush.bf16.msra.mxu0 %v5456
    %5667 = vmatpush.bf16.msra.mxu0 %v5448
    %5668 = vmatpush.bf16.msra.mxu0 %v5440
    %5669 = vmatpush.bf16.msra.mxu0 %v5432
    %5670 = vmatmul.bf16.gmra.mxu0 0
    %v5671 = vpop.f32.mrf.mxu0
    %v5672 = vadd.f32 %v5659, %v5671
    %v5673 = vpop.f32.mrf.mxu0
    %5674 = vdwg.mxu0
    %5675 = vmatpush.bf16.msra.mxu0 %v5425
    %5676 = vmatpush.bf16.msra.mxu0 %v5417
    %5677 = vmatpush.bf16.msra.mxu0 %v5409
    %5678 = vmatpush.bf16.msra.mxu0 %v5401
    %5679 = vmatpush.bf16.msra.mxu0 %v5393
    %5680 = vmatpush.bf16.msra.mxu0 %v5385
    %5681 = vmatpush.bf16.msra.mxu0 %v5377
    %5682 = vmatpush.bf16.msra.mxu0 %v5369
    %5683 = vmatmul.bf16.gmra.mxu0 0
    %v5684 = vpop.f32.mrf.mxu0
    %v5685 = vadd.f32 0.0, %v5684
    %v5686 = vpop.f32.mrf.mxu0
    %5687 = vdwg.mxu0
    %5688 = vmatpush.bf16.msra.mxu0 %v5489
    %5689 = vmatpush.bf16.msra.mxu0 %v5481
    %5690 = vmatpush.bf16.msra.mxu0 %v5473
    %5691 = vmatpush.bf16.msra.mxu0 %v5465
    %5692 = vmatpush.bf16.msra.mxu0 %v5457
    %5693 = vmatpush.bf16.msra.mxu0 %v5449
    %5694 = vmatpush.bf16.msra.mxu0 %v5441
    %5695 = vmatpush.bf16.msra.mxu0 %v5433
    %5696 = vmatmul.bf16.gmra.mxu0 0
    %v5697 = vpop.f32.mrf.mxu0
    %v5698 = vadd.f32 %v5685, %v5697
    %v5699 = vpop.f32.mrf.mxu0
    %5700 = vdwg.mxu0
    %5701 = vmatpush.bf16.msra.mxu0 %v5426
    %5702 = vmatpush.bf16.msra.mxu0 %v5418
    %5703 = vmatpush.bf16.msra.mxu0 %v5410
    %5704 = vmatpush.bf16.msra.mxu0 %v5402
    %5705 = vmatpush.bf16.msra.mxu0 %v5394
    %5706 = vmatpush.bf16.msra.mxu0 %v5386
    %5707 = vmatpush.bf16.msra.mxu0 %v5378
    %5708 = vmatpush.bf16.msra.mxu0 %v5370
    %5709 = vmatmul.bf16.gmra.mxu0 0
    %v5710 = vpop.f32.mrf.mxu0
    %v5711 = vadd.f32 0.0, %v5710
    %v5712 = vpop.f32.mrf.mxu0
    %5713 = vdwg.mxu0
    %5714 = vmatpush.bf16.msra.mxu0 %v5490
    %5715 = vmatpush.bf16.msra.mxu0 %v5482
    %5716 = vmatpush.bf16.msra.mxu0 %v5474
    %5717 = vmatpush.bf16.msra.mxu0 %v5466
    %5718 = vmatpush.bf16.msra.mxu0 %v5458
    %5719 = vmatpush.bf16.msra.mxu0 %v5450
    %5720 = vmatpush.bf16.msra.mxu0 %v5442
    %5721 = vmatpush.bf16.msra.mxu0 %v5434
    %5722 = vmatmul.bf16.gmra.mxu0 0
    %v5723 = vpop.f32.mrf.mxu0
    %v5724 = vadd.f32 %v5711, %v5723
    %v5725 = vpop.f32.mrf.mxu0
    %5726 = vdwg.mxu0
    %5727 = vmatpush.bf16.msra.mxu0 %v5427
    %5728 = vmatpush.bf16.msra.mxu0 %v5419
    %5729 = vmatpush.bf16.msra.mxu0 %v5411
    %5730 = vmatpush.bf16.msra.mxu0 %v5403
    %5731 = vmatpush.bf16.msra.mxu0 %v5395
    %5732 = vmatpush.bf16.msra.mxu0 %v5387
    %5733 = vmatpush.bf16.msra.mxu0 %v5379
    %5734 = vmatpush.bf16.msra.mxu0 %v5371
    %5735 = vmatmul.bf16.gmra.mxu0 0
    %v5736 = vpop.f32.mrf.mxu0
    %v5737 = vadd.f32 0.0, %v5736
    %v5738 = vpop.f32.mrf.mxu0
    %5739 = vdwg.mxu0
    %5740 = vmatpush.bf16.msra.mxu0 %v5491
    %5741 = vmatpush.bf16.msra.mxu0 %v5483
    %5742 = vmatpush.bf16.msra.mxu0 %v5475
    %5743 = vmatpush.bf16.msra.mxu0 %v5467
    %5744 = vmatpush.bf16.msra.mxu0 %v5459
    %5745 = vmatpush.bf16.msra.mxu0 %v5451
    %5746 = vmatpush.bf16.msra.mxu0 %v5443
    %5747 = vmatpush.bf16.msra.mxu0 %v5435
    %5748 = vmatmul.bf16.gmra.mxu0 0
    %v5749 = vpop.f32.mrf.mxu0
    %v5750 = vadd.f32 %v5737, %v5749
    %v5751 = vpop.f32.mrf.mxu0
    %5752 = vdwg.mxu0
    %5753 = vmatpush.bf16.msra.mxu0 %v5428
    %5754 = vmatpush.bf16.msra.mxu0 %v5420
    %5755 = vmatpush.bf16.msra.mxu0 %v5412
    %5756 = vmatpush.bf16.msra.mxu0 %v5404
    %5757 = vmatpush.bf16.msra.mxu0 %v5396
    %5758 = vmatpush.bf16.msra.mxu0 %v5388
    %5759 = vmatpush.bf16.msra.mxu0 %v5380
    %5760 = vmatpush.bf16.msra.mxu0 %v5372
    %5761 = vmatmul.bf16.gmra.mxu0 0
    %v5762 = vpop.f32.mrf.mxu0
    %v5763 = vadd.f32 0.0, %v5762
    %v5764 = vpop.f32.mrf.mxu0
    %5765 = vdwg.mxu0
    %5766 = vmatpush.bf16.msra.mxu0 %v5492
    %5767 = vmatpush.bf16.msra.mxu0 %v5484
    %5768 = vmatpush.bf16.msra.mxu0 %v5476
    %5769 = vmatpush.bf16.msra.mxu0 %v5468
    %5770 = vmatpush.bf16.msra.mxu0 %v5460
    %5771 = vmatpush.bf16.msra.mxu0 %v5452
    %5772 = vmatpush.bf16.msra.mxu0 %v5444
    %5773 = vmatpush.bf16.msra.mxu0 %v5436
    %5774 = vmatmul.bf16.gmra.mxu0 0
    %v5775 = vpop.f32.mrf.mxu0
    %v5776 = vadd.f32 %v5763, %v5775
    %v5777 = vpop.f32.mrf.mxu0
    %5778 = vdwg.mxu0
    %5779 = vmatpush.bf16.msra.mxu0 %v5429
    %5780 = vmatpush.bf16.msra.mxu0 %v5421
    %5781 = vmatpush.bf16.msra.mxu0 %v5413
    %5782 = vmatpush.bf16.msra.mxu0 %v5405
    %5783 = vmatpush.bf16.msra.mxu0 %v5397
    %5784 = vmatpush.bf16.msra.mxu0 %v5389
    %5785 = vmatpush.bf16.msra.mxu0 %v5381
    %5786 = vmatpush.bf16.msra.mxu0 %v5373
    %5787 = vmatmul.bf16.gmra.mxu0 0
    %v5788 = vpop.f32.mrf.mxu0
    %v5789 = vadd.f32 0.0, %v5788
    %v5790 = vpop.f32.mrf.mxu0
    %5791 = vdwg.mxu0
    %5792 = vmatpush.bf16.msra.mxu0 %v5493
    %5793 = vmatpush.bf16.msra.mxu0 %v5485
    %5794 = vmatpush.bf16.msra.mxu0 %v5477
    %5795 = vmatpush.bf16.msra.mxu0 %v5469
    %5796 = vmatpush.bf16.msra.mxu0 %v5461
    %5797 = vmatpush.bf16.msra.mxu0 %v5453
    %5798 = vmatpush.bf16.msra.mxu0 %v5445
    %5799 = vmatpush.bf16.msra.mxu0 %v5437
    %5800 = vmatmul.bf16.gmra.mxu0 0
    %v5801 = vpop.f32.mrf.mxu0
    %v5802 = vadd.f32 %v5789, %v5801
    %v5803 = vpop.f32.mrf.mxu0
    %5804 = vdwg.mxu0
    %5805 = vmatpush.bf16.msra.mxu0 %v5430
    %5806 = vmatpush.bf16.msra.mxu0 %v5422
    %5807 = vmatpush.bf16.msra.mxu0 %v5414
    %5808 = vmatpush.bf16.msra.mxu0 %v5406
    %5809 = vmatpush.bf16.msra.mxu0 %v5398
    %5810 = vmatpush.bf16.msra.mxu0 %v5390
    %5811 = vmatpush.bf16.msra.mxu0 %v5382
    %5812 = vmatpush.bf16.msra.mxu0 %v5374
    %5813 = vmatmul.bf16.gmra.mxu0 0
    %v5814 = vpop.f32.mrf.mxu0
    %v5815 = vadd.f32 0.0, %v5814
    %v5816 = vpop.f32.mrf.mxu0
    %5817 = vdwg.mxu0
    %5818 = vmatpush.bf16.msra.mxu0 %v5494
    %5819 = vmatpush.bf16.msra.mxu0 %v5486
    %5820 = vmatpush.bf16.msra.mxu0 %v5478
    %5821 = vmatpush.bf16.msra.mxu0 %v5470
    %5822 = vmatpush.bf16.msra.mxu0 %v5462
    %5823 = vmatpush.bf16.msra.mxu0 %v5454
    %5824 = vmatpush.bf16.msra.mxu0 %v5446
    %5825 = vmatpush.bf16.msra.mxu0 %v5438
    %5826 = vmatmul.bf16.gmra.mxu0 0
    %v5827 = vpop.f32.mrf.mxu0
    %v5828 = vadd.f32 %v5815, %v5827
    %v5829 = vpop.f32.mrf.mxu0
    %5830 = vdwg.mxu0
    %v5959 = vunpack.c.l.b16 %v3775
    %v5960 = vunpack.c.h.b16 %v3775
    %v5961 = vunpack.c.l.b16 %v3776
    %v5962 = vunpack.c.h.b16 %v3776
    %v5963 = vunpack.c.l.b16 %v3777
    %v5964 = vunpack.c.h.b16 %v3777
    %v5965 = vunpack.c.l.b16 %v3778
    %v5966 = vunpack.c.h.b16 %v3778
    %v5967 = vunpack.c.l.b16 %v3779
    %v5968 = vunpack.c.h.b16 %v3779
    %v5969 = vunpack.c.l.b16 %v3780
    %v5970 = vunpack.c.h.b16 %v3780
    %v5971 = vunpack.c.l.b16 %v3781
    %v5972 = vunpack.c.h.b16 %v3781
    %v5973 = vunpack.c.l.b16 %v3782
    %v5974 = vunpack.c.h.b16 %v3782
    %v5975 = vunpack.c.l.b16 %v3783
    %v5976 = vunpack.c.h.b16 %v3783
    %v5977 = vunpack.c.l.b16 %v3784
    %v5978 = vunpack.c.h.b16 %v3784
    %v5979 = vunpack.c.l.b16 %v3785
    %v5980 = vunpack.c.h.b16 %v3785
    %v5981 = vunpack.c.l.b16 %v3786
    %v5982 = vunpack.c.h.b16 %v3786
    %v5983 = vunpack.c.l.b16 %v3787
    %v5984 = vunpack.c.h.b16 %v3787
    %v5985 = vunpack.c.l.b16 %v3788
    %v5986 = vunpack.c.h.b16 %v3788
    %v5987 = vunpack.c.l.b16 %v3789
    %v5988 = vunpack.c.h.b16 %v3789
    %v5989 = vunpack.c.l.b16 %v3790
    %v5990 = vunpack.c.h.b16 %v3790
    %v5991 = vunpack.c.l.b16 %v3791
    %v5992 = vunpack.c.h.b16 %v3791
    %v5993 = vunpack.c.l.b16 %v3792
    %v5994 = vunpack.c.h.b16 %v3792
    %v5995 = vunpack.c.l.b16 %v3793
    %v5996 = vunpack.c.h.b16 %v3793
    %v5997 = vunpack.c.l.b16 %v3794
    %v5998 = vunpack.c.h.b16 %v3794
    %v5999 = vunpack.c.l.b16 %v3795
    %v6000 = vunpack.c.h.b16 %v3795
    %v6001 = vunpack.c.l.b16 %v3796
    %v6002 = vunpack.c.h.b16 %v3796
    %v6003 = vunpack.c.l.b16 %v3797
    %v6004 = vunpack.c.h.b16 %v3797
    %v6005 = vunpack.c.l.b16 %v3798
    %v6006 = vunpack.c.h.b16 %v3798
    %v6007 = vunpack.c.l.b16 %v3799
    %v6008 = vunpack.c.h.b16 %v3799
    %v6009 = vunpack.c.l.b16 %v3800
    %v6010 = vunpack.c.h.b16 %v3800
    %v6011 = vunpack.c.l.b16 %v3801
    %v6012 = vunpack.c.h.b16 %v3801
    %v6013 = vunpack.c.l.b16 %v3802
    %v6014 = vunpack.c.h.b16 %v3802
    %v6015 = vunpack.c.l.b16 %v3803
    %v6016 = vunpack.c.h.b16 %v3803
    %v6017 = vunpack.c.l.b16 %v3804
    %v6018 = vunpack.c.h.b16 %v3804
    %v6019 = vunpack.c.l.b16 %v3805
    %v6020 = vunpack.c.h.b16 %v3805
    %v6021 = vunpack.c.l.b16 %v3806
    %v6022 = vunpack.c.h.b16 %v3806
    %v6023 = vunpack.c.l.b16 %v3807
    %v6024 = vunpack.c.h.b16 %v3807
    %v6025 = vunpack.c.l.b16 %v3808
    %v6026 = vunpack.c.h.b16 %v3808
    %v6027 = vunpack.c.l.b16 %v3809
    %v6028 = vunpack.c.h.b16 %v3809
    %v6029 = vunpack.c.l.b16 %v3810
    %v6030 = vunpack.c.h.b16 %v3810
    %v6031 = vunpack.c.l.b16 %v3811
    %v6032 = vunpack.c.h.b16 %v3811
    %v6033 = vunpack.c.l.b16 %v3812
    %v6034 = vunpack.c.h.b16 %v3812
    %v6035 = vunpack.c.l.b16 %v3813
    %v6036 = vunpack.c.h.b16 %v3813
    %v6037 = vunpack.c.l.b16 %v3814
    %v6038 = vunpack.c.h.b16 %v3814
    %v6039 = vunpack.c.l.b16 %v3815
    %v6040 = vunpack.c.h.b16 %v3815
    %v6041 = vunpack.c.l.b16 %v3816
    %v6042 = vunpack.c.h.b16 %v3816
    %v6043 = vunpack.c.l.b16 %v3817
    %v6044 = vunpack.c.h.b16 %v3817
    %v6045 = vunpack.c.l.b16 %v3818
    %v6046 = vunpack.c.h.b16 %v3818
    %v6047 = vunpack.c.l.b16 %v3819
    %v6048 = vunpack.c.h.b16 %v3819
    %v6049 = vunpack.c.l.b16 %v3820
    %v6050 = vunpack.c.h.b16 %v3820
    %v6051 = vunpack.c.l.b16 %v3821
    %v6052 = vunpack.c.h.b16 %v3821
    %v6053 = vunpack.c.l.b16 %v3822
    %v6054 = vunpack.c.h.b16 %v3822
    %v6055 = vunpack.c.l.b16 %v3823
    %v6056 = vunpack.c.h.b16 %v3823
    %v6057 = vunpack.c.l.b16 %v3824
    %v6058 = vunpack.c.h.b16 %v3824
    %v6059 = vunpack.c.l.b16 %v3825
    %v6060 = vunpack.c.h.b16 %v3825
    %v6061 = vunpack.c.l.b16 %v3826
    %v6062 = vunpack.c.h.b16 %v3826
    %v6063 = vunpack.c.l.b16 %v3827
    %v6064 = vunpack.c.h.b16 %v3827
    %v6065 = vunpack.c.l.b16 %v3828
    %v6066 = vunpack.c.h.b16 %v3828
    %v6067 = vunpack.c.l.b16 %v3829
    %v6068 = vunpack.c.h.b16 %v3829
    %v6069 = vunpack.c.l.b16 %v3830
    %v6070 = vunpack.c.h.b16 %v3830
    %v6071 = vunpack.c.l.b16 %v3831
    %v6072 = vunpack.c.h.b16 %v3831
    %v6073 = vunpack.c.l.b16 %v3832
    %v6074 = vunpack.c.h.b16 %v3832
    %v6075 = vunpack.c.l.b16 %v3833
    %v6076 = vunpack.c.h.b16 %v3833
    %v6077 = vunpack.c.l.b16 %v3834
    %v6078 = vunpack.c.h.b16 %v3834
    %v6079 = vunpack.c.l.b16 %v3835
    %v6080 = vunpack.c.h.b16 %v3835
    %v6081 = vunpack.c.l.b16 %v3836
    %v6082 = vunpack.c.h.b16 %v3836
    %v6083 = vunpack.c.l.b16 %v3837
    %v6084 = vunpack.c.h.b16 %v3837
    %v6085 = vunpack.c.l.b16 %v3838
    %v6086 = vunpack.c.h.b16 %v3838
    %v6087 = vunpack.c.l.b16 %v3839
    %v6088 = vunpack.c.h.b16 %v3839
    %v6089 = vunpack.c.l.b16 %v3840
    %v6090 = vunpack.c.h.b16 %v3840
    %v6091 = vunpack.c.l.b16 %v3841
    %v6092 = vunpack.c.h.b16 %v3841
    %v6093 = vunpack.c.l.b16 %v3842
    %v6094 = vunpack.c.h.b16 %v3842
    %v6095 = vunpack.c.l.b16 %v3843
    %v6096 = vunpack.c.h.b16 %v3843
    %v6097 = vunpack.c.l.b16 %v3844
    %v6098 = vunpack.c.h.b16 %v3844
    %v6099 = vunpack.c.l.b16 %v3845
    %v6100 = vunpack.c.h.b16 %v3845
    %v6101 = vunpack.c.l.b16 %v3846
    %v6102 = vunpack.c.h.b16 %v3846
    %v6103 = vunpack.c.l.b16 %v3847
    %v6104 = vunpack.c.h.b16 %v3847
    %v6105 = vunpack.c.l.b16 %v3848
    %v6106 = vunpack.c.h.b16 %v3848
    %v6107 = vunpack.c.l.b16 %v3849
    %v6108 = vunpack.c.h.b16 %v3849
    %v6109 = vunpack.c.l.b16 %v3850
    %v6110 = vunpack.c.h.b16 %v3850
    %v6111 = vunpack.c.l.b16 %v3851
    %v6112 = vunpack.c.h.b16 %v3851
    %v6113 = vunpack.c.l.b16 %v3852
    %v6114 = vunpack.c.h.b16 %v3852
    %v6115 = vunpack.c.l.b16 %v3853
    %v6116 = vunpack.c.h.b16 %v3853
    %v6117 = vunpack.c.l.b16 %v3854
    %v6118 = vunpack.c.h.b16 %v3854
    %v6119 = vunpack.c.l.b16 %v3855
    %v6120 = vunpack.c.h.b16 %v3855
    %v6121 = vunpack.c.l.b16 %v3856
    %v6122 = vunpack.c.h.b16 %v3856
    %v6123 = vunpack.c.l.b16 %v3857
    %v6124 = vunpack.c.h.b16 %v3857
    %v6125 = vunpack.c.l.b16 %v3858
    %v6126 = vunpack.c.h.b16 %v3858
    %v6127 = vunpack.c.l.b16 %v3859
    %v6128 = vunpack.c.h.b16 %v3859
    %v6129 = vunpack.c.l.b16 %v3860
    %v6130 = vunpack.c.h.b16 %v3860
    %v6131 = vunpack.c.l.b16 %v3861
    %v6132 = vunpack.c.h.b16 %v3861
    %v6133 = vunpack.c.l.b16 %v3862
    %v6134 = vunpack.c.h.b16 %v3862
    %v6135 = vunpack.c.l.b16 %v3863
    %v6136 = vunpack.c.h.b16 %v3863
    %v6137 = vunpack.c.l.b16 %v3864
    %v6138 = vunpack.c.h.b16 %v3864
    %v6139 = vunpack.c.l.b16 %v3865
    %v6140 = vunpack.c.h.b16 %v3865
    %v6141 = vunpack.c.l.b16 %v3866
    %v6142 = vunpack.c.h.b16 %v3866
    %v6143 = vunpack.c.l.b16 %v3867
    %v6144 = vunpack.c.h.b16 %v3867
    %v6145 = vunpack.c.l.b16 %v3868
    %v6146 = vunpack.c.h.b16 %v3868
    %v6147 = vunpack.c.l.b16 %v3869
    %v6148 = vunpack.c.h.b16 %v3869
    %v6149 = vunpack.c.l.b16 %v3870
    %v6150 = vunpack.c.h.b16 %v3870
    %v6151 = vunpack.c.l.b16 %v3871
    %v6152 = vunpack.c.h.b16 %v3871
    %v6153 = vunpack.c.l.b16 %v3872
    %v6154 = vunpack.c.h.b16 %v3872
    %v6155 = vunpack.c.l.b16 %v3873
    %v6156 = vunpack.c.h.b16 %v3873
    %v6157 = vunpack.c.l.b16 %v3874
    %v6158 = vunpack.c.h.b16 %v3874
    %v6159 = vunpack.c.l.b16 %v3875
    %v6160 = vunpack.c.h.b16 %v3875
    %v6161 = vunpack.c.l.b16 %v3876
    %v6162 = vunpack.c.h.b16 %v3876
    %v6163 = vunpack.c.l.b16 %v3877
    %v6164 = vunpack.c.h.b16 %v3877
    %v6165 = vunpack.c.l.b16 %v3878
    %v6166 = vunpack.c.h.b16 %v3878
    %v6167 = vunpack.c.l.b16 %v3879
    %v6168 = vunpack.c.h.b16 %v3879
    %v6169 = vunpack.c.l.b16 %v3880
    %v6170 = vunpack.c.h.b16 %v3880
    %v6171 = vunpack.c.l.b16 %v3881
    %v6172 = vunpack.c.h.b16 %v3881
    %v6173 = vunpack.c.l.b16 %v3882
    %v6174 = vunpack.c.h.b16 %v3882
    %v6175 = vunpack.c.l.b16 %v3883
    %v6176 = vunpack.c.h.b16 %v3883
    %v6177 = vunpack.c.l.b16 %v3884
    %v6178 = vunpack.c.h.b16 %v3884
    %v6179 = vunpack.c.l.b16 %v3885
    %v6180 = vunpack.c.h.b16 %v3885
    %v6181 = vunpack.c.l.b16 %v3886
    %v6182 = vunpack.c.h.b16 %v3886
    %v6183 = vunpack.c.l.b16 %v3887
    %v6184 = vunpack.c.h.b16 %v3887
    %v6185 = vunpack.c.l.b16 %v3888
    %v6186 = vunpack.c.h.b16 %v3888
    %v6187 = vunpack.c.l.b16 %v3889
    %v6188 = vunpack.c.h.b16 %v3889
    %v6189 = vunpack.c.l.b16 %v3890
    %v6190 = vunpack.c.h.b16 %v3890
    %v6191 = vunpack.c.l.b16 %v3891
    %v6192 = vunpack.c.h.b16 %v3891
    %v6193 = vunpack.c.l.b16 %v3892
    %v6194 = vunpack.c.h.b16 %v3892
    %v6195 = vunpack.c.l.b16 %v3893
    %v6196 = vunpack.c.h.b16 %v3893
    %v6197 = vunpack.c.l.b16 %v3894
    %v6198 = vunpack.c.h.b16 %v3894
    %v6199 = vunpack.c.l.b16 %v3895
    %v6200 = vunpack.c.h.b16 %v3895
    %v6201 = vunpack.c.l.b16 %v3896
    %v6202 = vunpack.c.h.b16 %v3896
    %v6203 = vunpack.c.l.b16 %v3897
    %v6204 = vunpack.c.h.b16 %v3897
    %v6205 = vunpack.c.l.b16 %v3898
    %v6206 = vunpack.c.h.b16 %v3898
    %v6207 = vunpack.c.l.b16 %v3899
    %v6208 = vunpack.c.h.b16 %v3899
    %v6209 = vunpack.c.l.b16 %v3900
    %v6210 = vunpack.c.h.b16 %v3900
    %v6211 = vunpack.c.l.b16 %v3901
    %v6212 = vunpack.c.h.b16 %v3901
    %v6213 = vunpack.c.l.b16 %v3902
    %v6214 = vunpack.c.h.b16 %v3902
    %v6215 = vpack.c.b16 %v5967, %v5959
    %v6216 = vpack.c.b16 %v5968, %v5960
    %v6217 = vpack.c.b16 %v5969, %v5961
    %v6218 = vpack.c.b16 %v5970, %v5962
    %v6219 = vpack.c.b16 %v5971, %v5963
    %v6220 = vpack.c.b16 %v5972, %v5964
    %v6221 = vpack.c.b16 %v5973, %v5965
    %v6222 = vpack.c.b16 %v5974, %v5966
    %v6223 = vpack.c.b16 %v5983, %v5975
    %v6224 = vpack.c.b16 %v5984, %v5976
    %v6225 = vpack.c.b16 %v5985, %v5977
    %v6226 = vpack.c.b16 %v5986, %v5978
    %v6227 = vpack.c.b16 %v5987, %v5979
    %v6228 = vpack.c.b16 %v5988, %v5980
    %v6229 = vpack.c.b16 %v5989, %v5981
    %v6230 = vpack.c.b16 %v5990, %v5982
    %v6231 = vpack.c.b16 %v5999, %v5991
    %v6232 = vpack.c.b16 %v6000, %v5992
    %v6233 = vpack.c.b16 %v6001, %v5993
    %v6234 = vpack.c.b16 %v6002, %v5994
    %v6235 = vpack.c.b16 %v6003, %v5995
    %v6236 = vpack.c.b16 %v6004, %v5996
    %v6237 = vpack.c.b16 %v6005, %v5997
    %v6238 = vpack.c.b16 %v6006, %v5998
    %v6239 = vpack.c.b16 %v6015, %v6007
    %v6240 = vpack.c.b16 %v6016, %v6008
    %v6241 = vpack.c.b16 %v6017, %v6009
    %v6242 = vpack.c.b16 %v6018, %v6010
    %v6243 = vpack.c.b16 %v6019, %v6011
    %v6244 = vpack.c.b16 %v6020, %v6012
    %v6245 = vpack.c.b16 %v6021, %v6013
    %v6246 = vpack.c.b16 %v6022, %v6014
    %v6247 = vpack.c.b16 %v6031, %v6023
    %v6248 = vpack.c.b16 %v6032, %v6024
    %v6249 = vpack.c.b16 %v6033, %v6025
    %v6250 = vpack.c.b16 %v6034, %v6026
    %v6251 = vpack.c.b16 %v6035, %v6027
    %v6252 = vpack.c.b16 %v6036, %v6028
    %v6253 = vpack.c.b16 %v6037, %v6029
    %v6254 = vpack.c.b16 %v6038, %v6030
    %v6255 = vpack.c.b16 %v6047, %v6039
    %v6256 = vpack.c.b16 %v6048, %v6040
    %v6257 = vpack.c.b16 %v6049, %v6041
    %v6258 = vpack.c.b16 %v6050, %v6042
    %v6259 = vpack.c.b16 %v6051, %v6043
    %v6260 = vpack.c.b16 %v6052, %v6044
    %v6261 = vpack.c.b16 %v6053, %v6045
    %v6262 = vpack.c.b16 %v6054, %v6046
    %v6263 = vpack.c.b16 %v6063, %v6055
    %v6264 = vpack.c.b16 %v6064, %v6056
    %v6265 = vpack.c.b16 %v6065, %v6057
    %v6266 = vpack.c.b16 %v6066, %v6058
    %v6267 = vpack.c.b16 %v6067, %v6059
    %v6268 = vpack.c.b16 %v6068, %v6060
    %v6269 = vpack.c.b16 %v6069, %v6061
    %v6270 = vpack.c.b16 %v6070, %v6062
    %v6271 = vpack.c.b16 %v6079, %v6071
    %v6272 = vpack.c.b16 %v6080, %v6072
    %v6273 = vpack.c.b16 %v6081, %v6073
    %v6274 = vpack.c.b16 %v6082, %v6074
    %v6275 = vpack.c.b16 %v6083, %v6075
    %v6276 = vpack.c.b16 %v6084, %v6076
    %v6277 = vpack.c.b16 %v6085, %v6077
    %v6278 = vpack.c.b16 %v6086, %v6078
    %v6279 = vpack.c.b16 %v6095, %v6087
    %v6280 = vpack.c.b16 %v6096, %v6088
    %v6281 = vpack.c.b16 %v6097, %v6089
    %v6282 = vpack.c.b16 %v6098, %v6090
    %v6283 = vpack.c.b16 %v6099, %v6091
    %v6284 = vpack.c.b16 %v6100, %v6092
    %v6285 = vpack.c.b16 %v6101, %v6093
    %v6286 = vpack.c.b16 %v6102, %v6094
    %v6287 = vpack.c.b16 %v6111, %v6103
    %v6288 = vpack.c.b16 %v6112, %v6104
    %v6289 = vpack.c.b16 %v6113, %v6105
    %v6290 = vpack.c.b16 %v6114, %v6106
    %v6291 = vpack.c.b16 %v6115, %v6107
    %v6292 = vpack.c.b16 %v6116, %v6108
    %v6293 = vpack.c.b16 %v6117, %v6109
    %v6294 = vpack.c.b16 %v6118, %v6110
    %v6295 = vpack.c.b16 %v6127, %v6119
    %v6296 = vpack.c.b16 %v6128, %v6120
    %v6297 = vpack.c.b16 %v6129, %v6121
    %v6298 = vpack.c.b16 %v6130, %v6122
    %v6299 = vpack.c.b16 %v6131, %v6123
    %v6300 = vpack.c.b16 %v6132, %v6124
    %v6301 = vpack.c.b16 %v6133, %v6125
    %v6302 = vpack.c.b16 %v6134, %v6126
    %v6303 = vpack.c.b16 %v6143, %v6135
    %v6304 = vpack.c.b16 %v6144, %v6136
    %v6305 = vpack.c.b16 %v6145, %v6137
    %v6306 = vpack.c.b16 %v6146, %v6138
    %v6307 = vpack.c.b16 %v6147, %v6139
    %v6308 = vpack.c.b16 %v6148, %v6140
    %v6309 = vpack.c.b16 %v6149, %v6141
    %v6310 = vpack.c.b16 %v6150, %v6142
    %v6311 = vpack.c.b16 %v6159, %v6151
    %v6312 = vpack.c.b16 %v6160, %v6152
    %v6313 = vpack.c.b16 %v6161, %v6153
    %v6314 = vpack.c.b16 %v6162, %v6154
    %v6315 = vpack.c.b16 %v6163, %v6155
    %v6316 = vpack.c.b16 %v6164, %v6156
    %v6317 = vpack.c.b16 %v6165, %v6157
    %v6318 = vpack.c.b16 %v6166, %v6158
    %v6319 = vpack.c.b16 %v6175, %v6167
    %v6320 = vpack.c.b16 %v6176, %v6168
    %v6321 = vpack.c.b16 %v6177, %v6169
    %v6322 = vpack.c.b16 %v6178, %v6170
    %v6323 = vpack.c.b16 %v6179, %v6171
    %v6324 = vpack.c.b16 %v6180, %v6172
    %v6325 = vpack.c.b16 %v6181, %v6173
    %v6326 = vpack.c.b16 %v6182, %v6174
    %v6327 = vpack.c.b16 %v6191, %v6183
    %v6328 = vpack.c.b16 %v6192, %v6184
    %v6329 = vpack.c.b16 %v6193, %v6185
    %v6330 = vpack.c.b16 %v6194, %v6186
    %v6331 = vpack.c.b16 %v6195, %v6187
    %v6332 = vpack.c.b16 %v6196, %v6188
    %v6333 = vpack.c.b16 %v6197, %v6189
    %v6334 = vpack.c.b16 %v6198, %v6190
    %v6335 = vpack.c.b16 %v6207, %v6199
    %v6336 = vpack.c.b16 %v6208, %v6200
    %v6337 = vpack.c.b16 %v6209, %v6201
    %v6338 = vpack.c.b16 %v6210, %v6202
    %v6339 = vpack.c.b16 %v6211, %v6203
    %v6340 = vpack.c.b16 %v6212, %v6204
    %v6341 = vpack.c.b16 %v6213, %v6205
    %v6342 = vpack.c.b16 %v6214, %v6206
    %6471 = vmatpush.bf16.msra.mxu0 %v6271
    %6472 = vmatpush.bf16.msra.mxu0 %v6263
    %6473 = vmatpush.bf16.msra.mxu0 %v6255
    %6474 = vmatpush.bf16.msra.mxu0 %v6247
    %6475 = vmatpush.bf16.msra.mxu0 %v6239
    %6476 = vmatpush.bf16.msra.mxu0 %v6231
    %6477 = vmatpush.bf16.msra.mxu0 %v6223
    %6478 = vmatpush.bf16.msra.mxu0 %v6215
    %6479 = vmatmul.bf16.gmra.mxu0 %v4981
    %v6480 = vpop.f32.mrf.mxu0
    %v6481 = vadd.f32 %v5646, %v6480
    %v6482 = vpop.f32.mrf.mxu0
    %6483 = vdwg.mxu0
    %6484 = vmatpush.bf16.msra.mxu0 %v6335
    %6485 = vmatpush.bf16.msra.mxu0 %v6327
    %6486 = vmatpush.bf16.msra.mxu0 %v6319
    %6487 = vmatpush.bf16.msra.mxu0 %v6311
    %6488 = vmatpush.bf16.msra.mxu0 %v6303
    %6489 = vmatpush.bf16.msra.mxu0 %v6295
    %6490 = vmatpush.bf16.msra.mxu0 %v6287
    %6491 = vmatpush.bf16.msra.mxu0 %v6279
    %6492 = vmatmul.bf16.gmra.mxu0 %v4982
    %v6493 = vpop.f32.mrf.mxu0
    %v6494 = vadd.f32 %v6481, %v6493
    %v6495 = vpop.f32.mrf.mxu0
    %6496 = vdwg.mxu0
    %6497 = vmatpush.bf16.msra.mxu0 %v6272
    %6498 = vmatpush.bf16.msra.mxu0 %v6264
    %6499 = vmatpush.bf16.msra.mxu0 %v6256
    %6500 = vmatpush.bf16.msra.mxu0 %v6248
    %6501 = vmatpush.bf16.msra.mxu0 %v6240
    %6502 = vmatpush.bf16.msra.mxu0 %v6232
    %6503 = vmatpush.bf16.msra.mxu0 %v6224
    %6504 = vmatpush.bf16.msra.mxu0 %v6216
    %6505 = vmatmul.bf16.gmra.mxu0 %v4981
    %v6506 = vpop.f32.mrf.mxu0
    %v6507 = vadd.f32 %v5672, %v6506
    %v6508 = vpop.f32.mrf.mxu0
    %6509 = vdwg.mxu0
    %6510 = vmatpush.bf16.msra.mxu0 %v6336
    %6511 = vmatpush.bf16.msra.mxu0 %v6328
    %6512 = vmatpush.bf16.msra.mxu0 %v6320
    %6513 = vmatpush.bf16.msra.mxu0 %v6312
    %6514 = vmatpush.bf16.msra.mxu0 %v6304
    %6515 = vmatpush.bf16.msra.mxu0 %v6296
    %6516 = vmatpush.bf16.msra.mxu0 %v6288
    %6517 = vmatpush.bf16.msra.mxu0 %v6280
    %6518 = vmatmul.bf16.gmra.mxu0 %v4982
    %v6519 = vpop.f32.mrf.mxu0
    %v6520 = vadd.f32 %v6507, %v6519
    %v6521 = vpop.f32.mrf.mxu0
    %6522 = vdwg.mxu0
    %6523 = vmatpush.bf16.msra.mxu0 %v6273
    %6524 = vmatpush.bf16.msra.mxu0 %v6265
    %6525 = vmatpush.bf16.msra.mxu0 %v6257
    %6526 = vmatpush.bf16.msra.mxu0 %v6249
    %6527 = vmatpush.bf16.msra.mxu0 %v6241
    %6528 = vmatpush.bf16.msra.mxu0 %v6233
    %6529 = vmatpush.bf16.msra.mxu0 %v6225
    %6530 = vmatpush.bf16.msra.mxu0 %v6217
    %6531 = vmatmul.bf16.gmra.mxu0 %v4981
    %v6532 = vpop.f32.mrf.mxu0
    %v6533 = vadd.f32 %v5698, %v6532
    %v6534 = vpop.f32.mrf.mxu0
    %6535 = vdwg.mxu0
    %6536 = vmatpush.bf16.msra.mxu0 %v6337
    %6537 = vmatpush.bf16.msra.mxu0 %v6329
    %6538 = vmatpush.bf16.msra.mxu0 %v6321
    %6539 = vmatpush.bf16.msra.mxu0 %v6313
    %6540 = vmatpush.bf16.msra.mxu0 %v6305
    %6541 = vmatpush.bf16.msra.mxu0 %v6297
    %6542 = vmatpush.bf16.msra.mxu0 %v6289
    %6543 = vmatpush.bf16.msra.mxu0 %v6281
    %6544 = vmatmul.bf16.gmra.mxu0 %v4982
    %v6545 = vpop.f32.mrf.mxu0
    %v6546 = vadd.f32 %v6533, %v6545
    %v6547 = vpop.f32.mrf.mxu0
    %6548 = vdwg.mxu0
    %6549 = vmatpush.bf16.msra.mxu0 %v6274
    %6550 = vmatpush.bf16.msra.mxu0 %v6266
    %6551 = vmatpush.bf16.msra.mxu0 %v6258
    %6552 = vmatpush.bf16.msra.mxu0 %v6250
    %6553 = vmatpush.bf16.msra.mxu0 %v6242
    %6554 = vmatpush.bf16.msra.mxu0 %v6234
    %6555 = vmatpush.bf16.msra.mxu0 %v6226
    %6556 = vmatpush.bf16.msra.mxu0 %v6218
    %6557 = vmatmul.bf16.gmra.mxu0 %v4981
    %v6558 = vpop.f32.mrf.mxu0
    %v6559 = vadd.f32 %v5724, %v6558
    %v6560 = vpop.f32.mrf.mxu0
    %6561 = vdwg.mxu0
    %6562 = vmatpush.bf16.msra.mxu0 %v6338
    %6563 = vmatpush.bf16.msra.mxu0 %v6330
    %6564 = vmatpush.bf16.msra.mxu0 %v6322
    %6565 = vmatpush.bf16.msra.mxu0 %v6314
    %6566 = vmatpush.bf16.msra.mxu0 %v6306
    %6567 = vmatpush.bf16.msra.mxu0 %v6298
    %6568 = vmatpush.bf16.msra.mxu0 %v6290
    %6569 = vmatpush.bf16.msra.mxu0 %v6282
    %6570 = vmatmul.bf16.gmra.mxu0 %v4982
    %v6571 = vpop.f32.mrf.mxu0
    %v6572 = vadd.f32 %v6559, %v6571
    %v6573 = vpop.f32.mrf.mxu0
    %6574 = vdwg.mxu0
    %6575 = vmatpush.bf16.msra.mxu0 %v6275
    %6576 = vmatpush.bf16.msra.mxu0 %v6267
    %6577 = vmatpush.bf16.msra.mxu0 %v6259
    %6578 = vmatpush.bf16.msra.mxu0 %v6251
    %6579 = vmatpush.bf16.msra.mxu0 %v6243
    %6580 = vmatpush.bf16.msra.mxu0 %v6235
    %6581 = vmatpush.bf16.msra.mxu0 %v6227
    %6582 = vmatpush.bf16.msra.mxu0 %v6219
    %6583 = vmatmul.bf16.gmra.mxu0 %v4981
    %v6584 = vpop.f32.mrf.mxu0
    %v6585 = vadd.f32 %v5750, %v6584
    %v6586 = vpop.f32.mrf.mxu0
    %6587 = vdwg.mxu0
    %6588 = vmatpush.bf16.msra.mxu0 %v6339
    %6589 = vmatpush.bf16.msra.mxu0 %v6331
    %6590 = vmatpush.bf16.msra.mxu0 %v6323
    %6591 = vmatpush.bf16.msra.mxu0 %v6315
    %6592 = vmatpush.bf16.msra.mxu0 %v6307
    %6593 = vmatpush.bf16.msra.mxu0 %v6299
    %6594 = vmatpush.bf16.msra.mxu0 %v6291
    %6595 = vmatpush.bf16.msra.mxu0 %v6283
    %6596 = vmatmul.bf16.gmra.mxu0 %v4982
    %v6597 = vpop.f32.mrf.mxu0
    %v6598 = vadd.f32 %v6585, %v6597
    %v6599 = vpop.f32.mrf.mxu0
    %6600 = vdwg.mxu0
    %6601 = vmatpush.bf16.msra.mxu0 %v6276
    %6602 = vmatpush.bf16.msra.mxu0 %v6268
    %6603 = vmatpush.bf16.msra.mxu0 %v6260
    %6604 = vmatpush.bf16.msra.mxu0 %v6252
    %6605 = vmatpush.bf16.msra.mxu0 %v6244
    %6606 = vmatpush.bf16.msra.mxu0 %v6236
    %6607 = vmatpush.bf16.msra.mxu0 %v6228
    %6608 = vmatpush.bf16.msra.mxu0 %v6220
    %6609 = vmatmul.bf16.gmra.mxu0 %v4981
    %v6610 = vpop.f32.mrf.mxu0
    %v6611 = vadd.f32 %v5776, %v6610
    %v6612 = vpop.f32.mrf.mxu0
    %6613 = vdwg.mxu0
    %6614 = vmatpush.bf16.msra.mxu0 %v6340
    %6615 = vmatpush.bf16.msra.mxu0 %v6332
    %6616 = vmatpush.bf16.msra.mxu0 %v6324
    %6617 = vmatpush.bf16.msra.mxu0 %v6316
    %6618 = vmatpush.bf16.msra.mxu0 %v6308
    %6619 = vmatpush.bf16.msra.mxu0 %v6300
    %6620 = vmatpush.bf16.msra.mxu0 %v6292
    %6621 = vmatpush.bf16.msra.mxu0 %v6284
    %6622 = vmatmul.bf16.gmra.mxu0 %v4982
    %v6623 = vpop.f32.mrf.mxu0
    %v6624 = vadd.f32 %v6611, %v6623
    %v6625 = vpop.f32.mrf.mxu0
    %6626 = vdwg.mxu0
    %6627 = vmatpush.bf16.msra.mxu0 %v6277
    %6628 = vmatpush.bf16.msra.mxu0 %v6269
    %6629 = vmatpush.bf16.msra.mxu0 %v6261
    %6630 = vmatpush.bf16.msra.mxu0 %v6253
    %6631 = vmatpush.bf16.msra.mxu0 %v6245
    %6632 = vmatpush.bf16.msra.mxu0 %v6237
    %6633 = vmatpush.bf16.msra.mxu0 %v6229
    %6634 = vmatpush.bf16.msra.mxu0 %v6221
    %6635 = vmatmul.bf16.gmra.mxu0 %v4981
    %v6636 = vpop.f32.mrf.mxu0
    %v6637 = vadd.f32 %v5802, %v6636
    %v6638 = vpop.f32.mrf.mxu0
    %6639 = vdwg.mxu0
    %6640 = vmatpush.bf16.msra.mxu0 %v6341
    %6641 = vmatpush.bf16.msra.mxu0 %v6333
    %6642 = vmatpush.bf16.msra.mxu0 %v6325
    %6643 = vmatpush.bf16.msra.mxu0 %v6317
    %6644 = vmatpush.bf16.msra.mxu0 %v6309
    %6645 = vmatpush.bf16.msra.mxu0 %v6301
    %6646 = vmatpush.bf16.msra.mxu0 %v6293
    %6647 = vmatpush.bf16.msra.mxu0 %v6285
    %6648 = vmatmul.bf16.gmra.mxu0 %v4982
    %v6649 = vpop.f32.mrf.mxu0
    %v6650 = vadd.f32 %v6637, %v6649
    %v6651 = vpop.f32.mrf.mxu0
    %6652 = vdwg.mxu0
    %6653 = vmatpush.bf16.msra.mxu0 %v6278
    %6654 = vmatpush.bf16.msra.mxu0 %v6270
    %6655 = vmatpush.bf16.msra.mxu0 %v6262
    %6656 = vmatpush.bf16.msra.mxu0 %v6254
    %6657 = vmatpush.bf16.msra.mxu0 %v6246
    %6658 = vmatpush.bf16.msra.mxu0 %v6238
    %6659 = vmatpush.bf16.msra.mxu0 %v6230
    %6660 = vmatpush.bf16.msra.mxu0 %v6222
    %6661 = vmatmul.bf16.gmra.mxu0 %v4981
    %v6662 = vpop.f32.mrf.mxu0
    %v6663 = vadd.f32 %v5828, %v6662
    %v6664 = vpop.f32.mrf.mxu0
    %6665 = vdwg.mxu0
    %6666 = vmatpush.bf16.msra.mxu0 %v6342
    %6667 = vmatpush.bf16.msra.mxu0 %v6334
    %6668 = vmatpush.bf16.msra.mxu0 %v6326
    %6669 = vmatpush.bf16.msra.mxu0 %v6318
    %6670 = vmatpush.bf16.msra.mxu0 %v6310
    %6671 = vmatpush.bf16.msra.mxu0 %v6302
    %6672 = vmatpush.bf16.msra.mxu0 %v6294
    %6673 = vmatpush.bf16.msra.mxu0 %v6286
    %6674 = vmatmul.bf16.gmra.mxu0 %v4982
    %v6675 = vpop.f32.mrf.mxu0
    %v6676 = vadd.f32 %v6663, %v6675
    %v6677 = vpop.f32.mrf.mxu0
    %6678 = vdwg.mxu0
    %v6680 = vperm.slane %v4031, 0
    %v6681 = vperm.slane %v4031, 1
    %v6682 = vperm.slane %v4031, 2
    %v6683 = vperm.slane %v4031, 3
    %v6684 = vperm.slane %v4031, 4
    %v6685 = vperm.slane %v4031, 5
    %v6686 = vperm.slane %v4031, 6
    %v6687 = vperm.slane %v4031, 7
    %v6696 = vadd.f32 %v6494, %v6680
    %v6697 = vadd.f32 %v6520, %v6681
    %v6698 = vadd.f32 %v6546, %v6682
    %v6699 = vadd.f32 %v6572, %v6683
    %v6700 = vadd.f32 %v6598, %v6684
    %v6701 = vadd.f32 %v6624, %v6685
    %v6702 = vadd.f32 %v6650, %v6686
    %v6703 = vadd.f32 %v6676, %v6687
    %v6704 = vxor.u32 %v6696, 2147483648
    %v6705 = vxor.u32 %v6697, 2147483648
    %v6706 = vmul.f32 %v6704, 1.442695
    %v6707 = vpow.pop %v6706
    %v6708 = vmul.f32 %v6705, 1.442695
    %v6709 = vpow.pop %v6708
    %v6710 = vadd.f32 %v6707, 1.0
    %v6711 = vadd.f32 %v6709, 1.0
    %v6712 = vrcp.pop %v6710
    %v6713 = vmul.f32 %v6710, %v6712
    %v6714 = vsub.f32 1.0, %v6713
    %v6715 = vmul.f32 %v6712, %v6714
    %v6716 = vadd.f32 %v6712, %v6715
    %vm6717 = vweird.f32 %v6710
    %vm6718 = vweird.f32 %v6712
    %vm6719 = vmor %vm6717, %vm6718
    %v6720 = vsel %vm6719, %v6712, %v6716
    %v6721 = vand.u32 2147483647, %v6710
    %vm6722 = vcmp.eq.f32.partialorder %v6721, 8.507059e+37
    %v6723 = vand.u32 %v6710, 2147483648
    %v6724 = vor.u32 1.1754944e-38, %v6723
    %v6725 = vsel %vm6722, %v6724, %v6720
    %v6726 = vmul.f32 1.0, %v6725
    %v6727 = vrcp.pop %v6711
    %v6728 = vmul.f32 %v6711, %v6727
    %v6729 = vsub.f32 1.0, %v6728
    %v6730 = vmul.f32 %v6727, %v6729
    %v6731 = vadd.f32 %v6727, %v6730
    %vm6732 = vweird.f32 %v6711
    %vm6733 = vweird.f32 %v6727
    %vm6734 = vmor %vm6732, %vm6733
    %v6735 = vsel %vm6734, %v6727, %v6731
    %v6736 = vand.u32 2147483647, %v6711
    %vm6737 = vcmp.eq.f32.partialorder %v6736, 8.507059e+37
    %v6738 = vand.u32 %v6711, 2147483648
    %v6739 = vor.u32 1.1754944e-38, %v6738
    %v6740 = vsel %vm6737, %v6739, %v6735
    %v6741 = vmul.f32 1.0, %v6740
    %v6742 = vxor.u32 %v6698, 2147483648
    %v6743 = vxor.u32 %v6699, 2147483648
    %v6744 = vmul.f32 %v6742, 1.442695
    %v6745 = vpow.pop %v6744
    %v6746 = vmul.f32 %v6743, 1.442695
    %v6747 = vpow.pop %v6746
    %v6748 = vadd.f32 %v6745, 1.0
    %v6749 = vadd.f32 %v6747, 1.0
    %v6750 = vrcp.pop %v6748
    %v6751 = vmul.f32 %v6748, %v6750
    %v6752 = vsub.f32 1.0, %v6751
    %v6753 = vmul.f32 %v6750, %v6752
    %v6754 = vadd.f32 %v6750, %v6753
    %vm6755 = vweird.f32 %v6748
    %vm6756 = vweird.f32 %v6750
    %vm6757 = vmor %vm6755, %vm6756
    %v6758 = vsel %vm6757, %v6750, %v6754
    %v6759 = vand.u32 2147483647, %v6748
    %vm6760 = vcmp.eq.f32.partialorder %v6759, 8.507059e+37
    %v6761 = vand.u32 %v6748, 2147483648
    %v6762 = vor.u32 1.1754944e-38, %v6761
    %v6763 = vsel %vm6760, %v6762, %v6758
    %v6764 = vmul.f32 1.0, %v6763
    %v6765 = vrcp.pop %v6749
    %v6766 = vmul.f32 %v6749, %v6765
    %v6767 = vsub.f32 1.0, %v6766
    %v6768 = vmul.f32 %v6765, %v6767
    %v6769 = vadd.f32 %v6765, %v6768
    %vm6770 = vweird.f32 %v6749
    %vm6771 = vweird.f32 %v6765
    %vm6772 = vmor %vm6770, %vm6771
    %v6773 = vsel %vm6772, %v6765, %v6769
    %v6774 = vand.u32 2147483647, %v6749
    %vm6775 = vcmp.eq.f32.partialorder %v6774, 8.507059e+37
    %v6776 = vand.u32 %v6749, 2147483648
    %v6777 = vor.u32 1.1754944e-38, %v6776
    %v6778 = vsel %vm6775, %v6777, %v6773
    %v6779 = vmul.f32 1.0, %v6778
    %v6780 = vtanh.pop %v6700
    %v6781 = vtanh.pop %v6701
    %v6782 = vxor.u32 %v6702, 2147483648
    %v6783 = vxor.u32 %v6703, 2147483648
    %v6784 = vmul.f32 %v6782, 1.442695
    %v6785 = vpow.pop %v6784
    %v6786 = vmul.f32 %v6783, 1.442695
    %v6787 = vpow.pop %v6786
    %v6788 = vadd.f32 %v6785, 1.0
    %v6789 = vadd.f32 %v6787, 1.0
    %v6790 = vrcp.pop %v6788
    %v6791 = vmul.f32 %v6788, %v6790
    %v6792 = vsub.f32 1.0, %v6791
    %v6793 = vmul.f32 %v6790, %v6792
    %v6794 = vadd.f32 %v6790, %v6793
    %vm6795 = vweird.f32 %v6788
    %vm6796 = vweird.f32 %v6790
    %vm6797 = vmor %vm6795, %vm6796
    %v6798 = vsel %vm6797, %v6790, %v6794
    %v6799 = vand.u32 2147483647, %v6788
    %vm6800 = vcmp.eq.f32.partialorder %v6799, 8.507059e+37
    %v6801 = vand.u32 %v6788, 2147483648
    %v6802 = vor.u32 1.1754944e-38, %v6801
    %v6803 = vsel %vm6800, %v6802, %v6798
    %v6804 = vmul.f32 1.0, %v6803
    %v6805 = vrcp.pop %v6789
    %v6806 = vmul.f32 %v6789, %v6805
    %v6807 = vsub.f32 1.0, %v6806
    %v6808 = vmul.f32 %v6805, %v6807
    %v6809 = vadd.f32 %v6805, %v6808
    %vm6810 = vweird.f32 %v6789
    %vm6811 = vweird.f32 %v6805
    %vm6812 = vmor %vm6810, %vm6811
    %v6813 = vsel %vm6812, %v6805, %v6809
    %v6814 = vand.u32 2147483647, %v6789
    %vm6815 = vcmp.eq.f32.partialorder %v6814, 8.507059e+37
    %v6816 = vand.u32 %v6789, 2147483648
    %v6817 = vor.u32 1.1754944e-38, %v6816
    %v6818 = vsel %vm6815, %v6817, %v6813
    %v6819 = vmul.f32 1.0, %v6818
    %v6820 = vmul.f32 %v6764, 0.0
    %v6821 = vmul.f32 %v6779, 0.0
    %v6822 = vmul.f32 %v6726, %v6780
    %v6823 = vmul.f32 %v6741, %v6781
    %v6824 = vadd.f32 %v6820, %v6822
    %v6825 = vadd.f32 %v6821, %v6823
    %v6826 = vtanh.pop %v6824
    %v6827 = vtanh.pop %v6825
    %v6828 = vmul.f32 %v6804, %v6826
    %v6829 = vmul.f32 %v6819, %v6827
    %s6830 = scalar_lea.vmem [#allocation2], 16
    %v6831 = vld [vmem:[%s6830] sm:$0xff]
    %v6832 = vld [vmem:[%s6830 + $0x8] sm:$0xff]
    %6833 = vmatpush.bf16.msra.mxu0 %v4474
    %6834 = vmatpush.bf16.msra.mxu0 %v4466
    %6835 = vmatpush.bf16.msra.mxu0 %v4458
    %6836 = vmatpush.bf16.msra.mxu0 %v4450
    %6837 = vmatpush.bf16.msra.mxu0 %v4442
    %6838 = vmatpush.bf16.msra.mxu0 %v4434
    %6839 = vmatpush.bf16.msra.mxu0 %v4426
    %6840 = vmatpush.bf16.msra.mxu0 %v4418
    %6841 = vmatmul.bf16.gmra.mxu0 %v4981
    %v6842 = vpop.f32.mrf.mxu0
    %v6843 = vadd.f32 0.0, %v6842
    %v6844 = vpop.f32.mrf.mxu0
    %6845 = vdwg.mxu0
    %6846 = vmatpush.bf16.msra.mxu0 %v4538
    %6847 = vmatpush.bf16.msra.mxu0 %v4530
    %6848 = vmatpush.bf16.msra.mxu0 %v4522
    %6849 = vmatpush.bf16.msra.mxu0 %v4514
    %6850 = vmatpush.bf16.msra.mxu0 %v4506
    %6851 = vmatpush.bf16.msra.mxu0 %v4498
    %6852 = vmatpush.bf16.msra.mxu0 %v4490
    %6853 = vmatpush.bf16.msra.mxu0 %v4482
    %6854 = vmatmul.bf16.gmra.mxu0 %v4982
    %v6855 = vpop.f32.mrf.mxu0
    %v6856 = vadd.f32 %v6843, %v6855
    %v6857 = vpop.f32.mrf.mxu0
    %6858 = vdwg.mxu0
    %6859 = vmatpush.bf16.msra.mxu0 %v4475
    %6860 = vmatpush.bf16.msra.mxu0 %v4467
    %6861 = vmatpush.bf16.msra.mxu0 %v4459
    %6862 = vmatpush.bf16.msra.mxu0 %v4451
    %6863 = vmatpush.bf16.msra.mxu0 %v4443
    %6864 = vmatpush.bf16.msra.mxu0 %v4435
    %6865 = vmatpush.bf16.msra.mxu0 %v4427
    %6866 = vmatpush.bf16.msra.mxu0 %v4419
    %6867 = vmatmul.bf16.gmra.mxu0 %v4981
    %v6868 = vpop.f32.mrf.mxu0
    %v6869 = vadd.f32 0.0, %v6868
    %v6870 = vpop.f32.mrf.mxu0
    %6871 = vdwg.mxu0
    %6872 = vmatpush.bf16.msra.mxu0 %v4539
    %6873 = vmatpush.bf16.msra.mxu0 %v4531
    %6874 = vmatpush.bf16.msra.mxu0 %v4523
    %6875 = vmatpush.bf16.msra.mxu0 %v4515
    %6876 = vmatpush.bf16.msra.mxu0 %v4507
    %6877 = vmatpush.bf16.msra.mxu0 %v4499
    %6878 = vmatpush.bf16.msra.mxu0 %v4491
    %6879 = vmatpush.bf16.msra.mxu0 %v4483
    %6880 = vmatmul.bf16.gmra.mxu0 %v4982
    %v6881 = vpop.f32.mrf.mxu0
    %v6882 = vadd.f32 %v6869, %v6881
    %v6883 = vpop.f32.mrf.mxu0
    %6884 = vdwg.mxu0
    %6885 = vmatpush.bf16.msra.mxu0 %v4476
    %6886 = vmatpush.bf16.msra.mxu0 %v4468
    %6887 = vmatpush.bf16.msra.mxu0 %v4460
    %6888 = vmatpush.bf16.msra.mxu0 %v4452
    %6889 = vmatpush.bf16.msra.mxu0 %v4444
    %6890 = vmatpush.bf16.msra.mxu0 %v4436
    %6891 = vmatpush.bf16.msra.mxu0 %v4428
    %6892 = vmatpush.bf16.msra.mxu0 %v4420
    %6893 = vmatmul.bf16.gmra.mxu0 %v4981
    %v6894 = vpop.f32.mrf.mxu0
    %v6895 = vadd.f32 0.0, %v6894
    %v6896 = vpop.f32.mrf.mxu0
    %6897 = vdwg.mxu0
    %6898 = vmatpush.bf16.msra.mxu0 %v4540
    %6899 = vmatpush.bf16.msra.mxu0 %v4532
    %6900 = vmatpush.bf16.msra.mxu0 %v4524
    %6901 = vmatpush.bf16.msra.mxu0 %v4516
    %6902 = vmatpush.bf16.msra.mxu0 %v4508
    %6903 = vmatpush.bf16.msra.mxu0 %v4500
    %6904 = vmatpush.bf16.msra.mxu0 %v4492
    %6905 = vmatpush.bf16.msra.mxu0 %v4484
    %6906 = vmatmul.bf16.gmra.mxu0 %v4982
    %v6907 = vpop.f32.mrf.mxu0
    %v6908 = vadd.f32 %v6895, %v6907
    %v6909 = vpop.f32.mrf.mxu0
    %6910 = vdwg.mxu0
    %6911 = vmatpush.bf16.msra.mxu0 %v4477
    %6912 = vmatpush.bf16.msra.mxu0 %v4469
    %6913 = vmatpush.bf16.msra.mxu0 %v4461
    %6914 = vmatpush.bf16.msra.mxu0 %v4453
    %6915 = vmatpush.bf16.msra.mxu0 %v4445
    %6916 = vmatpush.bf16.msra.mxu0 %v4437
    %6917 = vmatpush.bf16.msra.mxu0 %v4429
    %6918 = vmatpush.bf16.msra.mxu0 %v4421
    %6919 = vmatmul.bf16.gmra.mxu0 %v4981
    %v6920 = vpop.f32.mrf.mxu0
    %v6921 = vadd.f32 0.0, %v6920
    %v6922 = vpop.f32.mrf.mxu0
    %6923 = vdwg.mxu0
    %6924 = vmatpush.bf16.msra.mxu0 %v4541
    %6925 = vmatpush.bf16.msra.mxu0 %v4533
    %6926 = vmatpush.bf16.msra.mxu0 %v4525
    %6927 = vmatpush.bf16.msra.mxu0 %v4517
    %6928 = vmatpush.bf16.msra.mxu0 %v4509
    %6929 = vmatpush.bf16.msra.mxu0 %v4501
    %6930 = vmatpush.bf16.msra.mxu0 %v4493
    %6931 = vmatpush.bf16.msra.mxu0 %v4485
    %6932 = vmatmul.bf16.gmra.mxu0 %v4982
    %v6933 = vpop.f32.mrf.mxu0
    %v6934 = vadd.f32 %v6921, %v6933
    %v6935 = vpop.f32.mrf.mxu0
    %6936 = vdwg.mxu0
    %6937 = vmatpush.bf16.msra.mxu0 %v4478
    %6938 = vmatpush.bf16.msra.mxu0 %v4470
    %6939 = vmatpush.bf16.msra.mxu0 %v4462
    %6940 = vmatpush.bf16.msra.mxu0 %v4454
    %6941 = vmatpush.bf16.msra.mxu0 %v4446
    %6942 = vmatpush.bf16.msra.mxu0 %v4438
    %6943 = vmatpush.bf16.msra.mxu0 %v4430
    %6944 = vmatpush.bf16.msra.mxu0 %v4422
    %6945 = vmatmul.bf16.gmra.mxu0 %v4981
    %v6946 = vpop.f32.mrf.mxu0
    %v6947 = vadd.f32 0.0, %v6946
    %v6948 = vpop.f32.mrf.mxu0
    %6949 = vdwg.mxu0
    %6950 = vmatpush.bf16.msra.mxu0 %v4542
    %6951 = vmatpush.bf16.msra.mxu0 %v4534
    %6952 = vmatpush.bf16.msra.mxu0 %v4526
    %6953 = vmatpush.bf16.msra.mxu0 %v4518
    %6954 = vmatpush.bf16.msra.mxu0 %v4510
    %6955 = vmatpush.bf16.msra.mxu0 %v4502
    %6956 = vmatpush.bf16.msra.mxu0 %v4494
    %6957 = vmatpush.bf16.msra.mxu0 %v4486
    %6958 = vmatmul.bf16.gmra.mxu0 %v4982
    %v6959 = vpop.f32.mrf.mxu0
    %v6960 = vadd.f32 %v6947, %v6959
    %v6961 = vpop.f32.mrf.mxu0
    %6962 = vdwg.mxu0
    %6963 = vmatpush.bf16.msra.mxu0 %v4479
    %6964 = vmatpush.bf16.msra.mxu0 %v4471
    %6965 = vmatpush.bf16.msra.mxu0 %v4463
    %6966 = vmatpush.bf16.msra.mxu0 %v4455
    %6967 = vmatpush.bf16.msra.mxu0 %v4447
    %6968 = vmatpush.bf16.msra.mxu0 %v4439
    %6969 = vmatpush.bf16.msra.mxu0 %v4431
    %6970 = vmatpush.bf16.msra.mxu0 %v4423
    %6971 = vmatmul.bf16.gmra.mxu0 %v4981
    %v6972 = vpop.f32.mrf.mxu0
    %v6973 = vadd.f32 0.0, %v6972
    %v6974 = vpop.f32.mrf.mxu0
    %6975 = vdwg.mxu0
    %6976 = vmatpush.bf16.msra.mxu0 %v4543
    %6977 = vmatpush.bf16.msra.mxu0 %v4535
    %6978 = vmatpush.bf16.msra.mxu0 %v4527
    %6979 = vmatpush.bf16.msra.mxu0 %v4519
    %6980 = vmatpush.bf16.msra.mxu0 %v4511
    %6981 = vmatpush.bf16.msra.mxu0 %v4503
    %6982 = vmatpush.bf16.msra.mxu0 %v4495
    %6983 = vmatpush.bf16.msra.mxu0 %v4487
    %6984 = vmatmul.bf16.gmra.mxu0 %v4982
    %v6985 = vpop.f32.mrf.mxu0
    %v6986 = vadd.f32 %v6973, %v6985
    %v6987 = vpop.f32.mrf.mxu0
    %6988 = vdwg.mxu0
    %6989 = vmatpush.bf16.msra.mxu0 %v4480
    %6990 = vmatpush.bf16.msra.mxu0 %v4472
    %6991 = vmatpush.bf16.msra.mxu0 %v4464
    %6992 = vmatpush.bf16.msra.mxu0 %v4456
    %6993 = vmatpush.bf16.msra.mxu0 %v4448
    %6994 = vmatpush.bf16.msra.mxu0 %v4440
    %6995 = vmatpush.bf16.msra.mxu0 %v4432
    %6996 = vmatpush.bf16.msra.mxu0 %v4424
    %6997 = vmatmul.bf16.gmra.mxu0 %v4981
    %v6998 = vpop.f32.mrf.mxu0
    %v6999 = vadd.f32 0.0, %v6998
    %v7000 = vpop.f32.mrf.mxu0
    %7001 = vdwg.mxu0
    %7002 = vmatpush.bf16.msra.mxu0 %v4544
    %7003 = vmatpush.bf16.msra.mxu0 %v4536
    %7004 = vmatpush.bf16.msra.mxu0 %v4528
    %7005 = vmatpush.bf16.msra.mxu0 %v4520
    %7006 = vmatpush.bf16.msra.mxu0 %v4512
    %7007 = vmatpush.bf16.msra.mxu0 %v4504
    %7008 = vmatpush.bf16.msra.mxu0 %v4496
    %7009 = vmatpush.bf16.msra.mxu0 %v4488
    %7010 = vmatmul.bf16.gmra.mxu0 %v4982
    %v7011 = vpop.f32.mrf.mxu0
    %v7012 = vadd.f32 %v6999, %v7011
    %v7013 = vpop.f32.mrf.mxu0
    %7014 = vdwg.mxu0
    %7015 = vmatpush.bf16.msra.mxu0 %v4481
    %7016 = vmatpush.bf16.msra.mxu0 %v4473
    %7017 = vmatpush.bf16.msra.mxu0 %v4465
    %7018 = vmatpush.bf16.msra.mxu0 %v4457
    %7019 = vmatpush.bf16.msra.mxu0 %v4449
    %7020 = vmatpush.bf16.msra.mxu0 %v4441
    %7021 = vmatpush.bf16.msra.mxu0 %v4433
    %7022 = vmatpush.bf16.msra.mxu0 %v4425
    %7023 = vmatmul.bf16.gmra.mxu0 %v4981
    %v7024 = vpop.f32.mrf.mxu0
    %v7025 = vadd.f32 0.0, %v7024
    %v7026 = vpop.f32.mrf.mxu0
    %7027 = vdwg.mxu0
    %7028 = vmatpush.bf16.msra.mxu0 %v4545
    %7029 = vmatpush.bf16.msra.mxu0 %v4537
    %7030 = vmatpush.bf16.msra.mxu0 %v4529
    %7031 = vmatpush.bf16.msra.mxu0 %v4521
    %7032 = vmatpush.bf16.msra.mxu0 %v4513
    %7033 = vmatpush.bf16.msra.mxu0 %v4505
    %7034 = vmatpush.bf16.msra.mxu0 %v4497
    %7035 = vmatpush.bf16.msra.mxu0 %v4489
    %7036 = vmatmul.bf16.gmra.mxu0 %v4982
    %v7037 = vpop.f32.mrf.mxu0
    %v7038 = vadd.f32 %v7025, %v7037
    %v7039 = vpop.f32.mrf.mxu0
    %7040 = vdwg.mxu0
    %v7049 = vrot.slane %v6882, 6
    %v7050 = vrot.slane %v6908, 4
    %v7051 = vrot.slane %v6934, 2
    %v7052 = vrot.slane %v6986, 6
    %v7053 = vrot.slane %v7012, 4
    %v7054 = vrot.slane %v7038, 2
    %v7055 = vsel %vm980, %v6856, %v7049
    %v7056 = vsel %vm982, %v7050, %v7051
    %v7057 = vsel %vm984, %v7055, %v7056
    %v7058 = vsel %vm980, %v6960, %v7052
    %v7059 = vsel %vm982, %v7053, %v7054
    %v7060 = vsel %vm984, %v7058, %v7059
    %v7063 = vadd.f32 %v6831, %v7057
    %v7064 = vadd.f32 %v6832, %v7060
    %v7065 = vxor.u32 %v7063, 2147483648
    %v7066 = vmul.f32 %v7065, 1.442695
    %v7067 = vpow.pop %v7066
    %v7068 = vadd.f32 %v7067, 1.0
    %v7069 = vrcp.pop %v7068
    %v7070 = vmul.f32 %v7068, %v7069
    %v7071 = vsub.f32 1.0, %v7070
    %v7072 = vmul.f32 %v7069, %v7071
    %v7073 = vadd.f32 %v7069, %v7072
    %vm7074 = vweird.f32 %v7068
    %vm7075 = vweird.f32 %v7069
    %vm7076 = vmor %vm7074, %vm7075
    %v7077 = vsel %vm7076, %v7069, %v7073
    %v7078 = vand.u32 2147483647, %v7068
    %vm7079 = vcmp.eq.f32.partialorder %v7078, 8.507059e+37
    %v7080 = vand.u32 %v7068, 2147483648
    %v7081 = vor.u32 1.1754944e-38, %v7080
    %v7082 = vsel %vm7079, %v7081, %v7077
    %v7083 = vmul.f32 1.0, %v7082
    %v7085 = vrot.slane %v7063, 4
    %v7087 = vxor.u32 %v7085, 2147483648
    %v7088 = vmul.f32 %v7087, 1.442695
    %v7089 = vpow.pop %v7088
    %v7090 = vadd.f32 %v7089, 1.0
    %v7091 = vrcp.pop %v7090
    %v7092 = vmul.f32 %v7090, %v7091
    %v7093 = vsub.f32 1.0, %v7092
    %v7094 = vmul.f32 %v7091, %v7093
    %v7095 = vadd.f32 %v7091, %v7094
    %vm7096 = vweird.f32 %v7090
    %vm7097 = vweird.f32 %v7091
    %vm7098 = vmor %vm7096, %vm7097
    %v7099 = vsel %vm7098, %v7091, %v7095
    %v7100 = vand.u32 2147483647, %v7090
    %vm7101 = vcmp.eq.f32.partialorder %v7100, 8.507059e+37
    %v7102 = vand.u32 %v7090, 2147483648
    %v7103 = vor.u32 1.1754944e-38, %v7102
    %v7104 = vsel %vm7101, %v7103, %v7099
    %v7105 = vmul.f32 1.0, %v7104
    %v7106 = vtanh.pop %v7064
    %v7108 = vrot.slane %v7064, 4
    %v7110 = vxor.u32 %v7108, 2147483648
    %v7111 = vmul.f32 %v7110, 1.442695
    %v7112 = vpow.pop %v7111
    %v7113 = vadd.f32 %v7112, 1.0
    %v7114 = vrcp.pop %v7113
    %v7115 = vmul.f32 %v7113, %v7114
    %v7116 = vsub.f32 1.0, %v7115
    %v7117 = vmul.f32 %v7114, %v7116
    %v7118 = vadd.f32 %v7114, %v7117
    %vm7119 = vweird.f32 %v7113
    %vm7120 = vweird.f32 %v7114
    %vm7121 = vmor %vm7119, %vm7120
    %v7122 = vsel %vm7121, %v7114, %v7118
    %v7123 = vand.u32 2147483647, %v7113
    %vm7124 = vcmp.eq.f32.partialorder %v7123, 8.507059e+37
    %v7125 = vand.u32 %v7113, 2147483648
    %v7126 = vor.u32 1.1754944e-38, %v7125
    %v7127 = vsel %vm7124, %v7126, %v7122
    %v7128 = vmul.f32 1.0, %v7127
    %v7129 = vmul.f32 %v7105, %v4972
    %v7130 = vmul.f32 %v7083, %v7106
    %v7131 = vadd.f32 %v7129, %v7130
    %v7132 = vtanh.pop %v7131
    %v7133 = vmul.f32 %v7128, %v7132
    %7135 = vst [vmem:[#allocation1] ss:$4 sm:$0xff] %v7133
    %v7136 = vld.sshfl [vmem:[#allocation1] sm:$0xff pattern:$0x73625140]
    %v7137 = vld.sshfl [vmem:[#allocation1 + $0x8] sm:$0xff pattern:$0x73625140]
    %v7140 = vpack.c.bf16 %v7136, %v7136
    %v7141 = vpack.c.bf16 %v7137, %v7137
    %v7142 = vpack.c.bf16 %v6828, %v6828
    %v7143 = vpack.c.bf16 %v6829, %v6829
    %7144 = vmatpush.bf16.msra.mxu0 %v5423
    %7145 = vmatpush.bf16.msra.mxu0 %v5415
    %7146 = vmatpush.bf16.msra.mxu0 %v5407
    %7147 = vmatpush.bf16.msra.mxu0 %v5399
    %7148 = vmatpush.bf16.msra.mxu0 %v5391
    %7149 = vmatpush.bf16.msra.mxu0 %v5383
    %7150 = vmatpush.bf16.msra.mxu0 %v5375
    %7151 = vmatpush.bf16.msra.mxu0 %v5367
    %7152 = vmatmul.bf16.gmra.mxu0 %v7142
    %v7153 = vpop.f32.mrf.mxu0
    %v7154 = vadd.f32 0.0, %v7153
    %v7155 = vpop.f32.mrf.mxu0
    %7156 = vdwg.mxu0
    %7157 = vmatpush.bf16.msra.mxu0 %v5487
    %7158 = vmatpush.bf16.msra.mxu0 %v5479
    %7159 = vmatpush.bf16.msra.mxu0 %v5471
    %7160 = vmatpush.bf16.msra.mxu0 %v5463
    %7161 = vmatpush.bf16.msra.mxu0 %v5455
    %7162 = vmatpush.bf16.msra.mxu0 %v5447
    %7163 = vmatpush.bf16.msra.mxu0 %v5439
    %7164 = vmatpush.bf16.msra.mxu0 %v5431
    %7165 = vmatmul.bf16.gmra.mxu0 %v7143
    %v7166 = vpop.f32.mrf.mxu0
    %v7167 = vadd.f32 %v7154, %v7166
    %v7168 = vpop.f32.mrf.mxu0
    %7169 = vdwg.mxu0
    %7170 = vmatpush.bf16.msra.mxu0 %v5424
    %7171 = vmatpush.bf16.msra.mxu0 %v5416
    %7172 = vmatpush.bf16.msra.mxu0 %v5408
    %7173 = vmatpush.bf16.msra.mxu0 %v5400
    %7174 = vmatpush.bf16.msra.mxu0 %v5392
    %7175 = vmatpush.bf16.msra.mxu0 %v5384
    %7176 = vmatpush.bf16.msra.mxu0 %v5376
    %7177 = vmatpush.bf16.msra.mxu0 %v5368
    %7178 = vmatmul.bf16.gmra.mxu0 %v7142
    %v7179 = vpop.f32.mrf.mxu0
    %v7180 = vadd.f32 0.0, %v7179
    %v7181 = vpop.f32.mrf.mxu0
    %7182 = vdwg.mxu0
    %7183 = vmatpush.bf16.msra.mxu0 %v5488
    %7184 = vmatpush.bf16.msra.mxu0 %v5480
    %7185 = vmatpush.bf16.msra.mxu0 %v5472
    %7186 = vmatpush.bf16.msra.mxu0 %v5464
    %7187 = vmatpush.bf16.msra.mxu0 %v5456
    %7188 = vmatpush.bf16.msra.mxu0 %v5448
    %7189 = vmatpush.bf16.msra.mxu0 %v5440
    %7190 = vmatpush.bf16.msra.mxu0 %v5432
    %7191 = vmatmul.bf16.gmra.mxu0 %v7143
    %v7192 = vpop.f32.mrf.mxu0
    %v7193 = vadd.f32 %v7180, %v7192
    %v7194 = vpop.f32.mrf.mxu0
    %7195 = vdwg.mxu0
    %7196 = vmatpush.bf16.msra.mxu0 %v5425
    %7197 = vmatpush.bf16.msra.mxu0 %v5417
    %7198 = vmatpush.bf16.msra.mxu0 %v5409
    %7199 = vmatpush.bf16.msra.mxu0 %v5401
    %7200 = vmatpush.bf16.msra.mxu0 %v5393
    %7201 = vmatpush.bf16.msra.mxu0 %v5385
    %7202 = vmatpush.bf16.msra.mxu0 %v5377
    %7203 = vmatpush.bf16.msra.mxu0 %v5369
    %7204 = vmatmul.bf16.gmra.mxu0 %v7142
    %v7205 = vpop.f32.mrf.mxu0
    %v7206 = vadd.f32 0.0, %v7205
    %v7207 = vpop.f32.mrf.mxu0
    %7208 = vdwg.mxu0
    %7209 = vmatpush.bf16.msra.mxu0 %v5489
    %7210 = vmatpush.bf16.msra.mxu0 %v5481
    %7211 = vmatpush.bf16.msra.mxu0 %v5473
    %7212 = vmatpush.bf16.msra.mxu0 %v5465
    %7213 = vmatpush.bf16.msra.mxu0 %v5457
    %7214 = vmatpush.bf16.msra.mxu0 %v5449
    %7215 = vmatpush.bf16.msra.mxu0 %v5441
    %7216 = vmatpush.bf16.msra.mxu0 %v5433
    %7217 = vmatmul.bf16.gmra.mxu0 %v7143
    %v7218 = vpop.f32.mrf.mxu0
    %v7219 = vadd.f32 %v7206, %v7218
    %v7220 = vpop.f32.mrf.mxu0
    %7221 = vdwg.mxu0
    %7222 = vmatpush.bf16.msra.mxu0 %v5426
    %7223 = vmatpush.bf16.msra.mxu0 %v5418
    %7224 = vmatpush.bf16.msra.mxu0 %v5410
    %7225 = vmatpush.bf16.msra.mxu0 %v5402
    %7226 = vmatpush.bf16.msra.mxu0 %v5394
    %7227 = vmatpush.bf16.msra.mxu0 %v5386
    %7228 = vmatpush.bf16.msra.mxu0 %v5378
    %7229 = vmatpush.bf16.msra.mxu0 %v5370
    %7230 = vmatmul.bf16.gmra.mxu0 %v7142
    %v7231 = vpop.f32.mrf.mxu0
    %v7232 = vadd.f32 0.0, %v7231
    %v7233 = vpop.f32.mrf.mxu0
    %7234 = vdwg.mxu0
    %7235 = vmatpush.bf16.msra.mxu0 %v5490
    %7236 = vmatpush.bf16.msra.mxu0 %v5482
    %7237 = vmatpush.bf16.msra.mxu0 %v5474
    %7238 = vmatpush.bf16.msra.mxu0 %v5466
    %7239 = vmatpush.bf16.msra.mxu0 %v5458
    %7240 = vmatpush.bf16.msra.mxu0 %v5450
    %7241 = vmatpush.bf16.msra.mxu0 %v5442
    %7242 = vmatpush.bf16.msra.mxu0 %v5434
    %7243 = vmatmul.bf16.gmra.mxu0 %v7143
    %v7244 = vpop.f32.mrf.mxu0
    %v7245 = vadd.f32 %v7232, %v7244
    %v7246 = vpop.f32.mrf.mxu0
    %7247 = vdwg.mxu0
    %7248 = vmatpush.bf16.msra.mxu0 %v5427
    %7249 = vmatpush.bf16.msra.mxu0 %v5419
    %7250 = vmatpush.bf16.msra.mxu0 %v5411
    %7251 = vmatpush.bf16.msra.mxu0 %v5403
    %7252 = vmatpush.bf16.msra.mxu0 %v5395
    %7253 = vmatpush.bf16.msra.mxu0 %v5387
    %7254 = vmatpush.bf16.msra.mxu0 %v5379
    %7255 = vmatpush.bf16.msra.mxu0 %v5371
    %7256 = vmatmul.bf16.gmra.mxu0 %v7142
    %v7257 = vpop.f32.mrf.mxu0
    %v7258 = vadd.f32 0.0, %v7257
    %v7259 = vpop.f32.mrf.mxu0
    %7260 = vdwg.mxu0
    %7261 = vmatpush.bf16.msra.mxu0 %v5491
    %7262 = vmatpush.bf16.msra.mxu0 %v5483
    %7263 = vmatpush.bf16.msra.mxu0 %v5475
    %7264 = vmatpush.bf16.msra.mxu0 %v5467
    %7265 = vmatpush.bf16.msra.mxu0 %v5459
    %7266 = vmatpush.bf16.msra.mxu0 %v5451
    %7267 = vmatpush.bf16.msra.mxu0 %v5443
    %7268 = vmatpush.bf16.msra.mxu0 %v5435
    %7269 = vmatmul.bf16.gmra.mxu0 %v7143
    %v7270 = vpop.f32.mrf.mxu0
    %v7271 = vadd.f32 %v7258, %v7270
    %v7272 = vpop.f32.mrf.mxu0
    %7273 = vdwg.mxu0
    %7274 = vmatpush.bf16.msra.mxu0 %v5428
    %7275 = vmatpush.bf16.msra.mxu0 %v5420
    %7276 = vmatpush.bf16.msra.mxu0 %v5412
    %7277 = vmatpush.bf16.msra.mxu0 %v5404
    %7278 = vmatpush.bf16.msra.mxu0 %v5396
    %7279 = vmatpush.bf16.msra.mxu0 %v5388
    %7280 = vmatpush.bf16.msra.mxu0 %v5380
    %7281 = vmatpush.bf16.msra.mxu0 %v5372
    %7282 = vmatmul.bf16.gmra.mxu0 %v7142
    %v7283 = vpop.f32.mrf.mxu0
    %v7284 = vadd.f32 0.0, %v7283
    %v7285 = vpop.f32.mrf.mxu0
    %7286 = vdwg.mxu0
    %7287 = vmatpush.bf16.msra.mxu0 %v5492
    %7288 = vmatpush.bf16.msra.mxu0 %v5484
    %7289 = vmatpush.bf16.msra.mxu0 %v5476
    %7290 = vmatpush.bf16.msra.mxu0 %v5468
    %7291 = vmatpush.bf16.msra.mxu0 %v5460
    %7292 = vmatpush.bf16.msra.mxu0 %v5452
    %7293 = vmatpush.bf16.msra.mxu0 %v5444
    %7294 = vmatpush.bf16.msra.mxu0 %v5436
    %7295 = vmatmul.bf16.gmra.mxu0 %v7143
    %v7296 = vpop.f32.mrf.mxu0
    %v7297 = vadd.f32 %v7284, %v7296
    %v7298 = vpop.f32.mrf.mxu0
    %7299 = vdwg.mxu0
    %7300 = vmatpush.bf16.msra.mxu0 %v5429
    %7301 = vmatpush.bf16.msra.mxu0 %v5421
    %7302 = vmatpush.bf16.msra.mxu0 %v5413
    %7303 = vmatpush.bf16.msra.mxu0 %v5405
    %7304 = vmatpush.bf16.msra.mxu0 %v5397
    %7305 = vmatpush.bf16.msra.mxu0 %v5389
    %7306 = vmatpush.bf16.msra.mxu0 %v5381
    %7307 = vmatpush.bf16.msra.mxu0 %v5373
    %7308 = vmatmul.bf16.gmra.mxu0 %v7142
    %v7309 = vpop.f32.mrf.mxu0
    %v7310 = vadd.f32 0.0, %v7309
    %v7311 = vpop.f32.mrf.mxu0
    %7312 = vdwg.mxu0
    %7313 = vmatpush.bf16.msra.mxu0 %v5493
    %7314 = vmatpush.bf16.msra.mxu0 %v5485
    %7315 = vmatpush.bf16.msra.mxu0 %v5477
    %7316 = vmatpush.bf16.msra.mxu0 %v5469
    %7317 = vmatpush.bf16.msra.mxu0 %v5461
    %7318 = vmatpush.bf16.msra.mxu0 %v5453
    %7319 = vmatpush.bf16.msra.mxu0 %v5445
    %7320 = vmatpush.bf16.msra.mxu0 %v5437
    %7321 = vmatmul.bf16.gmra.mxu0 %v7143
    %v7322 = vpop.f32.mrf.mxu0
    %v7323 = vadd.f32 %v7310, %v7322
    %v7324 = vpop.f32.mrf.mxu0
    %7325 = vdwg.mxu0
    %7326 = vmatpush.bf16.msra.mxu0 %v5430
    %7327 = vmatpush.bf16.msra.mxu0 %v5422
    %7328 = vmatpush.bf16.msra.mxu0 %v5414
    %7329 = vmatpush.bf16.msra.mxu0 %v5406
    %7330 = vmatpush.bf16.msra.mxu0 %v5398
    %7331 = vmatpush.bf16.msra.mxu0 %v5390
    %7332 = vmatpush.bf16.msra.mxu0 %v5382
    %7333 = vmatpush.bf16.msra.mxu0 %v5374
    %7334 = vmatmul.bf16.gmra.mxu0 %v7142
    %v7335 = vpop.f32.mrf.mxu0
    %v7336 = vadd.f32 0.0, %v7335
    %v7337 = vpop.f32.mrf.mxu0
    %7338 = vdwg.mxu0
    %7339 = vmatpush.bf16.msra.mxu0 %v5494
    %7340 = vmatpush.bf16.msra.mxu0 %v5486
    %7341 = vmatpush.bf16.msra.mxu0 %v5478
    %7342 = vmatpush.bf16.msra.mxu0 %v5470
    %7343 = vmatpush.bf16.msra.mxu0 %v5462
    %7344 = vmatpush.bf16.msra.mxu0 %v5454
    %7345 = vmatpush.bf16.msra.mxu0 %v5446
    %7346 = vmatpush.bf16.msra.mxu0 %v5438
    %7347 = vmatmul.bf16.gmra.mxu0 %v7143
    %v7348 = vpop.f32.mrf.mxu0
    %v7349 = vadd.f32 %v7336, %v7348
    %v7350 = vpop.f32.mrf.mxu0
    %7351 = vdwg.mxu0
    %7352 = vmatpush.bf16.msra.mxu0 %v6271
    %7353 = vmatpush.bf16.msra.mxu0 %v6263
    %7354 = vmatpush.bf16.msra.mxu0 %v6255
    %7355 = vmatpush.bf16.msra.mxu0 %v6247
    %7356 = vmatpush.bf16.msra.mxu0 %v6239
    %7357 = vmatpush.bf16.msra.mxu0 %v6231
    %7358 = vmatpush.bf16.msra.mxu0 %v6223
    %7359 = vmatpush.bf16.msra.mxu0 %v6215
    %7360 = vmatmul.bf16.gmra.mxu0 %v7140
    %v7361 = vpop.f32.mrf.mxu0
    %v7362 = vadd.f32 %v7167, %v7361
    %v7363 = vpop.f32.mrf.mxu0
    %7364 = vdwg.mxu0
    %7365 = vmatpush.bf16.msra.mxu0 %v6335
    %7366 = vmatpush.bf16.msra.mxu0 %v6327
    %7367 = vmatpush.bf16.msra.mxu0 %v6319
    %7368 = vmatpush.bf16.msra.mxu0 %v6311
    %7369 = vmatpush.bf16.msra.mxu0 %v6303
    %7370 = vmatpush.bf16.msra.mxu0 %v6295
    %7371 = vmatpush.bf16.msra.mxu0 %v6287
    %7372 = vmatpush.bf16.msra.mxu0 %v6279
    %7373 = vmatmul.bf16.gmra.mxu0 %v7141
    %v7374 = vpop.f32.mrf.mxu0
    %v7375 = vadd.f32 %v7362, %v7374
    %v7376 = vpop.f32.mrf.mxu0
    %7377 = vdwg.mxu0
    %7378 = vmatpush.bf16.msra.mxu0 %v6272
    %7379 = vmatpush.bf16.msra.mxu0 %v6264
    %7380 = vmatpush.bf16.msra.mxu0 %v6256
    %7381 = vmatpush.bf16.msra.mxu0 %v6248
    %7382 = vmatpush.bf16.msra.mxu0 %v6240
    %7383 = vmatpush.bf16.msra.mxu0 %v6232
    %7384 = vmatpush.bf16.msra.mxu0 %v6224
    %7385 = vmatpush.bf16.msra.mxu0 %v6216
    %7386 = vmatmul.bf16.gmra.mxu0 %v7140
    %v7387 = vpop.f32.mrf.mxu0
    %v7388 = vadd.f32 %v7193, %v7387
    %v7389 = vpop.f32.mrf.mxu0
    %7390 = vdwg.mxu0
    %7391 = vmatpush.bf16.msra.mxu0 %v6336
    %7392 = vmatpush.bf16.msra.mxu0 %v6328
    %7393 = vmatpush.bf16.msra.mxu0 %v6320
    %7394 = vmatpush.bf16.msra.mxu0 %v6312
    %7395 = vmatpush.bf16.msra.mxu0 %v6304
    %7396 = vmatpush.bf16.msra.mxu0 %v6296
    %7397 = vmatpush.bf16.msra.mxu0 %v6288
    %7398 = vmatpush.bf16.msra.mxu0 %v6280
    %7399 = vmatmul.bf16.gmra.mxu0 %v7141
    %v7400 = vpop.f32.mrf.mxu0
    %v7401 = vadd.f32 %v7388, %v7400
    %v7402 = vpop.f32.mrf.mxu0
    %7403 = vdwg.mxu0
    %7404 = vmatpush.bf16.msra.mxu0 %v6273
    %7405 = vmatpush.bf16.msra.mxu0 %v6265
    %7406 = vmatpush.bf16.msra.mxu0 %v6257
    %7407 = vmatpush.bf16.msra.mxu0 %v6249
    %7408 = vmatpush.bf16.msra.mxu0 %v6241
    %7409 = vmatpush.bf16.msra.mxu0 %v6233
    %7410 = vmatpush.bf16.msra.mxu0 %v6225
    %7411 = vmatpush.bf16.msra.mxu0 %v6217
    %7412 = vmatmul.bf16.gmra.mxu0 %v7140
    %v7413 = vpop.f32.mrf.mxu0
    %v7414 = vadd.f32 %v7219, %v7413
    %v7415 = vpop.f32.mrf.mxu0
    %7416 = vdwg.mxu0
    %7417 = vmatpush.bf16.msra.mxu0 %v6337
    %7418 = vmatpush.bf16.msra.mxu0 %v6329
    %7419 = vmatpush.bf16.msra.mxu0 %v6321
    %7420 = vmatpush.bf16.msra.mxu0 %v6313
    %7421 = vmatpush.bf16.msra.mxu0 %v6305
    %7422 = vmatpush.bf16.msra.mxu0 %v6297
    %7423 = vmatpush.bf16.msra.mxu0 %v6289
    %7424 = vmatpush.bf16.msra.mxu0 %v6281
    %7425 = vmatmul.bf16.gmra.mxu0 %v7141
    %v7426 = vpop.f32.mrf.mxu0
    %v7427 = vadd.f32 %v7414, %v7426
    %v7428 = vpop.f32.mrf.mxu0
    %7429 = vdwg.mxu0
    %7430 = vmatpush.bf16.msra.mxu0 %v6274
    %7431 = vmatpush.bf16.msra.mxu0 %v6266
    %7432 = vmatpush.bf16.msra.mxu0 %v6258
    %7433 = vmatpush.bf16.msra.mxu0 %v6250
    %7434 = vmatpush.bf16.msra.mxu0 %v6242
    %7435 = vmatpush.bf16.msra.mxu0 %v6234
    %7436 = vmatpush.bf16.msra.mxu0 %v6226
    %7437 = vmatpush.bf16.msra.mxu0 %v6218
    %7438 = vmatmul.bf16.gmra.mxu0 %v7140
    %v7439 = vpop.f32.mrf.mxu0
    %v7440 = vadd.f32 %v7245, %v7439
    %v7441 = vpop.f32.mrf.mxu0
    %7442 = vdwg.mxu0
    %7443 = vmatpush.bf16.msra.mxu0 %v6338
    %7444 = vmatpush.bf16.msra.mxu0 %v6330
    %7445 = vmatpush.bf16.msra.mxu0 %v6322
    %7446 = vmatpush.bf16.msra.mxu0 %v6314
    %7447 = vmatpush.bf16.msra.mxu0 %v6306
    %7448 = vmatpush.bf16.msra.mxu0 %v6298
    %7449 = vmatpush.bf16.msra.mxu0 %v6290
    %7450 = vmatpush.bf16.msra.mxu0 %v6282
    %7451 = vmatmul.bf16.gmra.mxu0 %v7141
    %v7452 = vpop.f32.mrf.mxu0
    %v7453 = vadd.f32 %v7440, %v7452
    %v7454 = vpop.f32.mrf.mxu0
    %7455 = vdwg.mxu0
    %7456 = vmatpush.bf16.msra.mxu0 %v6275
    %7457 = vmatpush.bf16.msra.mxu0 %v6267
    %7458 = vmatpush.bf16.msra.mxu0 %v6259
    %7459 = vmatpush.bf16.msra.mxu0 %v6251
    %7460 = vmatpush.bf16.msra.mxu0 %v6243
    %7461 = vmatpush.bf16.msra.mxu0 %v6235
    %7462 = vmatpush.bf16.msra.mxu0 %v6227
    %7463 = vmatpush.bf16.msra.mxu0 %v6219
    %7464 = vmatmul.bf16.gmra.mxu0 %v7140
    %v7465 = vpop.f32.mrf.mxu0
    %v7466 = vadd.f32 %v7271, %v7465
    %v7467 = vpop.f32.mrf.mxu0
    %7468 = vdwg.mxu0
    %7469 = vmatpush.bf16.msra.mxu0 %v6339
    %7470 = vmatpush.bf16.msra.mxu0 %v6331
    %7471 = vmatpush.bf16.msra.mxu0 %v6323
    %7472 = vmatpush.bf16.msra.mxu0 %v6315
    %7473 = vmatpush.bf16.msra.mxu0 %v6307
    %7474 = vmatpush.bf16.msra.mxu0 %v6299
    %7475 = vmatpush.bf16.msra.mxu0 %v6291
    %7476 = vmatpush.bf16.msra.mxu0 %v6283
    %7477 = vmatmul.bf16.gmra.mxu0 %v7141
    %v7478 = vpop.f32.mrf.mxu0
    %v7479 = vadd.f32 %v7466, %v7478
    %v7480 = vpop.f32.mrf.mxu0
    %7481 = vdwg.mxu0
    %7482 = vmatpush.bf16.msra.mxu0 %v6276
    %7483 = vmatpush.bf16.msra.mxu0 %v6268
    %7484 = vmatpush.bf16.msra.mxu0 %v6260
    %7485 = vmatpush.bf16.msra.mxu0 %v6252
    %7486 = vmatpush.bf16.msra.mxu0 %v6244
    %7487 = vmatpush.bf16.msra.mxu0 %v6236
    %7488 = vmatpush.bf16.msra.mxu0 %v6228
    %7489 = vmatpush.bf16.msra.mxu0 %v6220
    %7490 = vmatmul.bf16.gmra.mxu0 %v7140
    %v7491 = vpop.f32.mrf.mxu0
    %v7492 = vadd.f32 %v7297, %v7491
    %v7493 = vpop.f32.mrf.mxu0
    %7494 = vdwg.mxu0
    %7495 = vmatpush.bf16.msra.mxu0 %v6340
    %7496 = vmatpush.bf16.msra.mxu0 %v6332
    %7497 = vmatpush.bf16.msra.mxu0 %v6324
    %7498 = vmatpush.bf16.msra.mxu0 %v6316
    %7499 = vmatpush.bf16.msra.mxu0 %v6308
    %7500 = vmatpush.bf16.msra.mxu0 %v6300
    %7501 = vmatpush.bf16.msra.mxu0 %v6292
    %7502 = vmatpush.bf16.msra.mxu0 %v6284
    %7503 = vmatmul.bf16.gmra.mxu0 %v7141
    %v7504 = vpop.f32.mrf.mxu0
    %v7505 = vadd.f32 %v7492, %v7504
    %v7506 = vpop.f32.mrf.mxu0
    %7507 = vdwg.mxu0
    %7508 = vmatpush.bf16.msra.mxu0 %v6277
    %7509 = vmatpush.bf16.msra.mxu0 %v6269
    %7510 = vmatpush.bf16.msra.mxu0 %v6261
    %7511 = vmatpush.bf16.msra.mxu0 %v6253
    %7512 = vmatpush.bf16.msra.mxu0 %v6245
    %7513 = vmatpush.bf16.msra.mxu0 %v6237
    %7514 = vmatpush.bf16.msra.mxu0 %v6229
    %7515 = vmatpush.bf16.msra.mxu0 %v6221
    %7516 = vmatmul.bf16.gmra.mxu0 %v7140
    %v7517 = vpop.f32.mrf.mxu0
    %v7518 = vadd.f32 %v7323, %v7517
    %v7519 = vpop.f32.mrf.mxu0
    %7520 = vdwg.mxu0
    %7521 = vmatpush.bf16.msra.mxu0 %v6341
    %7522 = vmatpush.bf16.msra.mxu0 %v6333
    %7523 = vmatpush.bf16.msra.mxu0 %v6325
    %7524 = vmatpush.bf16.msra.mxu0 %v6317
    %7525 = vmatpush.bf16.msra.mxu0 %v6309
    %7526 = vmatpush.bf16.msra.mxu0 %v6301
    %7527 = vmatpush.bf16.msra.mxu0 %v6293
    %7528 = vmatpush.bf16.msra.mxu0 %v6285
    %7529 = vmatmul.bf16.gmra.mxu0 %v7141
    %v7530 = vpop.f32.mrf.mxu0
    %v7531 = vadd.f32 %v7518, %v7530
    %v7532 = vpop.f32.mrf.mxu0
    %7533 = vdwg.mxu0
    %7534 = vmatpush.bf16.msra.mxu0 %v6278
    %7535 = vmatpush.bf16.msra.mxu0 %v6270
    %7536 = vmatpush.bf16.msra.mxu0 %v6262
    %7537 = vmatpush.bf16.msra.mxu0 %v6254
    %7538 = vmatpush.bf16.msra.mxu0 %v6246
    %7539 = vmatpush.bf16.msra.mxu0 %v6238
    %7540 = vmatpush.bf16.msra.mxu0 %v6230
    %7541 = vmatpush.bf16.msra.mxu0 %v6222
    %7542 = vmatmul.bf16.gmra.mxu0 %v7140
    %v7543 = vpop.f32.mrf.mxu0
    %v7544 = vadd.f32 %v7349, %v7543
    %v7545 = vpop.f32.mrf.mxu0
    %7546 = vdwg.mxu0
    %7547 = vmatpush.bf16.msra.mxu0 %v6342
    %7548 = vmatpush.bf16.msra.mxu0 %v6334
    %7549 = vmatpush.bf16.msra.mxu0 %v6326
    %7550 = vmatpush.bf16.msra.mxu0 %v6318
    %7551 = vmatpush.bf16.msra.mxu0 %v6310
    %7552 = vmatpush.bf16.msra.mxu0 %v6302
    %7553 = vmatpush.bf16.msra.mxu0 %v6294
    %7554 = vmatpush.bf16.msra.mxu0 %v6286
    %7555 = vmatmul.bf16.gmra.mxu0 %v7141
    %v7556 = vpop.f32.mrf.mxu0
    %v7557 = vadd.f32 %v7544, %v7556
    %v7558 = vpop.f32.mrf.mxu0
    %7559 = vdwg.mxu0
    %v7560 = vadd.f32 %v7375, %v6680
    %v7561 = vadd.f32 %v7401, %v6681
    %v7562 = vadd.f32 %v7427, %v6682
    %v7563 = vadd.f32 %v7453, %v6683
    %v7564 = vadd.f32 %v7479, %v6684
    %v7565 = vadd.f32 %v7505, %v6685
    %v7566 = vadd.f32 %v7531, %v6686
    %v7567 = vadd.f32 %v7557, %v6687
    %v7568 = vxor.u32 %v7560, 2147483648
    %v7569 = vxor.u32 %v7561, 2147483648
    %v7570 = vmul.f32 %v7568, 1.442695
    %v7571 = vpow.pop %v7570
    %v7572 = vmul.f32 %v7569, 1.442695
    %v7573 = vpow.pop %v7572
    %v7574 = vadd.f32 %v7571, 1.0
    %v7575 = vadd.f32 %v7573, 1.0
    %v7576 = vrcp.pop %v7574
    %v7577 = vmul.f32 %v7574, %v7576
    %v7578 = vsub.f32 1.0, %v7577
    %v7579 = vmul.f32 %v7576, %v7578
    %v7580 = vadd.f32 %v7576, %v7579
    %vm7581 = vweird.f32 %v7574
    %vm7582 = vweird.f32 %v7576
    %vm7583 = vmor %vm7581, %vm7582
    %v7584 = vsel %vm7583, %v7576, %v7580
    %v7585 = vand.u32 2147483647, %v7574
    %vm7586 = vcmp.eq.f32.partialorder %v7585, 8.507059e+37
    %v7587 = vand.u32 %v7574, 2147483648
    %v7588 = vor.u32 1.1754944e-38, %v7587
    %v7589 = vsel %vm7586, %v7588, %v7584
    %v7590 = vmul.f32 1.0, %v7589
    %v7591 = vrcp.pop %v7575
    %v7592 = vmul.f32 %v7575, %v7591
    %v7593 = vsub.f32 1.0, %v7592
    %v7594 = vmul.f32 %v7591, %v7593
    %v7595 = vadd.f32 %v7591, %v7594
    %vm7596 = vweird.f32 %v7575
    %vm7597 = vweird.f32 %v7591
    %vm7598 = vmor %vm7596, %vm7597
    %v7599 = vsel %vm7598, %v7591, %v7595
    %v7600 = vand.u32 2147483647, %v7575
    %vm7601 = vcmp.eq.f32.partialorder %v7600, 8.507059e+37
    %v7602 = vand.u32 %v7575, 2147483648
    %v7603 = vor.u32 1.1754944e-38, %v7602
    %v7604 = vsel %vm7601, %v7603, %v7599
    %v7605 = vmul.f32 1.0, %v7604
    %v7606 = vxor.u32 %v7562, 2147483648
    %v7607 = vxor.u32 %v7563, 2147483648
    %v7608 = vmul.f32 %v7606, 1.442695
    %v7609 = vpow.pop %v7608
    %v7610 = vmul.f32 %v7607, 1.442695
    %v7611 = vpow.pop %v7610
    %v7612 = vadd.f32 %v7609, 1.0
    %v7613 = vadd.f32 %v7611, 1.0
    %v7614 = vrcp.pop %v7612
    %v7615 = vmul.f32 %v7612, %v7614
    %v7616 = vsub.f32 1.0, %v7615
    %v7617 = vmul.f32 %v7614, %v7616
    %v7618 = vadd.f32 %v7614, %v7617
    %vm7619 = vweird.f32 %v7612
    %vm7620 = vweird.f32 %v7614
    %vm7621 = vmor %vm7619, %vm7620
    %v7622 = vsel %vm7621, %v7614, %v7618
    %v7623 = vand.u32 2147483647, %v7612
    %vm7624 = vcmp.eq.f32.partialorder %v7623, 8.507059e+37
    %v7625 = vand.u32 %v7612, 2147483648
    %v7626 = vor.u32 1.1754944e-38, %v7625
    %v7627 = vsel %vm7624, %v7626, %v7622
    %v7628 = vmul.f32 1.0, %v7627
    %v7629 = vrcp.pop %v7613
    %v7630 = vmul.f32 %v7613, %v7629
    %v7631 = vsub.f32 1.0, %v7630
    %v7632 = vmul.f32 %v7629, %v7631
    %v7633 = vadd.f32 %v7629, %v7632
    %vm7634 = vweird.f32 %v7613
    %vm7635 = vweird.f32 %v7629
    %vm7636 = vmor %vm7634, %vm7635
    %v7637 = vsel %vm7636, %v7629, %v7633
    %v7638 = vand.u32 2147483647, %v7613
    %vm7639 = vcmp.eq.f32.partialorder %v7638, 8.507059e+37
    %v7640 = vand.u32 %v7613, 2147483648
    %v7641 = vor.u32 1.1754944e-38, %v7640
    %v7642 = vsel %vm7639, %v7641, %v7637
    %v7643 = vmul.f32 1.0, %v7642
    %v7644 = vtanh.pop %v7564
    %v7645 = vtanh.pop %v7565
    %v7646 = vxor.u32 %v7566, 2147483648
    %v7647 = vxor.u32 %v7567, 2147483648
    %v7648 = vmul.f32 %v7646, 1.442695
    %v7649 = vpow.pop %v7648
    %v7650 = vmul.f32 %v7647, 1.442695
    %v7651 = vpow.pop %v7650
    %v7652 = vadd.f32 %v7649, 1.0
    %v7653 = vadd.f32 %v7651, 1.0
    %v7654 = vrcp.pop %v7652
    %v7655 = vmul.f32 %v7652, %v7654
    %v7656 = vsub.f32 1.0, %v7655
    %v7657 = vmul.f32 %v7654, %v7656
    %v7658 = vadd.f32 %v7654, %v7657
    %vm7659 = vweird.f32 %v7652
    %vm7660 = vweird.f32 %v7654
    %vm7661 = vmor %vm7659, %vm7660
    %v7662 = vsel %vm7661, %v7654, %v7658
    %v7663 = vand.u32 2147483647, %v7652
    %vm7664 = vcmp.eq.f32.partialorder %v7663, 8.507059e+37
    %v7665 = vand.u32 %v7652, 2147483648
    %v7666 = vor.u32 1.1754944e-38, %v7665
    %v7667 = vsel %vm7664, %v7666, %v7662
    %v7668 = vmul.f32 1.0, %v7667
    %v7669 = vrcp.pop %v7653
    %v7670 = vmul.f32 %v7653, %v7669
    %v7671 = vsub.f32 1.0, %v7670
    %v7672 = vmul.f32 %v7669, %v7671
    %v7673 = vadd.f32 %v7669, %v7672
    %vm7674 = vweird.f32 %v7653
    %vm7675 = vweird.f32 %v7669
    %vm7676 = vmor %vm7674, %vm7675
    %v7677 = vsel %vm7676, %v7669, %v7673
    %v7678 = vand.u32 2147483647, %v7653
    %vm7679 = vcmp.eq.f32.partialorder %v7678, 8.507059e+37
    %v7680 = vand.u32 %v7653, 2147483648
    %v7681 = vor.u32 1.1754944e-38, %v7680
    %v7682 = vsel %vm7679, %v7681, %v7677
    %v7683 = vmul.f32 1.0, %v7682
    %v7684 = vmul.f32 %v7628, %v6824
    %v7685 = vmul.f32 %v7643, %v6825
    %v7686 = vmul.f32 %v7590, %v7644
    %v7687 = vmul.f32 %v7605, %v7645
    %v7688 = vadd.f32 %v7684, %v7686
    %v7689 = vadd.f32 %v7685, %v7687
    %v7690 = vtanh.pop %v7688
    %v7691 = vtanh.pop %v7689
    %v7692 = vmul.f32 %v7668, %v7690
    %v7693 = vmul.f32 %v7683, %v7691
    %v7694 = vpack.c.bf16 %v7692, %v7692
    %v7695 = vpack.c.bf16 %v7693, %v7693
    %v7696 = vld [vmem:[#allocation15] sm:$0xf]
    %v7697 = vld [vmem:[#allocation15 + $0x4] sm:$0xf]
    %v7698 = vld [vmem:[#allocation15 + $0x8] sm:$0xf]
    %v7699 = vld [vmem:[#allocation15 + $0xc] sm:$0xf]
    %v7700 = vld [vmem:[#allocation15 + $0x10] sm:$0xf]
    %v7701 = vld [vmem:[#allocation15 + $0x14] sm:$0xf]
    %v7702 = vld [vmem:[#allocation15 + $0x18] sm:$0xf]
    %v7703 = vld [vmem:[#allocation15 + $0x1c] sm:$0xf]
    %v7704 = vld [vmem:[#allocation15 + $0x20] sm:$0xf]
    %v7705 = vld [vmem:[#allocation15 + $0x24] sm:$0xf]
    %v7706 = vld [vmem:[#allocation15 + $0x28] sm:$0xf]
    %v7707 = vld [vmem:[#allocation15 + $0x2c] sm:$0xf]
    %v7708 = vld [vmem:[#allocation15 + $0x30] sm:$0xf]
    %v7709 = vld [vmem:[#allocation15 + $0x34] sm:$0xf]
    %v7710 = vld [vmem:[#allocation15 + $0x38] sm:$0xf]
    %v7711 = vld [vmem:[#allocation15 + $0x3c] sm:$0xf]
    %v7712 = vld [vmem:[#allocation15 + $0x40] sm:$0xf]
    %v7713 = vld [vmem:[#allocation15 + $0x44] sm:$0xf]
    %v7714 = vld [vmem:[#allocation15 + $0x48] sm:$0xf]
    %v7715 = vld [vmem:[#allocation15 + $0x4c] sm:$0xf]
    %v7716 = vld [vmem:[#allocation15 + $0x50] sm:$0xf]
    %v7717 = vld [vmem:[#allocation15 + $0x54] sm:$0xf]
    %v7718 = vld [vmem:[#allocation15 + $0x58] sm:$0xf]
    %v7719 = vld [vmem:[#allocation15 + $0x5c] sm:$0xf]
    %v7720 = vld [vmem:[#allocation15 + $0x60] sm:$0xf]
    %v7721 = vld [vmem:[#allocation15 + $0x64] sm:$0xf]
    %v7722 = vld [vmem:[#allocation15 + $0x68] sm:$0xf]
    %v7723 = vld [vmem:[#allocation15 + $0x6c] sm:$0xf]
    %v7724 = vld [vmem:[#allocation15 + $0x70] sm:$0xf]
    %v7725 = vld [vmem:[#allocation15 + $0x74] sm:$0xf]
    %v7726 = vld [vmem:[#allocation15 + $0x78] sm:$0xf]
    %v7727 = vld [vmem:[#allocation15 + $0x7c] sm:$0xf]
    %v7728 = vld [vmem:[#allocation17] sm:$0x1]
    %v7730 = vperm.slane %v7728, 0
    %v7764 = vunpack.c.l.b16 %v7696
    %v7765 = vunpack.c.l.b16 %v7697
    %v7766 = vunpack.c.l.b16 %v7698
    %v7767 = vunpack.c.l.b16 %v7699
    %v7768 = vunpack.c.l.b16 %v7700
    %v7769 = vunpack.c.l.b16 %v7701
    %v7770 = vunpack.c.l.b16 %v7702
    %v7771 = vunpack.c.l.b16 %v7703
    %v7772 = vunpack.c.l.b16 %v7704
    %v7773 = vunpack.c.l.b16 %v7705
    %v7774 = vunpack.c.l.b16 %v7706
    %v7775 = vunpack.c.l.b16 %v7707
    %v7776 = vunpack.c.l.b16 %v7708
    %v7777 = vunpack.c.l.b16 %v7709
    %v7778 = vunpack.c.l.b16 %v7710
    %v7779 = vunpack.c.l.b16 %v7711
    %v7780 = vunpack.c.l.b16 %v7712
    %v7781 = vunpack.c.l.b16 %v7713
    %v7782 = vunpack.c.l.b16 %v7714
    %v7783 = vunpack.c.l.b16 %v7715
    %v7784 = vunpack.c.l.b16 %v7716
    %v7785 = vunpack.c.l.b16 %v7717
    %v7786 = vunpack.c.l.b16 %v7718
    %v7787 = vunpack.c.l.b16 %v7719
    %v7788 = vunpack.c.l.b16 %v7720
    %v7789 = vunpack.c.l.b16 %v7721
    %v7790 = vunpack.c.l.b16 %v7722
    %v7791 = vunpack.c.l.b16 %v7723
    %v7792 = vunpack.c.l.b16 %v7724
    %v7793 = vunpack.c.l.b16 %v7725
    %v7794 = vunpack.c.l.b16 %v7726
    %v7795 = vunpack.c.l.b16 %v7727
    %v7796 = vpack.c.b16 %v7765, %v7764
    %v7797 = vpack.c.b16 %v7767, %v7766
    %v7798 = vpack.c.b16 %v7769, %v7768
    %v7799 = vpack.c.b16 %v7771, %v7770
    %v7800 = vpack.c.b16 %v7773, %v7772
    %v7801 = vpack.c.b16 %v7775, %v7774
    %v7802 = vpack.c.b16 %v7777, %v7776
    %v7803 = vpack.c.b16 %v7779, %v7778
    %v7804 = vpack.c.b16 %v7781, %v7780
    %v7805 = vpack.c.b16 %v7783, %v7782
    %v7806 = vpack.c.b16 %v7785, %v7784
    %v7807 = vpack.c.b16 %v7787, %v7786
    %v7808 = vpack.c.b16 %v7789, %v7788
    %v7809 = vpack.c.b16 %v7791, %v7790
    %v7810 = vpack.c.b16 %v7793, %v7792
    %v7811 = vpack.c.b16 %v7795, %v7794
    %7828 = vmatpush.bf16.msra.mxu0 %v7803
    %7829 = vmatpush.bf16.msra.mxu0 %v7802
    %7830 = vmatpush.bf16.msra.mxu0 %v7801
    %7831 = vmatpush.bf16.msra.mxu0 %v7800
    %7832 = vmatpush.bf16.msra.mxu0 %v7799
    %7833 = vmatpush.bf16.msra.mxu0 %v7798
    %7834 = vmatpush.bf16.msra.mxu0 %v7797
    %7835 = vmatpush.bf16.msra.mxu0 %v7796
    %7836 = vmatmul.bf16.gmra.mxu0 %v7694
    %v7837 = vpop.f32.mrf.mxu0
    %v7838 = vadd.f32 %v7730, %v7837
    %v7839 = vpop.f32.mrf.mxu0
    %7840 = vdwg.mxu0
    %7841 = vmatpush.bf16.msra.mxu0 %v7811
    %7842 = vmatpush.bf16.msra.mxu0 %v7810
    %7843 = vmatpush.bf16.msra.mxu0 %v7809
    %7844 = vmatpush.bf16.msra.mxu0 %v7808
    %7845 = vmatpush.bf16.msra.mxu0 %v7807
    %7846 = vmatpush.bf16.msra.mxu0 %v7806
    %7847 = vmatpush.bf16.msra.mxu0 %v7805
    %7848 = vmatpush.bf16.msra.mxu0 %v7804
    %7849 = vmatmul.bf16.gmra.mxu0 %v7695
    %v7850 = vpop.f32.mrf.mxu0
    %v7851 = vadd.f32 %v7838, %v7850
    %v7852 = vpop.f32.mrf.mxu0
    %7853 = vdwg.mxu0
    %v7854 = vmax.f32 %v7851, 0.0
    %v7855 = vpack.c.bf16 %v7854, %v7854
    %v7856 = vld [vmem:[#allocation18] sm:$0xf]
    %v7857 = vld [vmem:[#allocation18 + $0x4] sm:$0xf]
    %v7858 = vld [vmem:[#allocation18 + $0x8] sm:$0xf]
    %v7859 = vld [vmem:[#allocation18 + $0xc] sm:$0xf]
    %v7860 = vld [vmem:[#allocation18 + $0x10] sm:$0xf]
    %v7861 = vld [vmem:[#allocation18 + $0x14] sm:$0xf]
    %v7862 = vld [vmem:[#allocation18 + $0x18] sm:$0xf]
    %v7863 = vld [vmem:[#allocation18 + $0x1c] sm:$0xf]
    %v7864 = vld [vmem:[#allocation18 + $0x20] sm:$0xf]
    %v7865 = vld [vmem:[#allocation18 + $0x24] sm:$0xf]
    %v7866 = vld [vmem:[#allocation18 + $0x28] sm:$0xf]
    %v7867 = vld [vmem:[#allocation18 + $0x2c] sm:$0xf]
    %v7868 = vld [vmem:[#allocation18 + $0x30] sm:$0xf]
    %v7869 = vld [vmem:[#allocation18 + $0x34] sm:$0xf]
    %v7870 = vld [vmem:[#allocation18 + $0x38] sm:$0xf]
    %v7871 = vld [vmem:[#allocation18 + $0x3c] sm:$0xf]
    %v7872 = vld [vmem:[#allocation20] sm:$0x1]
    %v7874 = vperm.slane %v7872, 0
    %v7892 = vunpack.c.l.b16 %v7856
    %v7893 = vunpack.c.l.b16 %v7857
    %v7894 = vunpack.c.l.b16 %v7858
    %v7895 = vunpack.c.l.b16 %v7859
    %v7896 = vunpack.c.l.b16 %v7860
    %v7897 = vunpack.c.l.b16 %v7861
    %v7898 = vunpack.c.l.b16 %v7862
    %v7899 = vunpack.c.l.b16 %v7863
    %v7900 = vunpack.c.l.b16 %v7864
    %v7901 = vunpack.c.l.b16 %v7865
    %v7902 = vunpack.c.l.b16 %v7866
    %v7903 = vunpack.c.l.b16 %v7867
    %v7904 = vunpack.c.l.b16 %v7868
    %v7905 = vunpack.c.l.b16 %v7869
    %v7906 = vunpack.c.l.b16 %v7870
    %v7907 = vunpack.c.l.b16 %v7871
    %v7908 = vpack.c.b16 %v7893, %v7892
    %v7909 = vpack.c.b16 %v7895, %v7894
    %v7910 = vpack.c.b16 %v7897, %v7896
    %v7911 = vpack.c.b16 %v7899, %v7898
    %v7912 = vpack.c.b16 %v7901, %v7900
    %v7913 = vpack.c.b16 %v7903, %v7902
    %v7914 = vpack.c.b16 %v7905, %v7904
    %v7915 = vpack.c.b16 %v7907, %v7906
    %7924 = vmatpush.bf16.msra.mxu0 %v7915
    %7925 = vmatpush.bf16.msra.mxu0 %v7914
    %7926 = vmatpush.bf16.msra.mxu0 %v7913
    %7927 = vmatpush.bf16.msra.mxu0 %v7912
    %7928 = vmatpush.bf16.msra.mxu0 %v7911
    %7929 = vmatpush.bf16.msra.mxu0 %v7910
    %7930 = vmatpush.bf16.msra.mxu0 %v7909
    %7931 = vmatpush.bf16.msra.mxu0 %v7908
    %7932 = vmatmul.bf16.gmra.mxu0 %v7855
    %v7933 = vpop.f32.mrf.mxu0
    %v7934 = vadd.f32 %v7874, %v7933
    %v7935 = vpop.f32.mrf.mxu0
    %7936 = vdwg.mxu0
    %7937 = vst [vmem:[#allocation21] sm:$0x3] %v7934
    // Predicated region
    $region106: #{_lambda_.3} parent=1 // pred_check
      _
    $region107: #{_lambda_.3} parent=1 // pred_check_branch
      %7939 = sbr.rel (0) target = $region109
    $region108: #{_lambda_.3} parent=1 // pred_region
      %7941 = vsyncadd [#allocation5], 0
      %s7943 = sshll.u32 [#allocation21], 4
      %s7944 = int_to_ptr.vmem [resolvable:$true] %s7943
      %s7945 = sshll.u32 %s15, 4
      %s7946 = int_to_ptr.hbm [resolvable:$true] %s7945
      %7948 = dma.vmem_to_hbm [thread:$0]  %s7944, 32, %s7946, [#allocation5]
    $region109: #{_lambda_.3} parent=1 // pred_fallthru
      _
    // Predicated region
    $region110: #{_lambda_.3} parent=1 // pred_check
      _
    $region111: #{_lambda_.3} parent=1 // pred_check_branch
      %7950 = sbr.rel (0) target = $region113
    $region112: #{_lambda_.3} parent=1 // pred_region
      %7952 = dma.done [#allocation5], 32
    $region113: #{_lambda_.3} parent=1 // pred_fallthru
      _
    %7953 = vsyncpa [#allocation4], 1
    %7954 = vsyncpa [#allocation7], 1
    %7955 = vsyncpa [#allocation10], 1
    %7956 = vsyncpa [#allocation13], 1
    %7957 = vsyncpa [#allocation16], 1
    %7958 = vsyncpa [#allocation19], 1
    %7959 = vsyncpa [#allocation5], 1

</llo_original>
